<compile_context>
chip_gen: v5e
topology: v5e:2x2
jax: 0.10.0
libtpu: 0.0.40
codegen_flags: <defaults>
</compile_context>

<pallas_src>
import functools

import jax
import jax.numpy as jnp
import numpy as np
from jax.experimental import pallas as pl
from jax.experimental.pallas import tpu as pltpu

# (Cin, Cout, spatial H=W of the conv input) per conv layer.
_CONV_GEOM = ((3, 16, 32), (16, 32, 16), (32, 64, 8))
_FC_HID_PAD = 512   # fc1 hidden 500 -> 512 (zero-padded)
_FC_OUT_PAD = 128   # fc2 out     2  -> 128 (zero-padded, sliced off outside)
_MAX_B_TILE = 256   # per-grid-step batch tile; ~20 MiB VMEM at 256 (fits v7x's
                    # 64 MiB).  On v5e/v6e (128 MiB VMEM) this could be 512-1024.


# ---------------------------------------------------------------------------
# Fused kernel
# ---------------------------------------------------------------------------
def _zero_halo(pad_ref, H, interior_cols):
    """Zero only the halo (top/bottom rows + tail x-halo columns) of a padded
    activation scratch; the interior is fully overwritten every step."""
    bt, rows, cols = pad_ref.shape
    zrow = jnp.zeros((bt, 1, cols), pad_ref.dtype)
    pad_ref[:, 0:1, :] = zrow
    pad_ref[:, H + 1:H + 2, :] = zrow
    pad_ref[:, :, interior_cols:] = jnp.zeros(
        (bt, rows, cols - interior_cols), pad_ref.dtype)


def _conv_relu_pool(src_pad, w_ref, brow, sel_ref, B, H, W, cin, cout):
    """3x3 conv (padding=1) + bias + ReLU + 2x2/2 max-pool.

    src_pad : (B, H+2, (W+2)*cin) bf16 ref -- padded input, interior columns at
              lane offset 0, x-halo columns at the tail, halo rows 0 / H+1.
    w_ref   : (3, (W+2)*cin, W*cout) bf16 ref -- banded weights (one per dy).
    brow    : (1, W*cout) f32 -- bias tiled over output x.
    sel_ref : (W*cout, W*cout) bf16 0/1 ref -- [even x blocks | odd x blocks].
    Returns pooled (B*(H//2), (W//2)*cout) f32, lane-dense.
    """
    Hn, Wn = H // 2, W // 2
    acc = None
    for dy in range(3):                 # 3 MXU matmuls: K=(W+2)*cin, N=W*cout
        slab = src_pad[:, dy:dy + H, :].reshape(B * H, (W + 2) * cin)
        part = jnp.dot(slab, w_ref[dy], preferred_element_type=jnp.float32)
        acc = part if acc is None else acc + part
    acc = jnp.maximum(acc + brow, 0.0)            # bias + ReLU (f32, 512 lanes)

    # pool over y: pairwise max of consecutive rows (minor dim untouched)
    acc = acc.reshape(B * Hn, 2, W * cout)
    hmax = jnp.maximum(acc[:, 0, :], acc[:, 1, :])          # (B*Hn, W*cout)
    # pool over x: one 0/1 selection matmul on the idle MXU gathers the even
    # x-blocks into lanes [0,Wn*cout) and the odd x-blocks into the second
    # half, then a single aligned 256-lane maximum -> lane-dense pooled slab.
    both = jnp.dot(hmax.astype(jnp.bfloat16), sel_ref[...],
                   preferred_element_type=jnp.float32)      # (B*Hn, 2*Wn*cout)
    return jnp.maximum(both[:, :Wn * cout], both[:, Wn * cout:])


def lenet_kernel(x_ref, w1_ref, b1_ref, s1_ref, w2_ref, b2_ref, s2_ref,
                 w3_ref, b3_ref, s3_ref, fc1w_ref, fc1b_ref, fc2w_ref, fc2b_ref,
                 o_ref, pad1, pad2, pad3, flat):
    B = x_ref.shape[0]

    # Halo-only zero init, every step: cheap, and keeps the batch grid axis
    # truly "parallel" (no dependence on program_id(0)==0 -> v7x 2-TC safe).
    _zero_halo(pad1, 32, 32 * 3)
    _zero_halo(pad2, 16, 16 * 16)
    _zero_halo(pad3, 8, 8 * 32)

    # conv1: 32x32x3 -> pooled 16x16x16 (interior at lane offset 0 everywhere)
    pad1[:, 1:33, 0:96] = x_ref[...]
    p1 = _conv_relu_pool(pad1, w1_ref, b1_ref[...], s1_ref, B, 32, 32, 3, 16)
    pad2[:, 1:17, 0:256] = p1.reshape(B, 16, 256).astype(pad2.dtype)
    # conv2: 16x16x16 -> pooled 8x8x32
    p2 = _conv_relu_pool(pad2, w2_ref, b2_ref[...], s2_ref, B, 16, 16, 16, 32)
    pad3[:, 1:9, 0:256] = p2.reshape(B, 8, 256).astype(pad3.dtype)
    # conv3: 8x8x32 -> pooled 4x4x64, stored HWC into `flat` (B, 4, 4*64)
    p3 = _conv_relu_pool(pad3, w3_ref, b3_ref[...], s3_ref, B, 8, 8, 32, 64)
    flat[...] = p3.reshape(B, 4, 256).astype(flat.dtype)

    # fc1 (+ReLU): K=1024 split into 4 K=256 matmuls over the y rows of `flat`
    # (fc1 weight rows were pre-permuted from torch CHW flatten order to HWC).
    h = None
    for y in range(4):
        part = jnp.dot(flat[:, y, :], fc1w_ref[y],
                       preferred_element_type=jnp.float32)
        h = part if h is None else h + part
    h = jnp.maximum(h + fc1b_ref[...], 0.0)
    # TODO(synk): nn.Dropout(0.5) is identity at inference; a training-mode
    # kernel would draw a mask via pltpu.prng_seed / pltpu.prng_random_bits.
    o = jnp.dot(h.astype(jnp.bfloat16), fc2w_ref[...],
                preferred_element_type=jnp.float32) + fc2b_ref[...]
    o_ref[...] = o.astype(o_ref.dtype)


# ---------------------------------------------------------------------------
# Forward wrapper (accepts PyTorch-style NCHW input)
# ---------------------------------------------------------------------------
@functools.partial(jax.jit, static_argnums=(2,))
def lenet_forward(x_nchw, kp, out=2):
    B = x_nchw.shape[0]
    # NCHW -> lane-dense bf16 (B, H, W*Cin); the only XLA glue in the forward.
    x = jnp.transpose(x_nchw, (0, 2, 3, 1)).reshape(B, 32, 96).astype(jnp.bfloat16)

    b_tile = B if B <= _MAX_B_TILE else _MAX_B_TILE
    if B % b_tile:
        raise ValueError(f"batch {B} must be a multiple of the batch tile {b_tile}")
    nb = B // b_tile

    weights = (kp["w1"], kp["b1"], kp["sel1"], kp["w2"], kp["b2"], kp["sel2"],
               kp["w3"], kp["b3"], kp["sel3"],
               kp["fc1_w"], kp["fc1_b"], kp["fc2_w"], kp["fc2_b"])

    def resident(a):  # constant block index -> stays VMEM-resident across steps
        return pl.BlockSpec(a.shape, lambda b: (0,) * a.ndim)

    grid_spec = pltpu.PrefetchScalarGridSpec(
        num_scalar_prefetch=0,
        grid=(nb,),
        in_specs=[pl.BlockSpec((b_tile, 32, 96), lambda b: (b, 0, 0))]
                 + [resident(a) for a in weights],
        out_specs=pl.BlockSpec((b_tile, _FC_OUT_PAD), lambda b: (b, 0)),
        scratch_shapes=[
            pltpu.VMEM((b_tile, 34, 34 * 3), jnp.bfloat16),    # conv1 padded in
            pltpu.VMEM((b_tile, 18, 18 * 16), jnp.bfloat16),   # conv2 padded in
            pltpu.VMEM((b_tile, 10, 10 * 32), jnp.bfloat16),   # conv3 padded in
            pltpu.VMEM((b_tile, 4, 4 * 64), jnp.bfloat16),     # flattened conv3
        ])

    flops = 0
    for cin, cout, w in _CONV_GEOM:
        flops += 3 * 2 * (B * w) * ((w + 2) * cin) * (w * cout)  # banded convs
        flops += 2 * (B * w // 2) * (w * cout) * (w * cout)      # pool select mm
    flops += 4 * 2 * B * 256 * _FC_HID_PAD + 2 * B * _FC_HID_PAD * _FC_OUT_PAD
    bytes_accessed = (x.size * x.dtype.itemsize
                      + sum(a.size * a.dtype.itemsize for a in weights)
                      + B * _FC_OUT_PAD * 4)

    logits_pad = pl.pallas_call(
        lenet_kernel,
        out_shape=jax.ShapeDtypeStruct((B, _FC_OUT_PAD), jnp.float32),
        grid_spec=grid_spec,
        compiler_params=pltpu.CompilerParams(
            dimension_semantics=("parallel",),
            vmem_limit_bytes=32 * 1024 * 1024),
        cost_estimate=pl.CostEstimate(flops=flops, transcendentals=0,
                                      bytes_accessed=bytes_accessed),
    )(x, *weights)
    return logits_pad[:, :out]


# ---------------------------------------------------------------------------
# Parameters: logical (torch-shaped) init + host-side repack into kernel layout
# ---------------------------------------------------------------------------
def init_params(key, out=2):
    """Deterministic synthetic params; logical shapes match the nn.Module."""
    ks = jax.random.split(key, 10)

    def conv_w(k, cin, cout):  # HWIO
        return jax.random.normal(k, (3, 3, cin, cout), jnp.float32) / (9 * cin) ** 0.5

    def lin_w(k, fin, fout):
        return jax.random.normal(k, (fin, fout), jnp.float32) / fin ** 0.5

    return {
        "conv1_w": conv_w(ks[0], 3, 16),
        "conv1_b": jax.random.normal(ks[1], (16,), jnp.float32) * 0.01,
        "conv2_w": conv_w(ks[2], 16, 32),
        "conv2_b": jax.random.normal(ks[3], (32,), jnp.float32) * 0.01,
        "conv3_w": conv_w(ks[4], 32, 64),
        "conv3_b": jax.random.normal(ks[5], (64,), jnp.float32) * 0.01,
        "fc1_w": lin_w(ks[6], 4 * 4 * 64, 500),   # rows in torch CHW flatten order
        "fc1_b": jax.random.normal(ks[7], (500,), jnp.float32) * 0.01,
        "fc2_w": lin_w(ks[8], 500, out),
        "fc2_b": jax.random.normal(ks[9], (out,), jnp.float32) * 0.01,
    }


def _band_conv_weight(w_hwio, W):
    """Pack HWIO 3x3 weights into banded (3, (W+2)*Cin, W*Cout) matrices.
    K-row order matches the padded activation layout: W interior x positions
    first (lane offset 0), then the two x-halo positions (x=-1, x=W)."""
    w = np.asarray(w_hwio, np.float32)                    # (3, 3, Cin, Cout)
    cin, cout = w.shape[2], w.shape[3]
    wb = np.zeros((3, (W + 2) * cin, W * cout), np.float32)
    for dy in range(3):
        for dx in range(3):
            for x in range(W):
                xin = x + dx - 1                          # input column (pad=1)
                col = xin if 0 <= xin < W else (W if xin < 0 else W + 1)
                wb[dy, col * cin:(col + 1) * cin,
                   x * cout:(x + 1) * cout] = w[dy, dx]
    return jnp.asarray(wb, jnp.bfloat16)


def _pool_select_matrix(W, cout):
    """0/1 matrix (W*cout, W*cout): even x-blocks -> lanes [0, Wn*cout),
    odd x-blocks -> lanes [Wn*cout, 2*Wn*cout)."""
    Wn = W // 2
    s = np.zeros((W * cout, 2 * Wn * cout), np.float32)
    for x in range(W):
        dst = (x % 2) * Wn * cout + (x // 2) * cout
        for c in range(cout):
            s[x * cout + c, dst + c] = 1.0
    return jnp.asarray(s, jnp.bfloat16)


def pack_params(params, out=2):
    """One-time host-side repack of logical params into the kernel layout."""
    assert out <= _FC_OUT_PAD
    kp = {}
    for i, (cin, cout, hw) in enumerate(_CONV_GEOM, start=1):
        kp[f"w{i}"] = _band_conv_weight(params[f"conv{i}_w"], hw)
        kp[f"b{i}"] = jnp.tile(params[f"conv{i}_b"], hw).reshape(1, hw * cout)
        kp[f"sel{i}"] = _pool_select_matrix(hw, cout)
    # fc1: permute rows from torch CHW flatten order to HWC, pad 500 -> 512,
    # split K into the 4 y-rows used by the kernel: (4, 256, 512).
    fc1 = np.asarray(params["fc1_w"], np.float32).reshape(64, 4, 4, 500)
    fc1 = fc1.transpose(1, 2, 0, 3).reshape(4, 4 * 64, 500)
    fc1p = np.zeros((4, 4 * 64, _FC_HID_PAD), np.float32)
    fc1p[..., :500] = fc1
    kp["fc1_w"] = jnp.asarray(fc1p, jnp.bfloat16)
    fc1b = np.zeros((1, _FC_HID_PAD), np.float32)
    fc1b[0, :500] = np.asarray(params["fc1_b"], np.float32)
    kp["fc1_b"] = jnp.asarray(fc1b)
    # fc2: pad K 500 -> 512 and out -> 128 with zeros (sliced off outside).
    fc2 = np.zeros((_FC_HID_PAD, _FC_OUT_PAD), np.float32)
    fc2[:500, :out] = np.asarray(params["fc2_w"], np.float32)
    kp["fc2_w"] = jnp.asarray(fc2, jnp.bfloat16)
    fc2b = np.zeros((1, _FC_OUT_PAD), np.float32)
    fc2b[0, :out] = np.asarray(params["fc2_b"], np.float32)
    kp["fc2_b"] = jnp.asarray(fc2b)
    return kp


# ---------------------------------------------------------------------------
# Pure-JAX f32 reference (matches the PyTorch module) for a tolerance check
# ---------------------------------------------------------------------------
@jax.jit
def lenet_reference(x_nchw, params):
    hp = jax.lax.Precision.HIGHEST
    x = jnp.transpose(x_nchw, (0, 2, 3, 1))                      # NHWC

    def conv(y, w, b):
        y = jax.lax.conv_general_dilated(
            y, w, (1, 1), "SAME",
            dimension_numbers=("NHWC", "HWIO", "NHWC"), precision=hp)
        return jnp.maximum(y + b, 0.0)

    def pool(y):
        return jax.lax.reduce_window(y, -jnp.inf, jax.lax.max,
                                     (1, 2, 2, 1), (1, 2, 2, 1), "VALID")

    x = pool(conv(x, params["conv1_w"], params["conv1_b"]))
    x = pool(conv(x, params["conv2_w"], params["conv2_b"]))
    x = pool(conv(x, params["conv3_w"], params["conv3_b"]))
    xf = jnp.transpose(x, (0, 3, 1, 2)).reshape(x.shape[0], -1)  # torch CHW flatten
    h = jnp.maximum(jnp.dot(xf, params["fc1_w"], precision=hp) + params["fc1_b"], 0.0)
    return jnp.dot(h, params["fc2_w"], precision=hp) + params["fc2_b"]


if __name__ == "__main__":
    key = jax.random.PRNGKey(0)
    k_x, k_p = jax.random.split(key)
    # 32x32x3 input is implied by fc1 = Linear(4*4*64, 500)
    x = jax.random.normal(k_x, (2, 3, 32, 32), jnp.float32)
    params = init_params(k_p, out=2)
    kp = pack_params(params, out=2)

    logits = lenet_forward(x, kp, 2)
    jax.block_until_ready(logits)
    assert logits.shape == (2, 2), logits.shape

    # bf16-matmul kernel vs f32 reference (explicit tolerance, per review).
    ref = lenet_reference(x, params)
    err = float(jnp.max(jnp.abs(logits - ref)))
    assert err < 0.2, f"kernel/reference mismatch: max|diff|={err:.4f}"
    print("KERNEL_OK")
</pallas_src>

<mosaic_0001>
module attributes {stable_mosaic.version = 11 : i64} {
  func.func @lenet_kernel(%arg0: i32, %arg1: memref<2x32x96xbf16, #tpu.memory_space<vmem>>, %arg2: memref<3x102x512xbf16, #tpu.memory_space<vmem>>, %arg3: memref<1x512xf32, #tpu.memory_space<vmem>>, %arg4: memref<512x512xbf16, #tpu.memory_space<vmem>>, %arg5: memref<3x288x512xbf16, #tpu.memory_space<vmem>>, %arg6: memref<1x512xf32, #tpu.memory_space<vmem>>, %arg7: memref<512x512xbf16, #tpu.memory_space<vmem>>, %arg8: memref<3x320x512xbf16, #tpu.memory_space<vmem>>, %arg9: memref<1x512xf32, #tpu.memory_space<vmem>>, %arg10: memref<512x512xbf16, #tpu.memory_space<vmem>>, %arg11: memref<4x256x512xbf16, #tpu.memory_space<vmem>>, %arg12: memref<1x512xf32, #tpu.memory_space<vmem>>, %arg13: memref<512x128xbf16, #tpu.memory_space<vmem>>, %arg14: memref<1x128xf32, #tpu.memory_space<vmem>>, %arg15: memref<2x128xf32, #tpu.memory_space<vmem>>, %arg16: memref<2x34x102xbf16, #tpu.memory_space<vmem>>, %arg17: memref<2x18x288xbf16, #tpu.memory_space<vmem>>, %arg18: memref<2x10x320xbf16, #tpu.memory_space<vmem>>, %arg19: memref<2x4x256xbf16, #tpu.memory_space<vmem>>) attributes {dimension_semantics = [#tpu.dimension_semantics<parallel>], iteration_bounds = array<i64: 1>, scalar_prefetch = 0 : i64, scratch_operands = 4 : i64, tpu.core_type = #tpu.core_type<tc>, window_params = [{transform_indices = @transform_0, window_bounds = array<i64: 2, 32, 96>}, {pipeline_mode = #tpu.pipeline_mode<synchronous>, transform_indices = @transform_1, window_bounds = array<i64: 3, 102, 512>}, {pipeline_mode = #tpu.pipeline_mode<synchronous>, transform_indices = @transform_2, window_bounds = array<i64: 1, 512>}, {pipeline_mode = #tpu.pipeline_mode<synchronous>, transform_indices = @transform_3, window_bounds = array<i64: 512, 512>}, {pipeline_mode = #tpu.pipeline_mode<synchronous>, transform_indices = @transform_4, window_bounds = array<i64: 3, 288, 512>}, {pipeline_mode = #tpu.pipeline_mode<synchronous>, transform_indices = @transform_5, window_bounds = array<i64: 1, 512>}, {pipeline_mode = #tpu.pipeline_mode<synchronous>, transform_indices = @transform_6, window_bounds = array<i64: 512, 512>}, {pipeline_mode = #tpu.pipeline_mode<synchronous>, transform_indices = @transform_7, window_bounds = array<i64: 3, 320, 512>}, {pipeline_mode = #tpu.pipeline_mode<synchronous>, transform_indices = @transform_8, window_bounds = array<i64: 1, 512>}, {pipeline_mode = #tpu.pipeline_mode<synchronous>, transform_indices = @transform_9, window_bounds = array<i64: 512, 512>}, {pipeline_mode = #tpu.pipeline_mode<synchronous>, transform_indices = @transform_10, window_bounds = array<i64: 4, 256, 512>}, {pipeline_mode = #tpu.pipeline_mode<synchronous>, transform_indices = @transform_11, window_bounds = array<i64: 1, 512>}, {pipeline_mode = #tpu.pipeline_mode<synchronous>, transform_indices = @transform_12, window_bounds = array<i64: 512, 128>}, {pipeline_mode = #tpu.pipeline_mode<synchronous>, transform_indices = @transform_13, window_bounds = array<i64: 1, 128>}, {transform_indices = @transform_14, window_bounds = array<i64: 2, 128>}]} {
    %cst = arith.constant 0.000000e+00 : bf16
    %0 = vector.broadcast %cst : bf16 to vector<2x1x102xbf16>
    %c0 = arith.constant 0 : index
    %c0_0 = arith.constant 0 : index
    %c0_1 = arith.constant 0 : index
    %1 = vector.load %arg16[%c0, %c0_0, %c0_1] : memref<2x34x102xbf16, #tpu.memory_space<vmem>>, vector<2x1x102xbf16>
    tpu.vector_store %arg16[%c0, %c0_0, %c0_1], %0 {strides = array<i32>} : memref<2x34x102xbf16, #tpu.memory_space<vmem>>, vector<2x1x102xbf16>,
    %c0_2 = arith.constant 0 : index
    %c33 = arith.constant 33 : index
    %c0_3 = arith.constant 0 : index
    %2 = vector.load %arg16[%c0_2, %c33, %c0_3] : memref<2x34x102xbf16, #tpu.memory_space<vmem>>, vector<2x1x102xbf16>
    tpu.vector_store %arg16[%c0_2, %c33, %c0_3], %0 {strides = array<i32>} : memref<2x34x102xbf16, #tpu.memory_space<vmem>>, vector<2x1x102xbf16>,
    %cst_4 = arith.constant 0.000000e+00 : bf16
    %3 = vector.broadcast %cst_4 : bf16 to vector<2x34x6xbf16>
    %c0_5 = arith.constant 0 : index
    %c0_6 = arith.constant 0 : index
    %c96 = arith.constant 96 : index
    %4 = vector.load %arg16[%c0_5, %c0_6, %c96] : memref<2x34x102xbf16, #tpu.memory_space<vmem>>, vector<2x34x6xbf16>
    tpu.vector_store %arg16[%c0_5, %c0_6, %c96], %3 {strides = array<i32>} : memref<2x34x102xbf16, #tpu.memory_space<vmem>>, vector<2x34x6xbf16>,
    %cst_7 = arith.constant 0.000000e+00 : bf16
    %5 = vector.broadcast %cst_7 : bf16 to vector<2x1x288xbf16>
    %c0_8 = arith.constant 0 : index
    %c0_9 = arith.constant 0 : index
    %c0_10 = arith.constant 0 : index
    %6 = vector.load %arg17[%c0_8, %c0_9, %c0_10] : memref<2x18x288xbf16, #tpu.memory_space<vmem>>, vector<2x1x288xbf16>
    tpu.vector_store %arg17[%c0_8, %c0_9, %c0_10], %5 {strides = array<i32>} : memref<2x18x288xbf16, #tpu.memory_space<vmem>>, vector<2x1x288xbf16>,
    %c0_11 = arith.constant 0 : index
    %c17 = arith.constant 17 : index
    %c0_12 = arith.constant 0 : index
    %7 = vector.load %arg17[%c0_11, %c17, %c0_12] : memref<2x18x288xbf16, #tpu.memory_space<vmem>>, vector<2x1x288xbf16>
    tpu.vector_store %arg17[%c0_11, %c17, %c0_12], %5 {strides = array<i32>} : memref<2x18x288xbf16, #tpu.memory_space<vmem>>, vector<2x1x288xbf16>,
    %cst_13 = arith.constant 0.000000e+00 : bf16
    %8 = vector.broadcast %cst_13 : bf16 to vector<2x18x32xbf16>
    %c0_14 = arith.constant 0 : index
    %c0_15 = arith.constant 0 : index
    %c256 = arith.constant 256 : index
    %9 = vector.load %arg17[%c0_14, %c0_15, %c256] : memref<2x18x288xbf16, #tpu.memory_space<vmem>>, vector<2x18x32xbf16>
    tpu.vector_store %arg17[%c0_14, %c0_15, %c256], %8 {strides = array<i32>} : memref<2x18x288xbf16, #tpu.memory_space<vmem>>, vector<2x18x32xbf16>,
    %cst_16 = arith.constant 0.000000e+00 : bf16
    %10 = vector.broadcast %cst_16 : bf16 to vector<2x1x320xbf16>
    %c0_17 = arith.constant 0 : index
    %c0_18 = arith.constant 0 : index
    %c0_19 = arith.constant 0 : index
    %11 = vector.load %arg18[%c0_17, %c0_18, %c0_19] : memref<2x10x320xbf16, #tpu.memory_space<vmem>>, vector<2x1x320xbf16>
    tpu.vector_store %arg18[%c0_17, %c0_18, %c0_19], %10 {strides = array<i32>} : memref<2x10x320xbf16, #tpu.memory_space<vmem>>, vector<2x1x320xbf16>,
    %c0_20 = arith.constant 0 : index
    %c9 = arith.constant 9 : index
    %c0_21 = arith.constant 0 : index
    %12 = vector.load %arg18[%c0_20, %c9, %c0_21] : memref<2x10x320xbf16, #tpu.memory_space<vmem>>, vector<2x1x320xbf16>
    tpu.vector_store %arg18[%c0_20, %c9, %c0_21], %10 {strides = array<i32>} : memref<2x10x320xbf16, #tpu.memory_space<vmem>>, vector<2x1x320xbf16>,
    %cst_22 = arith.constant 0.000000e+00 : bf16
    %13 = vector.broadcast %cst_22 : bf16 to vector<2x10x64xbf16>
    %c0_23 = arith.constant 0 : index
    %c0_24 = arith.constant 0 : index
    %c256_25 = arith.constant 256 : index
    %14 = vector.load %arg18[%c0_23, %c0_24, %c256_25] : memref<2x10x320xbf16, #tpu.memory_space<vmem>>, vector<2x10x64xbf16>
    tpu.vector_store %arg18[%c0_23, %c0_24, %c256_25], %13 {strides = array<i32>} : memref<2x10x320xbf16, #tpu.memory_space<vmem>>, vector<2x10x64xbf16>,
    %c0_26 = arith.constant 0 : index
    %c0_27 = arith.constant 0 : index
    %c0_28 = arith.constant 0 : index
    %15 = vector.load %arg1[%c0_26, %c0_27, %c0_28] : memref<2x32x96xbf16, #tpu.memory_space<vmem>>, vector<2x32x96xbf16>
    %c0_29 = arith.constant 0 : index
    %c1 = arith.constant 1 : index
    %c0_30 = arith.constant 0 : index
    %16 = vector.load %arg16[%c0_29, %c1, %c0_30] : memref<2x34x102xbf16, #tpu.memory_space<vmem>>, vector<2x32x96xbf16>
    tpu.vector_store %arg16[%c0_29, %c1, %c0_30], %15 {strides = array<i32>} : memref<2x34x102xbf16, #tpu.memory_space<vmem>>, vector<2x32x96xbf16>,
    %c0_31 = arith.constant 0 : index
    %c0_32 = arith.constant 0 : index
    %17 = vector.load %arg3[%c0_31, %c0_32] : memref<1x512xf32, #tpu.memory_space<vmem>>, vector<1x512xf32>
    %c0_33 = arith.constant 0 : index
    %c0_34 = arith.constant 0 : index
    %c0_35 = arith.constant 0 : index
    %18 = vector.load %arg16[%c0_33, %c0_34, %c0_35] : memref<2x34x102xbf16, #tpu.memory_space<vmem>>, vector<2x32x102xbf16>
    %19 = vector.shape_cast %18 : vector<2x32x102xbf16> to vector<64x102xbf16>
    %c0_36 = arith.constant 0 : index
    %c0_37 = arith.constant 0 : index
    %c0_38 = arith.constant 0 : index
    %20 = vector.load %arg2[%c0_36, %c0_37, %c0_38] : memref<3x102x512xbf16, #tpu.memory_space<vmem>>, vector<1x102x512xbf16>
    %21 = vector.shape_cast %20 : vector<1x102x512xbf16> to vector<102x512xbf16>
    %cst_39 = arith.constant dense<0.000000e+00> : vector<64x512xf32>
    %22 = tpu.matmul %19, %21, %cst_39 {dimension_numbers = #tpu.dot_dimension_numbers<[1], [0], [0], [1], [0, 0, 1, 1], [], []>} : vector<64x102xbf16>, vector<102x512xbf16>, vector<64x512xf32> -> vector<64x512xf32>
    %c0_40 = arith.constant 0 : index
    %c1_41 = arith.constant 1 : index
    %c0_42 = arith.constant 0 : index
    %23 = vector.load %arg16[%c0_40, %c1_41, %c0_42] : memref<2x34x102xbf16, #tpu.memory_space<vmem>>, vector<2x32x102xbf16>
    %24 = vector.shape_cast %23 : vector<2x32x102xbf16> to vector<64x102xbf16>
    %c1_43 = arith.constant 1 : index
    %c0_44 = arith.constant 0 : index
    %c0_45 = arith.constant 0 : index
    %25 = vector.load %arg2[%c1_43, %c0_44, %c0_45] : memref<3x102x512xbf16, #tpu.memory_space<vmem>>, vector<1x102x512xbf16>
    %26 = vector.shape_cast %25 : vector<1x102x512xbf16> to vector<102x512xbf16>
    %cst_46 = arith.constant dense<0.000000e+00> : vector<64x512xf32>
    %27 = tpu.matmul %24, %26, %cst_46 {dimension_numbers = #tpu.dot_dimension_numbers<[1], [0], [0], [1], [0, 0, 1, 1], [], []>} : vector<64x102xbf16>, vector<102x512xbf16>, vector<64x512xf32> -> vector<64x512xf32>
    %28 = arith.addf %22, %27 : vector<64x512xf32>
    %c0_47 = arith.constant 0 : index
    %c2 = arith.constant 2 : index
    %c0_48 = arith.constant 0 : index
    %29 = vector.load %arg16[%c0_47, %c2, %c0_48] : memref<2x34x102xbf16, #tpu.memory_space<vmem>>, vector<2x32x102xbf16>
    %30 = vector.shape_cast %29 : vector<2x32x102xbf16> to vector<64x102xbf16>
    %c2_49 = arith.constant 2 : index
    %c0_50 = arith.constant 0 : index
    %c0_51 = arith.constant 0 : index
    %31 = vector.load %arg2[%c2_49, %c0_50, %c0_51] : memref<3x102x512xbf16, #tpu.memory_space<vmem>>, vector<1x102x512xbf16>
    %32 = vector.shape_cast %31 : vector<1x102x512xbf16> to vector<102x512xbf16>
    %cst_52 = arith.constant dense<0.000000e+00> : vector<64x512xf32>
    %33 = tpu.matmul %30, %32, %cst_52 {dimension_numbers = #tpu.dot_dimension_numbers<[1], [0], [0], [1], [0, 0, 1, 1], [], []>} : vector<64x102xbf16>, vector<102x512xbf16>, vector<64x512xf32> -> vector<64x512xf32>
    %34 = arith.addf %28, %33 : vector<64x512xf32>
    %35 = vector.broadcast %17 : vector<1x512xf32> to vector<64x512xf32>
    %36 = arith.addf %34, %35 : vector<64x512xf32>
    %cst_53 = arith.constant 0.000000e+00 : f32
    %37 = vector.broadcast %cst_53 : f32 to vector<64x512xf32>
    %38 = arith.maximumf %36, %37 : vector<64x512xf32>
    %39 = vector.shape_cast %38 : vector<64x512xf32> to vector<32x2x512xf32>
    %40 = vector.extract_strided_slice %39 {offsets = [0, 0, 0], sizes = [32, 1, 512], strides = [1, 1, 1]} : vector<32x2x512xf32> to vector<32x1x512xf32>
    %41 = vector.shape_cast %40 : vector<32x1x512xf32> to vector<32x512xf32>
    %42 = vector.extract_strided_slice %39 {offsets = [0, 1, 0], sizes = [32, 1, 512], strides = [1, 1, 1]} : vector<32x2x512xf32> to vector<32x1x512xf32>
    %43 = vector.shape_cast %42 : vector<32x1x512xf32> to vector<32x512xf32>
    %44 = arith.maximumf %41, %43 : vector<32x512xf32>
    %45 = arith.truncf %44 : vector<32x512xf32> to vector<32x512xbf16>
    %c0_54 = arith.constant 0 : index
    %c0_55 = arith.constant 0 : index
    %46 = vector.load %arg4[%c0_54, %c0_55] : memref<512x512xbf16, #tpu.memory_space<vmem>>, vector<512x512xbf16>
    %cst_56 = arith.constant dense<0.000000e+00> : vector<32x512xf32>
    %47 = tpu.matmul %45, %46, %cst_56 {dimension_numbers = #tpu.dot_dimension_numbers<[1], [0], [0], [1], [0, 0, 1, 1], [], []>} : vector<32x512xbf16>, vector<512x512xbf16>, vector<32x512xf32> -> vector<32x512xf32>
    %48 = vector.extract_strided_slice %47 {offsets = [0, 0], sizes = [32, 256], strides = [1, 1]} : vector<32x512xf32> to vector<32x256xf32>
    %49 = vector.extract_strided_slice %47 {offsets = [0, 256], sizes = [32, 256], strides = [1, 1]} : vector<32x512xf32> to vector<32x256xf32>
    %50 = arith.maximumf %48, %49 : vector<32x256xf32>
    %51 = vector.shape_cast %50 : vector<32x256xf32> to vector<2x16x256xf32>
    %52 = arith.truncf %51 : vector<2x16x256xf32> to vector<2x16x256xbf16>
    %c0_57 = arith.constant 0 : index
    %c1_58 = arith.constant 1 : index
    %c0_59 = arith.constant 0 : index
    %53 = vector.load %arg17[%c0_57, %c1_58, %c0_59] : memref<2x18x288xbf16, #tpu.memory_space<vmem>>, vector<2x16x256xbf16>
    tpu.vector_store %arg17[%c0_57, %c1_58, %c0_59], %52 {strides = array<i32>} : memref<2x18x288xbf16, #tpu.memory_space<vmem>>, vector<2x16x256xbf16>,
    %c0_60 = arith.constant 0 : index
    %c0_61 = arith.constant 0 : index
    %54 = vector.load %arg6[%c0_60, %c0_61] : memref<1x512xf32, #tpu.memory_space<vmem>>, vector<1x512xf32>
    %c0_62 = arith.constant 0 : index
    %c0_63 = arith.constant 0 : index
    %c0_64 = arith.constant 0 : index
    %55 = vector.load %arg17[%c0_62, %c0_63, %c0_64] : memref<2x18x288xbf16, #tpu.memory_space<vmem>>, vector<2x16x288xbf16>
    %56 = vector.shape_cast %55 : vector<2x16x288xbf16> to vector<32x288xbf16>
    %c0_65 = arith.constant 0 : index
    %c0_66 = arith.constant 0 : index
    %c0_67 = arith.constant 0 : index
    %57 = vector.load %arg5[%c0_65, %c0_66, %c0_67] : memref<3x288x512xbf16, #tpu.memory_space<vmem>>, vector<1x288x512xbf16>
    %58 = vector.shape_cast %57 : vector<1x288x512xbf16> to vector<288x512xbf16>
    %cst_68 = arith.constant dense<0.000000e+00> : vector<32x512xf32>
    %59 = tpu.matmul %56, %58, %cst_68 {dimension_numbers = #tpu.dot_dimension_numbers<[1], [0], [0], [1], [0, 0, 1, 1], [], []>} : vector<32x288xbf16>, vector<288x512xbf16>, vector<32x512xf32> -> vector<32x512xf32>
    %c0_69 = arith.constant 0 : index
    %c1_70 = arith.constant 1 : index
    %c0_71 = arith.constant 0 : index
    %60 = vector.load %arg17[%c0_69, %c1_70, %c0_71] : memref<2x18x288xbf16, #tpu.memory_space<vmem>>, vector<2x16x288xbf16>
    %61 = vector.shape_cast %60 : vector<2x16x288xbf16> to vector<32x288xbf16>
    %c1_72 = arith.constant 1 : index
    %c0_73 = arith.constant 0 : index
    %c0_74 = arith.constant 0 : index
    %62 = vector.load %arg5[%c1_72, %c0_73, %c0_74] : memref<3x288x512xbf16, #tpu.memory_space<vmem>>, vector<1x288x512xbf16>
    %63 = vector.shape_cast %62 : vector<1x288x512xbf16> to vector<288x512xbf16>
    %cst_75 = arith.constant dense<0.000000e+00> : vector<32x512xf32>
    %64 = tpu.matmul %61, %63, %cst_75 {dimension_numbers = #tpu.dot_dimension_numbers<[1], [0], [0], [1], [0, 0, 1, 1], [], []>} : vector<32x288xbf16>, vector<288x512xbf16>, vector<32x512xf32> -> vector<32x512xf32>
    %65 = arith.addf %59, %64 : vector<32x512xf32>
    %c0_76 = arith.constant 0 : index
    %c2_77 = arith.constant 2 : index
    %c0_78 = arith.constant 0 : index
    %66 = vector.load %arg17[%c0_76, %c2_77, %c0_78] : memref<2x18x288xbf16, #tpu.memory_space<vmem>>, vector<2x16x288xbf16>
    %67 = vector.shape_cast %66 : vector<2x16x288xbf16> to vector<32x288xbf16>
    %c2_79 = arith.constant 2 : index
    %c0_80 = arith.constant 0 : index
    %c0_81 = arith.constant 0 : index
    %68 = vector.load %arg5[%c2_79, %c0_80, %c0_81] : memref<3x288x512xbf16, #tpu.memory_space<vmem>>, vector<1x288x512xbf16>
    %69 = vector.shape_cast %68 : vector<1x288x512xbf16> to vector<288x512xbf16>
    %cst_82 = arith.constant dense<0.000000e+00> : vector<32x512xf32>
    %70 = tpu.matmul %67, %69, %cst_82 {dimension_numbers = #tpu.dot_dimension_numbers<[1], [0], [0], [1], [0, 0, 1, 1], [], []>} : vector<32x288xbf16>, vector<288x512xbf16>, vector<32x512xf32> -> vector<32x512xf32>
    %71 = arith.addf %65, %70 : vector<32x512xf32>
    %72 = vector.broadcast %54 : vector<1x512xf32> to vector<32x512xf32>
    %73 = arith.addf %71, %72 : vector<32x512xf32>
    %cst_83 = arith.constant 0.000000e+00 : f32
    %74 = vector.broadcast %cst_83 : f32 to vector<32x512xf32>
    %75 = arith.maximumf %73, %74 : vector<32x512xf32>
    %76 = vector.shape_cast %75 : vector<32x512xf32> to vector<16x2x512xf32>
    %77 = vector.extract_strided_slice %76 {offsets = [0, 0, 0], sizes = [16, 1, 512], strides = [1, 1, 1]} : vector<16x2x512xf32> to vector<16x1x512xf32>
    %78 = vector.shape_cast %77 : vector<16x1x512xf32> to vector<16x512xf32>
    %79 = vector.extract_strided_slice %76 {offsets = [0, 1, 0], sizes = [16, 1, 512], strides = [1, 1, 1]} : vector<16x2x512xf32> to vector<16x1x512xf32>
    %80 = vector.shape_cast %79 : vector<16x1x512xf32> to vector<16x512xf32>
    %81 = arith.maximumf %78, %80 : vector<16x512xf32>
    %82 = arith.truncf %81 : vector<16x512xf32> to vector<16x512xbf16>
    %c0_84 = arith.constant 0 : index
    %c0_85 = arith.constant 0 : index
    %83 = vector.load %arg7[%c0_84, %c0_85] : memref<512x512xbf16, #tpu.memory_space<vmem>>, vector<512x512xbf16>
    %cst_86 = arith.constant dense<0.000000e+00> : vector<16x512xf32>
    %84 = tpu.matmul %82, %83, %cst_86 {dimension_numbers = #tpu.dot_dimension_numbers<[1], [0], [0], [1], [0, 0, 1, 1], [], []>} : vector<16x512xbf16>, vector<512x512xbf16>, vector<16x512xf32> -> vector<16x512xf32>
    %85 = vector.extract_strided_slice %84 {offsets = [0, 0], sizes = [16, 256], strides = [1, 1]} : vector<16x512xf32> to vector<16x256xf32>
    %86 = vector.extract_strided_slice %84 {offsets = [0, 256], sizes = [16, 256], strides = [1, 1]} : vector<16x512xf32> to vector<16x256xf32>
    %87 = arith.maximumf %85, %86 : vector<16x256xf32>
    %88 = vector.shape_cast %87 : vector<16x256xf32> to vector<2x8x256xf32>
    %89 = arith.truncf %88 : vector<2x8x256xf32> to vector<2x8x256xbf16>
    %c0_87 = arith.constant 0 : index
    %c1_88 = arith.constant 1 : index
    %c0_89 = arith.constant 0 : index
    %90 = vector.load %arg18[%c0_87, %c1_88, %c0_89] : memref<2x10x320xbf16, #tpu.memory_space<vmem>>, vector<2x8x256xbf16>
    tpu.vector_store %arg18[%c0_87, %c1_88, %c0_89], %89 {strides = array<i32>} : memref<2x10x320xbf16, #tpu.memory_space<vmem>>, vector<2x8x256xbf16>,
    %c0_90 = arith.constant 0 : index
    %c0_91 = arith.constant 0 : index
    %91 = vector.load %arg9[%c0_90, %c0_91] : memref<1x512xf32, #tpu.memory_space<vmem>>, vector<1x512xf32>
    %c0_92 = arith.constant 0 : index
    %c0_93 = arith.constant 0 : index
    %c0_94 = arith.constant 0 : index
    %92 = vector.load %arg18[%c0_92, %c0_93, %c0_94] : memref<2x10x320xbf16, #tpu.memory_space<vmem>>, vector<2x8x320xbf16>
    %93 = vector.shape_cast %92 : vector<2x8x320xbf16> to vector<16x320xbf16>
    %c0_95 = arith.constant 0 : index
    %c0_96 = arith.constant 0 : index
    %c0_97 = arith.constant 0 : index
    %94 = vector.load %arg8[%c0_95, %c0_96, %c0_97] : memref<3x320x512xbf16, #tpu.memory_space<vmem>>, vector<1x320x512xbf16>
    %95 = vector.shape_cast %94 : vector<1x320x512xbf16> to vector<320x512xbf16>
    %cst_98 = arith.constant dense<0.000000e+00> : vector<16x512xf32>
    %96 = tpu.matmul %93, %95, %cst_98 {dimension_numbers = #tpu.dot_dimension_numbers<[1], [0], [0], [1], [0, 0, 1, 1], [], []>} : vector<16x320xbf16>, vector<320x512xbf16>, vector<16x512xf32> -> vector<16x512xf32>
    %c0_99 = arith.constant 0 : index
    %c1_100 = arith.constant 1 : index
    %c0_101 = arith.constant 0 : index
    %97 = vector.load %arg18[%c0_99, %c1_100, %c0_101] : memref<2x10x320xbf16, #tpu.memory_space<vmem>>, vector<2x8x320xbf16>
    %98 = vector.shape_cast %97 : vector<2x8x320xbf16> to vector<16x320xbf16>
    %c1_102 = arith.constant 1 : index
    %c0_103 = arith.constant 0 : index
    %c0_104 = arith.constant 0 : index
    %99 = vector.load %arg8[%c1_102, %c0_103, %c0_104] : memref<3x320x512xbf16, #tpu.memory_space<vmem>>, vector<1x320x512xbf16>
    %100 = vector.shape_cast %99 : vector<1x320x512xbf16> to vector<320x512xbf16>
    %cst_105 = arith.constant dense<0.000000e+00> : vector<16x512xf32>
    %101 = tpu.matmul %98, %100, %cst_105 {dimension_numbers = #tpu.dot_dimension_numbers<[1], [0], [0], [1], [0, 0, 1, 1], [], []>} : vector<16x320xbf16>, vector<320x512xbf16>, vector<16x512xf32> -> vector<16x512xf32>
    %102 = arith.addf %96, %101 : vector<16x512xf32>
    %c0_106 = arith.constant 0 : index
    %c2_107 = arith.constant 2 : index
    %c0_108 = arith.constant 0 : index
    %103 = vector.load %arg18[%c0_106, %c2_107, %c0_108] : memref<2x10x320xbf16, #tpu.memory_space<vmem>>, vector<2x8x320xbf16>
    %104 = vector.shape_cast %103 : vector<2x8x320xbf16> to vector<16x320xbf16>
    %c2_109 = arith.constant 2 : index
    %c0_110 = arith.constant 0 : index
    %c0_111 = arith.constant 0 : index
    %105 = vector.load %arg8[%c2_109, %c0_110, %c0_111] : memref<3x320x512xbf16, #tpu.memory_space<vmem>>, vector<1x320x512xbf16>
    %106 = vector.shape_cast %105 : vector<1x320x512xbf16> to vector<320x512xbf16>
    %cst_112 = arith.constant dense<0.000000e+00> : vector<16x512xf32>
    %107 = tpu.matmul %104, %106, %cst_112 {dimension_numbers = #tpu.dot_dimension_numbers<[1], [0], [0], [1], [0, 0, 1, 1], [], []>} : vector<16x320xbf16>, vector<320x512xbf16>, vector<16x512xf32> -> vector<16x512xf32>
    %108 = arith.addf %102, %107 : vector<16x512xf32>
    %109 = vector.broadcast %91 : vector<1x512xf32> to vector<16x512xf32>
    %110 = arith.addf %108, %109 : vector<16x512xf32>
    %cst_113 = arith.constant 0.000000e+00 : f32
    %111 = vector.broadcast %cst_113 : f32 to vector<16x512xf32>
    %112 = arith.maximumf %110, %111 : vector<16x512xf32>
    %113 = vector.shape_cast %112 : vector<16x512xf32> to vector<8x2x512xf32>
    %114 = vector.extract_strided_slice %113 {offsets = [0, 0, 0], sizes = [8, 1, 512], strides = [1, 1, 1]} : vector<8x2x512xf32> to vector<8x1x512xf32>
    %115 = vector.shape_cast %114 : vector<8x1x512xf32> to vector<8x512xf32>
    %116 = vector.extract_strided_slice %113 {offsets = [0, 1, 0], sizes = [8, 1, 512], strides = [1, 1, 1]} : vector<8x2x512xf32> to vector<8x1x512xf32>
    %117 = vector.shape_cast %116 : vector<8x1x512xf32> to vector<8x512xf32>
    %118 = arith.maximumf %115, %117 : vector<8x512xf32>
    %119 = arith.truncf %118 : vector<8x512xf32> to vector<8x512xbf16>
    %c0_114 = arith.constant 0 : index
    %c0_115 = arith.constant 0 : index
    %120 = vector.load %arg10[%c0_114, %c0_115] : memref<512x512xbf16, #tpu.memory_space<vmem>>, vector<512x512xbf16>
    %cst_116 = arith.constant dense<0.000000e+00> : vector<8x512xf32>
    %121 = tpu.matmul %119, %120, %cst_116 {dimension_numbers = #tpu.dot_dimension_numbers<[1], [0], [0], [1], [0, 0, 1, 1], [], []>} : vector<8x512xbf16>, vector<512x512xbf16>, vector<8x512xf32> -> vector<8x512xf32>
    %122 = vector.extract_strided_slice %121 {offsets = [0, 0], sizes = [8, 256], strides = [1, 1]} : vector<8x512xf32> to vector<8x256xf32>
    %123 = vector.extract_strided_slice %121 {offsets = [0, 256], sizes = [8, 256], strides = [1, 1]} : vector<8x512xf32> to vector<8x256xf32>
    %124 = arith.maximumf %122, %123 : vector<8x256xf32>
    %125 = vector.shape_cast %124 : vector<8x256xf32> to vector<2x4x256xf32>
    %126 = arith.truncf %125 : vector<2x4x256xf32> to vector<2x4x256xbf16>
    %c0_117 = arith.constant 0 : index
    %c0_118 = arith.constant 0 : index
    %c0_119 = arith.constant 0 : index
    %127 = vector.load %arg19[%c0_117, %c0_118, %c0_119] : memref<2x4x256xbf16, #tpu.memory_space<vmem>>, vector<2x4x256xbf16>
    tpu.vector_store %arg19[%c0_117, %c0_118, %c0_119], %126 {strides = array<i32>} : memref<2x4x256xbf16, #tpu.memory_space<vmem>>, vector<2x4x256xbf16>,
    %c0_120 = arith.constant 0 : index
    %c0_121 = arith.constant 0 : index
    %c0_122 = arith.constant 0 : index
    %128 = vector.load %arg19[%c0_120, %c0_121, %c0_122] : memref<2x4x256xbf16, #tpu.memory_space<vmem>>, vector<2x1x256xbf16>
    %129 = vector.shape_cast %128 : vector<2x1x256xbf16> to vector<2x256xbf16>
    %c0_123 = arith.constant 0 : index
    %c0_124 = arith.constant 0 : index
    %c0_125 = arith.constant 0 : index
    %130 = vector.load %arg11[%c0_123, %c0_124, %c0_125] : memref<4x256x512xbf16, #tpu.memory_space<vmem>>, vector<1x256x512xbf16>
    %131 = vector.shape_cast %130 : vector<1x256x512xbf16> to vector<256x512xbf16>
    %cst_126 = arith.constant dense<0.000000e+00> : vector<2x512xf32>
    %132 = tpu.matmul %129, %131, %cst_126 {dimension_numbers = #tpu.dot_dimension_numbers<[1], [0], [0], [1], [0, 0, 1, 1], [], []>} : vector<2x256xbf16>, vector<256x512xbf16>, vector<2x512xf32> -> vector<2x512xf32>
    %c0_127 = arith.constant 0 : index
    %c1_128 = arith.constant 1 : index
    %c0_129 = arith.constant 0 : index
    %133 = vector.load %arg19[%c0_127, %c1_128, %c0_129] : memref<2x4x256xbf16, #tpu.memory_space<vmem>>, vector<2x1x256xbf16>
    %134 = vector.shape_cast %133 : vector<2x1x256xbf16> to vector<2x256xbf16>
    %c1_130 = arith.constant 1 : index
    %c0_131 = arith.constant 0 : index
    %c0_132 = arith.constant 0 : index
    %135 = vector.load %arg11[%c1_130, %c0_131, %c0_132] : memref<4x256x512xbf16, #tpu.memory_space<vmem>>, vector<1x256x512xbf16>
    %136 = vector.shape_cast %135 : vector<1x256x512xbf16> to vector<256x512xbf16>
    %cst_133 = arith.constant dense<0.000000e+00> : vector<2x512xf32>
    %137 = tpu.matmul %134, %136, %cst_133 {dimension_numbers = #tpu.dot_dimension_numbers<[1], [0], [0], [1], [0, 0, 1, 1], [], []>} : vector<2x256xbf16>, vector<256x512xbf16>, vector<2x512xf32> -> vector<2x512xf32>
    %138 = arith.addf %132, %137 : vector<2x512xf32>
    %c0_134 = arith.constant 0 : index
    %c2_135 = arith.constant 2 : index
    %c0_136 = arith.constant 0 : index
    %139 = vector.load %arg19[%c0_134, %c2_135, %c0_136] : memref<2x4x256xbf16, #tpu.memory_space<vmem>>, vector<2x1x256xbf16>
    %140 = vector.shape_cast %139 : vector<2x1x256xbf16> to vector<2x256xbf16>
    %c2_137 = arith.constant 2 : index
    %c0_138 = arith.constant 0 : index
    %c0_139 = arith.constant 0 : index
    %141 = vector.load %arg11[%c2_137, %c0_138, %c0_139] : memref<4x256x512xbf16, #tpu.memory_space<vmem>>, vector<1x256x512xbf16>
    %142 = vector.shape_cast %141 : vector<1x256x512xbf16> to vector<256x512xbf16>
    %cst_140 = arith.constant dense<0.000000e+00> : vector<2x512xf32>
    %143 = tpu.matmul %140, %142, %cst_140 {dimension_numbers = #tpu.dot_dimension_numbers<[1], [0], [0], [1], [0, 0, 1, 1], [], []>} : vector<2x256xbf16>, vector<256x512xbf16>, vector<2x512xf32> -> vector<2x512xf32>
    %144 = arith.addf %138, %143 : vector<2x512xf32>
    %c0_141 = arith.constant 0 : index
    %c3 = arith.constant 3 : index
    %c0_142 = arith.constant 0 : index
    %145 = vector.load %arg19[%c0_141, %c3, %c0_142] : memref<2x4x256xbf16, #tpu.memory_space<vmem>>, vector<2x1x256xbf16>
    %146 = vector.shape_cast %145 : vector<2x1x256xbf16> to vector<2x256xbf16>
    %c3_143 = arith.constant 3 : index
    %c0_144 = arith.constant 0 : index
    %c0_145 = arith.constant 0 : index
    %147 = vector.load %arg11[%c3_143, %c0_144, %c0_145] : memref<4x256x512xbf16, #tpu.memory_space<vmem>>, vector<1x256x512xbf16>
    %148 = vector.shape_cast %147 : vector<1x256x512xbf16> to vector<256x512xbf16>
    %cst_146 = arith.constant dense<0.000000e+00> : vector<2x512xf32>
    %149 = tpu.matmul %146, %148, %cst_146 {dimension_numbers = #tpu.dot_dimension_numbers<[1], [0], [0], [1], [0, 0, 1, 1], [], []>} : vector<2x256xbf16>, vector<256x512xbf16>, vector<2x512xf32> -> vector<2x512xf32>
    %150 = arith.addf %144, %149 : vector<2x512xf32>
    %c0_147 = arith.constant 0 : index
    %c0_148 = arith.constant 0 : index
    %151 = vector.load %arg12[%c0_147, %c0_148] : memref<1x512xf32, #tpu.memory_space<vmem>>, vector<1x512xf32>
    %152 = vector.broadcast %151 : vector<1x512xf32> to vector<2x512xf32>
    %153 = arith.addf %150, %152 : vector<2x512xf32>
    %cst_149 = arith.constant 0.000000e+00 : f32
    %154 = vector.broadcast %cst_149 : f32 to vector<2x512xf32>
    %155 = arith.maximumf %153, %154 : vector<2x512xf32>
    %156 = arith.truncf %155 : vector<2x512xf32> to vector<2x512xbf16>
    %c0_150 = arith.constant 0 : index
    %c0_151 = arith.constant 0 : index
    %157 = vector.load %arg13[%c0_150, %c0_151] : memref<512x128xbf16, #tpu.memory_space<vmem>>, vector<512x128xbf16>
    %cst_152 = arith.constant dense<0.000000e+00> : vector<2x128xf32>
    %158 = tpu.matmul %156, %157, %cst_152 {dimension_numbers = #tpu.dot_dimension_numbers<[1], [0], [0], [1], [0, 0, 1, 1], [], []>} : vector<2x512xbf16>, vector<512x128xbf16>, vector<2x128xf32> -> vector<2x128xf32>
    %c0_153 = arith.constant 0 : index
    %c0_154 = arith.constant 0 : index
    %159 = vector.load %arg14[%c0_153, %c0_154] : memref<1x128xf32, #tpu.memory_space<vmem>>, vector<1x128xf32>
    %160 = vector.broadcast %159 : vector<1x128xf32> to vector<2x128xf32>
    %161 = arith.addf %158, %160 : vector<2x128xf32>
    %c0_155 = arith.constant 0 : index
    %c0_156 = arith.constant 0 : index
    %162 = vector.load %arg15[%c0_155, %c0_156] : memref<2x128xf32, #tpu.memory_space<vmem>>, vector<2x128xf32>
    tpu.vector_store %arg15[%c0_155, %c0_156], %161 {strides = array<i32>} : memref<2x128xf32, #tpu.memory_space<vmem>>, vector<2x128xf32>,
    return
  }
  func.func @transform_0(%arg0: i32) -> (i32, i32, i32) {
    %c0_i32 = arith.constant 0 : i32
    %c0_i32_0 = arith.constant 0 : i32
    %c0_i32_1 = arith.constant 0 : i32
    return %arg0, %c0_i32, %c0_i32_0 : i32, i32, i32
  }
  func.func @transform_1(%arg0: i32) -> (i32, i32, i32) {
    %c0_i32 = arith.constant 0 : i32
    %c0_i32_0 = arith.constant 0 : i32
    %c0_i32_1 = arith.constant 0 : i32
    %c0_i32_2 = arith.constant 0 : i32
    return %c0_i32, %c0_i32_0, %c0_i32_1 : i32, i32, i32
  }
  func.func @transform_2(%arg0: i32) -> (i32, i32) {
    %c0_i32 = arith.constant 0 : i32
    %c0_i32_0 = arith.constant 0 : i32
    %c0_i32_1 = arith.constant 0 : i32
    return %c0_i32, %c0_i32_0 : i32, i32
  }
  func.func @transform_3(%arg0: i32) -> (i32, i32) {
    %c0_i32 = arith.constant 0 : i32
    %c0_i32_0 = arith.constant 0 : i32
    %c0_i32_1 = arith.constant 0 : i32
    return %c0_i32, %c0_i32_0 : i32, i32
  }
  func.func @transform_4(%arg0: i32) -> (i32, i32, i32) {
    %c0_i32 = arith.constant 0 : i32
    %c0_i32_0 = arith.constant 0 : i32
    %c0_i32_1 = arith.constant 0 : i32
    %c0_i32_2 = arith.constant 0 : i32
    return %c0_i32, %c0_i32_0, %c0_i32_1 : i32, i32, i32
  }
  func.func @transform_5(%arg0: i32) -> (i32, i32) {
    %c0_i32 = arith.constant 0 : i32
    %c0_i32_0 = arith.constant 0 : i32
    %c0_i32_1 = arith.constant 0 : i32
    return %c0_i32, %c0_i32_0 : i32, i32
  }
  func.func @transform_6(%arg0: i32) -> (i32, i32) {
    %c0_i32 = arith.constant 0 : i32
    %c0_i32_0 = arith.constant 0 : i32
    %c0_i32_1 = arith.constant 0 : i32
    return %c0_i32, %c0_i32_0 : i32, i32
  }
  func.func @transform_7(%arg0: i32) -> (i32, i32, i32) {
    %c0_i32 = arith.constant 0 : i32
    %c0_i32_0 = arith.constant 0 : i32
    %c0_i32_1 = arith.constant 0 : i32
    %c0_i32_2 = arith.constant 0 : i32
    return %c0_i32, %c0_i32_0, %c0_i32_1 : i32, i32, i32
  }
  func.func @transform_8(%arg0: i32) -> (i32, i32) {
    %c0_i32 = arith.constant 0 : i32
    %c0_i32_0 = arith.constant 0 : i32
    %c0_i32_1 = arith.constant 0 : i32
    return %c0_i32, %c0_i32_0 : i32, i32
  }
  func.func @transform_9(%arg0: i32) -> (i32, i32) {
    %c0_i32 = arith.constant 0 : i32
    %c0_i32_0 = arith.constant 0 : i32
    %c0_i32_1 = arith.constant 0 : i32
    return %c0_i32, %c0_i32_0 : i32, i32
  }
  func.func @transform_10(%arg0: i32) -> (i32, i32, i32) {
    %c0_i32 = arith.constant 0 : i32
    %c0_i32_0 = arith.constant 0 : i32
    %c0_i32_1 = arith.constant 0 : i32
    %c0_i32_2 = arith.constant 0 : i32
    return %c0_i32, %c0_i32_0, %c0_i32_1 : i32, i32, i32
  }
  func.func @transform_11(%arg0: i32) -> (i32, i32) {
    %c0_i32 = arith.constant 0 : i32
    %c0_i32_0 = arith.constant 0 : i32
    %c0_i32_1 = arith.constant 0 : i32
    return %c0_i32, %c0_i32_0 : i32, i32
  }
  func.func @transform_12(%arg0: i32) -> (i32, i32) {
    %c0_i32 = arith.constant 0 : i32
    %c0_i32_0 = arith.constant 0 : i32
    %c0_i32_1 = arith.constant 0 : i32
    return %c0_i32, %c0_i32_0 : i32, i32
  }
  func.func @transform_13(%arg0: i32) -> (i32, i32) {
    %c0_i32 = arith.constant 0 : i32
    %c0_i32_0 = arith.constant 0 : i32
    %c0_i32_1 = arith.constant 0 : i32
    return %c0_i32, %c0_i32_0 : i32, i32
  }
  func.func @transform_14(%arg0: i32) -> (i32, i32) {
    %c0_i32 = arith.constant 0 : i32
    %c0_i32_0 = arith.constant 0 : i32
    return %arg0, %c0_i32 : i32, i32
  }
}

</mosaic_0001>

<llo_original>
// kernel: lenet_forward.1
$region0: #{lenet_forward.1}
  #allocation0 [shape = 'u32[]', space=smem, size = 0x4, offset = 0x4, fixed_abs, tag = 'smem constant byte address 0x4 - core index']
  #allocation1 [shape = 'u32[72,128]{1,0:T(1,128)}', space=vmem, size = 0x9000, scoped, tag = 'internal scratch']
  #allocation2 [shape = 'bf16[2,34,102]{2,1,0:T(8,128)(2,1)}', space=vmem, size = 0x5000, scoped, tag = 'scratch operand']
  #allocation3 [shape = 'bf16[2,18,288]{2,1,0:T(8,128)(2,1)}', space=vmem, size = 0x9000, scoped, tag = 'scratch operand']
  #allocation4 [shape = 'bf16[2,10,320]{2,1,0:T(8,128)(2,1)}', space=vmem, size = 0x6000, scoped, tag = 'scratch operand']
  #allocation5 [shape = 'bf16[2,4,256]{2,1,0:T(4,128)(2,1)}', space=vmem, size = 0x1000, scoped, tag = 'scratch operand']
  %s0 = inlined_call_operand.vmem [shape: bf16[2,32,96], index: 0, kind: input, shape index: {}]
  %s1 = inlined_call_operand.hbm [shape: bf16[3,102,512], index: 1, kind: input, shape index: {}]
  %s2 = inlined_call_operand.vmem [shape: f32[1,512], index: 2, kind: input, shape index: {}]
  %s3 = inlined_call_operand.hbm [shape: bf16[512,512], index: 3, kind: input, shape index: {}]
  %s4 = inlined_call_operand.hbm [shape: bf16[3,288,512], index: 4, kind: input, shape index: {}]
  %s5 = inlined_call_operand.vmem [shape: f32[1,512], index: 5, kind: input, shape index: {}]
  %s6 = inlined_call_operand.hbm [shape: bf16[512,512], index: 6, kind: input, shape index: {}]
  %s7 = inlined_call_operand.hbm [shape: bf16[3,320,512], index: 7, kind: input, shape index: {}]
  %s8 = inlined_call_operand.vmem [shape: f32[1,512], index: 8, kind: input, shape index: {}]
  %s9 = inlined_call_operand.hbm [shape: bf16[512,512], index: 9, kind: input, shape index: {}]
  %s10 = inlined_call_operand.hbm [shape: bf16[4,256,512], index: 10, kind: input, shape index: {}]
  %s11 = inlined_call_operand.vmem [shape: f32[1,512], index: 11, kind: input, shape index: {}]
  %s12 = inlined_call_operand.vmem [shape: bf16[512,128], index: 12, kind: input, shape index: {}]
  %s13 = inlined_call_operand.vmem [shape: f32[1,128], index: 13, kind: input, shape index: {}]
  %s14 = inlined_call_operand.hbm [shape: f32[2,128], index: 14, kind: output, shape index: {}]
  %s15 = sld [smem:[#allocation0]]
  $region94: #{lenet_forward.1} parent=0
    _
  %s17 = ssub.s32 1, %s15
  %s18 = scalar_select 0, %s17, %s15
  $region1: #{lenet_forward.1} parent=0
    #allocation6 [shape = 'u8[319488]{0}', space=vmem, size = 0x4e000, scoped, tag = 'input window, operand 1, single buffered']
    #allocation7 [shape = 's32[1]{0}', space=sflag, size = 0x4, scoped, tag = 'scoped memory for lenet_forward.1']
    #allocation8 [shape = 's32[1]{0}', space=sflag, size = 0x4, scoped, tag = 'scoped memory for lenet_forward.1']
    #allocation9 [shape = 'u8[524288]{0}', space=vmem, size = 0x80000, scoped, tag = 'input window, operand 3, single buffered']
    #allocation10 [shape = 's32[1]{0}', space=sflag, size = 0x4, scoped, tag = 'scoped memory for lenet_forward.1']
    #allocation11 [shape = 'u8[884736]{0}', space=vmem, size = 0xd8000, scoped, tag = 'input window, operand 4, single buffered']
    #allocation12 [shape = 'u8[524288]{0}', space=vmem, size = 0x80000, scoped, tag = 'input window, operand 6, single buffered']
    #allocation13 [shape = 's32[1]{0}', space=sflag, size = 0x4, scoped, tag = 'scoped memory for lenet_forward.1']
    #allocation14 [shape = 'u8[983040]{0}', space=vmem, size = 0xf0000, scoped, tag = 'input window, operand 7, single buffered']
    #allocation15 [shape = 'u8[524288]{0}', space=vmem, size = 0x80000, scoped, tag = 'input window, operand 9, single buffered']
    #allocation16 [shape = 's32[1]{0}', space=sflag, size = 0x4, scoped, tag = 'scoped memory for lenet_forward.1']
    #allocation17 [shape = 'u8[1048576]{0}', space=vmem, size = 0x100000, scoped, tag = 'input window, operand 10, single buffered']
    #allocation18 [shape = 'u8[1024]{0}', space=vmem, size = 0x400, scoped, tag = 'output window, operand 0, single buffered']
    %19 = vsyncpa [#allocation7], 0
    %20 = vsyncpa [#allocation10], 0
    %21 = vsyncpa [#allocation13], 0
    %22 = vsyncpa [#allocation16], 0
    %23 = vsyncpa [#allocation8], 0
    // Predicated region
    $region2: #{lenet_forward.1} parent=1 // pred_check
      _
    $region3: #{lenet_forward.1} parent=1 // pred_check_branch
      %25 = sbr.rel (0) target = $region5
    $region4: #{lenet_forward.1} parent=1 // pred_region
      _
    $region5: #{lenet_forward.1} parent=1 // pred_fallthru
      _
    // Predicated region
    $region6: #{lenet_forward.1} parent=1 // pred_check
      _
    $region7: #{lenet_forward.1} parent=1 // pred_check_branch
      %27 = sbr.rel (0) target = $region9
    $region8: #{lenet_forward.1} parent=1 // pred_region
      %29 = vsyncadd [#allocation7], 0
      %s30 = sshll.u32 %s1, 4
      %s31 = int_to_ptr.hbm [resolvable:$true] %s30
      %s32 = sshll.u32 [#allocation6], 4
      %s33 = int_to_ptr.vmem [resolvable:$true] %s32
      %38 = dma.hbm_to_vmem [thread:$0]  %s31, 9984, %s33, [#allocation7], 256, 256, 16
    $region9: #{lenet_forward.1} parent=1 // pred_fallthru
      _
    // Predicated region
    $region10: #{lenet_forward.1} parent=1 // pred_check
      _
    $region11: #{lenet_forward.1} parent=1 // pred_check_branch
      %40 = sbr.rel (0) target = $region13
    $region12: #{lenet_forward.1} parent=1 // pred_region
      _
    $region13: #{lenet_forward.1} parent=1 // pred_fallthru
      _
    // Predicated region
    $region14: #{lenet_forward.1} parent=1 // pred_check
      _
    $region15: #{lenet_forward.1} parent=1 // pred_check_branch
      %42 = sbr.rel (0) target = $region17
    $region16: #{lenet_forward.1} parent=1 // pred_region
      %44 = vsyncadd [#allocation10], 0
      %s45 = sshll.u32 %s3, 4
      %s46 = int_to_ptr.hbm [resolvable:$true] %s45
      %s47 = sshll.u32 [#allocation9], 4
      %s48 = int_to_ptr.vmem [resolvable:$true] %s47
      %53 = dma.hbm_to_vmem [thread:$0]  %s46, 16384, %s48, [#allocation10], 256, 256, 16
    $region17: #{lenet_forward.1} parent=1 // pred_fallthru
      _
    // Predicated region
    $region18: #{lenet_forward.1} parent=1 // pred_check
      _
    $region19: #{lenet_forward.1} parent=1 // pred_check_branch
      %55 = sbr.rel (0) target = $region21
    $region20: #{lenet_forward.1} parent=1 // pred_region
      %57 = vsyncadd [#allocation10], 0
      %s58 = sshll.u32 %s4, 4
      %s59 = int_to_ptr.hbm [resolvable:$true] %s58
      %s60 = sshll.u32 [#allocation11], 4
      %s61 = int_to_ptr.vmem [resolvable:$true] %s60
      %66 = dma.hbm_to_vmem [thread:$0]  %s59, 27648, %s61, [#allocation10], 256, 256, 16
    $region21: #{lenet_forward.1} parent=1 // pred_fallthru
      _
    // Predicated region
    $region22: #{lenet_forward.1} parent=1 // pred_check
      _
    $region23: #{lenet_forward.1} parent=1 // pred_check_branch
      %68 = sbr.rel (0) target = $region25
    $region24: #{lenet_forward.1} parent=1 // pred_region
      _
    $region25: #{lenet_forward.1} parent=1 // pred_fallthru
      _
    // Predicated region
    $region26: #{lenet_forward.1} parent=1 // pred_check
      _
    $region27: #{lenet_forward.1} parent=1 // pred_check_branch
      %70 = sbr.rel (0) target = $region29
    $region28: #{lenet_forward.1} parent=1 // pred_region
      %72 = vsyncadd [#allocation13], 0
      %s73 = sshll.u32 %s6, 4
      %s74 = int_to_ptr.hbm [resolvable:$true] %s73
      %s75 = sshll.u32 [#allocation12], 4
      %s76 = int_to_ptr.vmem [resolvable:$true] %s75
      %81 = dma.hbm_to_vmem [thread:$0]  %s74, 16384, %s76, [#allocation13], 256, 256, 16
    $region29: #{lenet_forward.1} parent=1 // pred_fallthru
      _
    // Predicated region
    $region30: #{lenet_forward.1} parent=1 // pred_check
      _
    $region31: #{lenet_forward.1} parent=1 // pred_check_branch
      %83 = sbr.rel (0) target = $region33
    $region32: #{lenet_forward.1} parent=1 // pred_region
      %85 = vsyncadd [#allocation13], 0
      %s86 = sshll.u32 %s7, 4
      %s87 = int_to_ptr.hbm [resolvable:$true] %s86
      %s88 = sshll.u32 [#allocation14], 4
      %s89 = int_to_ptr.vmem [resolvable:$true] %s88
      %94 = dma.hbm_to_vmem [thread:$0]  %s87, 30720, %s89, [#allocation13], 256, 256, 16
    $region33: #{lenet_forward.1} parent=1 // pred_fallthru
      _
    // Predicated region
    $region34: #{lenet_forward.1} parent=1 // pred_check
      _
    $region35: #{lenet_forward.1} parent=1 // pred_check_branch
      %96 = sbr.rel (0) target = $region37
    $region36: #{lenet_forward.1} parent=1 // pred_region
      _
    $region37: #{lenet_forward.1} parent=1 // pred_fallthru
      _
    // Predicated region
    $region38: #{lenet_forward.1} parent=1 // pred_check
      _
    $region39: #{lenet_forward.1} parent=1 // pred_check_branch
      %98 = sbr.rel (0) target = $region41
    $region40: #{lenet_forward.1} parent=1 // pred_region
      %100 = vsyncadd [#allocation16], 0
      %s101 = sshll.u32 %s9, 4
      %s102 = int_to_ptr.hbm [resolvable:$true] %s101
      %s103 = sshll.u32 [#allocation15], 4
      %s104 = int_to_ptr.vmem [resolvable:$true] %s103
      %109 = dma.hbm_to_vmem [thread:$0]  %s102, 16384, %s104, [#allocation16], 256, 256, 16
    $region41: #{lenet_forward.1} parent=1 // pred_fallthru
      _
    // Predicated region
    $region42: #{lenet_forward.1} parent=1 // pred_check
      _
    $region43: #{lenet_forward.1} parent=1 // pred_check_branch
      %111 = sbr.rel (0) target = $region45
    $region44: #{lenet_forward.1} parent=1 // pred_region
      %113 = vsyncadd [#allocation16], 0
      %s114 = sshll.u32 %s10, 4
      %s115 = int_to_ptr.hbm [resolvable:$true] %s114
      %s116 = sshll.u32 [#allocation17], 4
      %s117 = int_to_ptr.vmem [resolvable:$true] %s116
      %122 = dma.hbm_to_vmem [thread:$0]  %s115, 32768, %s117, [#allocation16], 256, 256, 16
    $region45: #{lenet_forward.1} parent=1 // pred_fallthru
      _
    // Predicated region
    $region46: #{lenet_forward.1} parent=1 // pred_check
      _
    $region47: #{lenet_forward.1} parent=1 // pred_check_branch
      %124 = sbr.rel (0) target = $region49
    $region48: #{lenet_forward.1} parent=1 // pred_region
      _
    $region49: #{lenet_forward.1} parent=1 // pred_fallthru
      _
    // Predicated region
    $region50: #{lenet_forward.1} parent=1 // pred_check
      _
    $region51: #{lenet_forward.1} parent=1 // pred_check_branch
      %126 = sbr.rel (0) target = $region53
    $region52: #{lenet_forward.1} parent=1 // pred_region
      _
    $region53: #{lenet_forward.1} parent=1 // pred_fallthru
      _
    // Predicated region
    $region54: #{lenet_forward.1} parent=1 // pred_check
      _
    $region55: #{lenet_forward.1} parent=1 // pred_check_branch
      %128 = sbr.rel (0) target = $region57
    $region56: #{lenet_forward.1} parent=1 // pred_region
      _
    $region57: #{lenet_forward.1} parent=1 // pred_fallthru
      _
    // Predicated region
    $region58: #{lenet_forward.1} parent=1 // pred_check
      _
    $region59: #{lenet_forward.1} parent=1 // pred_check_branch
      %130 = sbr.rel (0) target = $region61
    $region60: #{lenet_forward.1} parent=1 // pred_region
      %132 = dma.done [#allocation7], 9984
    $region61: #{lenet_forward.1} parent=1 // pred_fallthru
      _
    // Predicated region
    $region62: #{lenet_forward.1} parent=1 // pred_check
      _
    $region63: #{lenet_forward.1} parent=1 // pred_check_branch
      %134 = sbr.rel (0) target = $region65
    $region64: #{lenet_forward.1} parent=1 // pred_region
      %136 = dma.done [#allocation10], 16384
    $region65: #{lenet_forward.1} parent=1 // pred_fallthru
      _
    // Predicated region
    $region66: #{lenet_forward.1} parent=1 // pred_check
      _
    $region67: #{lenet_forward.1} parent=1 // pred_check_branch
      %138 = sbr.rel (0) target = $region69
    $region68: #{lenet_forward.1} parent=1 // pred_region
      %140 = dma.done [#allocation10], 27648
    $region69: #{lenet_forward.1} parent=1 // pred_fallthru
      _
    // Predicated region
    $region70: #{lenet_forward.1} parent=1 // pred_check
      _
    $region71: #{lenet_forward.1} parent=1 // pred_check_branch
      %142 = sbr.rel (0) target = $region73
    $region72: #{lenet_forward.1} parent=1 // pred_region
      %144 = dma.done [#allocation13], 16384
    $region73: #{lenet_forward.1} parent=1 // pred_fallthru
      _
    // Predicated region
    $region74: #{lenet_forward.1} parent=1 // pred_check
      _
    $region75: #{lenet_forward.1} parent=1 // pred_check_branch
      %146 = sbr.rel (0) target = $region77
    $region76: #{lenet_forward.1} parent=1 // pred_region
      %148 = dma.done [#allocation13], 30720
    $region77: #{lenet_forward.1} parent=1 // pred_fallthru
      _
    // Predicated region
    $region78: #{lenet_forward.1} parent=1 // pred_check
      _
    $region79: #{lenet_forward.1} parent=1 // pred_check_branch
      %150 = sbr.rel (0) target = $region81
    $region80: #{lenet_forward.1} parent=1 // pred_region
      %152 = dma.done [#allocation16], 16384
    $region81: #{lenet_forward.1} parent=1 // pred_fallthru
      _
    // Predicated region
    $region82: #{lenet_forward.1} parent=1 // pred_check
      _
    $region83: #{lenet_forward.1} parent=1 // pred_check_branch
      %154 = sbr.rel (0) target = $region85
    $region84: #{lenet_forward.1} parent=1 // pred_region
      %156 = dma.done [#allocation16], 32768
    $region85: #{lenet_forward.1} parent=1 // pred_fallthru
      _
    %vm158 = vcmask 827392
    %vm159 = vsmask.f32 256
    %vm160 = vmand %vm158, %vm159
    %v161 = vld [vmem:[#allocation2] sm:$0x1]
    %v162 = vsel %vm160, 0, %v161
    %163 = vst [vmem:[#allocation2] sm:$0x1] %v162
    %v164 = vld [vmem:[#allocation2 + $0x14] sm:$0x1]
    %v165 = vsel %vm160, 0, %v164
    %166 = vst [vmem:[#allocation2 + $0x14] sm:$0x1] %v165
    %vm167 = vsmask.f32 7938
    %vm168 = vmand %vm158, %vm167
    %v169 = vld [vmem:[#allocation2 + $0x10] sm:$0x1]
    %v170 = vsel %vm168, 0, %v169
    %171 = vst [vmem:[#allocation2 + $0x10] sm:$0x1] %v170
    %v172 = vld [vmem:[#allocation2 + $0x24] sm:$0x1]
    %v173 = vsel %vm168, 0, %v172
    %174 = vst [vmem:[#allocation2 + $0x24] sm:$0x1] %v173
    %vm175 = vcmask 831232
    %176 = vst.msk [vmem:[#allocation2] sm:$0xf] %vm175, 0
    %177 = vst.msk [vmem:[#allocation2 + $0x4] sm:$0xf] %vm175, 0
    %178 = vst.msk [vmem:[#allocation2 + $0x8] sm:$0xf] %vm175, 0
    %179 = vst.msk [vmem:[#allocation2 + $0xc] sm:$0xf] %vm175, 0
    %vm180 = vcmask 828160
    %181 = vst.msk [vmem:[#allocation2 + $0x10] sm:$0x1] %vm180, 0
    %182 = vst.msk [vmem:[#allocation2 + $0x14] sm:$0xf] %vm175, 0
    %183 = vst.msk [vmem:[#allocation2 + $0x18] sm:$0xf] %vm175, 0
    %184 = vst.msk [vmem:[#allocation2 + $0x1c] sm:$0xf] %vm175, 0
    %185 = vst.msk [vmem:[#allocation2 + $0x20] sm:$0xf] %vm175, 0
    %186 = vst.msk [vmem:[#allocation2 + $0x24] sm:$0x1] %vm180, 0
    %vm187 = vcmask 1040384
    %vm188 = vmand %vm187, %vm159
    %vm189 = vcmask 1044484
    %vm190 = vsmask.f32 4352
    %vm191 = vmand %vm189, %vm190
    %vm192 = vmor %vm191, %vm188
    %v193 = vld [vmem:[#allocation3] sm:$0x11]
    %v194 = vsel %vm192, 0, %v193
    %195 = vst [vmem:[#allocation3] sm:$0x11] %v194
    %vm196 = vcmask 253952
    %vm197 = vmand %vm196, %vm159
    %v198 = vld [vmem:[#allocation3 + $0x8] sm:$0x1]
    %v199 = vsel %vm197, 0, %v198
    %200 = vst [vmem:[#allocation3 + $0x8] sm:$0x1] %v199
    %v201 = vld [vmem:[#allocation3 + $0x24] sm:$0x11]
    %v202 = vsel %vm192, 0, %v201
    %203 = vst [vmem:[#allocation3 + $0x24] sm:$0x11] %v202
    %v204 = vld [vmem:[#allocation3 + $0x2c] sm:$0x1]
    %v205 = vsel %vm197, 0, %v204
    %206 = vst [vmem:[#allocation3 + $0x2c] sm:$0x1] %v205
    %vm207 = vmand %vm187, %vm167
    %vm208 = vsmask.f32 7954
    %vm209 = vmand %vm189, %vm208
    %vm210 = vmor %vm209, %vm207
    %v211 = vld [vmem:[#allocation3 + $0x18] sm:$0x11]
    %v212 = vsel %vm210, 0, %v211
    %213 = vst [vmem:[#allocation3 + $0x18] sm:$0x11] %v212
    %vm214 = vmand %vm196, %vm167
    %v215 = vld [vmem:[#allocation3 + $0x20] sm:$0x1]
    %v216 = vsel %vm214, 0, %v215
    %217 = vst [vmem:[#allocation3 + $0x20] sm:$0x1] %v216
    %v218 = vld [vmem:[#allocation3 + $0x3c] sm:$0x11]
    %v219 = vsel %vm210, 0, %v218
    %220 = vst [vmem:[#allocation3 + $0x3c] sm:$0x11] %v219
    %v221 = vld [vmem:[#allocation3 + $0x44] sm:$0x1]
    %v222 = vsel %vm214, 0, %v221
    %223 = vst [vmem:[#allocation3 + $0x44] sm:$0x1] %v222
    %vm224 = vcmask 257024
    %225 = vst.msk [vmem:[#allocation3 + $0x8] sm:$0xf] %vm224, 0
    %226 = vst.msk [vmem:[#allocation3 + $0x14] sm:$0xf] %vm224, 0
    %vm227 = vcmask 253952
    %228 = vst.msk [vmem:[#allocation3 + $0x20] sm:$0x1] %vm227, 0
    %229 = vst.msk [vmem:[#allocation3 + $0x2c] sm:$0xf] %vm224, 0
    %230 = vst.msk [vmem:[#allocation3 + $0x38] sm:$0xf] %vm224, 0
    %231 = vst.msk [vmem:[#allocation3 + $0x44] sm:$0x1] %vm227, 0
    %v232 = vld [vmem:[#allocation4] sm:$0x11]
    %v233 = vsel %vm192, 0, %v232
    %234 = vst [vmem:[#allocation4] sm:$0x11] %v233
    %vm235 = vcmask 516096
    %vm236 = vmand %vm235, %vm159
    %v237 = vld [vmem:[#allocation4 + $0x8] sm:$0x1]
    %v238 = vsel %vm236, 0, %v237
    %239 = vst [vmem:[#allocation4 + $0x8] sm:$0x1] %v238
    %v240 = vld [vmem:[#allocation4 + $0x18] sm:$0x11]
    %v241 = vsel %vm192, 0, %v240
    %242 = vst [vmem:[#allocation4 + $0x18] sm:$0x11] %v241
    %v243 = vld [vmem:[#allocation4 + $0x20] sm:$0x1]
    %v244 = vsel %vm236, 0, %v243
    %245 = vst [vmem:[#allocation4 + $0x20] sm:$0x1] %v244
    %v246 = vld [vmem:[#allocation4 + $0xc] sm:$0x11]
    %v247 = vsel %vm210, 0, %v246
    %248 = vst [vmem:[#allocation4 + $0xc] sm:$0x11] %v247
    %vm249 = vmand %vm235, %vm167
    %v250 = vld [vmem:[#allocation4 + $0x14] sm:$0x1]
    %v251 = vsel %vm249, 0, %v250
    %252 = vst [vmem:[#allocation4 + $0x14] sm:$0x1] %v251
    %v253 = vld [vmem:[#allocation4 + $0x24] sm:$0x11]
    %v254 = vsel %vm210, 0, %v253
    %255 = vst [vmem:[#allocation4 + $0x24] sm:$0x11] %v254
    %v256 = vld [vmem:[#allocation4 + $0x2c] sm:$0x1]
    %v257 = vsel %vm249, 0, %v256
    %258 = vst [vmem:[#allocation4 + $0x2c] sm:$0x1] %v257
    %vm259 = vcmask 519168
    %260 = vst.msk [vmem:[#allocation4 + $0x8] sm:$0xf] %vm259, 0
    %vm261 = vcmask 516096
    %262 = vst.msk [vmem:[#allocation4 + $0x14] sm:$0x1] %vm261, 0
    %263 = vst.msk [vmem:[#allocation4 + $0x20] sm:$0xf] %vm259, 0
    %264 = vst.msk [vmem:[#allocation4 + $0x2c] sm:$0x1] %vm261, 0
    %v265 = vld [vmem:[%s0] sm:$0xf]
    %v266 = vld [vmem:[%s0 + $0x4] sm:$0xf]
    %v267 = vld [vmem:[%s0 + $0x8] sm:$0xf]
    %v268 = vld [vmem:[%s0 + $0xc] sm:$0xf]
    %v269 = vld [vmem:[%s0 + $0x10] sm:$0xf]
    %v270 = vld [vmem:[%s0 + $0x14] sm:$0xf]
    %v271 = vld [vmem:[%s0 + $0x18] sm:$0xf]
    %v272 = vld [vmem:[%s0 + $0x1c] sm:$0xf]
    %vm273 = vsmask.f32 4368
    %vm274 = vmor %vm159, %vm273
    %v276 = vshrl.u32 %v265, 16
    %v278 = vrot.slane %v276, 7
    %v279 = vshll.u32 %v265, 16
    %v281 = vor.u32 %v278, %v279
    %v282 = vrot.slane %v278, 4
    %v284 = vshrl.u32 %v266, 16
    %v286 = vrot.slane %v284, 7
    %v287 = vshll.u32 %v266, 16
    %v289 = vor.u32 %v286, %v287
    %v290 = vsel %vm274, %v282, %v289
    %v291 = vrot.slane %v286, 4
    %v293 = vshrl.u32 %v267, 16
    %v295 = vrot.slane %v293, 7
    %v296 = vshll.u32 %v267, 16
    %v298 = vor.u32 %v295, %v296
    %v299 = vsel %vm274, %v291, %v298
    %v300 = vrot.slane %v295, 4
    %v302 = vshrl.u32 %v268, 16
    %v304 = vrot.slane %v302, 7
    %v305 = vshll.u32 %v268, 16
    %v307 = vor.u32 %v304, %v305
    %v308 = vsel %vm274, %v300, %v307
    %v309 = vrot.slane %v304, 4
    %v311 = vshrl.u32 %v269, 16
    %v313 = vrot.slane %v311, 7
    %v314 = vshll.u32 %v269, 16
    %v316 = vor.u32 %v313, %v314
    %v317 = vrot.slane %v313, 4
    %v319 = vshrl.u32 %v270, 16
    %v321 = vrot.slane %v319, 7
    %v322 = vshll.u32 %v270, 16
    %v324 = vor.u32 %v321, %v322
    %v325 = vsel %vm274, %v317, %v324
    %v326 = vrot.slane %v321, 4
    %v328 = vshrl.u32 %v271, 16
    %v330 = vrot.slane %v328, 7
    %v331 = vshll.u32 %v271, 16
    %v333 = vor.u32 %v330, %v331
    %v334 = vsel %vm274, %v326, %v333
    %v335 = vrot.slane %v330, 4
    %v337 = vshrl.u32 %v272, 16
    %v339 = vrot.slane %v337, 7
    %v340 = vshll.u32 %v272, 16
    %v342 = vor.u32 %v339, %v340
    %v343 = vsel %vm274, %v335, %v342
    %v344 = vrot.slane %v339, 4
    %vm355 = vcmask 781312
    %vm356 = vmand %vm355, %vm167
    %v357 = vld [vmem:[#allocation2] sm:$0xf]
    %v358 = vsel %vm356, %v281, %v357
    %359 = vst [vmem:[#allocation2] sm:$0xf] %v358
    %vm360 = vcmask 781312
    %361 = vst.msk [vmem:[#allocation2 + $0x4] sm:$0xf] %vm360, %v290
    %362 = vst.msk [vmem:[#allocation2 + $0x8] sm:$0xf] %vm360, %v299
    %363 = vst.msk [vmem:[#allocation2 + $0xc] sm:$0xf] %vm360, %v308
    %vm364 = vcmask 778240
    %vm365 = vmand %vm364, %vm159
    %v366 = vld [vmem:[#allocation2 + $0x10] sm:$0x1]
    %v367 = vsel %vm365, %v309, %v366
    %368 = vst [vmem:[#allocation2 + $0x10] sm:$0x1] %v367
    %v369 = vld [vmem:[#allocation2 + $0x14] sm:$0xf]
    %v370 = vsel %vm356, %v316, %v369
    %371 = vst [vmem:[#allocation2 + $0x14] sm:$0xf] %v370
    %372 = vst.msk [vmem:[#allocation2 + $0x18] sm:$0xf] %vm360, %v325
    %373 = vst.msk [vmem:[#allocation2 + $0x1c] sm:$0xf] %vm360, %v334
    %374 = vst.msk [vmem:[#allocation2 + $0x20] sm:$0xf] %vm360, %v343
    %v375 = vld [vmem:[#allocation2 + $0x24] sm:$0x1]
    %v376 = vsel %vm365, %v344, %v375
    %377 = vst [vmem:[#allocation2 + $0x24] sm:$0x1] %v376
    %v378 = vld [vmem:[%s2] sm:$0xf]
    %v379 = vld [vmem:[#allocation2] sm:$0xf]
    %v380 = vld [vmem:[#allocation2 + $0x4] sm:$0xf]
    %v381 = vld [vmem:[#allocation2 + $0x8] sm:$0xf]
    %v382 = vld [vmem:[#allocation2 + $0xc] sm:$0xf]
    %v383 = vld [vmem:[#allocation2 + $0x14] sm:$0xf]
    %v384 = vld [vmem:[#allocation2 + $0x18] sm:$0xf]
    %v385 = vld [vmem:[#allocation2 + $0x1c] sm:$0xf]
    %v386 = vld [vmem:[#allocation2 + $0x20] sm:$0xf]
    %v387 = vld [vmem:[#allocation6] sm:$0xff]
    %v388 = vld [vmem:[#allocation6 + $0x8] sm:$0xff]
    %v389 = vld [vmem:[#allocation6 + $0x10] sm:$0xff]
    %v390 = vld [vmem:[#allocation6 + $0x18] sm:$0xff]
    %v391 = vld [vmem:[#allocation6 + $0x20] sm:$0xff]
    %v392 = vld [vmem:[#allocation6 + $0x28] sm:$0xff]
    %v393 = vld [vmem:[#allocation6 + $0x30] sm:$0xff]
    %v394 = vld [vmem:[#allocation6 + $0x38] sm:$0xff]
    %v395 = vld [vmem:[#allocation6 + $0x40] sm:$0xff]
    %v396 = vld [vmem:[#allocation6 + $0x48] sm:$0xff]
    %v397 = vld [vmem:[#allocation6 + $0x50] sm:$0xff]
    %v398 = vld [vmem:[#allocation6 + $0x58] sm:$0xff]
    %v399 = vld [vmem:[#allocation6 + $0x60] sm:$0xff]
    %v400 = vld [vmem:[#allocation6 + $0x68] sm:$0xff]
    %v401 = vld [vmem:[#allocation6 + $0x70] sm:$0xff]
    %v402 = vld [vmem:[#allocation6 + $0x78] sm:$0xff]
    %v403 = vld [vmem:[#allocation6 + $0x80] sm:$0xff]
    %v404 = vld [vmem:[#allocation6 + $0x88] sm:$0xff]
    %v405 = vld [vmem:[#allocation6 + $0x90] sm:$0xff]
    %v406 = vld [vmem:[#allocation6 + $0x98] sm:$0xff]
    %v407 = vld [vmem:[#allocation6 + $0xa0] sm:$0xff]
    %v408 = vld [vmem:[#allocation6 + $0xa8] sm:$0xff]
    %v409 = vld [vmem:[#allocation6 + $0xb0] sm:$0xff]
    %v410 = vld [vmem:[#allocation6 + $0xb8] sm:$0xff]
    %v411 = vld [vmem:[#allocation6 + $0xc0] sm:$0x77]
    %v412 = vld [vmem:[#allocation6 + $0xc8] sm:$0x77]
    %v413 = vld [vmem:[#allocation2 + $0x10] sm:$0x1]
    %v414 = vld [vmem:[#allocation2 + $0x24] sm:$0x1]
    %vm415 = vsmask.f32 3328
    %vm416 = vsmask.f32 7440
    %vm417 = vmor %vm415, %vm416
    %v419 = vshrl.u32 %v379, 16
    %v421 = vrot.slane %v419, 4
    %v422 = vshll.u32 %v379, 16
    %v424 = vrot.slane %v422, 5
    %v425 = vor.u32 %v421, %v424
    %v426 = vrot.slane %v425, 4
    %v428 = vshll.u32 %v380, 16
    %v430 = vrot.slane %v428, 5
    %v431 = vsel %vm417, %v426, %v430
    %v432 = vshrl.u32 %v380, 16
    %v434 = vrot.slane %v432, 4
    %v435 = vor.u32 %v434, %v430
    %v436 = vrot.slane %v435, 4
    %v438 = vshll.u32 %v381, 16
    %v440 = vrot.slane %v438, 5
    %v441 = vsel %vm417, %v436, %v440
    %v442 = vshrl.u32 %v381, 16
    %v444 = vrot.slane %v442, 4
    %v445 = vor.u32 %v444, %v440
    %v446 = vrot.slane %v445, 4
    %v448 = vshll.u32 %v382, 16
    %v450 = vrot.slane %v448, 5
    %v451 = vsel %vm417, %v446, %v450
    %v452 = vshrl.u32 %v382, 16
    %v454 = vrot.slane %v452, 4
    %v455 = vor.u32 %v454, %v450
    %v456 = vrot.slane %v455, 4
    %v458 = vshll.u32 %v413, 16
    %v460 = vrot.slane %v458, 5
    %v461 = vsel %vm417, %v456, %v460
    %v463 = vshrl.u32 %v383, 16
    %v465 = vrot.slane %v463, 4
    %v466 = vshll.u32 %v383, 16
    %v468 = vrot.slane %v466, 5
    %v469 = vor.u32 %v465, %v468
    %v470 = vrot.slane %v469, 4
    %v472 = vshll.u32 %v384, 16
    %v474 = vrot.slane %v472, 5
    %v475 = vsel %vm417, %v470, %v474
    %v476 = vshrl.u32 %v384, 16
    %v478 = vrot.slane %v476, 4
    %v479 = vor.u32 %v478, %v474
    %v480 = vrot.slane %v479, 4
    %v482 = vshll.u32 %v385, 16
    %v484 = vrot.slane %v482, 5
    %v485 = vsel %vm417, %v480, %v484
    %v486 = vshrl.u32 %v385, 16
    %v488 = vrot.slane %v486, 4
    %v489 = vor.u32 %v488, %v484
    %v490 = vrot.slane %v489, 4
    %v492 = vshll.u32 %v386, 16
    %v494 = vrot.slane %v492, 5
    %v495 = vsel %vm417, %v490, %v494
    %v496 = vshrl.u32 %v386, 16
    %v498 = vrot.slane %v496, 4
    %v499 = vor.u32 %v498, %v494
    %v500 = vrot.slane %v499, 4
    %v502 = vshll.u32 %v414, 16
    %v504 = vrot.slane %v502, 5
    %v505 = vsel %vm417, %v500, %v504
    %s506 = scalar_lea.vmem [#allocation6], 208
    %v507 = vld [vmem:[%s506] sm:$0xff]
    %v508 = vld [vmem:[%s506 + $0x8] sm:$0xff]
    %v509 = vld [vmem:[%s506 + $0x10] sm:$0xff]
    %v510 = vld [vmem:[%s506 + $0x18] sm:$0xff]
    %v511 = vld [vmem:[%s506 + $0x20] sm:$0xff]
    %v512 = vld [vmem:[%s506 + $0x28] sm:$0xff]
    %v513 = vld [vmem:[%s506 + $0x30] sm:$0xff]
    %v514 = vld [vmem:[%s506 + $0x38] sm:$0xff]
    %v515 = vld [vmem:[%s506 + $0x40] sm:$0xff]
    %v516 = vld [vmem:[%s506 + $0x48] sm:$0xff]
    %v517 = vld [vmem:[%s506 + $0x50] sm:$0xff]
    %v518 = vld [vmem:[%s506 + $0x58] sm:$0xff]
    %v519 = vld [vmem:[%s506 + $0x60] sm:$0xff]
    %v520 = vld [vmem:[%s506 + $0x68] sm:$0xff]
    %v521 = vld [vmem:[%s506 + $0x70] sm:$0xff]
    %v522 = vld [vmem:[%s506 + $0x78] sm:$0xff]
    %v523 = vld [vmem:[%s506 + $0x80] sm:$0xff]
    %v524 = vld [vmem:[%s506 + $0x88] sm:$0xff]
    %v525 = vld [vmem:[%s506 + $0x90] sm:$0xff]
    %v526 = vld [vmem:[%s506 + $0x98] sm:$0xff]
    %v527 = vld [vmem:[%s506 + $0xa0] sm:$0xff]
    %v528 = vld [vmem:[%s506 + $0xa8] sm:$0xff]
    %v529 = vld [vmem:[%s506 + $0xb0] sm:$0xff]
    %v530 = vld [vmem:[%s506 + $0xb8] sm:$0xff]
    %v531 = vld [vmem:[%s506 + $0xc0] sm:$0x77]
    %v532 = vld [vmem:[%s506 + $0xc8] sm:$0x77]
    %v533 = vunpack.c.l.b16 %v431
    %v534 = vunpack.c.l.b16 %v441
    %v535 = vunpack.c.l.b16 %v451
    %v536 = vunpack.c.l.b16 %v461
    %v537 = vunpack.c.l.b16 %v475
    %v538 = vunpack.c.l.b16 %v485
    %v539 = vunpack.c.l.b16 %v495
    %v540 = vunpack.c.l.b16 %v505
    %v541 = vpack.c.b16 %v534, %v533
    %v542 = vpack.c.b16 %v536, %v535
    %v543 = vpack.c.b16 %v538, %v537
    %v544 = vpack.c.b16 %v540, %v539
    %v571 = vunpack.c.l.b16 %v507
    %v572 = vunpack.c.h.b16 %v507
    %v573 = vunpack.c.l.b16 %v508
    %v574 = vunpack.c.h.b16 %v508
    %v575 = vunpack.c.l.b16 %v509
    %v576 = vunpack.c.h.b16 %v509
    %v577 = vunpack.c.l.b16 %v510
    %v578 = vunpack.c.h.b16 %v510
    %v579 = vunpack.c.l.b16 %v511
    %v580 = vunpack.c.h.b16 %v511
    %v581 = vunpack.c.l.b16 %v512
    %v582 = vunpack.c.h.b16 %v512
    %v583 = vunpack.c.l.b16 %v513
    %v584 = vunpack.c.h.b16 %v513
    %v585 = vunpack.c.l.b16 %v514
    %v586 = vunpack.c.h.b16 %v514
    %v587 = vunpack.c.l.b16 %v515
    %v588 = vunpack.c.h.b16 %v515
    %v589 = vunpack.c.l.b16 %v516
    %v590 = vunpack.c.h.b16 %v516
    %v591 = vunpack.c.l.b16 %v517
    %v592 = vunpack.c.h.b16 %v517
    %v593 = vunpack.c.l.b16 %v518
    %v594 = vunpack.c.h.b16 %v518
    %v595 = vunpack.c.l.b16 %v519
    %v596 = vunpack.c.h.b16 %v519
    %v597 = vunpack.c.l.b16 %v520
    %v598 = vunpack.c.h.b16 %v520
    %v599 = vunpack.c.l.b16 %v521
    %v600 = vunpack.c.h.b16 %v521
    %v601 = vunpack.c.l.b16 %v522
    %v602 = vunpack.c.h.b16 %v522
    %v603 = vunpack.c.l.b16 %v523
    %v604 = vunpack.c.h.b16 %v523
    %v605 = vunpack.c.l.b16 %v524
    %v606 = vunpack.c.h.b16 %v524
    %v607 = vunpack.c.l.b16 %v525
    %v608 = vunpack.c.h.b16 %v525
    %v609 = vunpack.c.l.b16 %v526
    %v610 = vunpack.c.h.b16 %v526
    %v611 = vunpack.c.l.b16 %v527
    %v612 = vunpack.c.h.b16 %v527
    %v613 = vunpack.c.l.b16 %v528
    %v614 = vunpack.c.h.b16 %v528
    %v615 = vunpack.c.l.b16 %v529
    %v616 = vunpack.c.h.b16 %v529
    %v617 = vunpack.c.l.b16 %v530
    %v618 = vunpack.c.h.b16 %v530
    %v619 = vunpack.c.l.b16 %v531
    %v620 = vunpack.c.h.b16 %v531
    %v621 = vunpack.c.l.b16 %v532
    %v622 = vunpack.c.h.b16 %v532
    %v623 = vpack.c.b16 %v575, %v571
    %v624 = vpack.c.b16 %v576, %v572
    %v625 = vpack.c.b16 %v577, %v573
    %v626 = vpack.c.b16 %v578, %v574
    %v627 = vpack.c.b16 %v583, %v579
    %v628 = vpack.c.b16 %v584, %v580
    %v629 = vpack.c.b16 %v585, %v581
    %v630 = vpack.c.b16 %v586, %v582
    %v631 = vpack.c.b16 %v591, %v587
    %v632 = vpack.c.b16 %v592, %v588
    %v633 = vpack.c.b16 %v593, %v589
    %v634 = vpack.c.b16 %v594, %v590
    %v635 = vpack.c.b16 %v599, %v595
    %v636 = vpack.c.b16 %v600, %v596
    %v637 = vpack.c.b16 %v601, %v597
    %v638 = vpack.c.b16 %v602, %v598
    %v639 = vpack.c.b16 %v607, %v603
    %v640 = vpack.c.b16 %v608, %v604
    %v641 = vpack.c.b16 %v609, %v605
    %v642 = vpack.c.b16 %v610, %v606
    %v643 = vpack.c.b16 %v615, %v611
    %v644 = vpack.c.b16 %v616, %v612
    %v645 = vpack.c.b16 %v617, %v613
    %v646 = vpack.c.b16 %v618, %v614
    %v647 = vpack.c.b16 %v619, %v619
    %v648 = vpack.c.b16 %v620, %v620
    %v649 = vpack.c.b16 %v621, %v621
    %v650 = vpack.c.b16 %v622, %v622
    %vm675 = vcmask 834560
    %v677 = vsel %vm675, %v541, 0
    %v680 = vsel %vm675, %v542, 0
    %v683 = vsel %vm675, %v543, 0
    %v686 = vsel %vm675, %v544, 0
    %vm688 = vcmask 1042432
    %v690 = vsel %vm688, %v647, 0
    %v693 = vsel %vm688, %v648, 0
    %v696 = vsel %vm688, %v649, 0
    %v699 = vsel %vm688, %v650, 0
    %701 = vmatpush.bf16.msra.mxu0 0
    %702 = vmatpush.bf16.msra.mxu0 %v690
    %703 = vmatpush.bf16.msra.mxu0 %v643
    %704 = vmatpush.bf16.msra.mxu0 %v639
    %705 = vmatpush.bf16.msra.mxu0 %v635
    %706 = vmatpush.bf16.msra.mxu0 %v631
    %707 = vmatpush.bf16.msra.mxu0 %v627
    %708 = vmatpush.bf16.msra.mxu0 %v623
    %709 = vmatmul.bf16.gmra.mxu0 %v677
    %v710 = vpop.f32.mrf.mxu0
    %v711 = vadd.f32 0.0, %v710
    %v712 = vpop.f32.mrf.mxu0
    %v713 = vadd.f32 0.0, %v712
    %714 = vmatmul.bf16.gmra.mxu0 %v680
    %v715 = vpop.f32.mrf.mxu0
    %v716 = vadd.f32 0.0, %v715
    %v717 = vpop.f32.mrf.mxu0
    %v718 = vadd.f32 0.0, %v717
    %719 = vmatmul.bf16.gmra.mxu0 %v683
    %v720 = vpop.f32.mrf.mxu0
    %v721 = vadd.f32 0.0, %v720
    %v722 = vpop.f32.mrf.mxu0
    %v723 = vadd.f32 0.0, %v722
    %724 = vmatmul.bf16.gmra.mxu0 %v686
    %v725 = vpop.f32.mrf.mxu0
    %v726 = vadd.f32 0.0, %v725
    %v727 = vpop.f32.mrf.mxu0
    %v728 = vadd.f32 0.0, %v727
    %729 = vdwg.mxu0
    %730 = vmatpush.bf16.msra.mxu0 0
    %731 = vmatpush.bf16.msra.mxu0 %v693
    %732 = vmatpush.bf16.msra.mxu0 %v644
    %733 = vmatpush.bf16.msra.mxu0 %v640
    %734 = vmatpush.bf16.msra.mxu0 %v636
    %735 = vmatpush.bf16.msra.mxu0 %v632
    %736 = vmatpush.bf16.msra.mxu0 %v628
    %737 = vmatpush.bf16.msra.mxu0 %v624
    %738 = vmatmul.bf16.gmra.mxu0 %v677
    %v739 = vpop.f32.mrf.mxu0
    %v740 = vadd.f32 0.0, %v739
    %v741 = vpop.f32.mrf.mxu0
    %v742 = vadd.f32 0.0, %v741
    %743 = vmatmul.bf16.gmra.mxu0 %v680
    %v744 = vpop.f32.mrf.mxu0
    %v745 = vadd.f32 0.0, %v744
    %v746 = vpop.f32.mrf.mxu0
    %v747 = vadd.f32 0.0, %v746
    %748 = vmatmul.bf16.gmra.mxu0 %v683
    %v749 = vpop.f32.mrf.mxu0
    %v750 = vadd.f32 0.0, %v749
    %v751 = vpop.f32.mrf.mxu0
    %v752 = vadd.f32 0.0, %v751
    %753 = vmatmul.bf16.gmra.mxu0 %v686
    %v754 = vpop.f32.mrf.mxu0
    %v755 = vadd.f32 0.0, %v754
    %v756 = vpop.f32.mrf.mxu0
    %v757 = vadd.f32 0.0, %v756
    %758 = vdwg.mxu0
    %759 = vmatpush.bf16.msra.mxu0 0
    %760 = vmatpush.bf16.msra.mxu0 %v696
    %761 = vmatpush.bf16.msra.mxu0 %v645
    %762 = vmatpush.bf16.msra.mxu0 %v641
    %763 = vmatpush.bf16.msra.mxu0 %v637
    %764 = vmatpush.bf16.msra.mxu0 %v633
    %765 = vmatpush.bf16.msra.mxu0 %v629
    %766 = vmatpush.bf16.msra.mxu0 %v625
    %767 = vmatmul.bf16.gmra.mxu0 %v677
    %v768 = vpop.f32.mrf.mxu0
    %v769 = vadd.f32 0.0, %v768
    %v770 = vpop.f32.mrf.mxu0
    %v771 = vadd.f32 0.0, %v770
    %772 = vmatmul.bf16.gmra.mxu0 %v680
    %v773 = vpop.f32.mrf.mxu0
    %v774 = vadd.f32 0.0, %v773
    %v775 = vpop.f32.mrf.mxu0
    %v776 = vadd.f32 0.0, %v775
    %777 = vmatmul.bf16.gmra.mxu0 %v683
    %v778 = vpop.f32.mrf.mxu0
    %v779 = vadd.f32 0.0, %v778
    %v780 = vpop.f32.mrf.mxu0
    %v781 = vadd.f32 0.0, %v780
    %782 = vmatmul.bf16.gmra.mxu0 %v686
    %v783 = vpop.f32.mrf.mxu0
    %v784 = vadd.f32 0.0, %v783
    %v785 = vpop.f32.mrf.mxu0
    %v786 = vadd.f32 0.0, %v785
    %787 = vdwg.mxu0
    %788 = vmatpush.bf16.msra.mxu0 0
    %789 = vmatpush.bf16.msra.mxu0 %v699
    %790 = vmatpush.bf16.msra.mxu0 %v646
    %791 = vmatpush.bf16.msra.mxu0 %v642
    %792 = vmatpush.bf16.msra.mxu0 %v638
    %793 = vmatpush.bf16.msra.mxu0 %v634
    %794 = vmatpush.bf16.msra.mxu0 %v630
    %795 = vmatpush.bf16.msra.mxu0 %v626
    %796 = vmatmul.bf16.gmra.mxu0 %v677
    %v797 = vpop.f32.mrf.mxu0
    %v798 = vadd.f32 0.0, %v797
    %v799 = vpop.f32.mrf.mxu0
    %v800 = vadd.f32 0.0, %v799
    %801 = vmatmul.bf16.gmra.mxu0 %v680
    %v802 = vpop.f32.mrf.mxu0
    %v803 = vadd.f32 0.0, %v802
    %v804 = vpop.f32.mrf.mxu0
    %v805 = vadd.f32 0.0, %v804
    %806 = vmatmul.bf16.gmra.mxu0 %v683
    %v807 = vpop.f32.mrf.mxu0
    %v808 = vadd.f32 0.0, %v807
    %v809 = vpop.f32.mrf.mxu0
    %v810 = vadd.f32 0.0, %v809
    %811 = vmatmul.bf16.gmra.mxu0 %v686
    %v812 = vpop.f32.mrf.mxu0
    %v813 = vadd.f32 0.0, %v812
    %v814 = vpop.f32.mrf.mxu0
    %v815 = vadd.f32 0.0, %v814
    %816 = vdwg.mxu0
    %v825 = vunpack.c.l.b16 %v379
    %v826 = vunpack.c.l.b16 %v380
    %v827 = vunpack.c.l.b16 %v381
    %v828 = vunpack.c.l.b16 %v382
    %v829 = vunpack.c.l.b16 %v383
    %v830 = vunpack.c.l.b16 %v384
    %v831 = vunpack.c.l.b16 %v385
    %v832 = vunpack.c.l.b16 %v386
    %v833 = vpack.c.b16 %v826, %v825
    %v834 = vpack.c.b16 %v828, %v827
    %v835 = vpack.c.b16 %v830, %v829
    %v836 = vpack.c.b16 %v832, %v831
    %v863 = vunpack.c.l.b16 %v387
    %v864 = vunpack.c.h.b16 %v387
    %v865 = vunpack.c.l.b16 %v388
    %v866 = vunpack.c.h.b16 %v388
    %v867 = vunpack.c.l.b16 %v389
    %v868 = vunpack.c.h.b16 %v389
    %v869 = vunpack.c.l.b16 %v390
    %v870 = vunpack.c.h.b16 %v390
    %v871 = vunpack.c.l.b16 %v391
    %v872 = vunpack.c.h.b16 %v391
    %v873 = vunpack.c.l.b16 %v392
    %v874 = vunpack.c.h.b16 %v392
    %v875 = vunpack.c.l.b16 %v393
    %v876 = vunpack.c.h.b16 %v393
    %v877 = vunpack.c.l.b16 %v394
    %v878 = vunpack.c.h.b16 %v394
    %v879 = vunpack.c.l.b16 %v395
    %v880 = vunpack.c.h.b16 %v395
    %v881 = vunpack.c.l.b16 %v396
    %v882 = vunpack.c.h.b16 %v396
    %v883 = vunpack.c.l.b16 %v397
    %v884 = vunpack.c.h.b16 %v397
    %v885 = vunpack.c.l.b16 %v398
    %v886 = vunpack.c.h.b16 %v398
    %v887 = vunpack.c.l.b16 %v399
    %v888 = vunpack.c.h.b16 %v399
    %v889 = vunpack.c.l.b16 %v400
    %v890 = vunpack.c.h.b16 %v400
    %v891 = vunpack.c.l.b16 %v401
    %v892 = vunpack.c.h.b16 %v401
    %v893 = vunpack.c.l.b16 %v402
    %v894 = vunpack.c.h.b16 %v402
    %v895 = vunpack.c.l.b16 %v403
    %v896 = vunpack.c.h.b16 %v403
    %v897 = vunpack.c.l.b16 %v404
    %v898 = vunpack.c.h.b16 %v404
    %v899 = vunpack.c.l.b16 %v405
    %v900 = vunpack.c.h.b16 %v405
    %v901 = vunpack.c.l.b16 %v406
    %v902 = vunpack.c.h.b16 %v406
    %v903 = vunpack.c.l.b16 %v407
    %v904 = vunpack.c.h.b16 %v407
    %v905 = vunpack.c.l.b16 %v408
    %v906 = vunpack.c.h.b16 %v408
    %v907 = vunpack.c.l.b16 %v409
    %v908 = vunpack.c.h.b16 %v409
    %v909 = vunpack.c.l.b16 %v410
    %v910 = vunpack.c.h.b16 %v410
    %v911 = vunpack.c.l.b16 %v411
    %v912 = vunpack.c.h.b16 %v411
    %v913 = vunpack.c.l.b16 %v412
    %v914 = vunpack.c.h.b16 %v412
    %v915 = vpack.c.b16 %v867, %v863
    %v916 = vpack.c.b16 %v868, %v864
    %v917 = vpack.c.b16 %v869, %v865
    %v918 = vpack.c.b16 %v870, %v866
    %v919 = vpack.c.b16 %v875, %v871
    %v920 = vpack.c.b16 %v876, %v872
    %v921 = vpack.c.b16 %v877, %v873
    %v922 = vpack.c.b16 %v878, %v874
    %v923 = vpack.c.b16 %v883, %v879
    %v924 = vpack.c.b16 %v884, %v880
    %v925 = vpack.c.b16 %v885, %v881
    %v926 = vpack.c.b16 %v886, %v882
    %v927 = vpack.c.b16 %v891, %v887
    %v928 = vpack.c.b16 %v892, %v888
    %v929 = vpack.c.b16 %v893, %v889
    %v930 = vpack.c.b16 %v894, %v890
    %v931 = vpack.c.b16 %v899, %v895
    %v932 = vpack.c.b16 %v900, %v896
    %v933 = vpack.c.b16 %v901, %v897
    %v934 = vpack.c.b16 %v902, %v898
    %v935 = vpack.c.b16 %v907, %v903
    %v936 = vpack.c.b16 %v908, %v904
    %v937 = vpack.c.b16 %v909, %v905
    %v938 = vpack.c.b16 %v910, %v906
    %v939 = vpack.c.b16 %v911, %v911
    %v940 = vpack.c.b16 %v912, %v912
    %v941 = vpack.c.b16 %v913, %v913
    %v942 = vpack.c.b16 %v914, %v914
    %v968 = vsel %vm675, %v833, 0
    %v971 = vsel %vm675, %v834, 0
    %v974 = vsel %vm675, %v835, 0
    %v977 = vsel %vm675, %v836, 0
    %v980 = vsel %vm688, %v939, 0
    %v983 = vsel %vm688, %v940, 0
    %v986 = vsel %vm688, %v941, 0
    %v989 = vsel %vm688, %v942, 0
    %991 = vmatpush.bf16.msra.mxu0 0
    %992 = vmatpush.bf16.msra.mxu0 %v980
    %993 = vmatpush.bf16.msra.mxu0 %v935
    %994 = vmatpush.bf16.msra.mxu0 %v931
    %995 = vmatpush.bf16.msra.mxu0 %v927
    %996 = vmatpush.bf16.msra.mxu0 %v923
    %997 = vmatpush.bf16.msra.mxu0 %v919
    %998 = vmatpush.bf16.msra.mxu0 %v915
    %999 = vmatmul.bf16.gmra.mxu0 %v968
    %v1000 = vpop.f32.mrf.mxu0
    %v1001 = vadd.f32 %v711, %v1000
    %v1002 = vpop.f32.mrf.mxu0
    %v1003 = vadd.f32 %v713, %v1002
    %1004 = vmatmul.bf16.gmra.mxu0 %v971
    %v1005 = vpop.f32.mrf.mxu0
    %v1006 = vadd.f32 %v716, %v1005
    %v1007 = vpop.f32.mrf.mxu0
    %v1008 = vadd.f32 %v718, %v1007
    %1009 = vmatmul.bf16.gmra.mxu0 %v974
    %v1010 = vpop.f32.mrf.mxu0
    %v1011 = vadd.f32 %v721, %v1010
    %v1012 = vpop.f32.mrf.mxu0
    %v1013 = vadd.f32 %v723, %v1012
    %1014 = vmatmul.bf16.gmra.mxu0 %v977
    %v1015 = vpop.f32.mrf.mxu0
    %v1016 = vadd.f32 %v726, %v1015
    %v1017 = vpop.f32.mrf.mxu0
    %v1018 = vadd.f32 %v728, %v1017
    %1019 = vdwg.mxu0
    %1020 = vmatpush.bf16.msra.mxu0 0
    %1021 = vmatpush.bf16.msra.mxu0 %v983
    %1022 = vmatpush.bf16.msra.mxu0 %v936
    %1023 = vmatpush.bf16.msra.mxu0 %v932
    %1024 = vmatpush.bf16.msra.mxu0 %v928
    %1025 = vmatpush.bf16.msra.mxu0 %v924
    %1026 = vmatpush.bf16.msra.mxu0 %v920
    %1027 = vmatpush.bf16.msra.mxu0 %v916
    %1028 = vmatmul.bf16.gmra.mxu0 %v968
    %v1029 = vpop.f32.mrf.mxu0
    %v1030 = vadd.f32 %v740, %v1029
    %v1031 = vpop.f32.mrf.mxu0
    %v1032 = vadd.f32 %v742, %v1031
    %1033 = vmatmul.bf16.gmra.mxu0 %v971
    %v1034 = vpop.f32.mrf.mxu0
    %v1035 = vadd.f32 %v745, %v1034
    %v1036 = vpop.f32.mrf.mxu0
    %v1037 = vadd.f32 %v747, %v1036
    %1038 = vmatmul.bf16.gmra.mxu0 %v974
    %v1039 = vpop.f32.mrf.mxu0
    %v1040 = vadd.f32 %v750, %v1039
    %v1041 = vpop.f32.mrf.mxu0
    %v1042 = vadd.f32 %v752, %v1041
    %1043 = vmatmul.bf16.gmra.mxu0 %v977
    %v1044 = vpop.f32.mrf.mxu0
    %v1045 = vadd.f32 %v755, %v1044
    %v1046 = vpop.f32.mrf.mxu0
    %v1047 = vadd.f32 %v757, %v1046
    %1048 = vdwg.mxu0
    %1049 = vmatpush.bf16.msra.mxu0 0
    %1050 = vmatpush.bf16.msra.mxu0 %v986
    %1051 = vmatpush.bf16.msra.mxu0 %v937
    %1052 = vmatpush.bf16.msra.mxu0 %v933
    %1053 = vmatpush.bf16.msra.mxu0 %v929
    %1054 = vmatpush.bf16.msra.mxu0 %v925
    %1055 = vmatpush.bf16.msra.mxu0 %v921
    %1056 = vmatpush.bf16.msra.mxu0 %v917
    %1057 = vmatmul.bf16.gmra.mxu0 %v968
    %v1058 = vpop.f32.mrf.mxu0
    %v1059 = vadd.f32 %v769, %v1058
    %v1060 = vpop.f32.mrf.mxu0
    %v1061 = vadd.f32 %v771, %v1060
    %1062 = vmatmul.bf16.gmra.mxu0 %v971
    %v1063 = vpop.f32.mrf.mxu0
    %v1064 = vadd.f32 %v774, %v1063
    %v1065 = vpop.f32.mrf.mxu0
    %v1066 = vadd.f32 %v776, %v1065
    %1067 = vmatmul.bf16.gmra.mxu0 %v974
    %v1068 = vpop.f32.mrf.mxu0
    %v1069 = vadd.f32 %v779, %v1068
    %v1070 = vpop.f32.mrf.mxu0
    %v1071 = vadd.f32 %v781, %v1070
    %1072 = vmatmul.bf16.gmra.mxu0 %v977
    %v1073 = vpop.f32.mrf.mxu0
    %v1074 = vadd.f32 %v784, %v1073
    %v1075 = vpop.f32.mrf.mxu0
    %v1076 = vadd.f32 %v786, %v1075
    %1077 = vdwg.mxu0
    %1078 = vmatpush.bf16.msra.mxu0 0
    %1079 = vmatpush.bf16.msra.mxu0 %v989
    %1080 = vmatpush.bf16.msra.mxu0 %v938
    %1081 = vmatpush.bf16.msra.mxu0 %v934
    %1082 = vmatpush.bf16.msra.mxu0 %v930
    %1083 = vmatpush.bf16.msra.mxu0 %v926
    %1084 = vmatpush.bf16.msra.mxu0 %v922
    %1085 = vmatpush.bf16.msra.mxu0 %v918
    %1086 = vmatmul.bf16.gmra.mxu0 %v968
    %v1087 = vpop.f32.mrf.mxu0
    %v1088 = vadd.f32 %v798, %v1087
    %v1089 = vpop.f32.mrf.mxu0
    %v1090 = vadd.f32 %v800, %v1089
    %1091 = vmatmul.bf16.gmra.mxu0 %v971
    %v1092 = vpop.f32.mrf.mxu0
    %v1093 = vadd.f32 %v803, %v1092
    %v1094 = vpop.f32.mrf.mxu0
    %v1095 = vadd.f32 %v805, %v1094
    %1096 = vmatmul.bf16.gmra.mxu0 %v974
    %v1097 = vpop.f32.mrf.mxu0
    %v1098 = vadd.f32 %v808, %v1097
    %v1099 = vpop.f32.mrf.mxu0
    %v1100 = vadd.f32 %v810, %v1099
    %1101 = vmatmul.bf16.gmra.mxu0 %v977
    %v1102 = vpop.f32.mrf.mxu0
    %v1103 = vadd.f32 %v813, %v1102
    %v1104 = vpop.f32.mrf.mxu0
    %v1105 = vadd.f32 %v815, %v1104
    %1106 = vdwg.mxu0
    %v1107 = vld [vmem:[#allocation2] sm:$0xe]
    %v1108 = vld [vmem:[#allocation2 + $0x14] sm:$0xe]
    %vm1113 = vcmask 1042432
    %vm1114 = vcmask 1046532
    %vm1115 = vmor %vm1113, %vm1114
    %v1116 = vrot.slane %v1107, 5
    %v1117 = vrot.slane %v1116, 4
    %v1118 = vrot.slane %v380, 5
    %v1119 = vsel %vm1115, %v1117, %v1118
    %v1120 = vrot.slane %v1118, 4
    %v1121 = vrot.slane %v381, 5
    %v1122 = vsel %vm1115, %v1120, %v1121
    %v1123 = vrot.slane %v1121, 4
    %v1124 = vrot.slane %v382, 5
    %v1125 = vsel %vm1115, %v1123, %v1124
    %v1126 = vrot.slane %v1124, 4
    %v1127 = vrot.slane %v413, 5
    %v1128 = vsel %vm1115, %v1126, %v1127
    %v1129 = vrot.slane %v1108, 5
    %v1130 = vrot.slane %v1129, 4
    %v1131 = vrot.slane %v384, 5
    %v1132 = vsel %vm1115, %v1130, %v1131
    %v1133 = vrot.slane %v1131, 4
    %v1134 = vrot.slane %v385, 5
    %v1135 = vsel %vm1115, %v1133, %v1134
    %v1136 = vrot.slane %v1134, 4
    %v1137 = vrot.slane %v386, 5
    %v1138 = vsel %vm1115, %v1136, %v1137
    %v1139 = vrot.slane %v1137, 4
    %v1140 = vrot.slane %v414, 5
    %v1141 = vsel %vm1115, %v1139, %v1140
    %s1142 = scalar_lea.vmem [#allocation6], 416
    %v1143 = vld [vmem:[%s1142] sm:$0xff]
    %v1144 = vld [vmem:[%s1142 + $0x8] sm:$0xff]
    %v1145 = vld [vmem:[%s1142 + $0x10] sm:$0xff]
    %v1146 = vld [vmem:[%s1142 + $0x18] sm:$0xff]
    %v1147 = vld [vmem:[%s1142 + $0x20] sm:$0xff]
    %v1148 = vld [vmem:[%s1142 + $0x28] sm:$0xff]
    %v1149 = vld [vmem:[%s1142 + $0x30] sm:$0xff]
    %v1150 = vld [vmem:[%s1142 + $0x38] sm:$0xff]
    %v1151 = vld [vmem:[%s1142 + $0x40] sm:$0xff]
    %v1152 = vld [vmem:[%s1142 + $0x48] sm:$0xff]
    %v1153 = vld [vmem:[%s1142 + $0x50] sm:$0xff]
    %v1154 = vld [vmem:[%s1142 + $0x58] sm:$0xff]
    %v1155 = vld [vmem:[%s1142 + $0x60] sm:$0xff]
    %v1156 = vld [vmem:[%s1142 + $0x68] sm:$0xff]
    %v1157 = vld [vmem:[%s1142 + $0x70] sm:$0xff]
    %v1158 = vld [vmem:[%s1142 + $0x78] sm:$0xff]
    %v1159 = vld [vmem:[%s1142 + $0x80] sm:$0xff]
    %v1160 = vld [vmem:[%s1142 + $0x88] sm:$0xff]
    %v1161 = vld [vmem:[%s1142 + $0x90] sm:$0xff]
    %v1162 = vld [vmem:[%s1142 + $0x98] sm:$0xff]
    %v1163 = vld [vmem:[%s1142 + $0xa0] sm:$0xff]
    %v1164 = vld [vmem:[%s1142 + $0xa8] sm:$0xff]
    %v1165 = vld [vmem:[%s1142 + $0xb0] sm:$0xff]
    %v1166 = vld [vmem:[%s1142 + $0xb8] sm:$0xff]
    %v1167 = vld [vmem:[%s1142 + $0xc0] sm:$0x77]
    %v1168 = vld [vmem:[%s1142 + $0xc8] sm:$0x77]
    %v1169 = vunpack.c.l.b16 %v1119
    %v1170 = vunpack.c.l.b16 %v1122
    %v1171 = vunpack.c.l.b16 %v1125
    %v1172 = vunpack.c.l.b16 %v1128
    %v1173 = vunpack.c.l.b16 %v1132
    %v1174 = vunpack.c.l.b16 %v1135
    %v1175 = vunpack.c.l.b16 %v1138
    %v1176 = vunpack.c.l.b16 %v1141
    %v1177 = vpack.c.b16 %v1170, %v1169
    %v1178 = vpack.c.b16 %v1172, %v1171
    %v1179 = vpack.c.b16 %v1174, %v1173
    %v1180 = vpack.c.b16 %v1176, %v1175
    %v1207 = vunpack.c.l.b16 %v1143
    %v1208 = vunpack.c.h.b16 %v1143
    %v1209 = vunpack.c.l.b16 %v1144
    %v1210 = vunpack.c.h.b16 %v1144
    %v1211 = vunpack.c.l.b16 %v1145
    %v1212 = vunpack.c.h.b16 %v1145
    %v1213 = vunpack.c.l.b16 %v1146
    %v1214 = vunpack.c.h.b16 %v1146
    %v1215 = vunpack.c.l.b16 %v1147
    %v1216 = vunpack.c.h.b16 %v1147
    %v1217 = vunpack.c.l.b16 %v1148
    %v1218 = vunpack.c.h.b16 %v1148
    %v1219 = vunpack.c.l.b16 %v1149
    %v1220 = vunpack.c.h.b16 %v1149
    %v1221 = vunpack.c.l.b16 %v1150
    %v1222 = vunpack.c.h.b16 %v1150
    %v1223 = vunpack.c.l.b16 %v1151
    %v1224 = vunpack.c.h.b16 %v1151
    %v1225 = vunpack.c.l.b16 %v1152
    %v1226 = vunpack.c.h.b16 %v1152
    %v1227 = vunpack.c.l.b16 %v1153
    %v1228 = vunpack.c.h.b16 %v1153
    %v1229 = vunpack.c.l.b16 %v1154
    %v1230 = vunpack.c.h.b16 %v1154
    %v1231 = vunpack.c.l.b16 %v1155
    %v1232 = vunpack.c.h.b16 %v1155
    %v1233 = vunpack.c.l.b16 %v1156
    %v1234 = vunpack.c.h.b16 %v1156
    %v1235 = vunpack.c.l.b16 %v1157
    %v1236 = vunpack.c.h.b16 %v1157
    %v1237 = vunpack.c.l.b16 %v1158
    %v1238 = vunpack.c.h.b16 %v1158
    %v1239 = vunpack.c.l.b16 %v1159
    %v1240 = vunpack.c.h.b16 %v1159
    %v1241 = vunpack.c.l.b16 %v1160
    %v1242 = vunpack.c.h.b16 %v1160
    %v1243 = vunpack.c.l.b16 %v1161
    %v1244 = vunpack.c.h.b16 %v1161
    %v1245 = vunpack.c.l.b16 %v1162
    %v1246 = vunpack.c.h.b16 %v1162
    %v1247 = vunpack.c.l.b16 %v1163
    %v1248 = vunpack.c.h.b16 %v1163
    %v1249 = vunpack.c.l.b16 %v1164
    %v1250 = vunpack.c.h.b16 %v1164
    %v1251 = vunpack.c.l.b16 %v1165
    %v1252 = vunpack.c.h.b16 %v1165
    %v1253 = vunpack.c.l.b16 %v1166
    %v1254 = vunpack.c.h.b16 %v1166
    %v1255 = vunpack.c.l.b16 %v1167
    %v1256 = vunpack.c.h.b16 %v1167
    %v1257 = vunpack.c.l.b16 %v1168
    %v1258 = vunpack.c.h.b16 %v1168
    %v1259 = vpack.c.b16 %v1211, %v1207
    %v1260 = vpack.c.b16 %v1212, %v1208
    %v1261 = vpack.c.b16 %v1213, %v1209
    %v1262 = vpack.c.b16 %v1214, %v1210
    %v1263 = vpack.c.b16 %v1219, %v1215
    %v1264 = vpack.c.b16 %v1220, %v1216
    %v1265 = vpack.c.b16 %v1221, %v1217
    %v1266 = vpack.c.b16 %v1222, %v1218
    %v1267 = vpack.c.b16 %v1227, %v1223
    %v1268 = vpack.c.b16 %v1228, %v1224
    %v1269 = vpack.c.b16 %v1229, %v1225
    %v1270 = vpack.c.b16 %v1230, %v1226
    %v1271 = vpack.c.b16 %v1235, %v1231
    %v1272 = vpack.c.b16 %v1236, %v1232
    %v1273 = vpack.c.b16 %v1237, %v1233
    %v1274 = vpack.c.b16 %v1238, %v1234
    %v1275 = vpack.c.b16 %v1243, %v1239
    %v1276 = vpack.c.b16 %v1244, %v1240
    %v1277 = vpack.c.b16 %v1245, %v1241
    %v1278 = vpack.c.b16 %v1246, %v1242
    %v1279 = vpack.c.b16 %v1251, %v1247
    %v1280 = vpack.c.b16 %v1252, %v1248
    %v1281 = vpack.c.b16 %v1253, %v1249
    %v1282 = vpack.c.b16 %v1254, %v1250
    %v1283 = vpack.c.b16 %v1255, %v1255
    %v1284 = vpack.c.b16 %v1256, %v1256
    %v1285 = vpack.c.b16 %v1257, %v1257
    %v1286 = vpack.c.b16 %v1258, %v1258
    %v1312 = vsel %vm675, %v1177, 0
    %v1315 = vsel %vm675, %v1178, 0
    %v1318 = vsel %vm675, %v1179, 0
    %v1321 = vsel %vm675, %v1180, 0
    %v1324 = vsel %vm688, %v1283, 0
    %v1327 = vsel %vm688, %v1284, 0
    %v1330 = vsel %vm688, %v1285, 0
    %v1333 = vsel %vm688, %v1286, 0
    %1335 = vmatpush.bf16.msra.mxu0 0
    %1336 = vmatpush.bf16.msra.mxu0 %v1324
    %1337 = vmatpush.bf16.msra.mxu0 %v1279
    %1338 = vmatpush.bf16.msra.mxu0 %v1275
    %1339 = vmatpush.bf16.msra.mxu0 %v1271
    %1340 = vmatpush.bf16.msra.mxu0 %v1267
    %1341 = vmatpush.bf16.msra.mxu0 %v1263
    %1342 = vmatpush.bf16.msra.mxu0 %v1259
    %1343 = vmatmul.bf16.gmra.mxu0 %v1312
    %v1344 = vpop.f32.mrf.mxu0
    %v1345 = vadd.f32 0.0, %v1344
    %v1346 = vpop.f32.mrf.mxu0
    %v1347 = vadd.f32 0.0, %v1346
    %1348 = vmatmul.bf16.gmra.mxu0 %v1315
    %v1349 = vpop.f32.mrf.mxu0
    %v1350 = vadd.f32 0.0, %v1349
    %v1351 = vpop.f32.mrf.mxu0
    %v1352 = vadd.f32 0.0, %v1351
    %1353 = vmatmul.bf16.gmra.mxu0 %v1318
    %v1354 = vpop.f32.mrf.mxu0
    %v1355 = vadd.f32 0.0, %v1354
    %v1356 = vpop.f32.mrf.mxu0
    %v1357 = vadd.f32 0.0, %v1356
    %1358 = vmatmul.bf16.gmra.mxu0 %v1321
    %v1359 = vpop.f32.mrf.mxu0
    %v1360 = vadd.f32 0.0, %v1359
    %v1361 = vpop.f32.mrf.mxu0
    %v1362 = vadd.f32 0.0, %v1361
    %1363 = vdwg.mxu0
    %1364 = vmatpush.bf16.msra.mxu0 0
    %1365 = vmatpush.bf16.msra.mxu0 %v1327
    %1366 = vmatpush.bf16.msra.mxu0 %v1280
    %1367 = vmatpush.bf16.msra.mxu0 %v1276
    %1368 = vmatpush.bf16.msra.mxu0 %v1272
    %1369 = vmatpush.bf16.msra.mxu0 %v1268
    %1370 = vmatpush.bf16.msra.mxu0 %v1264
    %1371 = vmatpush.bf16.msra.mxu0 %v1260
    %1372 = vmatmul.bf16.gmra.mxu0 %v1312
    %v1373 = vpop.f32.mrf.mxu0
    %v1374 = vadd.f32 0.0, %v1373
    %v1375 = vpop.f32.mrf.mxu0
    %v1376 = vadd.f32 0.0, %v1375
    %1377 = vmatmul.bf16.gmra.mxu0 %v1315
    %v1378 = vpop.f32.mrf.mxu0
    %v1379 = vadd.f32 0.0, %v1378
    %v1380 = vpop.f32.mrf.mxu0
    %v1381 = vadd.f32 0.0, %v1380
    %1382 = vmatmul.bf16.gmra.mxu0 %v1318
    %v1383 = vpop.f32.mrf.mxu0
    %v1384 = vadd.f32 0.0, %v1383
    %v1385 = vpop.f32.mrf.mxu0
    %v1386 = vadd.f32 0.0, %v1385
    %1387 = vmatmul.bf16.gmra.mxu0 %v1321
    %v1388 = vpop.f32.mrf.mxu0
    %v1389 = vadd.f32 0.0, %v1388
    %v1390 = vpop.f32.mrf.mxu0
    %v1391 = vadd.f32 0.0, %v1390
    %1392 = vdwg.mxu0
    %1393 = vmatpush.bf16.msra.mxu0 0
    %1394 = vmatpush.bf16.msra.mxu0 %v1330
    %1395 = vmatpush.bf16.msra.mxu0 %v1281
    %1396 = vmatpush.bf16.msra.mxu0 %v1277
    %1397 = vmatpush.bf16.msra.mxu0 %v1273
    %1398 = vmatpush.bf16.msra.mxu0 %v1269
    %1399 = vmatpush.bf16.msra.mxu0 %v1265
    %1400 = vmatpush.bf16.msra.mxu0 %v1261
    %1401 = vmatmul.bf16.gmra.mxu0 %v1312
    %v1402 = vpop.f32.mrf.mxu0
    %v1403 = vadd.f32 0.0, %v1402
    %v1404 = vpop.f32.mrf.mxu0
    %v1405 = vadd.f32 0.0, %v1404
    %1406 = vmatmul.bf16.gmra.mxu0 %v1315
    %v1407 = vpop.f32.mrf.mxu0
    %v1408 = vadd.f32 0.0, %v1407
    %v1409 = vpop.f32.mrf.mxu0
    %v1410 = vadd.f32 0.0, %v1409
    %1411 = vmatmul.bf16.gmra.mxu0 %v1318
    %v1412 = vpop.f32.mrf.mxu0
    %v1413 = vadd.f32 0.0, %v1412
    %v1414 = vpop.f32.mrf.mxu0
    %v1415 = vadd.f32 0.0, %v1414
    %1416 = vmatmul.bf16.gmra.mxu0 %v1321
    %v1417 = vpop.f32.mrf.mxu0
    %v1418 = vadd.f32 0.0, %v1417
    %v1419 = vpop.f32.mrf.mxu0
    %v1420 = vadd.f32 0.0, %v1419
    %1421 = vdwg.mxu0
    %1422 = vmatpush.bf16.msra.mxu0 0
    %1423 = vmatpush.bf16.msra.mxu0 %v1333
    %1424 = vmatpush.bf16.msra.mxu0 %v1282
    %1425 = vmatpush.bf16.msra.mxu0 %v1278
    %1426 = vmatpush.bf16.msra.mxu0 %v1274
    %1427 = vmatpush.bf16.msra.mxu0 %v1270
    %1428 = vmatpush.bf16.msra.mxu0 %v1266
    %1429 = vmatpush.bf16.msra.mxu0 %v1262
    %1430 = vmatmul.bf16.gmra.mxu0 %v1312
    %v1431 = vpop.f32.mrf.mxu0
    %v1432 = vadd.f32 0.0, %v1431
    %v1433 = vpop.f32.mrf.mxu0
    %v1434 = vadd.f32 0.0, %v1433
    %1435 = vmatmul.bf16.gmra.mxu0 %v1315
    %v1436 = vpop.f32.mrf.mxu0
    %v1437 = vadd.f32 0.0, %v1436
    %v1438 = vpop.f32.mrf.mxu0
    %v1439 = vadd.f32 0.0, %v1438
    %1440 = vmatmul.bf16.gmra.mxu0 %v1318
    %v1441 = vpop.f32.mrf.mxu0
    %v1442 = vadd.f32 0.0, %v1441
    %v1443 = vpop.f32.mrf.mxu0
    %v1444 = vadd.f32 0.0, %v1443
    %1445 = vmatmul.bf16.gmra.mxu0 %v1321
    %v1446 = vpop.f32.mrf.mxu0
    %v1447 = vadd.f32 0.0, %v1446
    %v1448 = vpop.f32.mrf.mxu0
    %v1449 = vadd.f32 0.0, %v1448
    %1450 = vdwg.mxu0
    %v1451 = vadd.f32 %v1001, %v1345
    %v1452 = vadd.f32 %v1030, %v1374
    %v1453 = vadd.f32 %v1059, %v1403
    %v1454 = vadd.f32 %v1088, %v1432
    %v1455 = vadd.f32 %v1003, %v1347
    %v1456 = vadd.f32 %v1032, %v1376
    %v1457 = vadd.f32 %v1061, %v1405
    %v1458 = vadd.f32 %v1090, %v1434
    %v1459 = vadd.f32 %v1006, %v1350
    %v1460 = vadd.f32 %v1035, %v1379
    %v1461 = vadd.f32 %v1064, %v1408
    %v1462 = vadd.f32 %v1093, %v1437
    %v1463 = vadd.f32 %v1008, %v1352
    %v1464 = vadd.f32 %v1037, %v1381
    %v1465 = vadd.f32 %v1066, %v1410
    %v1466 = vadd.f32 %v1095, %v1439
    %v1467 = vadd.f32 %v1011, %v1355
    %v1468 = vadd.f32 %v1040, %v1384
    %v1469 = vadd.f32 %v1069, %v1413
    %v1470 = vadd.f32 %v1098, %v1442
    %v1471 = vadd.f32 %v1013, %v1357
    %v1472 = vadd.f32 %v1042, %v1386
    %v1473 = vadd.f32 %v1071, %v1415
    %v1474 = vadd.f32 %v1100, %v1444
    %v1475 = vadd.f32 %v1016, %v1360
    %v1476 = vadd.f32 %v1045, %v1389
    %v1477 = vadd.f32 %v1074, %v1418
    %v1478 = vadd.f32 %v1103, %v1447
    %v1479 = vadd.f32 %v1018, %v1362
    %v1480 = vadd.f32 %v1047, %v1391
    %v1481 = vadd.f32 %v1076, %v1420
    %v1482 = vadd.f32 %v1105, %v1449
    %v1484 = vperm.slane %v378, 0
    %v1485 = vperm.slane %v378, 1
    %v1486 = vperm.slane %v378, 2
    %v1487 = vperm.slane %v378, 3
    %v1492 = vadd.f32 %v1451, %v1484
    %v1493 = vadd.f32 %v1452, %v1485
    %v1494 = vadd.f32 %v1453, %v1486
    %v1495 = vadd.f32 %v1454, %v1487
    %v1496 = vadd.f32 %v1455, %v1484
    %v1497 = vadd.f32 %v1456, %v1485
    %v1498 = vadd.f32 %v1457, %v1486
    %v1499 = vadd.f32 %v1458, %v1487
    %v1500 = vadd.f32 %v1459, %v1484
    %v1501 = vadd.f32 %v1460, %v1485
    %v1502 = vadd.f32 %v1461, %v1486
    %v1503 = vadd.f32 %v1462, %v1487
    %v1504 = vadd.f32 %v1463, %v1484
    %v1505 = vadd.f32 %v1464, %v1485
    %v1506 = vadd.f32 %v1465, %v1486
    %v1507 = vadd.f32 %v1466, %v1487
    %v1508 = vadd.f32 %v1467, %v1484
    %v1509 = vadd.f32 %v1468, %v1485
    %v1510 = vadd.f32 %v1469, %v1486
    %v1511 = vadd.f32 %v1470, %v1487
    %v1512 = vadd.f32 %v1471, %v1484
    %v1513 = vadd.f32 %v1472, %v1485
    %v1514 = vadd.f32 %v1473, %v1486
    %v1515 = vadd.f32 %v1474, %v1487
    %v1516 = vadd.f32 %v1475, %v1484
    %v1517 = vadd.f32 %v1476, %v1485
    %v1518 = vadd.f32 %v1477, %v1486
    %v1519 = vadd.f32 %v1478, %v1487
    %v1520 = vadd.f32 %v1479, %v1484
    %v1521 = vadd.f32 %v1480, %v1485
    %v1522 = vadd.f32 %v1481, %v1486
    %v1523 = vadd.f32 %v1482, %v1487
    %v1524 = vmax.f32 %v1492, 0.0
    %v1525 = vmax.f32 %v1493, 0.0
    %v1526 = vmax.f32 %v1494, 0.0
    %v1527 = vmax.f32 %v1495, 0.0
    %v1528 = vmax.f32 %v1496, 0.0
    %v1529 = vmax.f32 %v1497, 0.0
    %v1530 = vmax.f32 %v1498, 0.0
    %v1531 = vmax.f32 %v1499, 0.0
    %v1532 = vmax.f32 %v1500, 0.0
    %v1533 = vmax.f32 %v1501, 0.0
    %v1534 = vmax.f32 %v1502, 0.0
    %v1535 = vmax.f32 %v1503, 0.0
    %v1536 = vmax.f32 %v1504, 0.0
    %v1537 = vmax.f32 %v1505, 0.0
    %v1538 = vmax.f32 %v1506, 0.0
    %v1539 = vmax.f32 %v1507, 0.0
    %v1540 = vmax.f32 %v1508, 0.0
    %v1541 = vmax.f32 %v1509, 0.0
    %v1542 = vmax.f32 %v1510, 0.0
    %v1543 = vmax.f32 %v1511, 0.0
    %v1544 = vmax.f32 %v1512, 0.0
    %v1545 = vmax.f32 %v1513, 0.0
    %v1546 = vmax.f32 %v1514, 0.0
    %v1547 = vmax.f32 %v1515, 0.0
    %v1548 = vmax.f32 %v1516, 0.0
    %v1549 = vmax.f32 %v1517, 0.0
    %v1550 = vmax.f32 %v1518, 0.0
    %v1551 = vmax.f32 %v1519, 0.0
    %v1552 = vmax.f32 %v1520, 0.0
    %v1553 = vmax.f32 %v1521, 0.0
    %v1554 = vmax.f32 %v1522, 0.0
    %v1555 = vmax.f32 %v1523, 0.0
    %v1588 = vrot.slane %v1525, 6
    %v1589 = vrot.slane %v1526, 4
    %v1590 = vrot.slane %v1527, 2
    %v1591 = vrot.slane %v1529, 6
    %v1592 = vrot.slane %v1530, 4
    %v1593 = vrot.slane %v1531, 2
    %v1594 = vrot.slane %v1533, 6
    %v1595 = vrot.slane %v1534, 4
    %v1596 = vrot.slane %v1535, 2
    %v1597 = vrot.slane %v1537, 6
    %v1598 = vrot.slane %v1538, 4
    %v1599 = vrot.slane %v1539, 2
    %v1600 = vrot.slane %v1541, 6
    %v1601 = vrot.slane %v1542, 4
    %v1602 = vrot.slane %v1543, 2
    %v1603 = vrot.slane %v1545, 6
    %v1604 = vrot.slane %v1546, 4
    %v1605 = vrot.slane %v1547, 2
    %v1606 = vrot.slane %v1549, 6
    %v1607 = vrot.slane %v1550, 4
    %v1608 = vrot.slane %v1551, 2
    %v1609 = vrot.slane %v1553, 6
    %v1610 = vrot.slane %v1554, 4
    %v1611 = vrot.slane %v1555, 2
    %vm1612 = vcmask 1041408
    %v1613 = vsel %vm1612, %v1524, %v1588
    %vm1614 = vcmask 1045508
    %v1615 = vsel %vm1614, %v1589, %v1590
    %vm1616 = vcmask 1043456
    %v1617 = vsel %vm1616, %v1613, %v1615
    %vm1618 = vcmask 1043458
    %v1619 = vsel %vm1618, %v1524, %v1588
    %vm1620 = vcmask 1045504
    %v1621 = vsel %vm1620, %v1590, %v1589
    %vm1622 = vcmask 1045506
    %v1623 = vsel %vm1622, %v1619, %v1621
    %v1624 = vrot.slane %v1623, 2
    %v1625 = vsel %vm1614, %v1524, %v1588
    %v1626 = vsel %vm1612, %v1589, %v1590
    %v1627 = vsel %vm1616, %v1626, %v1625
    %v1628 = vrot.slane %v1627, 4
    %v1629 = vsel %vm1620, %v1588, %v1524
    %v1630 = vsel %vm1618, %v1589, %v1590
    %v1631 = vsel %vm1622, %v1630, %v1629
    %v1632 = vrot.slane %v1631, 6
    %v1633 = vsel %vm1612, %v1528, %v1591
    %v1634 = vsel %vm1614, %v1592, %v1593
    %v1635 = vsel %vm1616, %v1633, %v1634
    %v1636 = vsel %vm1618, %v1528, %v1591
    %v1637 = vsel %vm1620, %v1593, %v1592
    %v1638 = vsel %vm1622, %v1636, %v1637
    %v1639 = vrot.slane %v1638, 2
    %v1640 = vsel %vm1614, %v1528, %v1591
    %v1641 = vsel %vm1612, %v1592, %v1593
    %v1642 = vsel %vm1616, %v1641, %v1640
    %v1643 = vrot.slane %v1642, 4
    %v1644 = vsel %vm1620, %v1591, %v1528
    %v1645 = vsel %vm1618, %v1592, %v1593
    %v1646 = vsel %vm1622, %v1645, %v1644
    %v1647 = vrot.slane %v1646, 6
    %v1648 = vsel %vm1612, %v1532, %v1594
    %v1649 = vsel %vm1614, %v1595, %v1596
    %v1650 = vsel %vm1616, %v1648, %v1649
    %v1651 = vsel %vm1618, %v1532, %v1594
    %v1652 = vsel %vm1620, %v1596, %v1595
    %v1653 = vsel %vm1622, %v1651, %v1652
    %v1654 = vrot.slane %v1653, 2
    %v1655 = vsel %vm1614, %v1532, %v1594
    %v1656 = vsel %vm1612, %v1595, %v1596
    %v1657 = vsel %vm1616, %v1656, %v1655
    %v1658 = vrot.slane %v1657, 4
    %v1659 = vsel %vm1620, %v1594, %v1532
    %v1660 = vsel %vm1618, %v1595, %v1596
    %v1661 = vsel %vm1622, %v1660, %v1659
    %v1662 = vrot.slane %v1661, 6
    %v1663 = vsel %vm1612, %v1536, %v1597
    %v1664 = vsel %vm1614, %v1598, %v1599
    %v1665 = vsel %vm1616, %v1663, %v1664
    %v1666 = vsel %vm1618, %v1536, %v1597
    %v1667 = vsel %vm1620, %v1599, %v1598
    %v1668 = vsel %vm1622, %v1666, %v1667
    %v1669 = vrot.slane %v1668, 2
    %v1670 = vsel %vm1614, %v1536, %v1597
    %v1671 = vsel %vm1612, %v1598, %v1599
    %v1672 = vsel %vm1616, %v1671, %v1670
    %v1673 = vrot.slane %v1672, 4
    %v1674 = vsel %vm1620, %v1597, %v1536
    %v1675 = vsel %vm1618, %v1598, %v1599
    %v1676 = vsel %vm1622, %v1675, %v1674
    %v1677 = vrot.slane %v1676, 6
    %v1678 = vsel %vm1612, %v1540, %v1600
    %v1679 = vsel %vm1614, %v1601, %v1602
    %v1680 = vsel %vm1616, %v1678, %v1679
    %v1681 = vsel %vm1618, %v1540, %v1600
    %v1682 = vsel %vm1620, %v1602, %v1601
    %v1683 = vsel %vm1622, %v1681, %v1682
    %v1684 = vrot.slane %v1683, 2
    %v1685 = vsel %vm1614, %v1540, %v1600
    %v1686 = vsel %vm1612, %v1601, %v1602
    %v1687 = vsel %vm1616, %v1686, %v1685
    %v1688 = vrot.slane %v1687, 4
    %v1689 = vsel %vm1620, %v1600, %v1540
    %v1690 = vsel %vm1618, %v1601, %v1602
    %v1691 = vsel %vm1622, %v1690, %v1689
    %v1692 = vrot.slane %v1691, 6
    %v1693 = vsel %vm1612, %v1544, %v1603
    %v1694 = vsel %vm1614, %v1604, %v1605
    %v1695 = vsel %vm1616, %v1693, %v1694
    %v1696 = vsel %vm1618, %v1544, %v1603
    %v1697 = vsel %vm1620, %v1605, %v1604
    %v1698 = vsel %vm1622, %v1696, %v1697
    %v1699 = vrot.slane %v1698, 2
    %v1700 = vsel %vm1614, %v1544, %v1603
    %v1701 = vsel %vm1612, %v1604, %v1605
    %v1702 = vsel %vm1616, %v1701, %v1700
    %v1703 = vrot.slane %v1702, 4
    %v1704 = vsel %vm1620, %v1603, %v1544
    %v1705 = vsel %vm1618, %v1604, %v1605
    %v1706 = vsel %vm1622, %v1705, %v1704
    %v1707 = vrot.slane %v1706, 6
    %v1708 = vsel %vm1612, %v1548, %v1606
    %v1709 = vsel %vm1614, %v1607, %v1608
    %v1710 = vsel %vm1616, %v1708, %v1709
    %v1711 = vsel %vm1618, %v1548, %v1606
    %v1712 = vsel %vm1620, %v1608, %v1607
    %v1713 = vsel %vm1622, %v1711, %v1712
    %v1714 = vrot.slane %v1713, 2
    %v1715 = vsel %vm1614, %v1548, %v1606
    %v1716 = vsel %vm1612, %v1607, %v1608
    %v1717 = vsel %vm1616, %v1716, %v1715
    %v1718 = vrot.slane %v1717, 4
    %v1719 = vsel %vm1620, %v1606, %v1548
    %v1720 = vsel %vm1618, %v1607, %v1608
    %v1721 = vsel %vm1622, %v1720, %v1719
    %v1722 = vrot.slane %v1721, 6
    %v1723 = vsel %vm1612, %v1552, %v1609
    %v1724 = vsel %vm1614, %v1610, %v1611
    %v1725 = vsel %vm1616, %v1723, %v1724
    %v1726 = vsel %vm1618, %v1552, %v1609
    %v1727 = vsel %vm1620, %v1611, %v1610
    %v1728 = vsel %vm1622, %v1726, %v1727
    %v1729 = vrot.slane %v1728, 2
    %v1730 = vsel %vm1614, %v1552, %v1609
    %v1731 = vsel %vm1612, %v1610, %v1611
    %v1732 = vsel %vm1616, %v1731, %v1730
    %v1733 = vrot.slane %v1732, 4
    %v1734 = vsel %vm1620, %v1609, %v1552
    %v1735 = vsel %vm1618, %v1610, %v1611
    %v1736 = vsel %vm1622, %v1735, %v1734
    %v1737 = vrot.slane %v1736, 6
    %v1770 = vrot.slane %v1617, 7
    %v1771 = vrot.slane %v1770, 2
    %v1772 = vrot.slane %v1624, 7
    %v1773 = vrot.slane %v1772, 2
    %v1774 = vrot.slane %v1628, 7
    %v1775 = vrot.slane %v1774, 2
    %v1776 = vrot.slane %v1632, 7
    %v1777 = vrot.slane %v1776, 2
    %v1778 = vrot.slane %v1635, 7
    %v1779 = vrot.slane %v1778, 2
    %v1780 = vrot.slane %v1639, 7
    %v1781 = vrot.slane %v1780, 2
    %v1782 = vrot.slane %v1643, 7
    %v1783 = vrot.slane %v1782, 2
    %v1784 = vrot.slane %v1647, 7
    %v1785 = vrot.slane %v1784, 2
    %v1786 = vrot.slane %v1650, 7
    %v1787 = vrot.slane %v1786, 2
    %v1788 = vrot.slane %v1654, 7
    %v1789 = vrot.slane %v1788, 2
    %v1790 = vrot.slane %v1658, 7
    %v1791 = vrot.slane %v1790, 2
    %v1792 = vrot.slane %v1662, 7
    %v1793 = vrot.slane %v1792, 2
    %v1794 = vrot.slane %v1665, 7
    %v1795 = vrot.slane %v1794, 2
    %v1796 = vrot.slane %v1669, 7
    %v1797 = vrot.slane %v1796, 2
    %v1798 = vrot.slane %v1673, 7
    %v1799 = vrot.slane %v1798, 2
    %v1800 = vrot.slane %v1677, 7
    %v1801 = vrot.slane %v1800, 2
    %v1802 = vrot.slane %v1680, 7
    %v1803 = vrot.slane %v1802, 2
    %v1804 = vrot.slane %v1684, 7
    %v1805 = vrot.slane %v1804, 2
    %v1806 = vrot.slane %v1688, 7
    %v1807 = vrot.slane %v1806, 2
    %v1808 = vrot.slane %v1692, 7
    %v1809 = vrot.slane %v1808, 2
    %v1810 = vrot.slane %v1695, 7
    %v1811 = vrot.slane %v1810, 2
    %v1812 = vrot.slane %v1699, 7
    %v1813 = vrot.slane %v1812, 2
    %v1814 = vrot.slane %v1703, 7
    %v1815 = vrot.slane %v1814, 2
    %v1816 = vrot.slane %v1707, 7
    %v1817 = vrot.slane %v1816, 2
    %v1818 = vrot.slane %v1710, 7
    %v1819 = vrot.slane %v1818, 2
    %v1820 = vrot.slane %v1714, 7
    %v1821 = vrot.slane %v1820, 2
    %v1822 = vrot.slane %v1718, 7
    %v1823 = vrot.slane %v1822, 2
    %v1824 = vrot.slane %v1722, 7
    %v1825 = vrot.slane %v1824, 2
    %v1826 = vrot.slane %v1725, 7
    %v1827 = vrot.slane %v1826, 2
    %v1828 = vrot.slane %v1729, 7
    %v1829 = vrot.slane %v1828, 2
    %v1830 = vrot.slane %v1733, 7
    %v1831 = vrot.slane %v1830, 2
    %v1832 = vrot.slane %v1737, 7
    %v1833 = vrot.slane %v1832, 2
    %v1866 = vmax.f32 %v1617, %v1771
    %v1867 = vmax.f32 %v1624, %v1773
    %v1868 = vmax.f32 %v1628, %v1775
    %v1869 = vmax.f32 %v1632, %v1777
    %v1870 = vmax.f32 %v1635, %v1779
    %v1871 = vmax.f32 %v1639, %v1781
    %v1872 = vmax.f32 %v1643, %v1783
    %v1873 = vmax.f32 %v1647, %v1785
    %v1874 = vmax.f32 %v1650, %v1787
    %v1875 = vmax.f32 %v1654, %v1789
    %v1876 = vmax.f32 %v1658, %v1791
    %v1877 = vmax.f32 %v1662, %v1793
    %v1878 = vmax.f32 %v1665, %v1795
    %v1879 = vmax.f32 %v1669, %v1797
    %v1880 = vmax.f32 %v1673, %v1799
    %v1881 = vmax.f32 %v1677, %v1801
    %v1882 = vmax.f32 %v1680, %v1803
    %v1883 = vmax.f32 %v1684, %v1805
    %v1884 = vmax.f32 %v1688, %v1807
    %v1885 = vmax.f32 %v1692, %v1809
    %v1886 = vmax.f32 %v1695, %v1811
    %v1887 = vmax.f32 %v1699, %v1813
    %v1888 = vmax.f32 %v1703, %v1815
    %v1889 = vmax.f32 %v1707, %v1817
    %v1890 = vmax.f32 %v1710, %v1819
    %v1891 = vmax.f32 %v1714, %v1821
    %v1892 = vmax.f32 %v1718, %v1823
    %v1893 = vmax.f32 %v1722, %v1825
    %v1894 = vmax.f32 %v1725, %v1827
    %v1895 = vmax.f32 %v1729, %v1829
    %v1896 = vmax.f32 %v1733, %v1831
    %v1897 = vmax.f32 %v1737, %v1833
    %v1930 = vperm.slane %v1866, 0
    %v1931 = vperm.slane %v1866, 2
    %v1932 = vperm.slane %v1866, 4
    %v1933 = vperm.slane %v1866, 6
    %v1934 = vperm.slane %v1867, 0
    %v1935 = vperm.slane %v1867, 2
    %v1936 = vperm.slane %v1867, 4
    %v1937 = vperm.slane %v1867, 6
    %v1938 = vperm.slane %v1868, 0
    %v1939 = vperm.slane %v1868, 2
    %v1940 = vperm.slane %v1868, 4
    %v1941 = vperm.slane %v1868, 6
    %v1942 = vperm.slane %v1869, 0
    %v1943 = vperm.slane %v1869, 2
    %v1944 = vperm.slane %v1869, 4
    %v1945 = vperm.slane %v1869, 6
    %v1946 = vperm.slane %v1870, 0
    %v1947 = vperm.slane %v1870, 2
    %v1948 = vperm.slane %v1870, 4
    %v1949 = vperm.slane %v1870, 6
    %v1950 = vperm.slane %v1871, 0
    %v1951 = vperm.slane %v1871, 2
    %v1952 = vperm.slane %v1871, 4
    %v1953 = vperm.slane %v1871, 6
    %v1954 = vperm.slane %v1872, 0
    %v1955 = vperm.slane %v1872, 2
    %v1956 = vperm.slane %v1872, 4
    %v1957 = vperm.slane %v1872, 6
    %v1958 = vperm.slane %v1873, 0
    %v1959 = vperm.slane %v1873, 2
    %v1960 = vperm.slane %v1873, 4
    %v1961 = vperm.slane %v1873, 6
    %v1962 = vperm.slane %v1874, 0
    %v1963 = vperm.slane %v1874, 2
    %v1964 = vperm.slane %v1874, 4
    %v1965 = vperm.slane %v1874, 6
    %v1966 = vperm.slane %v1875, 0
    %v1967 = vperm.slane %v1875, 2
    %v1968 = vperm.slane %v1875, 4
    %v1969 = vperm.slane %v1875, 6
    %v1970 = vperm.slane %v1876, 0
    %v1971 = vperm.slane %v1876, 2
    %v1972 = vperm.slane %v1876, 4
    %v1973 = vperm.slane %v1876, 6
    %v1974 = vperm.slane %v1877, 0
    %v1975 = vperm.slane %v1877, 2
    %v1976 = vperm.slane %v1877, 4
    %v1977 = vperm.slane %v1877, 6
    %v1978 = vperm.slane %v1878, 0
    %v1979 = vperm.slane %v1878, 2
    %v1980 = vperm.slane %v1878, 4
    %v1981 = vperm.slane %v1878, 6
    %v1982 = vperm.slane %v1879, 0
    %v1983 = vperm.slane %v1879, 2
    %v1984 = vperm.slane %v1879, 4
    %v1985 = vperm.slane %v1879, 6
    %v1986 = vperm.slane %v1880, 0
    %v1987 = vperm.slane %v1880, 2
    %v1988 = vperm.slane %v1880, 4
    %v1989 = vperm.slane %v1880, 6
    %v1990 = vperm.slane %v1881, 0
    %v1991 = vperm.slane %v1881, 2
    %v1992 = vperm.slane %v1881, 4
    %v1993 = vperm.slane %v1881, 6
    %v1994 = vperm.slane %v1882, 0
    %v1995 = vperm.slane %v1882, 2
    %v1996 = vperm.slane %v1882, 4
    %v1997 = vperm.slane %v1882, 6
    %v1998 = vperm.slane %v1883, 0
    %v1999 = vperm.slane %v1883, 2
    %v2000 = vperm.slane %v1883, 4
    %v2001 = vperm.slane %v1883, 6
    %v2002 = vperm.slane %v1884, 0
    %v2003 = vperm.slane %v1884, 2
    %v2004 = vperm.slane %v1884, 4
    %v2005 = vperm.slane %v1884, 6
    %v2006 = vperm.slane %v1885, 0
    %v2007 = vperm.slane %v1885, 2
    %v2008 = vperm.slane %v1885, 4
    %v2009 = vperm.slane %v1885, 6
    %v2010 = vperm.slane %v1886, 0
    %v2011 = vperm.slane %v1886, 2
    %v2012 = vperm.slane %v1886, 4
    %v2013 = vperm.slane %v1886, 6
    %v2014 = vperm.slane %v1887, 0
    %v2015 = vperm.slane %v1887, 2
    %v2016 = vperm.slane %v1887, 4
    %v2017 = vperm.slane %v1887, 6
    %v2018 = vperm.slane %v1888, 0
    %v2019 = vperm.slane %v1888, 2
    %v2020 = vperm.slane %v1888, 4
    %v2021 = vperm.slane %v1888, 6
    %v2022 = vperm.slane %v1889, 0
    %v2023 = vperm.slane %v1889, 2
    %v2024 = vperm.slane %v1889, 4
    %v2025 = vperm.slane %v1889, 6
    %v2026 = vperm.slane %v1890, 0
    %v2027 = vperm.slane %v1890, 2
    %v2028 = vperm.slane %v1890, 4
    %v2029 = vperm.slane %v1890, 6
    %v2030 = vperm.slane %v1891, 0
    %v2031 = vperm.slane %v1891, 2
    %v2032 = vperm.slane %v1891, 4
    %v2033 = vperm.slane %v1891, 6
    %v2034 = vperm.slane %v1892, 0
    %v2035 = vperm.slane %v1892, 2
    %v2036 = vperm.slane %v1892, 4
    %v2037 = vperm.slane %v1892, 6
    %v2038 = vperm.slane %v1893, 0
    %v2039 = vperm.slane %v1893, 2
    %v2040 = vperm.slane %v1893, 4
    %v2041 = vperm.slane %v1893, 6
    %v2042 = vperm.slane %v1894, 0
    %v2043 = vperm.slane %v1894, 2
    %v2044 = vperm.slane %v1894, 4
    %v2045 = vperm.slane %v1894, 6
    %v2046 = vperm.slane %v1895, 0
    %v2047 = vperm.slane %v1895, 2
    %v2048 = vperm.slane %v1895, 4
    %v2049 = vperm.slane %v1895, 6
    %v2050 = vperm.slane %v1896, 0
    %v2051 = vperm.slane %v1896, 2
    %v2052 = vperm.slane %v1896, 4
    %v2053 = vperm.slane %v1896, 6
    %v2054 = vperm.slane %v1897, 0
    %v2055 = vperm.slane %v1897, 2
    %v2056 = vperm.slane %v1897, 4
    %v2057 = vperm.slane %v1897, 6
    %v2186 = vpack.c.bf16 %v1930, %v1930
    %v2187 = vpack.c.bf16 %v1931, %v1931
    %v2188 = vpack.c.bf16 %v1932, %v1932
    %v2189 = vpack.c.bf16 %v1933, %v1933
    %v2190 = vpack.c.bf16 %v1934, %v1934
    %v2191 = vpack.c.bf16 %v1935, %v1935
    %v2192 = vpack.c.bf16 %v1936, %v1936
    %v2193 = vpack.c.bf16 %v1937, %v1937
    %v2194 = vpack.c.bf16 %v1938, %v1938
    %v2195 = vpack.c.bf16 %v1939, %v1939
    %v2196 = vpack.c.bf16 %v1940, %v1940
    %v2197 = vpack.c.bf16 %v1941, %v1941
    %v2198 = vpack.c.bf16 %v1942, %v1942
    %v2199 = vpack.c.bf16 %v1943, %v1943
    %v2200 = vpack.c.bf16 %v1944, %v1944
    %v2201 = vpack.c.bf16 %v1945, %v1945
    %v2202 = vpack.c.bf16 %v1946, %v1946
    %v2203 = vpack.c.bf16 %v1947, %v1947
    %v2204 = vpack.c.bf16 %v1948, %v1948
    %v2205 = vpack.c.bf16 %v1949, %v1949
    %v2206 = vpack.c.bf16 %v1950, %v1950
    %v2207 = vpack.c.bf16 %v1951, %v1951
    %v2208 = vpack.c.bf16 %v1952, %v1952
    %v2209 = vpack.c.bf16 %v1953, %v1953
    %v2210 = vpack.c.bf16 %v1954, %v1954
    %v2211 = vpack.c.bf16 %v1955, %v1955
    %v2212 = vpack.c.bf16 %v1956, %v1956
    %v2213 = vpack.c.bf16 %v1957, %v1957
    %v2214 = vpack.c.bf16 %v1958, %v1958
    %v2215 = vpack.c.bf16 %v1959, %v1959
    %v2216 = vpack.c.bf16 %v1960, %v1960
    %v2217 = vpack.c.bf16 %v1961, %v1961
    %v2218 = vpack.c.bf16 %v1962, %v1962
    %v2219 = vpack.c.bf16 %v1963, %v1963
    %v2220 = vpack.c.bf16 %v1964, %v1964
    %v2221 = vpack.c.bf16 %v1965, %v1965
    %v2222 = vpack.c.bf16 %v1966, %v1966
    %v2223 = vpack.c.bf16 %v1967, %v1967
    %v2224 = vpack.c.bf16 %v1968, %v1968
    %v2225 = vpack.c.bf16 %v1969, %v1969
    %v2226 = vpack.c.bf16 %v1970, %v1970
    %v2227 = vpack.c.bf16 %v1971, %v1971
    %v2228 = vpack.c.bf16 %v1972, %v1972
    %v2229 = vpack.c.bf16 %v1973, %v1973
    %v2230 = vpack.c.bf16 %v1974, %v1974
    %v2231 = vpack.c.bf16 %v1975, %v1975
    %v2232 = vpack.c.bf16 %v1976, %v1976
    %v2233 = vpack.c.bf16 %v1977, %v1977
    %v2234 = vpack.c.bf16 %v1978, %v1978
    %v2235 = vpack.c.bf16 %v1979, %v1979
    %v2236 = vpack.c.bf16 %v1980, %v1980
    %v2237 = vpack.c.bf16 %v1981, %v1981
    %v2238 = vpack.c.bf16 %v1982, %v1982
    %v2239 = vpack.c.bf16 %v1983, %v1983
    %v2240 = vpack.c.bf16 %v1984, %v1984
    %v2241 = vpack.c.bf16 %v1985, %v1985
    %v2242 = vpack.c.bf16 %v1986, %v1986
    %v2243 = vpack.c.bf16 %v1987, %v1987
    %v2244 = vpack.c.bf16 %v1988, %v1988
    %v2245 = vpack.c.bf16 %v1989, %v1989
    %v2246 = vpack.c.bf16 %v1990, %v1990
    %v2247 = vpack.c.bf16 %v1991, %v1991
    %v2248 = vpack.c.bf16 %v1992, %v1992
    %v2249 = vpack.c.bf16 %v1993, %v1993
    %v2250 = vpack.c.bf16 %v1994, %v1994
    %v2251 = vpack.c.bf16 %v1995, %v1995
    %v2252 = vpack.c.bf16 %v1996, %v1996
    %v2253 = vpack.c.bf16 %v1997, %v1997
    %v2254 = vpack.c.bf16 %v1998, %v1998
    %v2255 = vpack.c.bf16 %v1999, %v1999
    %v2256 = vpack.c.bf16 %v2000, %v2000
    %v2257 = vpack.c.bf16 %v2001, %v2001
    %v2258 = vpack.c.bf16 %v2002, %v2002
    %v2259 = vpack.c.bf16 %v2003, %v2003
    %v2260 = vpack.c.bf16 %v2004, %v2004
    %v2261 = vpack.c.bf16 %v2005, %v2005
    %v2262 = vpack.c.bf16 %v2006, %v2006
    %v2263 = vpack.c.bf16 %v2007, %v2007
    %v2264 = vpack.c.bf16 %v2008, %v2008
    %v2265 = vpack.c.bf16 %v2009, %v2009
    %v2266 = vpack.c.bf16 %v2010, %v2010
    %v2267 = vpack.c.bf16 %v2011, %v2011
    %v2268 = vpack.c.bf16 %v2012, %v2012
    %v2269 = vpack.c.bf16 %v2013, %v2013
    %v2270 = vpack.c.bf16 %v2014, %v2014
    %v2271 = vpack.c.bf16 %v2015, %v2015
    %v2272 = vpack.c.bf16 %v2016, %v2016
    %v2273 = vpack.c.bf16 %v2017, %v2017
    %v2274 = vpack.c.bf16 %v2018, %v2018
    %v2275 = vpack.c.bf16 %v2019, %v2019
    %v2276 = vpack.c.bf16 %v2020, %v2020
    %v2277 = vpack.c.bf16 %v2021, %v2021
    %v2278 = vpack.c.bf16 %v2022, %v2022
    %v2279 = vpack.c.bf16 %v2023, %v2023
    %v2280 = vpack.c.bf16 %v2024, %v2024
    %v2281 = vpack.c.bf16 %v2025, %v2025
    %v2282 = vpack.c.bf16 %v2026, %v2026
    %v2283 = vpack.c.bf16 %v2027, %v2027
    %v2284 = vpack.c.bf16 %v2028, %v2028
    %v2285 = vpack.c.bf16 %v2029, %v2029
    %v2286 = vpack.c.bf16 %v2030, %v2030
    %v2287 = vpack.c.bf16 %v2031, %v2031
    %v2288 = vpack.c.bf16 %v2032, %v2032
    %v2289 = vpack.c.bf16 %v2033, %v2033
    %v2290 = vpack.c.bf16 %v2034, %v2034
    %v2291 = vpack.c.bf16 %v2035, %v2035
    %v2292 = vpack.c.bf16 %v2036, %v2036
    %v2293 = vpack.c.bf16 %v2037, %v2037
    %v2294 = vpack.c.bf16 %v2038, %v2038
    %v2295 = vpack.c.bf16 %v2039, %v2039
    %v2296 = vpack.c.bf16 %v2040, %v2040
    %v2297 = vpack.c.bf16 %v2041, %v2041
    %v2298 = vpack.c.bf16 %v2042, %v2042
    %v2299 = vpack.c.bf16 %v2043, %v2043
    %v2300 = vpack.c.bf16 %v2044, %v2044
    %v2301 = vpack.c.bf16 %v2045, %v2045
    %v2302 = vpack.c.bf16 %v2046, %v2046
    %v2303 = vpack.c.bf16 %v2047, %v2047
    %v2304 = vpack.c.bf16 %v2048, %v2048
    %v2305 = vpack.c.bf16 %v2049, %v2049
    %v2306 = vpack.c.bf16 %v2050, %v2050
    %v2307 = vpack.c.bf16 %v2051, %v2051
    %v2308 = vpack.c.bf16 %v2052, %v2052
    %v2309 = vpack.c.bf16 %v2053, %v2053
    %v2310 = vpack.c.bf16 %v2054, %v2054
    %v2311 = vpack.c.bf16 %v2055, %v2055
    %v2312 = vpack.c.bf16 %v2056, %v2056
    %v2313 = vpack.c.bf16 %v2057, %v2057
    %v2314 = vld [vmem:[#allocation9] sm:$0xff]
    %v2315 = vld [vmem:[#allocation9 + $0x8] sm:$0xff]
    %v2316 = vld [vmem:[#allocation9 + $0x10] sm:$0xff]
    %v2317 = vld [vmem:[#allocation9 + $0x18] sm:$0xff]
    %v2318 = vld [vmem:[#allocation9 + $0x20] sm:$0xff]
    %v2319 = vld [vmem:[#allocation9 + $0x28] sm:$0xff]
    %v2320 = vld [vmem:[#allocation9 + $0x30] sm:$0xff]
    %v2321 = vld [vmem:[#allocation9 + $0x38] sm:$0xff]
    %v2322 = vld [vmem:[#allocation9 + $0x40] sm:$0xff]
    %v2323 = vld [vmem:[#allocation9 + $0x48] sm:$0xff]
    %v2324 = vld [vmem:[#allocation9 + $0x50] sm:$0xff]
    %v2325 = vld [vmem:[#allocation9 + $0x58] sm:$0xff]
    %v2326 = vld [vmem:[#allocation9 + $0x60] sm:$0xff]
    %v2327 = vld [vmem:[#allocation9 + $0x68] sm:$0xff]
    %v2328 = vld [vmem:[#allocation9 + $0x70] sm:$0xff]
    %v2329 = vld [vmem:[#allocation9 + $0x78] sm:$0xff]
    %v2330 = vld [vmem:[#allocation9 + $0x80] sm:$0xff]
    %v2331 = vld [vmem:[#allocation9 + $0x88] sm:$0xff]
    %v2332 = vld [vmem:[#allocation9 + $0x90] sm:$0xff]
    %v2333 = vld [vmem:[#allocation9 + $0x98] sm:$0xff]
    %v2334 = vld [vmem:[#allocation9 + $0xa0] sm:$0xff]
    %v2335 = vld [vmem:[#allocation9 + $0xa8] sm:$0xff]
    %v2336 = vld [vmem:[#allocation9 + $0xb0] sm:$0xff]
    %v2337 = vld [vmem:[#allocation9 + $0xb8] sm:$0xff]
    %v2338 = vld [vmem:[#allocation9 + $0xc0] sm:$0xff]
    %v2339 = vld [vmem:[#allocation9 + $0xc8] sm:$0xff]
    %v2340 = vld [vmem:[#allocation9 + $0xd0] sm:$0xff]
    %v2341 = vld [vmem:[#allocation9 + $0xd8] sm:$0xff]
    %v2342 = vld [vmem:[#allocation9 + $0xe0] sm:$0xff]
    %v2343 = vld [vmem:[#allocation9 + $0xe8] sm:$0xff]
    %v2344 = vld [vmem:[#allocation9 + $0xf0] sm:$0xff]
    %v2345 = vld [vmem:[#allocation9 + $0xf8] sm:$0xff]
    %v2346 = vld [vmem:[#allocation9 + $0x100] sm:$0xff]
    %v2347 = vld [vmem:[#allocation9 + $0x108] sm:$0xff]
    %v2348 = vld [vmem:[#allocation9 + $0x110] sm:$0xff]
    %v2349 = vld [vmem:[#allocation9 + $0x118] sm:$0xff]
    %v2350 = vld [vmem:[#allocation9 + $0x120] sm:$0xff]
    %v2351 = vld [vmem:[#allocation9 + $0x128] sm:$0xff]
    %v2352 = vld [vmem:[#allocation9 + $0x130] sm:$0xff]
    %v2353 = vld [vmem:[#allocation9 + $0x138] sm:$0xff]
    %v2354 = vld [vmem:[#allocation9 + $0x140] sm:$0xff]
    %v2355 = vld [vmem:[#allocation9 + $0x148] sm:$0xff]
    %v2356 = vld [vmem:[#allocation9 + $0x150] sm:$0xff]
    %v2357 = vld [vmem:[#allocation9 + $0x158] sm:$0xff]
    %v2358 = vld [vmem:[#allocation9 + $0x160] sm:$0xff]
    %v2359 = vld [vmem:[#allocation9 + $0x168] sm:$0xff]
    %v2360 = vld [vmem:[#allocation9 + $0x170] sm:$0xff]
    %v2361 = vld [vmem:[#allocation9 + $0x178] sm:$0xff]
    %v2362 = vld [vmem:[#allocation9 + $0x180] sm:$0xff]
    %v2363 = vld [vmem:[#allocation9 + $0x188] sm:$0xff]
    %v2364 = vld [vmem:[#allocation9 + $0x190] sm:$0xff]
    %v2365 = vld [vmem:[#allocation9 + $0x198] sm:$0xff]
    %v2366 = vld [vmem:[#allocation9 + $0x1a0] sm:$0xff]
    %v2367 = vld [vmem:[#allocation9 + $0x1a8] sm:$0xff]
    %v2368 = vld [vmem:[#allocation9 + $0x1b0] sm:$0xff]
    %v2369 = vld [vmem:[#allocation9 + $0x1b8] sm:$0xff]
    %v2370 = vld [vmem:[#allocation9 + $0x1c0] sm:$0xff]
    %v2371 = vld [vmem:[#allocation9 + $0x1c8] sm:$0xff]
    %v2372 = vld [vmem:[#allocation9 + $0x1d0] sm:$0xff]
    %v2373 = vld [vmem:[#allocation9 + $0x1d8] sm:$0xff]
    %v2374 = vld [vmem:[#allocation9 + $0x1e0] sm:$0xff]
    %v2375 = vld [vmem:[#allocation9 + $0x1e8] sm:$0xff]
    %v2376 = vld [vmem:[#allocation9 + $0x1f0] sm:$0xff]
    %v2377 = vld [vmem:[#allocation9 + $0x1f8] sm:$0xff]
    %v2378 = vld [vmem:[#allocation9 + $0x200] sm:$0xff]
    %v2379 = vld [vmem:[#allocation9 + $0x208] sm:$0xff]
    %v2380 = vld [vmem:[#allocation9 + $0x210] sm:$0xff]
    %v2381 = vld [vmem:[#allocation9 + $0x218] sm:$0xff]
    %v2382 = vld [vmem:[#allocation9 + $0x220] sm:$0xff]
    %v2383 = vld [vmem:[#allocation9 + $0x228] sm:$0xff]
    %v2384 = vld [vmem:[#allocation9 + $0x230] sm:$0xff]
    %v2385 = vld [vmem:[#allocation9 + $0x238] sm:$0xff]
    %v2386 = vld [vmem:[#allocation9 + $0x240] sm:$0xff]
    %v2387 = vld [vmem:[#allocation9 + $0x248] sm:$0xff]
    %v2388 = vld [vmem:[#allocation9 + $0x250] sm:$0xff]
    %v2389 = vld [vmem:[#allocation9 + $0x258] sm:$0xff]
    %v2390 = vld [vmem:[#allocation9 + $0x260] sm:$0xff]
    %v2391 = vld [vmem:[#allocation9 + $0x268] sm:$0xff]
    %v2392 = vld [vmem:[#allocation9 + $0x270] sm:$0xff]
    %v2393 = vld [vmem:[#allocation9 + $0x278] sm:$0xff]
    %v2394 = vld [vmem:[#allocation9 + $0x280] sm:$0xff]
    %v2395 = vld [vmem:[#allocation9 + $0x288] sm:$0xff]
    %v2396 = vld [vmem:[#allocation9 + $0x290] sm:$0xff]
    %v2397 = vld [vmem:[#allocation9 + $0x298] sm:$0xff]
    %v2398 = vld [vmem:[#allocation9 + $0x2a0] sm:$0xff]
    %v2399 = vld [vmem:[#allocation9 + $0x2a8] sm:$0xff]
    %v2400 = vld [vmem:[#allocation9 + $0x2b0] sm:$0xff]
    %v2401 = vld [vmem:[#allocation9 + $0x2b8] sm:$0xff]
    %v2402 = vld [vmem:[#allocation9 + $0x2c0] sm:$0xff]
    %v2403 = vld [vmem:[#allocation9 + $0x2c8] sm:$0xff]
    %v2404 = vld [vmem:[#allocation9 + $0x2d0] sm:$0xff]
    %v2405 = vld [vmem:[#allocation9 + $0x2d8] sm:$0xff]
    %v2406 = vld [vmem:[#allocation9 + $0x2e0] sm:$0xff]
    %v2407 = vld [vmem:[#allocation9 + $0x2e8] sm:$0xff]
    %v2408 = vld [vmem:[#allocation9 + $0x2f0] sm:$0xff]
    %v2409 = vld [vmem:[#allocation9 + $0x2f8] sm:$0xff]
    %v2410 = vld [vmem:[#allocation9 + $0x300] sm:$0xff]
    %v2411 = vld [vmem:[#allocation9 + $0x308] sm:$0xff]
    %v2412 = vld [vmem:[#allocation9 + $0x310] sm:$0xff]
    %v2413 = vld [vmem:[#allocation9 + $0x318] sm:$0xff]
    %v2414 = vld [vmem:[#allocation9 + $0x320] sm:$0xff]
    %v2415 = vld [vmem:[#allocation9 + $0x328] sm:$0xff]
    %v2416 = vld [vmem:[#allocation9 + $0x330] sm:$0xff]
    %v2417 = vld [vmem:[#allocation9 + $0x338] sm:$0xff]
    %v2418 = vld [vmem:[#allocation9 + $0x340] sm:$0xff]
    %v2419 = vld [vmem:[#allocation9 + $0x348] sm:$0xff]
    %v2420 = vld [vmem:[#allocation9 + $0x350] sm:$0xff]
    %v2421 = vld [vmem:[#allocation9 + $0x358] sm:$0xff]
    %v2422 = vld [vmem:[#allocation9 + $0x360] sm:$0xff]
    %v2423 = vld [vmem:[#allocation9 + $0x368] sm:$0xff]
    %v2424 = vld [vmem:[#allocation9 + $0x370] sm:$0xff]
    %v2425 = vld [vmem:[#allocation9 + $0x378] sm:$0xff]
    %v2426 = vld [vmem:[#allocation9 + $0x380] sm:$0xff]
    %v2427 = vld [vmem:[#allocation9 + $0x388] sm:$0xff]
    %v2428 = vld [vmem:[#allocation9 + $0x390] sm:$0xff]
    %v2429 = vld [vmem:[#allocation9 + $0x398] sm:$0xff]
    %v2430 = vld [vmem:[#allocation9 + $0x3a0] sm:$0xff]
    %v2431 = vld [vmem:[#allocation9 + $0x3a8] sm:$0xff]
    %v2432 = vld [vmem:[#allocation9 + $0x3b0] sm:$0xff]
    %v2433 = vld [vmem:[#allocation9 + $0x3b8] sm:$0xff]
    %v2434 = vld [vmem:[#allocation9 + $0x3c0] sm:$0xff]
    %v2435 = vld [vmem:[#allocation9 + $0x3c8] sm:$0xff]
    %v2436 = vld [vmem:[#allocation9 + $0x3d0] sm:$0xff]
    %v2437 = vld [vmem:[#allocation9 + $0x3d8] sm:$0xff]
    %v2438 = vld [vmem:[#allocation9 + $0x3e0] sm:$0xff]
    %v2439 = vld [vmem:[#allocation9 + $0x3e8] sm:$0xff]
    %v2440 = vld [vmem:[#allocation9 + $0x3f0] sm:$0xff]
    %v2441 = vld [vmem:[#allocation9 + $0x3f8] sm:$0xff]
    %v2570 = vunpack.c.l.b16 %v2186
    %v2571 = vunpack.c.l.b16 %v2187
    %v2572 = vunpack.c.l.b16 %v2188
    %v2573 = vunpack.c.l.b16 %v2189
    %v2574 = vunpack.c.l.b16 %v2190
    %v2575 = vunpack.c.l.b16 %v2191
    %v2576 = vunpack.c.l.b16 %v2192
    %v2577 = vunpack.c.l.b16 %v2193
    %v2578 = vunpack.c.l.b16 %v2194
    %v2579 = vunpack.c.l.b16 %v2195
    %v2580 = vunpack.c.l.b16 %v2196
    %v2581 = vunpack.c.l.b16 %v2197
    %v2582 = vunpack.c.l.b16 %v2198
    %v2583 = vunpack.c.l.b16 %v2199
    %v2584 = vunpack.c.l.b16 %v2200
    %v2585 = vunpack.c.l.b16 %v2201
    %v2586 = vunpack.c.l.b16 %v2202
    %v2587 = vunpack.c.l.b16 %v2203
    %v2588 = vunpack.c.l.b16 %v2204
    %v2589 = vunpack.c.l.b16 %v2205
    %v2590 = vunpack.c.l.b16 %v2206
    %v2591 = vunpack.c.l.b16 %v2207
    %v2592 = vunpack.c.l.b16 %v2208
    %v2593 = vunpack.c.l.b16 %v2209
    %v2594 = vunpack.c.l.b16 %v2210
    %v2595 = vunpack.c.l.b16 %v2211
    %v2596 = vunpack.c.l.b16 %v2212
    %v2597 = vunpack.c.l.b16 %v2213
    %v2598 = vunpack.c.l.b16 %v2214
    %v2599 = vunpack.c.l.b16 %v2215
    %v2600 = vunpack.c.l.b16 %v2216
    %v2601 = vunpack.c.l.b16 %v2217
    %v2602 = vunpack.c.l.b16 %v2218
    %v2603 = vunpack.c.l.b16 %v2219
    %v2604 = vunpack.c.l.b16 %v2220
    %v2605 = vunpack.c.l.b16 %v2221
    %v2606 = vunpack.c.l.b16 %v2222
    %v2607 = vunpack.c.l.b16 %v2223
    %v2608 = vunpack.c.l.b16 %v2224
    %v2609 = vunpack.c.l.b16 %v2225
    %v2610 = vunpack.c.l.b16 %v2226
    %v2611 = vunpack.c.l.b16 %v2227
    %v2612 = vunpack.c.l.b16 %v2228
    %v2613 = vunpack.c.l.b16 %v2229
    %v2614 = vunpack.c.l.b16 %v2230
    %v2615 = vunpack.c.l.b16 %v2231
    %v2616 = vunpack.c.l.b16 %v2232
    %v2617 = vunpack.c.l.b16 %v2233
    %v2618 = vunpack.c.l.b16 %v2234
    %v2619 = vunpack.c.l.b16 %v2235
    %v2620 = vunpack.c.l.b16 %v2236
    %v2621 = vunpack.c.l.b16 %v2237
    %v2622 = vunpack.c.l.b16 %v2238
    %v2623 = vunpack.c.l.b16 %v2239
    %v2624 = vunpack.c.l.b16 %v2240
    %v2625 = vunpack.c.l.b16 %v2241
    %v2626 = vunpack.c.l.b16 %v2242
    %v2627 = vunpack.c.l.b16 %v2243
    %v2628 = vunpack.c.l.b16 %v2244
    %v2629 = vunpack.c.l.b16 %v2245
    %v2630 = vunpack.c.l.b16 %v2246
    %v2631 = vunpack.c.l.b16 %v2247
    %v2632 = vunpack.c.l.b16 %v2248
    %v2633 = vunpack.c.l.b16 %v2249
    %v2634 = vunpack.c.l.b16 %v2250
    %v2635 = vunpack.c.l.b16 %v2251
    %v2636 = vunpack.c.l.b16 %v2252
    %v2637 = vunpack.c.l.b16 %v2253
    %v2638 = vunpack.c.l.b16 %v2254
    %v2639 = vunpack.c.l.b16 %v2255
    %v2640 = vunpack.c.l.b16 %v2256
    %v2641 = vunpack.c.l.b16 %v2257
    %v2642 = vunpack.c.l.b16 %v2258
    %v2643 = vunpack.c.l.b16 %v2259
    %v2644 = vunpack.c.l.b16 %v2260
    %v2645 = vunpack.c.l.b16 %v2261
    %v2646 = vunpack.c.l.b16 %v2262
    %v2647 = vunpack.c.l.b16 %v2263
    %v2648 = vunpack.c.l.b16 %v2264
    %v2649 = vunpack.c.l.b16 %v2265
    %v2650 = vunpack.c.l.b16 %v2266
    %v2651 = vunpack.c.l.b16 %v2267
    %v2652 = vunpack.c.l.b16 %v2268
    %v2653 = vunpack.c.l.b16 %v2269
    %v2654 = vunpack.c.l.b16 %v2270
    %v2655 = vunpack.c.l.b16 %v2271
    %v2656 = vunpack.c.l.b16 %v2272
    %v2657 = vunpack.c.l.b16 %v2273
    %v2658 = vunpack.c.l.b16 %v2274
    %v2659 = vunpack.c.l.b16 %v2275
    %v2660 = vunpack.c.l.b16 %v2276
    %v2661 = vunpack.c.l.b16 %v2277
    %v2662 = vunpack.c.l.b16 %v2278
    %v2663 = vunpack.c.l.b16 %v2279
    %v2664 = vunpack.c.l.b16 %v2280
    %v2665 = vunpack.c.l.b16 %v2281
    %v2666 = vunpack.c.l.b16 %v2282
    %v2667 = vunpack.c.l.b16 %v2283
    %v2668 = vunpack.c.l.b16 %v2284
    %v2669 = vunpack.c.l.b16 %v2285
    %v2670 = vunpack.c.l.b16 %v2286
    %v2671 = vunpack.c.l.b16 %v2287
    %v2672 = vunpack.c.l.b16 %v2288
    %v2673 = vunpack.c.l.b16 %v2289
    %v2674 = vunpack.c.l.b16 %v2290
    %v2675 = vunpack.c.l.b16 %v2291
    %v2676 = vunpack.c.l.b16 %v2292
    %v2677 = vunpack.c.l.b16 %v2293
    %v2678 = vunpack.c.l.b16 %v2294
    %v2679 = vunpack.c.l.b16 %v2295
    %v2680 = vunpack.c.l.b16 %v2296
    %v2681 = vunpack.c.l.b16 %v2297
    %v2682 = vunpack.c.l.b16 %v2298
    %v2683 = vunpack.c.l.b16 %v2299
    %v2684 = vunpack.c.l.b16 %v2300
    %v2685 = vunpack.c.l.b16 %v2301
    %v2686 = vunpack.c.l.b16 %v2302
    %v2687 = vunpack.c.l.b16 %v2303
    %v2688 = vunpack.c.l.b16 %v2304
    %v2689 = vunpack.c.l.b16 %v2305
    %v2690 = vunpack.c.l.b16 %v2306
    %v2691 = vunpack.c.l.b16 %v2307
    %v2692 = vunpack.c.l.b16 %v2308
    %v2693 = vunpack.c.l.b16 %v2309
    %v2694 = vunpack.c.l.b16 %v2310
    %v2695 = vunpack.c.l.b16 %v2311
    %v2696 = vunpack.c.l.b16 %v2312
    %v2697 = vunpack.c.l.b16 %v2313
    %v2698 = vrot.slane %v2574, 7
    %vm2699 = vcmask 1041409
    %v2700 = vsel %vm2699, %v2698, %v2570
    %v2701 = vrot.slane %v2578, 6
    %vm2702 = vcmask 1042434
    %v2703 = vsel %vm2702, %v2701, %v2700
    %v2704 = vrot.slane %v2582, 5
    %vm2705 = vcmask 1043459
    %v2706 = vsel %vm2705, %v2704, %v2703
    %v2707 = vrot.slane %v2586, 4
    %vm2708 = vcmask 1044484
    %v2709 = vsel %vm2708, %v2707, %v2706
    %v2710 = vrot.slane %v2590, 3
    %vm2711 = vcmask 1045509
    %v2712 = vsel %vm2711, %v2710, %v2709
    %v2713 = vrot.slane %v2594, 2
    %vm2714 = vcmask 1046534
    %v2715 = vsel %vm2714, %v2713, %v2712
    %v2716 = vrot.slane %v2598, 1
    %vm2717 = vcmask 1047559
    %v2718 = vsel %vm2717, %v2716, %v2715
    %v2719 = vrot.slane %v2575, 7
    %v2720 = vsel %vm2699, %v2719, %v2571
    %v2721 = vrot.slane %v2579, 6
    %v2722 = vsel %vm2702, %v2721, %v2720
    %v2723 = vrot.slane %v2583, 5
    %v2724 = vsel %vm2705, %v2723, %v2722
    %v2725 = vrot.slane %v2587, 4
    %v2726 = vsel %vm2708, %v2725, %v2724
    %v2727 = vrot.slane %v2591, 3
    %v2728 = vsel %vm2711, %v2727, %v2726
    %v2729 = vrot.slane %v2595, 2
    %v2730 = vsel %vm2714, %v2729, %v2728
    %v2731 = vrot.slane %v2599, 1
    %v2732 = vsel %vm2717, %v2731, %v2730
    %v2733 = vrot.slane %v2576, 7
    %v2734 = vsel %vm2699, %v2733, %v2572
    %v2735 = vrot.slane %v2580, 6
    %v2736 = vsel %vm2702, %v2735, %v2734
    %v2737 = vrot.slane %v2584, 5
    %v2738 = vsel %vm2705, %v2737, %v2736
    %v2739 = vrot.slane %v2588, 4
    %v2740 = vsel %vm2708, %v2739, %v2738
    %v2741 = vrot.slane %v2592, 3
    %v2742 = vsel %vm2711, %v2741, %v2740
    %v2743 = vrot.slane %v2596, 2
    %v2744 = vsel %vm2714, %v2743, %v2742
    %v2745 = vrot.slane %v2600, 1
    %v2746 = vsel %vm2717, %v2745, %v2744
    %v2747 = vrot.slane %v2577, 7
    %v2748 = vsel %vm2699, %v2747, %v2573
    %v2749 = vrot.slane %v2581, 6
    %v2750 = vsel %vm2702, %v2749, %v2748
    %v2751 = vrot.slane %v2585, 5
    %v2752 = vsel %vm2705, %v2751, %v2750
    %v2753 = vrot.slane %v2589, 4
    %v2754 = vsel %vm2708, %v2753, %v2752
    %v2755 = vrot.slane %v2593, 3
    %v2756 = vsel %vm2711, %v2755, %v2754
    %v2757 = vrot.slane %v2597, 2
    %v2758 = vsel %vm2714, %v2757, %v2756
    %v2759 = vrot.slane %v2601, 1
    %v2760 = vsel %vm2717, %v2759, %v2758
    %v2761 = vrot.slane %v2606, 7
    %v2762 = vsel %vm2699, %v2761, %v2602
    %v2763 = vrot.slane %v2610, 6
    %v2764 = vsel %vm2702, %v2763, %v2762
    %v2765 = vrot.slane %v2614, 5
    %v2766 = vsel %vm2705, %v2765, %v2764
    %v2767 = vrot.slane %v2618, 4
    %v2768 = vsel %vm2708, %v2767, %v2766
    %v2769 = vrot.slane %v2622, 3
    %v2770 = vsel %vm2711, %v2769, %v2768
    %v2771 = vrot.slane %v2626, 2
    %v2772 = vsel %vm2714, %v2771, %v2770
    %v2773 = vrot.slane %v2630, 1
    %v2774 = vsel %vm2717, %v2773, %v2772
    %v2775 = vrot.slane %v2607, 7
    %v2776 = vsel %vm2699, %v2775, %v2603
    %v2777 = vrot.slane %v2611, 6
    %v2778 = vsel %vm2702, %v2777, %v2776
    %v2779 = vrot.slane %v2615, 5
    %v2780 = vsel %vm2705, %v2779, %v2778
    %v2781 = vrot.slane %v2619, 4
    %v2782 = vsel %vm2708, %v2781, %v2780
    %v2783 = vrot.slane %v2623, 3
    %v2784 = vsel %vm2711, %v2783, %v2782
    %v2785 = vrot.slane %v2627, 2
    %v2786 = vsel %vm2714, %v2785, %v2784
    %v2787 = vrot.slane %v2631, 1
    %v2788 = vsel %vm2717, %v2787, %v2786
    %v2789 = vrot.slane %v2608, 7
    %v2790 = vsel %vm2699, %v2789, %v2604
    %v2791 = vrot.slane %v2612, 6
    %v2792 = vsel %vm2702, %v2791, %v2790
    %v2793 = vrot.slane %v2616, 5
    %v2794 = vsel %vm2705, %v2793, %v2792
    %v2795 = vrot.slane %v2620, 4
    %v2796 = vsel %vm2708, %v2795, %v2794
    %v2797 = vrot.slane %v2624, 3
    %v2798 = vsel %vm2711, %v2797, %v2796
    %v2799 = vrot.slane %v2628, 2
    %v2800 = vsel %vm2714, %v2799, %v2798
    %v2801 = vrot.slane %v2632, 1
    %v2802 = vsel %vm2717, %v2801, %v2800
    %v2803 = vrot.slane %v2609, 7
    %v2804 = vsel %vm2699, %v2803, %v2605
    %v2805 = vrot.slane %v2613, 6
    %v2806 = vsel %vm2702, %v2805, %v2804
    %v2807 = vrot.slane %v2617, 5
    %v2808 = vsel %vm2705, %v2807, %v2806
    %v2809 = vrot.slane %v2621, 4
    %v2810 = vsel %vm2708, %v2809, %v2808
    %v2811 = vrot.slane %v2625, 3
    %v2812 = vsel %vm2711, %v2811, %v2810
    %v2813 = vrot.slane %v2629, 2
    %v2814 = vsel %vm2714, %v2813, %v2812
    %v2815 = vrot.slane %v2633, 1
    %v2816 = vsel %vm2717, %v2815, %v2814
    %v2817 = vrot.slane %v2638, 7
    %v2818 = vsel %vm2699, %v2817, %v2634
    %v2819 = vrot.slane %v2642, 6
    %v2820 = vsel %vm2702, %v2819, %v2818
    %v2821 = vrot.slane %v2646, 5
    %v2822 = vsel %vm2705, %v2821, %v2820
    %v2823 = vrot.slane %v2650, 4
    %v2824 = vsel %vm2708, %v2823, %v2822
    %v2825 = vrot.slane %v2654, 3
    %v2826 = vsel %vm2711, %v2825, %v2824
    %v2827 = vrot.slane %v2658, 2
    %v2828 = vsel %vm2714, %v2827, %v2826
    %v2829 = vrot.slane %v2662, 1
    %v2830 = vsel %vm2717, %v2829, %v2828
    %v2831 = vrot.slane %v2639, 7
    %v2832 = vsel %vm2699, %v2831, %v2635
    %v2833 = vrot.slane %v2643, 6
    %v2834 = vsel %vm2702, %v2833, %v2832
    %v2835 = vrot.slane %v2647, 5
    %v2836 = vsel %vm2705, %v2835, %v2834
    %v2837 = vrot.slane %v2651, 4
    %v2838 = vsel %vm2708, %v2837, %v2836
    %v2839 = vrot.slane %v2655, 3
    %v2840 = vsel %vm2711, %v2839, %v2838
    %v2841 = vrot.slane %v2659, 2
    %v2842 = vsel %vm2714, %v2841, %v2840
    %v2843 = vrot.slane %v2663, 1
    %v2844 = vsel %vm2717, %v2843, %v2842
    %v2845 = vrot.slane %v2640, 7
    %v2846 = vsel %vm2699, %v2845, %v2636
    %v2847 = vrot.slane %v2644, 6
    %v2848 = vsel %vm2702, %v2847, %v2846
    %v2849 = vrot.slane %v2648, 5
    %v2850 = vsel %vm2705, %v2849, %v2848
    %v2851 = vrot.slane %v2652, 4
    %v2852 = vsel %vm2708, %v2851, %v2850
    %v2853 = vrot.slane %v2656, 3
    %v2854 = vsel %vm2711, %v2853, %v2852
    %v2855 = vrot.slane %v2660, 2
    %v2856 = vsel %vm2714, %v2855, %v2854
    %v2857 = vrot.slane %v2664, 1
    %v2858 = vsel %vm2717, %v2857, %v2856
    %v2859 = vrot.slane %v2641, 7
    %v2860 = vsel %vm2699, %v2859, %v2637
    %v2861 = vrot.slane %v2645, 6
    %v2862 = vsel %vm2702, %v2861, %v2860
    %v2863 = vrot.slane %v2649, 5
    %v2864 = vsel %vm2705, %v2863, %v2862
    %v2865 = vrot.slane %v2653, 4
    %v2866 = vsel %vm2708, %v2865, %v2864
    %v2867 = vrot.slane %v2657, 3
    %v2868 = vsel %vm2711, %v2867, %v2866
    %v2869 = vrot.slane %v2661, 2
    %v2870 = vsel %vm2714, %v2869, %v2868
    %v2871 = vrot.slane %v2665, 1
    %v2872 = vsel %vm2717, %v2871, %v2870
    %v2873 = vrot.slane %v2670, 7
    %v2874 = vsel %vm2699, %v2873, %v2666
    %v2875 = vrot.slane %v2674, 6
    %v2876 = vsel %vm2702, %v2875, %v2874
    %v2877 = vrot.slane %v2678, 5
    %v2878 = vsel %vm2705, %v2877, %v2876
    %v2879 = vrot.slane %v2682, 4
    %v2880 = vsel %vm2708, %v2879, %v2878
    %v2881 = vrot.slane %v2686, 3
    %v2882 = vsel %vm2711, %v2881, %v2880
    %v2883 = vrot.slane %v2690, 2
    %v2884 = vsel %vm2714, %v2883, %v2882
    %v2885 = vrot.slane %v2694, 1
    %v2886 = vsel %vm2717, %v2885, %v2884
    %v2887 = vrot.slane %v2671, 7
    %v2888 = vsel %vm2699, %v2887, %v2667
    %v2889 = vrot.slane %v2675, 6
    %v2890 = vsel %vm2702, %v2889, %v2888
    %v2891 = vrot.slane %v2679, 5
    %v2892 = vsel %vm2705, %v2891, %v2890
    %v2893 = vrot.slane %v2683, 4
    %v2894 = vsel %vm2708, %v2893, %v2892
    %v2895 = vrot.slane %v2687, 3
    %v2896 = vsel %vm2711, %v2895, %v2894
    %v2897 = vrot.slane %v2691, 2
    %v2898 = vsel %vm2714, %v2897, %v2896
    %v2899 = vrot.slane %v2695, 1
    %v2900 = vsel %vm2717, %v2899, %v2898
    %v2901 = vrot.slane %v2672, 7
    %v2902 = vsel %vm2699, %v2901, %v2668
    %v2903 = vrot.slane %v2676, 6
    %v2904 = vsel %vm2702, %v2903, %v2902
    %v2905 = vrot.slane %v2680, 5
    %v2906 = vsel %vm2705, %v2905, %v2904
    %v2907 = vrot.slane %v2684, 4
    %v2908 = vsel %vm2708, %v2907, %v2906
    %v2909 = vrot.slane %v2688, 3
    %v2910 = vsel %vm2711, %v2909, %v2908
    %v2911 = vrot.slane %v2692, 2
    %v2912 = vsel %vm2714, %v2911, %v2910
    %v2913 = vrot.slane %v2696, 1
    %v2914 = vsel %vm2717, %v2913, %v2912
    %v2915 = vrot.slane %v2673, 7
    %v2916 = vsel %vm2699, %v2915, %v2669
    %v2917 = vrot.slane %v2677, 6
    %v2918 = vsel %vm2702, %v2917, %v2916
    %v2919 = vrot.slane %v2681, 5
    %v2920 = vsel %vm2705, %v2919, %v2918
    %v2921 = vrot.slane %v2685, 4
    %v2922 = vsel %vm2708, %v2921, %v2920
    %v2923 = vrot.slane %v2689, 3
    %v2924 = vsel %vm2711, %v2923, %v2922
    %v2925 = vrot.slane %v2693, 2
    %v2926 = vsel %vm2714, %v2925, %v2924
    %v2927 = vrot.slane %v2697, 1
    %v2928 = vsel %vm2717, %v2927, %v2926
    %v2929 = vpack.c.b16 %v2774, %v2718
    %v2930 = vpack.c.b16 %v2788, %v2732
    %v2931 = vpack.c.b16 %v2802, %v2746
    %v2932 = vpack.c.b16 %v2816, %v2760
    %v2933 = vpack.c.b16 %v2886, %v2830
    %v2934 = vpack.c.b16 %v2900, %v2844
    %v2935 = vpack.c.b16 %v2914, %v2858
    %v2936 = vpack.c.b16 %v2928, %v2872
    %v3073 = vunpack.c.l.b16 %v2314
    %v3074 = vunpack.c.h.b16 %v2314
    %v3075 = vunpack.c.l.b16 %v2315
    %v3076 = vunpack.c.h.b16 %v2315
    %v3077 = vunpack.c.l.b16 %v2316
    %v3078 = vunpack.c.h.b16 %v2316
    %v3079 = vunpack.c.l.b16 %v2317
    %v3080 = vunpack.c.h.b16 %v2317
    %v3081 = vunpack.c.l.b16 %v2318
    %v3082 = vunpack.c.h.b16 %v2318
    %v3083 = vunpack.c.l.b16 %v2319
    %v3084 = vunpack.c.h.b16 %v2319
    %v3085 = vunpack.c.l.b16 %v2320
    %v3086 = vunpack.c.h.b16 %v2320
    %v3087 = vunpack.c.l.b16 %v2321
    %v3088 = vunpack.c.h.b16 %v2321
    %v3089 = vunpack.c.l.b16 %v2322
    %v3090 = vunpack.c.h.b16 %v2322
    %v3091 = vunpack.c.l.b16 %v2323
    %v3092 = vunpack.c.h.b16 %v2323
    %v3093 = vunpack.c.l.b16 %v2324
    %v3094 = vunpack.c.h.b16 %v2324
    %v3095 = vunpack.c.l.b16 %v2325
    %v3096 = vunpack.c.h.b16 %v2325
    %v3097 = vunpack.c.l.b16 %v2326
    %v3098 = vunpack.c.h.b16 %v2326
    %v3099 = vunpack.c.l.b16 %v2327
    %v3100 = vunpack.c.h.b16 %v2327
    %v3101 = vunpack.c.l.b16 %v2328
    %v3102 = vunpack.c.h.b16 %v2328
    %v3103 = vunpack.c.l.b16 %v2329
    %v3104 = vunpack.c.h.b16 %v2329
    %v3105 = vunpack.c.l.b16 %v2330
    %v3106 = vunpack.c.h.b16 %v2330
    %v3107 = vunpack.c.l.b16 %v2331
    %v3108 = vunpack.c.h.b16 %v2331
    %v3109 = vunpack.c.l.b16 %v2332
    %v3110 = vunpack.c.h.b16 %v2332
    %v3111 = vunpack.c.l.b16 %v2333
    %v3112 = vunpack.c.h.b16 %v2333
    %v3113 = vunpack.c.l.b16 %v2334
    %v3114 = vunpack.c.h.b16 %v2334
    %v3115 = vunpack.c.l.b16 %v2335
    %v3116 = vunpack.c.h.b16 %v2335
    %v3117 = vunpack.c.l.b16 %v2336
    %v3118 = vunpack.c.h.b16 %v2336
    %v3119 = vunpack.c.l.b16 %v2337
    %v3120 = vunpack.c.h.b16 %v2337
    %v3121 = vunpack.c.l.b16 %v2338
    %v3122 = vunpack.c.h.b16 %v2338
    %v3123 = vunpack.c.l.b16 %v2339
    %v3124 = vunpack.c.h.b16 %v2339
    %v3125 = vunpack.c.l.b16 %v2340
    %v3126 = vunpack.c.h.b16 %v2340
    %v3127 = vunpack.c.l.b16 %v2341
    %v3128 = vunpack.c.h.b16 %v2341
    %v3129 = vunpack.c.l.b16 %v2342
    %v3130 = vunpack.c.h.b16 %v2342
    %v3131 = vunpack.c.l.b16 %v2343
    %v3132 = vunpack.c.h.b16 %v2343
    %v3133 = vunpack.c.l.b16 %v2344
    %v3134 = vunpack.c.h.b16 %v2344
    %v3135 = vunpack.c.l.b16 %v2345
    %v3136 = vunpack.c.h.b16 %v2345
    %v3137 = vunpack.c.l.b16 %v2346
    %v3138 = vunpack.c.h.b16 %v2346
    %v3139 = vunpack.c.l.b16 %v2347
    %v3140 = vunpack.c.h.b16 %v2347
    %v3141 = vunpack.c.l.b16 %v2348
    %v3142 = vunpack.c.h.b16 %v2348
    %v3143 = vunpack.c.l.b16 %v2349
    %v3144 = vunpack.c.h.b16 %v2349
    %v3145 = vunpack.c.l.b16 %v2350
    %v3146 = vunpack.c.h.b16 %v2350
    %v3147 = vunpack.c.l.b16 %v2351
    %v3148 = vunpack.c.h.b16 %v2351
    %v3149 = vunpack.c.l.b16 %v2352
    %v3150 = vunpack.c.h.b16 %v2352
    %v3151 = vunpack.c.l.b16 %v2353
    %v3152 = vunpack.c.h.b16 %v2353
    %v3153 = vunpack.c.l.b16 %v2354
    %v3154 = vunpack.c.h.b16 %v2354
    %v3155 = vunpack.c.l.b16 %v2355
    %v3156 = vunpack.c.h.b16 %v2355
    %v3157 = vunpack.c.l.b16 %v2356
    %v3158 = vunpack.c.h.b16 %v2356
    %v3159 = vunpack.c.l.b16 %v2357
    %v3160 = vunpack.c.h.b16 %v2357
    %v3161 = vunpack.c.l.b16 %v2358
    %v3162 = vunpack.c.h.b16 %v2358
    %v3163 = vunpack.c.l.b16 %v2359
    %v3164 = vunpack.c.h.b16 %v2359
    %v3165 = vunpack.c.l.b16 %v2360
    %v3166 = vunpack.c.h.b16 %v2360
    %v3167 = vunpack.c.l.b16 %v2361
    %v3168 = vunpack.c.h.b16 %v2361
    %v3169 = vunpack.c.l.b16 %v2362
    %v3170 = vunpack.c.h.b16 %v2362
    %v3171 = vunpack.c.l.b16 %v2363
    %v3172 = vunpack.c.h.b16 %v2363
    %v3173 = vunpack.c.l.b16 %v2364
    %v3174 = vunpack.c.h.b16 %v2364
    %v3175 = vunpack.c.l.b16 %v2365
    %v3176 = vunpack.c.h.b16 %v2365
    %v3177 = vunpack.c.l.b16 %v2366
    %v3178 = vunpack.c.h.b16 %v2366
    %v3179 = vunpack.c.l.b16 %v2367
    %v3180 = vunpack.c.h.b16 %v2367
    %v3181 = vunpack.c.l.b16 %v2368
    %v3182 = vunpack.c.h.b16 %v2368
    %v3183 = vunpack.c.l.b16 %v2369
    %v3184 = vunpack.c.h.b16 %v2369
    %v3185 = vunpack.c.l.b16 %v2370
    %v3186 = vunpack.c.h.b16 %v2370
    %v3187 = vunpack.c.l.b16 %v2371
    %v3188 = vunpack.c.h.b16 %v2371
    %v3189 = vunpack.c.l.b16 %v2372
    %v3190 = vunpack.c.h.b16 %v2372
    %v3191 = vunpack.c.l.b16 %v2373
    %v3192 = vunpack.c.h.b16 %v2373
    %v3193 = vunpack.c.l.b16 %v2374
    %v3194 = vunpack.c.h.b16 %v2374
    %v3195 = vunpack.c.l.b16 %v2375
    %v3196 = vunpack.c.h.b16 %v2375
    %v3197 = vunpack.c.l.b16 %v2376
    %v3198 = vunpack.c.h.b16 %v2376
    %v3199 = vunpack.c.l.b16 %v2377
    %v3200 = vunpack.c.h.b16 %v2377
    %v3201 = vunpack.c.l.b16 %v2378
    %v3202 = vunpack.c.h.b16 %v2378
    %v3203 = vunpack.c.l.b16 %v2379
    %v3204 = vunpack.c.h.b16 %v2379
    %v3205 = vunpack.c.l.b16 %v2380
    %v3206 = vunpack.c.h.b16 %v2380
    %v3207 = vunpack.c.l.b16 %v2381
    %v3208 = vunpack.c.h.b16 %v2381
    %v3209 = vunpack.c.l.b16 %v2382
    %v3210 = vunpack.c.h.b16 %v2382
    %v3211 = vunpack.c.l.b16 %v2383
    %v3212 = vunpack.c.h.b16 %v2383
    %v3213 = vunpack.c.l.b16 %v2384
    %v3214 = vunpack.c.h.b16 %v2384
    %v3215 = vunpack.c.l.b16 %v2385
    %v3216 = vunpack.c.h.b16 %v2385
    %v3217 = vunpack.c.l.b16 %v2386
    %v3218 = vunpack.c.h.b16 %v2386
    %v3219 = vunpack.c.l.b16 %v2387
    %v3220 = vunpack.c.h.b16 %v2387
    %v3221 = vunpack.c.l.b16 %v2388
    %v3222 = vunpack.c.h.b16 %v2388
    %v3223 = vunpack.c.l.b16 %v2389
    %v3224 = vunpack.c.h.b16 %v2389
    %v3225 = vunpack.c.l.b16 %v2390
    %v3226 = vunpack.c.h.b16 %v2390
    %v3227 = vunpack.c.l.b16 %v2391
    %v3228 = vunpack.c.h.b16 %v2391
    %v3229 = vunpack.c.l.b16 %v2392
    %v3230 = vunpack.c.h.b16 %v2392
    %v3231 = vunpack.c.l.b16 %v2393
    %v3232 = vunpack.c.h.b16 %v2393
    %v3233 = vunpack.c.l.b16 %v2394
    %v3234 = vunpack.c.h.b16 %v2394
    %v3235 = vunpack.c.l.b16 %v2395
    %v3236 = vunpack.c.h.b16 %v2395
    %v3237 = vunpack.c.l.b16 %v2396
    %v3238 = vunpack.c.h.b16 %v2396
    %v3239 = vunpack.c.l.b16 %v2397
    %v3240 = vunpack.c.h.b16 %v2397
    %v3241 = vunpack.c.l.b16 %v2398
    %v3242 = vunpack.c.h.b16 %v2398
    %v3243 = vunpack.c.l.b16 %v2399
    %v3244 = vunpack.c.h.b16 %v2399
    %v3245 = vunpack.c.l.b16 %v2400
    %v3246 = vunpack.c.h.b16 %v2400
    %v3247 = vunpack.c.l.b16 %v2401
    %v3248 = vunpack.c.h.b16 %v2401
    %v3249 = vunpack.c.l.b16 %v2402
    %v3250 = vunpack.c.h.b16 %v2402
    %v3251 = vunpack.c.l.b16 %v2403
    %v3252 = vunpack.c.h.b16 %v2403
    %v3253 = vunpack.c.l.b16 %v2404
    %v3254 = vunpack.c.h.b16 %v2404
    %v3255 = vunpack.c.l.b16 %v2405
    %v3256 = vunpack.c.h.b16 %v2405
    %v3257 = vunpack.c.l.b16 %v2406
    %v3258 = vunpack.c.h.b16 %v2406
    %v3259 = vunpack.c.l.b16 %v2407
    %v3260 = vunpack.c.h.b16 %v2407
    %v3261 = vunpack.c.l.b16 %v2408
    %v3262 = vunpack.c.h.b16 %v2408
    %v3263 = vunpack.c.l.b16 %v2409
    %v3264 = vunpack.c.h.b16 %v2409
    %v3265 = vunpack.c.l.b16 %v2410
    %v3266 = vunpack.c.h.b16 %v2410
    %v3267 = vunpack.c.l.b16 %v2411
    %v3268 = vunpack.c.h.b16 %v2411
    %v3269 = vunpack.c.l.b16 %v2412
    %v3270 = vunpack.c.h.b16 %v2412
    %v3271 = vunpack.c.l.b16 %v2413
    %v3272 = vunpack.c.h.b16 %v2413
    %v3273 = vunpack.c.l.b16 %v2414
    %v3274 = vunpack.c.h.b16 %v2414
    %v3275 = vunpack.c.l.b16 %v2415
    %v3276 = vunpack.c.h.b16 %v2415
    %v3277 = vunpack.c.l.b16 %v2416
    %v3278 = vunpack.c.h.b16 %v2416
    %v3279 = vunpack.c.l.b16 %v2417
    %v3280 = vunpack.c.h.b16 %v2417
    %v3281 = vunpack.c.l.b16 %v2418
    %v3282 = vunpack.c.h.b16 %v2418
    %v3283 = vunpack.c.l.b16 %v2419
    %v3284 = vunpack.c.h.b16 %v2419
    %v3285 = vunpack.c.l.b16 %v2420
    %v3286 = vunpack.c.h.b16 %v2420
    %v3287 = vunpack.c.l.b16 %v2421
    %v3288 = vunpack.c.h.b16 %v2421
    %v3289 = vunpack.c.l.b16 %v2422
    %v3290 = vunpack.c.h.b16 %v2422
    %v3291 = vunpack.c.l.b16 %v2423
    %v3292 = vunpack.c.h.b16 %v2423
    %v3293 = vunpack.c.l.b16 %v2424
    %v3294 = vunpack.c.h.b16 %v2424
    %v3295 = vunpack.c.l.b16 %v2425
    %v3296 = vunpack.c.h.b16 %v2425
    %v3297 = vunpack.c.l.b16 %v2426
    %v3298 = vunpack.c.h.b16 %v2426
    %v3299 = vunpack.c.l.b16 %v2427
    %v3300 = vunpack.c.h.b16 %v2427
    %v3301 = vunpack.c.l.b16 %v2428
    %v3302 = vunpack.c.h.b16 %v2428
    %v3303 = vunpack.c.l.b16 %v2429
    %v3304 = vunpack.c.h.b16 %v2429
    %v3305 = vunpack.c.l.b16 %v2430
    %v3306 = vunpack.c.h.b16 %v2430
    %v3307 = vunpack.c.l.b16 %v2431
    %v3308 = vunpack.c.h.b16 %v2431
    %v3309 = vunpack.c.l.b16 %v2432
    %v3310 = vunpack.c.h.b16 %v2432
    %v3311 = vunpack.c.l.b16 %v2433
    %v3312 = vunpack.c.h.b16 %v2433
    %v3313 = vunpack.c.l.b16 %v2434
    %v3314 = vunpack.c.h.b16 %v2434
    %v3315 = vunpack.c.l.b16 %v2435
    %v3316 = vunpack.c.h.b16 %v2435
    %v3317 = vunpack.c.l.b16 %v2436
    %v3318 = vunpack.c.h.b16 %v2436
    %v3319 = vunpack.c.l.b16 %v2437
    %v3320 = vunpack.c.h.b16 %v2437
    %v3321 = vunpack.c.l.b16 %v2438
    %v3322 = vunpack.c.h.b16 %v2438
    %v3323 = vunpack.c.l.b16 %v2439
    %v3324 = vunpack.c.h.b16 %v2439
    %v3325 = vunpack.c.l.b16 %v2440
    %v3326 = vunpack.c.h.b16 %v2440
    %v3327 = vunpack.c.l.b16 %v2441
    %v3328 = vunpack.c.h.b16 %v2441
    %v3329 = vpack.c.b16 %v3077, %v3073
    %v3330 = vpack.c.b16 %v3078, %v3074
    %v3331 = vpack.c.b16 %v3079, %v3075
    %v3332 = vpack.c.b16 %v3080, %v3076
    %v3333 = vpack.c.b16 %v3085, %v3081
    %v3334 = vpack.c.b16 %v3086, %v3082
    %v3335 = vpack.c.b16 %v3087, %v3083
    %v3336 = vpack.c.b16 %v3088, %v3084
    %v3337 = vpack.c.b16 %v3093, %v3089
    %v3338 = vpack.c.b16 %v3094, %v3090
    %v3339 = vpack.c.b16 %v3095, %v3091
    %v3340 = vpack.c.b16 %v3096, %v3092
    %v3341 = vpack.c.b16 %v3101, %v3097
    %v3342 = vpack.c.b16 %v3102, %v3098
    %v3343 = vpack.c.b16 %v3103, %v3099
    %v3344 = vpack.c.b16 %v3104, %v3100
    %v3345 = vpack.c.b16 %v3109, %v3105
    %v3346 = vpack.c.b16 %v3110, %v3106
    %v3347 = vpack.c.b16 %v3111, %v3107
    %v3348 = vpack.c.b16 %v3112, %v3108
    %v3349 = vpack.c.b16 %v3117, %v3113
    %v3350 = vpack.c.b16 %v3118, %v3114
    %v3351 = vpack.c.b16 %v3119, %v3115
    %v3352 = vpack.c.b16 %v3120, %v3116
    %v3353 = vpack.c.b16 %v3125, %v3121
    %v3354 = vpack.c.b16 %v3126, %v3122
    %v3355 = vpack.c.b16 %v3127, %v3123
    %v3356 = vpack.c.b16 %v3128, %v3124
    %v3357 = vpack.c.b16 %v3133, %v3129
    %v3358 = vpack.c.b16 %v3134, %v3130
    %v3359 = vpack.c.b16 %v3135, %v3131
    %v3360 = vpack.c.b16 %v3136, %v3132
    %v3361 = vpack.c.b16 %v3141, %v3137
    %v3362 = vpack.c.b16 %v3142, %v3138
    %v3363 = vpack.c.b16 %v3143, %v3139
    %v3364 = vpack.c.b16 %v3144, %v3140
    %v3365 = vpack.c.b16 %v3149, %v3145
    %v3366 = vpack.c.b16 %v3150, %v3146
    %v3367 = vpack.c.b16 %v3151, %v3147
    %v3368 = vpack.c.b16 %v3152, %v3148
    %v3369 = vpack.c.b16 %v3157, %v3153
    %v3370 = vpack.c.b16 %v3158, %v3154
    %v3371 = vpack.c.b16 %v3159, %v3155
    %v3372 = vpack.c.b16 %v3160, %v3156
    %v3373 = vpack.c.b16 %v3165, %v3161
    %v3374 = vpack.c.b16 %v3166, %v3162
    %v3375 = vpack.c.b16 %v3167, %v3163
    %v3376 = vpack.c.b16 %v3168, %v3164
    %v3377 = vpack.c.b16 %v3173, %v3169
    %v3378 = vpack.c.b16 %v3174, %v3170
    %v3379 = vpack.c.b16 %v3175, %v3171
    %v3380 = vpack.c.b16 %v3176, %v3172
    %v3381 = vpack.c.b16 %v3181, %v3177
    %v3382 = vpack.c.b16 %v3182, %v3178
    %v3383 = vpack.c.b16 %v3183, %v3179
    %v3384 = vpack.c.b16 %v3184, %v3180
    %v3385 = vpack.c.b16 %v3189, %v3185
    %v3386 = vpack.c.b16 %v3190, %v3186
    %v3387 = vpack.c.b16 %v3191, %v3187
    %v3388 = vpack.c.b16 %v3192, %v3188
    %v3389 = vpack.c.b16 %v3197, %v3193
    %v3390 = vpack.c.b16 %v3198, %v3194
    %v3391 = vpack.c.b16 %v3199, %v3195
    %v3392 = vpack.c.b16 %v3200, %v3196
    %v3393 = vpack.c.b16 %v3205, %v3201
    %v3394 = vpack.c.b16 %v3206, %v3202
    %v3395 = vpack.c.b16 %v3207, %v3203
    %v3396 = vpack.c.b16 %v3208, %v3204
    %v3397 = vpack.c.b16 %v3213, %v3209
    %v3398 = vpack.c.b16 %v3214, %v3210
    %v3399 = vpack.c.b16 %v3215, %v3211
    %v3400 = vpack.c.b16 %v3216, %v3212
    %v3401 = vpack.c.b16 %v3221, %v3217
    %v3402 = vpack.c.b16 %v3222, %v3218
    %v3403 = vpack.c.b16 %v3223, %v3219
    %v3404 = vpack.c.b16 %v3224, %v3220
    %v3405 = vpack.c.b16 %v3229, %v3225
    %v3406 = vpack.c.b16 %v3230, %v3226
    %v3407 = vpack.c.b16 %v3231, %v3227
    %v3408 = vpack.c.b16 %v3232, %v3228
    %v3409 = vpack.c.b16 %v3237, %v3233
    %v3410 = vpack.c.b16 %v3238, %v3234
    %v3411 = vpack.c.b16 %v3239, %v3235
    %v3412 = vpack.c.b16 %v3240, %v3236
    %v3413 = vpack.c.b16 %v3245, %v3241
    %v3414 = vpack.c.b16 %v3246, %v3242
    %v3415 = vpack.c.b16 %v3247, %v3243
    %v3416 = vpack.c.b16 %v3248, %v3244
    %v3417 = vpack.c.b16 %v3253, %v3249
    %v3418 = vpack.c.b16 %v3254, %v3250
    %v3419 = vpack.c.b16 %v3255, %v3251
    %v3420 = vpack.c.b16 %v3256, %v3252
    %v3421 = vpack.c.b16 %v3261, %v3257
    %v3422 = vpack.c.b16 %v3262, %v3258
    %v3423 = vpack.c.b16 %v3263, %v3259
    %v3424 = vpack.c.b16 %v3264, %v3260
    %v3425 = vpack.c.b16 %v3269, %v3265
    %v3426 = vpack.c.b16 %v3270, %v3266
    %v3427 = vpack.c.b16 %v3271, %v3267
    %v3428 = vpack.c.b16 %v3272, %v3268
    %v3429 = vpack.c.b16 %v3277, %v3273
    %v3430 = vpack.c.b16 %v3278, %v3274
    %v3431 = vpack.c.b16 %v3279, %v3275
    %v3432 = vpack.c.b16 %v3280, %v3276
    %v3433 = vpack.c.b16 %v3285, %v3281
    %v3434 = vpack.c.b16 %v3286, %v3282
    %v3435 = vpack.c.b16 %v3287, %v3283
    %v3436 = vpack.c.b16 %v3288, %v3284
    %v3437 = vpack.c.b16 %v3293, %v3289
    %v3438 = vpack.c.b16 %v3294, %v3290
    %v3439 = vpack.c.b16 %v3295, %v3291
    %v3440 = vpack.c.b16 %v3296, %v3292
    %v3441 = vpack.c.b16 %v3301, %v3297
    %v3442 = vpack.c.b16 %v3302, %v3298
    %v3443 = vpack.c.b16 %v3303, %v3299
    %v3444 = vpack.c.b16 %v3304, %v3300
    %v3445 = vpack.c.b16 %v3309, %v3305
    %v3446 = vpack.c.b16 %v3310, %v3306
    %v3447 = vpack.c.b16 %v3311, %v3307
    %v3448 = vpack.c.b16 %v3312, %v3308
    %v3449 = vpack.c.b16 %v3317, %v3313
    %v3450 = vpack.c.b16 %v3318, %v3314
    %v3451 = vpack.c.b16 %v3319, %v3315
    %v3452 = vpack.c.b16 %v3320, %v3316
    %v3453 = vpack.c.b16 %v3325, %v3321
    %v3454 = vpack.c.b16 %v3326, %v3322
    %v3455 = vpack.c.b16 %v3327, %v3323
    %v3456 = vpack.c.b16 %v3328, %v3324
    %3585 = vmatpush.bf16.msra.mxu0 %v3357
    %3586 = vmatpush.bf16.msra.mxu0 %v3353
    %3587 = vmatpush.bf16.msra.mxu0 %v3349
    %3588 = vmatpush.bf16.msra.mxu0 %v3345
    %3589 = vmatpush.bf16.msra.mxu0 %v3341
    %3590 = vmatpush.bf16.msra.mxu0 %v3337
    %3591 = vmatpush.bf16.msra.mxu0 %v3333
    %3592 = vmatpush.bf16.msra.mxu0 %v3329
    %3593 = vmatmul.bf16.gmra.mxu0 %v2929
    %v3594 = vpop.f32.mrf.mxu0
    %v3595 = vadd.f32 0.0, %v3594
    %v3596 = vpop.f32.mrf.mxu0
    %v3597 = vadd.f32 0.0, %v3596
    %3598 = vmatmul.bf16.gmra.mxu0 %v2933
    %v3599 = vpop.f32.mrf.mxu0
    %v3600 = vadd.f32 0.0, %v3599
    %v3601 = vpop.f32.mrf.mxu0
    %v3602 = vadd.f32 0.0, %v3601
    %3603 = vdwg.mxu0
    %3604 = vmatpush.bf16.msra.mxu0 %v3389
    %3605 = vmatpush.bf16.msra.mxu0 %v3385
    %3606 = vmatpush.bf16.msra.mxu0 %v3381
    %3607 = vmatpush.bf16.msra.mxu0 %v3377
    %3608 = vmatpush.bf16.msra.mxu0 %v3373
    %3609 = vmatpush.bf16.msra.mxu0 %v3369
    %3610 = vmatpush.bf16.msra.mxu0 %v3365
    %3611 = vmatpush.bf16.msra.mxu0 %v3361
    %3612 = vmatmul.bf16.gmra.mxu0 %v2930
    %v3613 = vpop.f32.mrf.mxu0
    %v3614 = vadd.f32 %v3595, %v3613
    %v3615 = vpop.f32.mrf.mxu0
    %v3616 = vadd.f32 %v3597, %v3615
    %3617 = vmatmul.bf16.gmra.mxu0 %v2934
    %v3618 = vpop.f32.mrf.mxu0
    %v3619 = vadd.f32 %v3600, %v3618
    %v3620 = vpop.f32.mrf.mxu0
    %v3621 = vadd.f32 %v3602, %v3620
    %3622 = vdwg.mxu0
    %3623 = vmatpush.bf16.msra.mxu0 %v3421
    %3624 = vmatpush.bf16.msra.mxu0 %v3417
    %3625 = vmatpush.bf16.msra.mxu0 %v3413
    %3626 = vmatpush.bf16.msra.mxu0 %v3409
    %3627 = vmatpush.bf16.msra.mxu0 %v3405
    %3628 = vmatpush.bf16.msra.mxu0 %v3401
    %3629 = vmatpush.bf16.msra.mxu0 %v3397
    %3630 = vmatpush.bf16.msra.mxu0 %v3393
    %3631 = vmatmul.bf16.gmra.mxu0 %v2931
    %v3632 = vpop.f32.mrf.mxu0
    %v3633 = vadd.f32 %v3614, %v3632
    %v3634 = vpop.f32.mrf.mxu0
    %v3635 = vadd.f32 %v3616, %v3634
    %3636 = vmatmul.bf16.gmra.mxu0 %v2935
    %v3637 = vpop.f32.mrf.mxu0
    %v3638 = vadd.f32 %v3619, %v3637
    %v3639 = vpop.f32.mrf.mxu0
    %v3640 = vadd.f32 %v3621, %v3639
    %3641 = vdwg.mxu0
    %3642 = vmatpush.bf16.msra.mxu0 %v3453
    %3643 = vmatpush.bf16.msra.mxu0 %v3449
    %3644 = vmatpush.bf16.msra.mxu0 %v3445
    %3645 = vmatpush.bf16.msra.mxu0 %v3441
    %3646 = vmatpush.bf16.msra.mxu0 %v3437
    %3647 = vmatpush.bf16.msra.mxu0 %v3433
    %3648 = vmatpush.bf16.msra.mxu0 %v3429
    %3649 = vmatpush.bf16.msra.mxu0 %v3425
    %3650 = vmatmul.bf16.gmra.mxu0 %v2932
    %v3651 = vpop.f32.mrf.mxu0
    %v3652 = vadd.f32 %v3633, %v3651
    %v3653 = vpop.f32.mrf.mxu0
    %v3654 = vadd.f32 %v3635, %v3653
    %3655 = vmatmul.bf16.gmra.mxu0 %v2936
    %v3656 = vpop.f32.mrf.mxu0
    %v3657 = vadd.f32 %v3638, %v3656
    %v3658 = vpop.f32.mrf.mxu0
    %v3659 = vadd.f32 %v3640, %v3658
    %3660 = vdwg.mxu0
    %3661 = vmatpush.bf16.msra.mxu0 %v3358
    %3662 = vmatpush.bf16.msra.mxu0 %v3354
    %3663 = vmatpush.bf16.msra.mxu0 %v3350
    %3664 = vmatpush.bf16.msra.mxu0 %v3346
    %3665 = vmatpush.bf16.msra.mxu0 %v3342
    %3666 = vmatpush.bf16.msra.mxu0 %v3338
    %3667 = vmatpush.bf16.msra.mxu0 %v3334
    %3668 = vmatpush.bf16.msra.mxu0 %v3330
    %3669 = vmatmul.bf16.gmra.mxu0 %v2929
    %v3670 = vpop.f32.mrf.mxu0
    %v3671 = vadd.f32 0.0, %v3670
    %v3672 = vpop.f32.mrf.mxu0
    %v3673 = vadd.f32 0.0, %v3672
    %3674 = vmatmul.bf16.gmra.mxu0 %v2933
    %v3675 = vpop.f32.mrf.mxu0
    %v3676 = vadd.f32 0.0, %v3675
    %v3677 = vpop.f32.mrf.mxu0
    %v3678 = vadd.f32 0.0, %v3677
    %3679 = vdwg.mxu0
    %3680 = vmatpush.bf16.msra.mxu0 %v3390
    %3681 = vmatpush.bf16.msra.mxu0 %v3386
    %3682 = vmatpush.bf16.msra.mxu0 %v3382
    %3683 = vmatpush.bf16.msra.mxu0 %v3378
    %3684 = vmatpush.bf16.msra.mxu0 %v3374
    %3685 = vmatpush.bf16.msra.mxu0 %v3370
    %3686 = vmatpush.bf16.msra.mxu0 %v3366
    %3687 = vmatpush.bf16.msra.mxu0 %v3362
    %3688 = vmatmul.bf16.gmra.mxu0 %v2930
    %v3689 = vpop.f32.mrf.mxu0
    %v3690 = vadd.f32 %v3671, %v3689
    %v3691 = vpop.f32.mrf.mxu0
    %v3692 = vadd.f32 %v3673, %v3691
    %3693 = vmatmul.bf16.gmra.mxu0 %v2934
    %v3694 = vpop.f32.mrf.mxu0
    %v3695 = vadd.f32 %v3676, %v3694
    %v3696 = vpop.f32.mrf.mxu0
    %v3697 = vadd.f32 %v3678, %v3696
    %3698 = vdwg.mxu0
    %3699 = vmatpush.bf16.msra.mxu0 %v3422
    %3700 = vmatpush.bf16.msra.mxu0 %v3418
    %3701 = vmatpush.bf16.msra.mxu0 %v3414
    %3702 = vmatpush.bf16.msra.mxu0 %v3410
    %3703 = vmatpush.bf16.msra.mxu0 %v3406
    %3704 = vmatpush.bf16.msra.mxu0 %v3402
    %3705 = vmatpush.bf16.msra.mxu0 %v3398
    %3706 = vmatpush.bf16.msra.mxu0 %v3394
    %3707 = vmatmul.bf16.gmra.mxu0 %v2931
    %v3708 = vpop.f32.mrf.mxu0
    %v3709 = vadd.f32 %v3690, %v3708
    %v3710 = vpop.f32.mrf.mxu0
    %v3711 = vadd.f32 %v3692, %v3710
    %3712 = vmatmul.bf16.gmra.mxu0 %v2935
    %v3713 = vpop.f32.mrf.mxu0
    %v3714 = vadd.f32 %v3695, %v3713
    %v3715 = vpop.f32.mrf.mxu0
    %v3716 = vadd.f32 %v3697, %v3715
    %3717 = vdwg.mxu0
    %3718 = vmatpush.bf16.msra.mxu0 %v3454
    %3719 = vmatpush.bf16.msra.mxu0 %v3450
    %3720 = vmatpush.bf16.msra.mxu0 %v3446
    %3721 = vmatpush.bf16.msra.mxu0 %v3442
    %3722 = vmatpush.bf16.msra.mxu0 %v3438
    %3723 = vmatpush.bf16.msra.mxu0 %v3434
    %3724 = vmatpush.bf16.msra.mxu0 %v3430
    %3725 = vmatpush.bf16.msra.mxu0 %v3426
    %3726 = vmatmul.bf16.gmra.mxu0 %v2932
    %v3727 = vpop.f32.mrf.mxu0
    %v3728 = vadd.f32 %v3709, %v3727
    %v3729 = vpop.f32.mrf.mxu0
    %v3730 = vadd.f32 %v3711, %v3729
    %3731 = vmatmul.bf16.gmra.mxu0 %v2936
    %v3732 = vpop.f32.mrf.mxu0
    %v3733 = vadd.f32 %v3714, %v3732
    %v3734 = vpop.f32.mrf.mxu0
    %v3735 = vadd.f32 %v3716, %v3734
    %3736 = vdwg.mxu0
    %3737 = vmatpush.bf16.msra.mxu0 %v3359
    %3738 = vmatpush.bf16.msra.mxu0 %v3355
    %3739 = vmatpush.bf16.msra.mxu0 %v3351
    %3740 = vmatpush.bf16.msra.mxu0 %v3347
    %3741 = vmatpush.bf16.msra.mxu0 %v3343
    %3742 = vmatpush.bf16.msra.mxu0 %v3339
    %3743 = vmatpush.bf16.msra.mxu0 %v3335
    %3744 = vmatpush.bf16.msra.mxu0 %v3331
    %3745 = vmatmul.bf16.gmra.mxu0 %v2929
    %v3746 = vpop.f32.mrf.mxu0
    %v3747 = vadd.f32 0.0, %v3746
    %v3748 = vpop.f32.mrf.mxu0
    %v3749 = vadd.f32 0.0, %v3748
    %3750 = vmatmul.bf16.gmra.mxu0 %v2933
    %v3751 = vpop.f32.mrf.mxu0
    %v3752 = vadd.f32 0.0, %v3751
    %v3753 = vpop.f32.mrf.mxu0
    %v3754 = vadd.f32 0.0, %v3753
    %3755 = vdwg.mxu0
    %3756 = vmatpush.bf16.msra.mxu0 %v3391
    %3757 = vmatpush.bf16.msra.mxu0 %v3387
    %3758 = vmatpush.bf16.msra.mxu0 %v3383
    %3759 = vmatpush.bf16.msra.mxu0 %v3379
    %3760 = vmatpush.bf16.msra.mxu0 %v3375
    %3761 = vmatpush.bf16.msra.mxu0 %v3371
    %3762 = vmatpush.bf16.msra.mxu0 %v3367
    %3763 = vmatpush.bf16.msra.mxu0 %v3363
    %3764 = vmatmul.bf16.gmra.mxu0 %v2930
    %v3765 = vpop.f32.mrf.mxu0
    %v3766 = vadd.f32 %v3747, %v3765
    %v3767 = vpop.f32.mrf.mxu0
    %v3768 = vadd.f32 %v3749, %v3767
    %3769 = vmatmul.bf16.gmra.mxu0 %v2934
    %v3770 = vpop.f32.mrf.mxu0
    %v3771 = vadd.f32 %v3752, %v3770
    %v3772 = vpop.f32.mrf.mxu0
    %v3773 = vadd.f32 %v3754, %v3772
    %3774 = vdwg.mxu0
    %3775 = vmatpush.bf16.msra.mxu0 %v3423
    %3776 = vmatpush.bf16.msra.mxu0 %v3419
    %3777 = vmatpush.bf16.msra.mxu0 %v3415
    %3778 = vmatpush.bf16.msra.mxu0 %v3411
    %3779 = vmatpush.bf16.msra.mxu0 %v3407
    %3780 = vmatpush.bf16.msra.mxu0 %v3403
    %3781 = vmatpush.bf16.msra.mxu0 %v3399
    %3782 = vmatpush.bf16.msra.mxu0 %v3395
    %3783 = vmatmul.bf16.gmra.mxu0 %v2931
    %v3784 = vpop.f32.mrf.mxu0
    %v3785 = vadd.f32 %v3766, %v3784
    %v3786 = vpop.f32.mrf.mxu0
    %v3787 = vadd.f32 %v3768, %v3786
    %3788 = vmatmul.bf16.gmra.mxu0 %v2935
    %v3789 = vpop.f32.mrf.mxu0
    %v3790 = vadd.f32 %v3771, %v3789
    %v3791 = vpop.f32.mrf.mxu0
    %v3792 = vadd.f32 %v3773, %v3791
    %3793 = vdwg.mxu0
    %3794 = vmatpush.bf16.msra.mxu0 %v3455
    %3795 = vmatpush.bf16.msra.mxu0 %v3451
    %3796 = vmatpush.bf16.msra.mxu0 %v3447
    %3797 = vmatpush.bf16.msra.mxu0 %v3443
    %3798 = vmatpush.bf16.msra.mxu0 %v3439
    %3799 = vmatpush.bf16.msra.mxu0 %v3435
    %3800 = vmatpush.bf16.msra.mxu0 %v3431
    %3801 = vmatpush.bf16.msra.mxu0 %v3427
    %3802 = vmatmul.bf16.gmra.mxu0 %v2932
    %v3803 = vpop.f32.mrf.mxu0
    %v3804 = vadd.f32 %v3785, %v3803
    %v3805 = vpop.f32.mrf.mxu0
    %v3806 = vadd.f32 %v3787, %v3805
    %3807 = vmatmul.bf16.gmra.mxu0 %v2936
    %v3808 = vpop.f32.mrf.mxu0
    %v3809 = vadd.f32 %v3790, %v3808
    %v3810 = vpop.f32.mrf.mxu0
    %v3811 = vadd.f32 %v3792, %v3810
    %3812 = vdwg.mxu0
    %3813 = vmatpush.bf16.msra.mxu0 %v3360
    %3814 = vmatpush.bf16.msra.mxu0 %v3356
    %3815 = vmatpush.bf16.msra.mxu0 %v3352
    %3816 = vmatpush.bf16.msra.mxu0 %v3348
    %3817 = vmatpush.bf16.msra.mxu0 %v3344
    %3818 = vmatpush.bf16.msra.mxu0 %v3340
    %3819 = vmatpush.bf16.msra.mxu0 %v3336
    %3820 = vmatpush.bf16.msra.mxu0 %v3332
    %3821 = vmatmul.bf16.gmra.mxu0 %v2929
    %v3822 = vpop.f32.mrf.mxu0
    %v3823 = vadd.f32 0.0, %v3822
    %v3824 = vpop.f32.mrf.mxu0
    %v3825 = vadd.f32 0.0, %v3824
    %3826 = vmatmul.bf16.gmra.mxu0 %v2933
    %v3827 = vpop.f32.mrf.mxu0
    %v3828 = vadd.f32 0.0, %v3827
    %v3829 = vpop.f32.mrf.mxu0
    %v3830 = vadd.f32 0.0, %v3829
    %3831 = vdwg.mxu0
    %3832 = vmatpush.bf16.msra.mxu0 %v3392
    %3833 = vmatpush.bf16.msra.mxu0 %v3388
    %3834 = vmatpush.bf16.msra.mxu0 %v3384
    %3835 = vmatpush.bf16.msra.mxu0 %v3380
    %3836 = vmatpush.bf16.msra.mxu0 %v3376
    %3837 = vmatpush.bf16.msra.mxu0 %v3372
    %3838 = vmatpush.bf16.msra.mxu0 %v3368
    %3839 = vmatpush.bf16.msra.mxu0 %v3364
    %3840 = vmatmul.bf16.gmra.mxu0 %v2930
    %v3841 = vpop.f32.mrf.mxu0
    %v3842 = vadd.f32 %v3823, %v3841
    %v3843 = vpop.f32.mrf.mxu0
    %v3844 = vadd.f32 %v3825, %v3843
    %3845 = vmatmul.bf16.gmra.mxu0 %v2934
    %v3846 = vpop.f32.mrf.mxu0
    %v3847 = vadd.f32 %v3828, %v3846
    %v3848 = vpop.f32.mrf.mxu0
    %v3849 = vadd.f32 %v3830, %v3848
    %3850 = vdwg.mxu0
    %3851 = vmatpush.bf16.msra.mxu0 %v3424
    %3852 = vmatpush.bf16.msra.mxu0 %v3420
    %3853 = vmatpush.bf16.msra.mxu0 %v3416
    %3854 = vmatpush.bf16.msra.mxu0 %v3412
    %3855 = vmatpush.bf16.msra.mxu0 %v3408
    %3856 = vmatpush.bf16.msra.mxu0 %v3404
    %3857 = vmatpush.bf16.msra.mxu0 %v3400
    %3858 = vmatpush.bf16.msra.mxu0 %v3396
    %3859 = vmatmul.bf16.gmra.mxu0 %v2931
    %v3860 = vpop.f32.mrf.mxu0
    %v3861 = vadd.f32 %v3842, %v3860
    %v3862 = vpop.f32.mrf.mxu0
    %v3863 = vadd.f32 %v3844, %v3862
    %3864 = vmatmul.bf16.gmra.mxu0 %v2935
    %v3865 = vpop.f32.mrf.mxu0
    %v3866 = vadd.f32 %v3847, %v3865
    %v3867 = vpop.f32.mrf.mxu0
    %v3868 = vadd.f32 %v3849, %v3867
    %3869 = vdwg.mxu0
    %3870 = vmatpush.bf16.msra.mxu0 %v3456
    %3871 = vmatpush.bf16.msra.mxu0 %v3452
    %3872 = vmatpush.bf16.msra.mxu0 %v3448
    %3873 = vmatpush.bf16.msra.mxu0 %v3444
    %3874 = vmatpush.bf16.msra.mxu0 %v3440
    %3875 = vmatpush.bf16.msra.mxu0 %v3436
    %3876 = vmatpush.bf16.msra.mxu0 %v3432
    %3877 = vmatpush.bf16.msra.mxu0 %v3428
    %3878 = vmatmul.bf16.gmra.mxu0 %v2932
    %v3879 = vpop.f32.mrf.mxu0
    %v3880 = vadd.f32 %v3861, %v3879
    %v3881 = vpop.f32.mrf.mxu0
    %v3882 = vadd.f32 %v3863, %v3881
    %3883 = vmatmul.bf16.gmra.mxu0 %v2936
    %v3884 = vpop.f32.mrf.mxu0
    %v3885 = vadd.f32 %v3866, %v3884
    %v3886 = vpop.f32.mrf.mxu0
    %v3887 = vadd.f32 %v3868, %v3886
    %3888 = vdwg.mxu0
    %v3889 = vmax.f32 %v3652, %v3804
    %v3890 = vmax.f32 %v3728, %v3880
    %v3891 = vmax.f32 %v3654, %v3806
    %v3892 = vmax.f32 %v3730, %v3882
    %v3893 = vmax.f32 %v3657, %v3809
    %v3894 = vmax.f32 %v3733, %v3885
    %v3895 = vmax.f32 %v3659, %v3811
    %v3896 = vmax.f32 %v3735, %v3887
    %v3897 = vpack.c.bf16 %v3890, %v3889
    %v3898 = vpack.c.bf16 %v3892, %v3891
    %v3899 = vpack.c.bf16 %v3894, %v3893
    %v3900 = vpack.c.bf16 %v3896, %v3895
    %v3902 = vshrl.u32 %v3897, 16
    %v3904 = vrot.slane %v3902, 7
    %v3905 = vshll.u32 %v3897, 16
    %v3907 = vor.u32 %v3904, %v3905
    %v3908 = vrot.slane %v3904, 4
    %v3910 = vshrl.u32 %v3898, 16
    %v3912 = vrot.slane %v3910, 7
    %v3913 = vshll.u32 %v3898, 16
    %v3915 = vor.u32 %v3912, %v3913
    %v3916 = vsel %vm274, %v3908, %v3915
    %v3917 = vrot.slane %v3912, 4
    %v3919 = vshrl.u32 %v3899, 16
    %v3921 = vrot.slane %v3919, 7
    %v3922 = vshll.u32 %v3899, 16
    %v3924 = vor.u32 %v3921, %v3922
    %v3925 = vrot.slane %v3921, 4
    %v3927 = vshrl.u32 %v3900, 16
    %v3929 = vrot.slane %v3927, 7
    %v3930 = vshll.u32 %v3900, 16
    %v3932 = vor.u32 %v3929, %v3930
    %v3933 = vsel %vm274, %v3925, %v3932
    %v3934 = vrot.slane %v3929, 4
    %vm3941 = vcmask 1043456
    %vm3942 = vmand %vm3941, %vm167
    %vm3943 = vcmask 1047556
    %vm3944 = vmand %vm3943, %vm208
    %vm3945 = vmor %vm3944, %vm3942
    %v3946 = vld [vmem:[#allocation3] sm:$0xff]
    %v3947 = vsel %vm3945, %v3907, %v3946
    %3948 = vst [vmem:[#allocation3] sm:$0xff] %v3947
    %3949 = vst [vmem:[#allocation3 + $0xc] sm:$0xff] %v3916
    %v3950 = vld [vmem:[#allocation3 + $0x18] sm:$0x11]
    %v3951 = vsel %vm192, %v3917, %v3950
    %3952 = vst [vmem:[#allocation3 + $0x18] sm:$0x11] %v3951
    %v3953 = vld [vmem:[#allocation3 + $0x24] sm:$0xff]
    %v3954 = vsel %vm3945, %v3924, %v3953
    %3955 = vst [vmem:[#allocation3 + $0x24] sm:$0xff] %v3954
    %3956 = vst [vmem:[#allocation3 + $0x30] sm:$0xff] %v3933
    %v3957 = vld [vmem:[#allocation3 + $0x3c] sm:$0x11]
    %v3958 = vsel %vm192, %v3934, %v3957
    %3959 = vst [vmem:[#allocation3 + $0x3c] sm:$0x11] %v3958
    %v3960 = vld [vmem:[%s5] sm:$0xf]
    %v3961 = vld [vmem:[#allocation3] sm:$0xff]
    %v3962 = vld [vmem:[#allocation3 + $0x8] sm:$0xf]
    %v3963 = vld [vmem:[#allocation3 + $0xc] sm:$0xff]
    %v3964 = vld [vmem:[#allocation3 + $0x14] sm:$0xf]
    %v3965 = vld [vmem:[#allocation3 + $0x24] sm:$0xff]
    %v3966 = vld [vmem:[#allocation3 + $0x2c] sm:$0xf]
    %v3967 = vld [vmem:[#allocation3 + $0x30] sm:$0xff]
    %v3968 = vld [vmem:[#allocation3 + $0x38] sm:$0xf]
    %v3969 = vld [vmem:[#allocation11] sm:$0xff]
    %v3970 = vld [vmem:[#allocation11 + $0x8] sm:$0xff]
    %v3971 = vld [vmem:[#allocation11 + $0x10] sm:$0xff]
    %v3972 = vld [vmem:[#allocation11 + $0x18] sm:$0xff]
    %v3973 = vld [vmem:[#allocation11 + $0x20] sm:$0xff]
    %v3974 = vld [vmem:[#allocation11 + $0x28] sm:$0xff]
    %v3975 = vld [vmem:[#allocation11 + $0x30] sm:$0xff]
    %v3976 = vld [vmem:[#allocation11 + $0x38] sm:$0xff]
    %v3977 = vld [vmem:[#allocation11 + $0x40] sm:$0xff]
    %v3978 = vld [vmem:[#allocation11 + $0x48] sm:$0xff]
    %v3979 = vld [vmem:[#allocation11 + $0x50] sm:$0xff]
    %v3980 = vld [vmem:[#allocation11 + $0x58] sm:$0xff]
    %v3981 = vld [vmem:[#allocation11 + $0x60] sm:$0xff]
    %v3982 = vld [vmem:[#allocation11 + $0x68] sm:$0xff]
    %v3983 = vld [vmem:[#allocation11 + $0x70] sm:$0xff]
    %v3984 = vld [vmem:[#allocation11 + $0x78] sm:$0xff]
    %v3985 = vld [vmem:[#allocation11 + $0x80] sm:$0xff]
    %v3986 = vld [vmem:[#allocation11 + $0x88] sm:$0xff]
    %v3987 = vld [vmem:[#allocation11 + $0x90] sm:$0xff]
    %v3988 = vld [vmem:[#allocation11 + $0x98] sm:$0xff]
    %v3989 = vld [vmem:[#allocation11 + $0xa0] sm:$0xff]
    %v3990 = vld [vmem:[#allocation11 + $0xa8] sm:$0xff]
    %v3991 = vld [vmem:[#allocation11 + $0xb0] sm:$0xff]
    %v3992 = vld [vmem:[#allocation11 + $0xb8] sm:$0xff]
    %v3993 = vld [vmem:[#allocation11 + $0xc0] sm:$0xff]
    %v3994 = vld [vmem:[#allocation11 + $0xc8] sm:$0xff]
    %v3995 = vld [vmem:[#allocation11 + $0xd0] sm:$0xff]
    %v3996 = vld [vmem:[#allocation11 + $0xd8] sm:$0xff]
    %v3997 = vld [vmem:[#allocation11 + $0xe0] sm:$0xff]
    %v3998 = vld [vmem:[#allocation11 + $0xe8] sm:$0xff]
    %v3999 = vld [vmem:[#allocation11 + $0xf0] sm:$0xff]
    %v4000 = vld [vmem:[#allocation11 + $0xf8] sm:$0xff]
    %v4001 = vld [vmem:[#allocation11 + $0x100] sm:$0xff]
    %v4002 = vld [vmem:[#allocation11 + $0x108] sm:$0xff]
    %v4003 = vld [vmem:[#allocation11 + $0x110] sm:$0xff]
    %v4004 = vld [vmem:[#allocation11 + $0x118] sm:$0xff]
    %v4005 = vld [vmem:[#allocation11 + $0x120] sm:$0xff]
    %v4006 = vld [vmem:[#allocation11 + $0x128] sm:$0xff]
    %v4007 = vld [vmem:[#allocation11 + $0x130] sm:$0xff]
    %v4008 = vld [vmem:[#allocation11 + $0x138] sm:$0xff]
    %v4009 = vld [vmem:[#allocation11 + $0x140] sm:$0xff]
    %v4010 = vld [vmem:[#allocation11 + $0x148] sm:$0xff]
    %v4011 = vld [vmem:[#allocation11 + $0x150] sm:$0xff]
    %v4012 = vld [vmem:[#allocation11 + $0x158] sm:$0xff]
    %v4013 = vld [vmem:[#allocation11 + $0x160] sm:$0xff]
    %v4014 = vld [vmem:[#allocation11 + $0x168] sm:$0xff]
    %v4015 = vld [vmem:[#allocation11 + $0x170] sm:$0xff]
    %v4016 = vld [vmem:[#allocation11 + $0x178] sm:$0xff]
    %v4017 = vld [vmem:[#allocation11 + $0x180] sm:$0xff]
    %v4018 = vld [vmem:[#allocation11 + $0x188] sm:$0xff]
    %v4019 = vld [vmem:[#allocation11 + $0x190] sm:$0xff]
    %v4020 = vld [vmem:[#allocation11 + $0x198] sm:$0xff]
    %v4021 = vld [vmem:[#allocation11 + $0x1a0] sm:$0xff]
    %v4022 = vld [vmem:[#allocation11 + $0x1a8] sm:$0xff]
    %v4023 = vld [vmem:[#allocation11 + $0x1b0] sm:$0xff]
    %v4024 = vld [vmem:[#allocation11 + $0x1b8] sm:$0xff]
    %v4025 = vld [vmem:[#allocation11 + $0x1c0] sm:$0xff]
    %v4026 = vld [vmem:[#allocation11 + $0x1c8] sm:$0xff]
    %v4027 = vld [vmem:[#allocation11 + $0x1d0] sm:$0xff]
    %v4028 = vld [vmem:[#allocation11 + $0x1d8] sm:$0xff]
    %v4029 = vld [vmem:[#allocation11 + $0x1e0] sm:$0xff]
    %v4030 = vld [vmem:[#allocation11 + $0x1e8] sm:$0xff]
    %v4031 = vld [vmem:[#allocation11 + $0x1f0] sm:$0xff]
    %v4032 = vld [vmem:[#allocation11 + $0x1f8] sm:$0xff]
    %v4033 = vld [vmem:[#allocation11 + $0x200] sm:$0xff]
    %v4034 = vld [vmem:[#allocation11 + $0x208] sm:$0xff]
    %v4035 = vld [vmem:[#allocation11 + $0x210] sm:$0xff]
    %v4036 = vld [vmem:[#allocation11 + $0x218] sm:$0xff]
    %v4037 = vld [vmem:[#allocation11 + $0x220] sm:$0xff]
    %v4038 = vld [vmem:[#allocation11 + $0x228] sm:$0xff]
    %v4039 = vld [vmem:[#allocation11 + $0x230] sm:$0xff]
    %v4040 = vld [vmem:[#allocation11 + $0x238] sm:$0xff]
    %v4041 = vld [vmem:[#allocation3 + $0x18] sm:$0x11]
    %v4042 = vld [vmem:[#allocation3 + $0x20] sm:$0x1]
    %v4043 = vld [vmem:[#allocation3 + $0x3c] sm:$0x11]
    %v4044 = vld [vmem:[#allocation3 + $0x44] sm:$0x1]
    %v4046 = vshrl.u32 %v3961, 16
    %v4048 = vrot.slane %v4046, 4
    %v4049 = vshll.u32 %v3961, 16
    %v4051 = vrot.slane %v4049, 5
    %v4052 = vor.u32 %v4048, %v4051
    %v4053 = vrot.slane %v4052, 4
    %v4055 = vshll.u32 %v3963, 16
    %v4057 = vrot.slane %v4055, 5
    %v4058 = vsel %vm417, %v4053, %v4057
    %v4060 = vshrl.u32 %v3962, 16
    %v4062 = vrot.slane %v4060, 4
    %v4063 = vshll.u32 %v3962, 16
    %v4065 = vrot.slane %v4063, 5
    %v4066 = vor.u32 %v4062, %v4065
    %v4067 = vrot.slane %v4066, 4
    %v4069 = vshll.u32 %v3964, 16
    %v4071 = vrot.slane %v4069, 5
    %v4072 = vsel %vm417, %v4067, %v4071
    %v4073 = vshrl.u32 %v3963, 16
    %v4075 = vrot.slane %v4073, 4
    %v4076 = vor.u32 %v4075, %v4057
    %v4077 = vrot.slane %v4076, 4
    %v4079 = vshll.u32 %v4041, 16
    %v4081 = vrot.slane %v4079, 5
    %v4082 = vsel %vm417, %v4077, %v4081
    %v4083 = vshrl.u32 %v3964, 16
    %v4085 = vrot.slane %v4083, 4
    %v4086 = vor.u32 %v4085, %v4071
    %v4087 = vrot.slane %v4086, 4
    %v4089 = vshll.u32 %v4042, 16
    %v4091 = vrot.slane %v4089, 5
    %v4092 = vsel %vm417, %v4087, %v4091
    %v4094 = vshrl.u32 %v3965, 16
    %v4096 = vrot.slane %v4094, 4
    %v4097 = vshll.u32 %v3965, 16
    %v4099 = vrot.slane %v4097, 5
    %v4100 = vor.u32 %v4096, %v4099
    %v4101 = vrot.slane %v4100, 4
    %v4103 = vshll.u32 %v3967, 16
    %v4105 = vrot.slane %v4103, 5
    %v4106 = vsel %vm417, %v4101, %v4105
    %v4108 = vshrl.u32 %v3966, 16
    %v4110 = vrot.slane %v4108, 4
    %v4111 = vshll.u32 %v3966, 16
    %v4113 = vrot.slane %v4111, 5
    %v4114 = vor.u32 %v4110, %v4113
    %v4115 = vrot.slane %v4114, 4
    %v4117 = vshll.u32 %v3968, 16
    %v4119 = vrot.slane %v4117, 5
    %v4120 = vsel %vm417, %v4115, %v4119
    %v4121 = vshrl.u32 %v3967, 16
    %v4123 = vrot.slane %v4121, 4
    %v4124 = vor.u32 %v4123, %v4105
    %v4125 = vrot.slane %v4124, 4
    %v4127 = vshll.u32 %v4043, 16
    %v4129 = vrot.slane %v4127, 5
    %v4130 = vsel %vm417, %v4125, %v4129
    %v4131 = vshrl.u32 %v3968, 16
    %v4133 = vrot.slane %v4131, 4
    %v4134 = vor.u32 %v4133, %v4119
    %v4135 = vrot.slane %v4134, 4
    %v4137 = vshll.u32 %v4044, 16
    %v4139 = vrot.slane %v4137, 5
    %v4140 = vsel %vm417, %v4135, %v4139
    %s4141 = scalar_lea.vmem [#allocation11], 576
    %v4142 = vld [vmem:[%s4141] sm:$0xff]
    %v4143 = vld [vmem:[%s4141 + $0x8] sm:$0xff]
    %v4144 = vld [vmem:[%s4141 + $0x10] sm:$0xff]
    %v4145 = vld [vmem:[%s4141 + $0x18] sm:$0xff]
    %v4146 = vld [vmem:[%s4141 + $0x20] sm:$0xff]
    %v4147 = vld [vmem:[%s4141 + $0x28] sm:$0xff]
    %v4148 = vld [vmem:[%s4141 + $0x30] sm:$0xff]
    %v4149 = vld [vmem:[%s4141 + $0x38] sm:$0xff]
    %v4150 = vld [vmem:[%s4141 + $0x40] sm:$0xff]
    %v4151 = vld [vmem:[%s4141 + $0x48] sm:$0xff]
    %v4152 = vld [vmem:[%s4141 + $0x50] sm:$0xff]
    %v4153 = vld [vmem:[%s4141 + $0x58] sm:$0xff]
    %v4154 = vld [vmem:[%s4141 + $0x60] sm:$0xff]
    %v4155 = vld [vmem:[%s4141 + $0x68] sm:$0xff]
    %v4156 = vld [vmem:[%s4141 + $0x70] sm:$0xff]
    %v4157 = vld [vmem:[%s4141 + $0x78] sm:$0xff]
    %v4158 = vld [vmem:[%s4141 + $0x80] sm:$0xff]
    %v4159 = vld [vmem:[%s4141 + $0x88] sm:$0xff]
    %v4160 = vld [vmem:[%s4141 + $0x90] sm:$0xff]
    %v4161 = vld [vmem:[%s4141 + $0x98] sm:$0xff]
    %v4162 = vld [vmem:[%s4141 + $0xa0] sm:$0xff]
    %v4163 = vld [vmem:[%s4141 + $0xa8] sm:$0xff]
    %v4164 = vld [vmem:[%s4141 + $0xb0] sm:$0xff]
    %v4165 = vld [vmem:[%s4141 + $0xb8] sm:$0xff]
    %v4166 = vld [vmem:[%s4141 + $0xc0] sm:$0xff]
    %v4167 = vld [vmem:[%s4141 + $0xc8] sm:$0xff]
    %v4168 = vld [vmem:[%s4141 + $0xd0] sm:$0xff]
    %v4169 = vld [vmem:[%s4141 + $0xd8] sm:$0xff]
    %v4170 = vld [vmem:[%s4141 + $0xe0] sm:$0xff]
    %v4171 = vld [vmem:[%s4141 + $0xe8] sm:$0xff]
    %v4172 = vld [vmem:[%s4141 + $0xf0] sm:$0xff]
    %v4173 = vld [vmem:[%s4141 + $0xf8] sm:$0xff]
    %v4174 = vld [vmem:[%s4141 + $0x100] sm:$0xff]
    %v4175 = vld [vmem:[%s4141 + $0x108] sm:$0xff]
    %v4176 = vld [vmem:[%s4141 + $0x110] sm:$0xff]
    %v4177 = vld [vmem:[%s4141 + $0x118] sm:$0xff]
    %v4178 = vld [vmem:[%s4141 + $0x120] sm:$0xff]
    %v4179 = vld [vmem:[%s4141 + $0x128] sm:$0xff]
    %v4180 = vld [vmem:[%s4141 + $0x130] sm:$0xff]
    %v4181 = vld [vmem:[%s4141 + $0x138] sm:$0xff]
    %v4182 = vld [vmem:[%s4141 + $0x140] sm:$0xff]
    %v4183 = vld [vmem:[%s4141 + $0x148] sm:$0xff]
    %v4184 = vld [vmem:[%s4141 + $0x150] sm:$0xff]
    %v4185 = vld [vmem:[%s4141 + $0x158] sm:$0xff]
    %v4186 = vld [vmem:[%s4141 + $0x160] sm:$0xff]
    %v4187 = vld [vmem:[%s4141 + $0x168] sm:$0xff]
    %v4188 = vld [vmem:[%s4141 + $0x170] sm:$0xff]
    %v4189 = vld [vmem:[%s4141 + $0x178] sm:$0xff]
    %v4190 = vld [vmem:[%s4141 + $0x180] sm:$0xff]
    %v4191 = vld [vmem:[%s4141 + $0x188] sm:$0xff]
    %v4192 = vld [vmem:[%s4141 + $0x190] sm:$0xff]
    %v4193 = vld [vmem:[%s4141 + $0x198] sm:$0xff]
    %v4194 = vld [vmem:[%s4141 + $0x1a0] sm:$0xff]
    %v4195 = vld [vmem:[%s4141 + $0x1a8] sm:$0xff]
    %v4196 = vld [vmem:[%s4141 + $0x1b0] sm:$0xff]
    %v4197 = vld [vmem:[%s4141 + $0x1b8] sm:$0xff]
    %v4198 = vld [vmem:[%s4141 + $0x1c0] sm:$0xff]
    %v4199 = vld [vmem:[%s4141 + $0x1c8] sm:$0xff]
    %v4200 = vld [vmem:[%s4141 + $0x1d0] sm:$0xff]
    %v4201 = vld [vmem:[%s4141 + $0x1d8] sm:$0xff]
    %v4202 = vld [vmem:[%s4141 + $0x1e0] sm:$0xff]
    %v4203 = vld [vmem:[%s4141 + $0x1e8] sm:$0xff]
    %v4204 = vld [vmem:[%s4141 + $0x1f0] sm:$0xff]
    %v4205 = vld [vmem:[%s4141 + $0x1f8] sm:$0xff]
    %v4206 = vld [vmem:[%s4141 + $0x200] sm:$0xff]
    %v4207 = vld [vmem:[%s4141 + $0x208] sm:$0xff]
    %v4208 = vld [vmem:[%s4141 + $0x210] sm:$0xff]
    %v4209 = vld [vmem:[%s4141 + $0x218] sm:$0xff]
    %v4210 = vld [vmem:[%s4141 + $0x220] sm:$0xff]
    %v4211 = vld [vmem:[%s4141 + $0x228] sm:$0xff]
    %v4212 = vld [vmem:[%s4141 + $0x230] sm:$0xff]
    %v4213 = vld [vmem:[%s4141 + $0x238] sm:$0xff]
    %v4214 = vunpack.c.l.b16 %v4058
    %v4215 = vunpack.c.h.b16 %v4058
    %v4216 = vunpack.c.l.b16 %v4072
    %v4217 = vunpack.c.l.b16 %v4082
    %v4218 = vunpack.c.h.b16 %v4082
    %v4219 = vunpack.c.l.b16 %v4092
    %v4220 = vunpack.c.l.b16 %v4106
    %v4221 = vunpack.c.h.b16 %v4106
    %v4222 = vunpack.c.l.b16 %v4120
    %v4223 = vunpack.c.l.b16 %v4130
    %v4224 = vunpack.c.h.b16 %v4130
    %v4225 = vunpack.c.l.b16 %v4140
    %v4226 = vpack.c.b16 %v4217, %v4214
    %v4227 = vpack.c.b16 %v4218, %v4215
    %v4228 = vpack.c.b16 %v4219, %v4216
    %v4229 = vpack.c.b16 %v4223, %v4220
    %v4230 = vpack.c.b16 %v4224, %v4221
    %v4231 = vpack.c.b16 %v4225, %v4222
    %v4308 = vunpack.c.l.b16 %v4142
    %v4309 = vunpack.c.h.b16 %v4142
    %v4310 = vunpack.c.l.b16 %v4143
    %v4311 = vunpack.c.h.b16 %v4143
    %v4312 = vunpack.c.l.b16 %v4144
    %v4313 = vunpack.c.h.b16 %v4144
    %v4314 = vunpack.c.l.b16 %v4145
    %v4315 = vunpack.c.h.b16 %v4145
    %v4316 = vunpack.c.l.b16 %v4146
    %v4317 = vunpack.c.h.b16 %v4146
    %v4318 = vunpack.c.l.b16 %v4147
    %v4319 = vunpack.c.h.b16 %v4147
    %v4320 = vunpack.c.l.b16 %v4148
    %v4321 = vunpack.c.h.b16 %v4148
    %v4322 = vunpack.c.l.b16 %v4149
    %v4323 = vunpack.c.h.b16 %v4149
    %v4324 = vunpack.c.l.b16 %v4150
    %v4325 = vunpack.c.h.b16 %v4150
    %v4326 = vunpack.c.l.b16 %v4151
    %v4327 = vunpack.c.h.b16 %v4151
    %v4328 = vunpack.c.l.b16 %v4152
    %v4329 = vunpack.c.h.b16 %v4152
    %v4330 = vunpack.c.l.b16 %v4153
    %v4331 = vunpack.c.h.b16 %v4153
    %v4332 = vunpack.c.l.b16 %v4154
    %v4333 = vunpack.c.h.b16 %v4154
    %v4334 = vunpack.c.l.b16 %v4155
    %v4335 = vunpack.c.h.b16 %v4155
    %v4336 = vunpack.c.l.b16 %v4156
    %v4337 = vunpack.c.h.b16 %v4156
    %v4338 = vunpack.c.l.b16 %v4157
    %v4339 = vunpack.c.h.b16 %v4157
    %v4340 = vunpack.c.l.b16 %v4158
    %v4341 = vunpack.c.h.b16 %v4158
    %v4342 = vunpack.c.l.b16 %v4159
    %v4343 = vunpack.c.h.b16 %v4159
    %v4344 = vunpack.c.l.b16 %v4160
    %v4345 = vunpack.c.h.b16 %v4160
    %v4346 = vunpack.c.l.b16 %v4161
    %v4347 = vunpack.c.h.b16 %v4161
    %v4348 = vunpack.c.l.b16 %v4162
    %v4349 = vunpack.c.h.b16 %v4162
    %v4350 = vunpack.c.l.b16 %v4163
    %v4351 = vunpack.c.h.b16 %v4163
    %v4352 = vunpack.c.l.b16 %v4164
    %v4353 = vunpack.c.h.b16 %v4164
    %v4354 = vunpack.c.l.b16 %v4165
    %v4355 = vunpack.c.h.b16 %v4165
    %v4356 = vunpack.c.l.b16 %v4166
    %v4357 = vunpack.c.h.b16 %v4166
    %v4358 = vunpack.c.l.b16 %v4167
    %v4359 = vunpack.c.h.b16 %v4167
    %v4360 = vunpack.c.l.b16 %v4168
    %v4361 = vunpack.c.h.b16 %v4168
    %v4362 = vunpack.c.l.b16 %v4169
    %v4363 = vunpack.c.h.b16 %v4169
    %v4364 = vunpack.c.l.b16 %v4170
    %v4365 = vunpack.c.h.b16 %v4170
    %v4366 = vunpack.c.l.b16 %v4171
    %v4367 = vunpack.c.h.b16 %v4171
    %v4368 = vunpack.c.l.b16 %v4172
    %v4369 = vunpack.c.h.b16 %v4172
    %v4370 = vunpack.c.l.b16 %v4173
    %v4371 = vunpack.c.h.b16 %v4173
    %v4372 = vunpack.c.l.b16 %v4174
    %v4373 = vunpack.c.h.b16 %v4174
    %v4374 = vunpack.c.l.b16 %v4175
    %v4375 = vunpack.c.h.b16 %v4175
    %v4376 = vunpack.c.l.b16 %v4176
    %v4377 = vunpack.c.h.b16 %v4176
    %v4378 = vunpack.c.l.b16 %v4177
    %v4379 = vunpack.c.h.b16 %v4177
    %v4380 = vunpack.c.l.b16 %v4178
    %v4381 = vunpack.c.h.b16 %v4178
    %v4382 = vunpack.c.l.b16 %v4179
    %v4383 = vunpack.c.h.b16 %v4179
    %v4384 = vunpack.c.l.b16 %v4180
    %v4385 = vunpack.c.h.b16 %v4180
    %v4386 = vunpack.c.l.b16 %v4181
    %v4387 = vunpack.c.h.b16 %v4181
    %v4388 = vunpack.c.l.b16 %v4182
    %v4389 = vunpack.c.h.b16 %v4182
    %v4390 = vunpack.c.l.b16 %v4183
    %v4391 = vunpack.c.h.b16 %v4183
    %v4392 = vunpack.c.l.b16 %v4184
    %v4393 = vunpack.c.h.b16 %v4184
    %v4394 = vunpack.c.l.b16 %v4185
    %v4395 = vunpack.c.h.b16 %v4185
    %v4396 = vunpack.c.l.b16 %v4186
    %v4397 = vunpack.c.h.b16 %v4186
    %v4398 = vunpack.c.l.b16 %v4187
    %v4399 = vunpack.c.h.b16 %v4187
    %v4400 = vunpack.c.l.b16 %v4188
    %v4401 = vunpack.c.h.b16 %v4188
    %v4402 = vunpack.c.l.b16 %v4189
    %v4403 = vunpack.c.h.b16 %v4189
    %v4404 = vunpack.c.l.b16 %v4190
    %v4405 = vunpack.c.h.b16 %v4190
    %v4406 = vunpack.c.l.b16 %v4191
    %v4407 = vunpack.c.h.b16 %v4191
    %v4408 = vunpack.c.l.b16 %v4192
    %v4409 = vunpack.c.h.b16 %v4192
    %v4410 = vunpack.c.l.b16 %v4193
    %v4411 = vunpack.c.h.b16 %v4193
    %v4412 = vunpack.c.l.b16 %v4194
    %v4413 = vunpack.c.h.b16 %v4194
    %v4414 = vunpack.c.l.b16 %v4195
    %v4415 = vunpack.c.h.b16 %v4195
    %v4416 = vunpack.c.l.b16 %v4196
    %v4417 = vunpack.c.h.b16 %v4196
    %v4418 = vunpack.c.l.b16 %v4197
    %v4419 = vunpack.c.h.b16 %v4197
    %v4420 = vunpack.c.l.b16 %v4198
    %v4421 = vunpack.c.h.b16 %v4198
    %v4422 = vunpack.c.l.b16 %v4199
    %v4423 = vunpack.c.h.b16 %v4199
    %v4424 = vunpack.c.l.b16 %v4200
    %v4425 = vunpack.c.h.b16 %v4200
    %v4426 = vunpack.c.l.b16 %v4201
    %v4427 = vunpack.c.h.b16 %v4201
    %v4428 = vunpack.c.l.b16 %v4202
    %v4429 = vunpack.c.h.b16 %v4202
    %v4430 = vunpack.c.l.b16 %v4203
    %v4431 = vunpack.c.h.b16 %v4203
    %v4432 = vunpack.c.l.b16 %v4204
    %v4433 = vunpack.c.h.b16 %v4204
    %v4434 = vunpack.c.l.b16 %v4205
    %v4435 = vunpack.c.h.b16 %v4205
    %v4436 = vunpack.c.l.b16 %v4206
    %v4437 = vunpack.c.h.b16 %v4206
    %v4438 = vunpack.c.l.b16 %v4207
    %v4439 = vunpack.c.h.b16 %v4207
    %v4440 = vunpack.c.l.b16 %v4208
    %v4441 = vunpack.c.h.b16 %v4208
    %v4442 = vunpack.c.l.b16 %v4209
    %v4443 = vunpack.c.h.b16 %v4209
    %v4444 = vunpack.c.l.b16 %v4210
    %v4445 = vunpack.c.h.b16 %v4210
    %v4446 = vunpack.c.l.b16 %v4211
    %v4447 = vunpack.c.h.b16 %v4211
    %v4448 = vunpack.c.l.b16 %v4212
    %v4449 = vunpack.c.h.b16 %v4212
    %v4450 = vunpack.c.l.b16 %v4213
    %v4451 = vunpack.c.h.b16 %v4213
    %v4452 = vpack.c.b16 %v4312, %v4308
    %v4453 = vpack.c.b16 %v4313, %v4309
    %v4454 = vpack.c.b16 %v4314, %v4310
    %v4455 = vpack.c.b16 %v4315, %v4311
    %v4456 = vpack.c.b16 %v4320, %v4316
    %v4457 = vpack.c.b16 %v4321, %v4317
    %v4458 = vpack.c.b16 %v4322, %v4318
    %v4459 = vpack.c.b16 %v4323, %v4319
    %v4460 = vpack.c.b16 %v4328, %v4324
    %v4461 = vpack.c.b16 %v4329, %v4325
    %v4462 = vpack.c.b16 %v4330, %v4326
    %v4463 = vpack.c.b16 %v4331, %v4327
    %v4464 = vpack.c.b16 %v4336, %v4332
    %v4465 = vpack.c.b16 %v4337, %v4333
    %v4466 = vpack.c.b16 %v4338, %v4334
    %v4467 = vpack.c.b16 %v4339, %v4335
    %v4468 = vpack.c.b16 %v4344, %v4340
    %v4469 = vpack.c.b16 %v4345, %v4341
    %v4470 = vpack.c.b16 %v4346, %v4342
    %v4471 = vpack.c.b16 %v4347, %v4343
    %v4472 = vpack.c.b16 %v4352, %v4348
    %v4473 = vpack.c.b16 %v4353, %v4349
    %v4474 = vpack.c.b16 %v4354, %v4350
    %v4475 = vpack.c.b16 %v4355, %v4351
    %v4476 = vpack.c.b16 %v4360, %v4356
    %v4477 = vpack.c.b16 %v4361, %v4357
    %v4478 = vpack.c.b16 %v4362, %v4358
    %v4479 = vpack.c.b16 %v4363, %v4359
    %v4480 = vpack.c.b16 %v4368, %v4364
    %v4481 = vpack.c.b16 %v4369, %v4365
    %v4482 = vpack.c.b16 %v4370, %v4366
    %v4483 = vpack.c.b16 %v4371, %v4367
    %v4484 = vpack.c.b16 %v4376, %v4372
    %v4485 = vpack.c.b16 %v4377, %v4373
    %v4486 = vpack.c.b16 %v4378, %v4374
    %v4487 = vpack.c.b16 %v4379, %v4375
    %v4488 = vpack.c.b16 %v4384, %v4380
    %v4489 = vpack.c.b16 %v4385, %v4381
    %v4490 = vpack.c.b16 %v4386, %v4382
    %v4491 = vpack.c.b16 %v4387, %v4383
    %v4492 = vpack.c.b16 %v4392, %v4388
    %v4493 = vpack.c.b16 %v4393, %v4389
    %v4494 = vpack.c.b16 %v4394, %v4390
    %v4495 = vpack.c.b16 %v4395, %v4391
    %v4496 = vpack.c.b16 %v4400, %v4396
    %v4497 = vpack.c.b16 %v4401, %v4397
    %v4498 = vpack.c.b16 %v4402, %v4398
    %v4499 = vpack.c.b16 %v4403, %v4399
    %v4500 = vpack.c.b16 %v4408, %v4404
    %v4501 = vpack.c.b16 %v4409, %v4405
    %v4502 = vpack.c.b16 %v4410, %v4406
    %v4503 = vpack.c.b16 %v4411, %v4407
    %v4504 = vpack.c.b16 %v4416, %v4412
    %v4505 = vpack.c.b16 %v4417, %v4413
    %v4506 = vpack.c.b16 %v4418, %v4414
    %v4507 = vpack.c.b16 %v4419, %v4415
    %v4508 = vpack.c.b16 %v4424, %v4420
    %v4509 = vpack.c.b16 %v4425, %v4421
    %v4510 = vpack.c.b16 %v4426, %v4422
    %v4511 = vpack.c.b16 %v4427, %v4423
    %v4512 = vpack.c.b16 %v4432, %v4428
    %v4513 = vpack.c.b16 %v4433, %v4429
    %v4514 = vpack.c.b16 %v4434, %v4430
    %v4515 = vpack.c.b16 %v4435, %v4431
    %v4516 = vpack.c.b16 %v4440, %v4436
    %v4517 = vpack.c.b16 %v4441, %v4437
    %v4518 = vpack.c.b16 %v4442, %v4438
    %v4519 = vpack.c.b16 %v4443, %v4439
    %v4520 = vpack.c.b16 %v4448, %v4444
    %v4521 = vpack.c.b16 %v4449, %v4445
    %v4522 = vpack.c.b16 %v4450, %v4446
    %v4523 = vpack.c.b16 %v4451, %v4447
    %vm4596 = vcmask 261120
    %v4598 = vsel %vm4596, %v4228, 0
    %v4601 = vsel %vm4596, %v4231, 0
    %4603 = vmatpush.bf16.msra.mxu0 %v4480
    %4604 = vmatpush.bf16.msra.mxu0 %v4476
    %4605 = vmatpush.bf16.msra.mxu0 %v4472
    %4606 = vmatpush.bf16.msra.mxu0 %v4468
    %4607 = vmatpush.bf16.msra.mxu0 %v4464
    %4608 = vmatpush.bf16.msra.mxu0 %v4460
    %4609 = vmatpush.bf16.msra.mxu0 %v4456
    %4610 = vmatpush.bf16.msra.mxu0 %v4452
    %4611 = vmatmul.bf16.gmra.mxu0 %v4226
    %v4612 = vpop.f32.mrf.mxu0
    %v4613 = vadd.f32 0.0, %v4612
    %v4614 = vpop.f32.mrf.mxu0
    %v4615 = vadd.f32 0.0, %v4614
    %4616 = vmatmul.bf16.gmra.mxu0 %v4229
    %v4617 = vpop.f32.mrf.mxu0
    %v4618 = vadd.f32 0.0, %v4617
    %v4619 = vpop.f32.mrf.mxu0
    %v4620 = vadd.f32 0.0, %v4619
    %4621 = vdwg.mxu0
    %4622 = vmatpush.bf16.msra.mxu0 %v4512
    %4623 = vmatpush.bf16.msra.mxu0 %v4508
    %4624 = vmatpush.bf16.msra.mxu0 %v4504
    %4625 = vmatpush.bf16.msra.mxu0 %v4500
    %4626 = vmatpush.bf16.msra.mxu0 %v4496
    %4627 = vmatpush.bf16.msra.mxu0 %v4492
    %4628 = vmatpush.bf16.msra.mxu0 %v4488
    %4629 = vmatpush.bf16.msra.mxu0 %v4484
    %4630 = vmatmul.bf16.gmra.mxu0 %v4227
    %v4631 = vpop.f32.mrf.mxu0
    %v4632 = vadd.f32 %v4613, %v4631
    %v4633 = vpop.f32.mrf.mxu0
    %v4634 = vadd.f32 %v4615, %v4633
    %4635 = vmatmul.bf16.gmra.mxu0 %v4230
    %v4636 = vpop.f32.mrf.mxu0
    %v4637 = vadd.f32 %v4618, %v4636
    %v4638 = vpop.f32.mrf.mxu0
    %v4639 = vadd.f32 %v4620, %v4638
    %4640 = vdwg.mxu0
    %4641 = vmatpush.bf16.msra.mxu0 0
    %4642 = vmatpush.bf16.msra.mxu0 0
    %4643 = vmatpush.bf16.msra.mxu0 0
    %4644 = vmatpush.bf16.msra.mxu0 0
    %4645 = vmatpush.bf16.msra.mxu0 0
    %4646 = vmatpush.bf16.msra.mxu0 0
    %4647 = vmatpush.bf16.msra.mxu0 %v4520
    %4648 = vmatpush.bf16.msra.mxu0 %v4516
    %4649 = vmatmul.bf16.gmra.mxu0 %v4598
    %v4650 = vpop.f32.mrf.mxu0
    %v4651 = vadd.f32 %v4632, %v4650
    %v4652 = vpop.f32.mrf.mxu0
    %v4653 = vadd.f32 %v4634, %v4652
    %4654 = vmatmul.bf16.gmra.mxu0 %v4601
    %v4655 = vpop.f32.mrf.mxu0
    %v4656 = vadd.f32 %v4637, %v4655
    %v4657 = vpop.f32.mrf.mxu0
    %v4658 = vadd.f32 %v4639, %v4657
    %4659 = vdwg.mxu0
    %4660 = vmatpush.bf16.msra.mxu0 %v4481
    %4661 = vmatpush.bf16.msra.mxu0 %v4477
    %4662 = vmatpush.bf16.msra.mxu0 %v4473
    %4663 = vmatpush.bf16.msra.mxu0 %v4469
    %4664 = vmatpush.bf16.msra.mxu0 %v4465
    %4665 = vmatpush.bf16.msra.mxu0 %v4461
    %4666 = vmatpush.bf16.msra.mxu0 %v4457
    %4667 = vmatpush.bf16.msra.mxu0 %v4453
    %4668 = vmatmul.bf16.gmra.mxu0 %v4226
    %v4669 = vpop.f32.mrf.mxu0
    %v4670 = vadd.f32 0.0, %v4669
    %v4671 = vpop.f32.mrf.mxu0
    %v4672 = vadd.f32 0.0, %v4671
    %4673 = vmatmul.bf16.gmra.mxu0 %v4229
    %v4674 = vpop.f32.mrf.mxu0
    %v4675 = vadd.f32 0.0, %v4674
    %v4676 = vpop.f32.mrf.mxu0
    %v4677 = vadd.f32 0.0, %v4676
    %4678 = vdwg.mxu0
    %4679 = vmatpush.bf16.msra.mxu0 %v4513
    %4680 = vmatpush.bf16.msra.mxu0 %v4509
    %4681 = vmatpush.bf16.msra.mxu0 %v4505
    %4682 = vmatpush.bf16.msra.mxu0 %v4501
    %4683 = vmatpush.bf16.msra.mxu0 %v4497
    %4684 = vmatpush.bf16.msra.mxu0 %v4493
    %4685 = vmatpush.bf16.msra.mxu0 %v4489
    %4686 = vmatpush.bf16.msra.mxu0 %v4485
    %4687 = vmatmul.bf16.gmra.mxu0 %v4227
    %v4688 = vpop.f32.mrf.mxu0
    %v4689 = vadd.f32 %v4670, %v4688
    %v4690 = vpop.f32.mrf.mxu0
    %v4691 = vadd.f32 %v4672, %v4690
    %4692 = vmatmul.bf16.gmra.mxu0 %v4230
    %v4693 = vpop.f32.mrf.mxu0
    %v4694 = vadd.f32 %v4675, %v4693
    %v4695 = vpop.f32.mrf.mxu0
    %v4696 = vadd.f32 %v4677, %v4695
    %4697 = vdwg.mxu0
    %4698 = vmatpush.bf16.msra.mxu0 0
    %4699 = vmatpush.bf16.msra.mxu0 0
    %4700 = vmatpush.bf16.msra.mxu0 0
    %4701 = vmatpush.bf16.msra.mxu0 0
    %4702 = vmatpush.bf16.msra.mxu0 0
    %4703 = vmatpush.bf16.msra.mxu0 0
    %4704 = vmatpush.bf16.msra.mxu0 %v4521
    %4705 = vmatpush.bf16.msra.mxu0 %v4517
    %4706 = vmatmul.bf16.gmra.mxu0 %v4598
    %v4707 = vpop.f32.mrf.mxu0
    %v4708 = vadd.f32 %v4689, %v4707
    %v4709 = vpop.f32.mrf.mxu0
    %v4710 = vadd.f32 %v4691, %v4709
    %4711 = vmatmul.bf16.gmra.mxu0 %v4601
    %v4712 = vpop.f32.mrf.mxu0
    %v4713 = vadd.f32 %v4694, %v4712
    %v4714 = vpop.f32.mrf.mxu0
    %v4715 = vadd.f32 %v4696, %v4714
    %4716 = vdwg.mxu0
    %4717 = vmatpush.bf16.msra.mxu0 %v4482
    %4718 = vmatpush.bf16.msra.mxu0 %v4478
    %4719 = vmatpush.bf16.msra.mxu0 %v4474
    %4720 = vmatpush.bf16.msra.mxu0 %v4470
    %4721 = vmatpush.bf16.msra.mxu0 %v4466
    %4722 = vmatpush.bf16.msra.mxu0 %v4462
    %4723 = vmatpush.bf16.msra.mxu0 %v4458
    %4724 = vmatpush.bf16.msra.mxu0 %v4454
    %4725 = vmatmul.bf16.gmra.mxu0 %v4226
    %v4726 = vpop.f32.mrf.mxu0
    %v4727 = vadd.f32 0.0, %v4726
    %v4728 = vpop.f32.mrf.mxu0
    %v4729 = vadd.f32 0.0, %v4728
    %4730 = vmatmul.bf16.gmra.mxu0 %v4229
    %v4731 = vpop.f32.mrf.mxu0
    %v4732 = vadd.f32 0.0, %v4731
    %v4733 = vpop.f32.mrf.mxu0
    %v4734 = vadd.f32 0.0, %v4733
    %4735 = vdwg.mxu0
    %4736 = vmatpush.bf16.msra.mxu0 %v4514
    %4737 = vmatpush.bf16.msra.mxu0 %v4510
    %4738 = vmatpush.bf16.msra.mxu0 %v4506
    %4739 = vmatpush.bf16.msra.mxu0 %v4502
    %4740 = vmatpush.bf16.msra.mxu0 %v4498
    %4741 = vmatpush.bf16.msra.mxu0 %v4494
    %4742 = vmatpush.bf16.msra.mxu0 %v4490
    %4743 = vmatpush.bf16.msra.mxu0 %v4486
    %4744 = vmatmul.bf16.gmra.mxu0 %v4227
    %v4745 = vpop.f32.mrf.mxu0
    %v4746 = vadd.f32 %v4727, %v4745
    %v4747 = vpop.f32.mrf.mxu0
    %v4748 = vadd.f32 %v4729, %v4747
    %4749 = vmatmul.bf16.gmra.mxu0 %v4230
    %v4750 = vpop.f32.mrf.mxu0
    %v4751 = vadd.f32 %v4732, %v4750
    %v4752 = vpop.f32.mrf.mxu0
    %v4753 = vadd.f32 %v4734, %v4752
    %4754 = vdwg.mxu0
    %4755 = vmatpush.bf16.msra.mxu0 0
    %4756 = vmatpush.bf16.msra.mxu0 0
    %4757 = vmatpush.bf16.msra.mxu0 0
    %4758 = vmatpush.bf16.msra.mxu0 0
    %4759 = vmatpush.bf16.msra.mxu0 0
    %4760 = vmatpush.bf16.msra.mxu0 0
    %4761 = vmatpush.bf16.msra.mxu0 %v4522
    %4762 = vmatpush.bf16.msra.mxu0 %v4518
    %4763 = vmatmul.bf16.gmra.mxu0 %v4598
    %v4764 = vpop.f32.mrf.mxu0
    %v4765 = vadd.f32 %v4746, %v4764
    %v4766 = vpop.f32.mrf.mxu0
    %v4767 = vadd.f32 %v4748, %v4766
    %4768 = vmatmul.bf16.gmra.mxu0 %v4601
    %v4769 = vpop.f32.mrf.mxu0
    %v4770 = vadd.f32 %v4751, %v4769
    %v4771 = vpop.f32.mrf.mxu0
    %v4772 = vadd.f32 %v4753, %v4771
    %4773 = vdwg.mxu0
    %4774 = vmatpush.bf16.msra.mxu0 %v4483
    %4775 = vmatpush.bf16.msra.mxu0 %v4479
    %4776 = vmatpush.bf16.msra.mxu0 %v4475
    %4777 = vmatpush.bf16.msra.mxu0 %v4471
    %4778 = vmatpush.bf16.msra.mxu0 %v4467
    %4779 = vmatpush.bf16.msra.mxu0 %v4463
    %4780 = vmatpush.bf16.msra.mxu0 %v4459
    %4781 = vmatpush.bf16.msra.mxu0 %v4455
    %4782 = vmatmul.bf16.gmra.mxu0 %v4226
    %v4783 = vpop.f32.mrf.mxu0
    %v4784 = vadd.f32 0.0, %v4783
    %v4785 = vpop.f32.mrf.mxu0
    %v4786 = vadd.f32 0.0, %v4785
    %4787 = vmatmul.bf16.gmra.mxu0 %v4229
    %v4788 = vpop.f32.mrf.mxu0
    %v4789 = vadd.f32 0.0, %v4788
    %v4790 = vpop.f32.mrf.mxu0
    %v4791 = vadd.f32 0.0, %v4790
    %4792 = vdwg.mxu0
    %4793 = vmatpush.bf16.msra.mxu0 %v4515
    %4794 = vmatpush.bf16.msra.mxu0 %v4511
    %4795 = vmatpush.bf16.msra.mxu0 %v4507
    %4796 = vmatpush.bf16.msra.mxu0 %v4503
    %4797 = vmatpush.bf16.msra.mxu0 %v4499
    %4798 = vmatpush.bf16.msra.mxu0 %v4495
    %4799 = vmatpush.bf16.msra.mxu0 %v4491
    %4800 = vmatpush.bf16.msra.mxu0 %v4487
    %4801 = vmatmul.bf16.gmra.mxu0 %v4227
    %v4802 = vpop.f32.mrf.mxu0
    %v4803 = vadd.f32 %v4784, %v4802
    %v4804 = vpop.f32.mrf.mxu0
    %v4805 = vadd.f32 %v4786, %v4804
    %4806 = vmatmul.bf16.gmra.mxu0 %v4230
    %v4807 = vpop.f32.mrf.mxu0
    %v4808 = vadd.f32 %v4789, %v4807
    %v4809 = vpop.f32.mrf.mxu0
    %v4810 = vadd.f32 %v4791, %v4809
    %4811 = vdwg.mxu0
    %4812 = vmatpush.bf16.msra.mxu0 0
    %4813 = vmatpush.bf16.msra.mxu0 0
    %4814 = vmatpush.bf16.msra.mxu0 0
    %4815 = vmatpush.bf16.msra.mxu0 0
    %4816 = vmatpush.bf16.msra.mxu0 0
    %4817 = vmatpush.bf16.msra.mxu0 0
    %4818 = vmatpush.bf16.msra.mxu0 %v4523
    %4819 = vmatpush.bf16.msra.mxu0 %v4519
    %4820 = vmatmul.bf16.gmra.mxu0 %v4598
    %v4821 = vpop.f32.mrf.mxu0
    %v4822 = vadd.f32 %v4803, %v4821
    %v4823 = vpop.f32.mrf.mxu0
    %v4824 = vadd.f32 %v4805, %v4823
    %4825 = vmatmul.bf16.gmra.mxu0 %v4601
    %v4826 = vpop.f32.mrf.mxu0
    %v4827 = vadd.f32 %v4808, %v4826
    %v4828 = vpop.f32.mrf.mxu0
    %v4829 = vadd.f32 %v4810, %v4828
    %4830 = vdwg.mxu0
    %v4839 = vunpack.c.l.b16 %v3961
    %v4840 = vunpack.c.h.b16 %v3961
    %v4841 = vunpack.c.l.b16 %v3962
    %v4842 = vunpack.c.l.b16 %v3963
    %v4843 = vunpack.c.h.b16 %v3963
    %v4844 = vunpack.c.l.b16 %v3964
    %v4845 = vunpack.c.l.b16 %v3965
    %v4846 = vunpack.c.h.b16 %v3965
    %v4847 = vunpack.c.l.b16 %v3966
    %v4848 = vunpack.c.l.b16 %v3967
    %v4849 = vunpack.c.h.b16 %v3967
    %v4850 = vunpack.c.l.b16 %v3968
    %v4851 = vpack.c.b16 %v4842, %v4839
    %v4852 = vpack.c.b16 %v4843, %v4840
    %v4853 = vpack.c.b16 %v4844, %v4841
    %v4854 = vpack.c.b16 %v4848, %v4845
    %v4855 = vpack.c.b16 %v4849, %v4846
    %v4856 = vpack.c.b16 %v4850, %v4847
    %v4933 = vunpack.c.l.b16 %v3969
    %v4934 = vunpack.c.h.b16 %v3969
    %v4935 = vunpack.c.l.b16 %v3970
    %v4936 = vunpack.c.h.b16 %v3970
    %v4937 = vunpack.c.l.b16 %v3971
    %v4938 = vunpack.c.h.b16 %v3971
    %v4939 = vunpack.c.l.b16 %v3972
    %v4940 = vunpack.c.h.b16 %v3972
    %v4941 = vunpack.c.l.b16 %v3973
    %v4942 = vunpack.c.h.b16 %v3973
    %v4943 = vunpack.c.l.b16 %v3974
    %v4944 = vunpack.c.h.b16 %v3974
    %v4945 = vunpack.c.l.b16 %v3975
    %v4946 = vunpack.c.h.b16 %v3975
    %v4947 = vunpack.c.l.b16 %v3976
    %v4948 = vunpack.c.h.b16 %v3976
    %v4949 = vunpack.c.l.b16 %v3977
    %v4950 = vunpack.c.h.b16 %v3977
    %v4951 = vunpack.c.l.b16 %v3978
    %v4952 = vunpack.c.h.b16 %v3978
    %v4953 = vunpack.c.l.b16 %v3979
    %v4954 = vunpack.c.h.b16 %v3979
    %v4955 = vunpack.c.l.b16 %v3980
    %v4956 = vunpack.c.h.b16 %v3980
    %v4957 = vunpack.c.l.b16 %v3981
    %v4958 = vunpack.c.h.b16 %v3981
    %v4959 = vunpack.c.l.b16 %v3982
    %v4960 = vunpack.c.h.b16 %v3982
    %v4961 = vunpack.c.l.b16 %v3983
    %v4962 = vunpack.c.h.b16 %v3983
    %v4963 = vunpack.c.l.b16 %v3984
    %v4964 = vunpack.c.h.b16 %v3984
    %v4965 = vunpack.c.l.b16 %v3985
    %v4966 = vunpack.c.h.b16 %v3985
    %v4967 = vunpack.c.l.b16 %v3986
    %v4968 = vunpack.c.h.b16 %v3986
    %v4969 = vunpack.c.l.b16 %v3987
    %v4970 = vunpack.c.h.b16 %v3987
    %v4971 = vunpack.c.l.b16 %v3988
    %v4972 = vunpack.c.h.b16 %v3988
    %v4973 = vunpack.c.l.b16 %v3989
    %v4974 = vunpack.c.h.b16 %v3989
    %v4975 = vunpack.c.l.b16 %v3990
    %v4976 = vunpack.c.h.b16 %v3990
    %v4977 = vunpack.c.l.b16 %v3991
    %v4978 = vunpack.c.h.b16 %v3991
    %v4979 = vunpack.c.l.b16 %v3992
    %v4980 = vunpack.c.h.b16 %v3992
    %v4981 = vunpack.c.l.b16 %v3993
    %v4982 = vunpack.c.h.b16 %v3993
    %v4983 = vunpack.c.l.b16 %v3994
    %v4984 = vunpack.c.h.b16 %v3994
    %v4985 = vunpack.c.l.b16 %v3995
    %v4986 = vunpack.c.h.b16 %v3995
    %v4987 = vunpack.c.l.b16 %v3996
    %v4988 = vunpack.c.h.b16 %v3996
    %v4989 = vunpack.c.l.b16 %v3997
    %v4990 = vunpack.c.h.b16 %v3997
    %v4991 = vunpack.c.l.b16 %v3998
    %v4992 = vunpack.c.h.b16 %v3998
    %v4993 = vunpack.c.l.b16 %v3999
    %v4994 = vunpack.c.h.b16 %v3999
    %v4995 = vunpack.c.l.b16 %v4000
    %v4996 = vunpack.c.h.b16 %v4000
    %v4997 = vunpack.c.l.b16 %v4001
    %v4998 = vunpack.c.h.b16 %v4001
    %v4999 = vunpack.c.l.b16 %v4002
    %v5000 = vunpack.c.h.b16 %v4002
    %v5001 = vunpack.c.l.b16 %v4003
    %v5002 = vunpack.c.h.b16 %v4003
    %v5003 = vunpack.c.l.b16 %v4004
    %v5004 = vunpack.c.h.b16 %v4004
    %v5005 = vunpack.c.l.b16 %v4005
    %v5006 = vunpack.c.h.b16 %v4005
    %v5007 = vunpack.c.l.b16 %v4006
    %v5008 = vunpack.c.h.b16 %v4006
    %v5009 = vunpack.c.l.b16 %v4007
    %v5010 = vunpack.c.h.b16 %v4007
    %v5011 = vunpack.c.l.b16 %v4008
    %v5012 = vunpack.c.h.b16 %v4008
    %v5013 = vunpack.c.l.b16 %v4009
    %v5014 = vunpack.c.h.b16 %v4009
    %v5015 = vunpack.c.l.b16 %v4010
    %v5016 = vunpack.c.h.b16 %v4010
    %v5017 = vunpack.c.l.b16 %v4011
    %v5018 = vunpack.c.h.b16 %v4011
    %v5019 = vunpack.c.l.b16 %v4012
    %v5020 = vunpack.c.h.b16 %v4012
    %v5021 = vunpack.c.l.b16 %v4013
    %v5022 = vunpack.c.h.b16 %v4013
    %v5023 = vunpack.c.l.b16 %v4014
    %v5024 = vunpack.c.h.b16 %v4014
    %v5025 = vunpack.c.l.b16 %v4015
    %v5026 = vunpack.c.h.b16 %v4015
    %v5027 = vunpack.c.l.b16 %v4016
    %v5028 = vunpack.c.h.b16 %v4016
    %v5029 = vunpack.c.l.b16 %v4017
    %v5030 = vunpack.c.h.b16 %v4017
    %v5031 = vunpack.c.l.b16 %v4018
    %v5032 = vunpack.c.h.b16 %v4018
    %v5033 = vunpack.c.l.b16 %v4019
    %v5034 = vunpack.c.h.b16 %v4019
    %v5035 = vunpack.c.l.b16 %v4020
    %v5036 = vunpack.c.h.b16 %v4020
    %v5037 = vunpack.c.l.b16 %v4021
    %v5038 = vunpack.c.h.b16 %v4021
    %v5039 = vunpack.c.l.b16 %v4022
    %v5040 = vunpack.c.h.b16 %v4022
    %v5041 = vunpack.c.l.b16 %v4023
    %v5042 = vunpack.c.h.b16 %v4023
    %v5043 = vunpack.c.l.b16 %v4024
    %v5044 = vunpack.c.h.b16 %v4024
    %v5045 = vunpack.c.l.b16 %v4025
    %v5046 = vunpack.c.h.b16 %v4025
    %v5047 = vunpack.c.l.b16 %v4026
    %v5048 = vunpack.c.h.b16 %v4026
    %v5049 = vunpack.c.l.b16 %v4027
    %v5050 = vunpack.c.h.b16 %v4027
    %v5051 = vunpack.c.l.b16 %v4028
    %v5052 = vunpack.c.h.b16 %v4028
    %v5053 = vunpack.c.l.b16 %v4029
    %v5054 = vunpack.c.h.b16 %v4029
    %v5055 = vunpack.c.l.b16 %v4030
    %v5056 = vunpack.c.h.b16 %v4030
    %v5057 = vunpack.c.l.b16 %v4031
    %v5058 = vunpack.c.h.b16 %v4031
    %v5059 = vunpack.c.l.b16 %v4032
    %v5060 = vunpack.c.h.b16 %v4032
    %v5061 = vunpack.c.l.b16 %v4033
    %v5062 = vunpack.c.h.b16 %v4033
    %v5063 = vunpack.c.l.b16 %v4034
    %v5064 = vunpack.c.h.b16 %v4034
    %v5065 = vunpack.c.l.b16 %v4035
    %v5066 = vunpack.c.h.b16 %v4035
    %v5067 = vunpack.c.l.b16 %v4036
    %v5068 = vunpack.c.h.b16 %v4036
    %v5069 = vunpack.c.l.b16 %v4037
    %v5070 = vunpack.c.h.b16 %v4037
    %v5071 = vunpack.c.l.b16 %v4038
    %v5072 = vunpack.c.h.b16 %v4038
    %v5073 = vunpack.c.l.b16 %v4039
    %v5074 = vunpack.c.h.b16 %v4039
    %v5075 = vunpack.c.l.b16 %v4040
    %v5076 = vunpack.c.h.b16 %v4040
    %v5077 = vpack.c.b16 %v4937, %v4933
    %v5078 = vpack.c.b16 %v4938, %v4934
    %v5079 = vpack.c.b16 %v4939, %v4935
    %v5080 = vpack.c.b16 %v4940, %v4936
    %v5081 = vpack.c.b16 %v4945, %v4941
    %v5082 = vpack.c.b16 %v4946, %v4942
    %v5083 = vpack.c.b16 %v4947, %v4943
    %v5084 = vpack.c.b16 %v4948, %v4944
    %v5085 = vpack.c.b16 %v4953, %v4949
    %v5086 = vpack.c.b16 %v4954, %v4950
    %v5087 = vpack.c.b16 %v4955, %v4951
    %v5088 = vpack.c.b16 %v4956, %v4952
    %v5089 = vpack.c.b16 %v4961, %v4957
    %v5090 = vpack.c.b16 %v4962, %v4958
    %v5091 = vpack.c.b16 %v4963, %v4959
    %v5092 = vpack.c.b16 %v4964, %v4960
    %v5093 = vpack.c.b16 %v4969, %v4965
    %v5094 = vpack.c.b16 %v4970, %v4966
    %v5095 = vpack.c.b16 %v4971, %v4967
    %v5096 = vpack.c.b16 %v4972, %v4968
    %v5097 = vpack.c.b16 %v4977, %v4973
    %v5098 = vpack.c.b16 %v4978, %v4974
    %v5099 = vpack.c.b16 %v4979, %v4975
    %v5100 = vpack.c.b16 %v4980, %v4976
    %v5101 = vpack.c.b16 %v4985, %v4981
    %v5102 = vpack.c.b16 %v4986, %v4982
    %v5103 = vpack.c.b16 %v4987, %v4983
    %v5104 = vpack.c.b16 %v4988, %v4984
    %v5105 = vpack.c.b16 %v4993, %v4989
    %v5106 = vpack.c.b16 %v4994, %v4990
    %v5107 = vpack.c.b16 %v4995, %v4991
    %v5108 = vpack.c.b16 %v4996, %v4992
    %v5109 = vpack.c.b16 %v5001, %v4997
    %v5110 = vpack.c.b16 %v5002, %v4998
    %v5111 = vpack.c.b16 %v5003, %v4999
    %v5112 = vpack.c.b16 %v5004, %v5000
    %v5113 = vpack.c.b16 %v5009, %v5005
    %v5114 = vpack.c.b16 %v5010, %v5006
    %v5115 = vpack.c.b16 %v5011, %v5007
    %v5116 = vpack.c.b16 %v5012, %v5008
    %v5117 = vpack.c.b16 %v5017, %v5013
    %v5118 = vpack.c.b16 %v5018, %v5014
    %v5119 = vpack.c.b16 %v5019, %v5015
    %v5120 = vpack.c.b16 %v5020, %v5016
    %v5121 = vpack.c.b16 %v5025, %v5021
    %v5122 = vpack.c.b16 %v5026, %v5022
    %v5123 = vpack.c.b16 %v5027, %v5023
    %v5124 = vpack.c.b16 %v5028, %v5024
    %v5125 = vpack.c.b16 %v5033, %v5029
    %v5126 = vpack.c.b16 %v5034, %v5030
    %v5127 = vpack.c.b16 %v5035, %v5031
    %v5128 = vpack.c.b16 %v5036, %v5032
    %v5129 = vpack.c.b16 %v5041, %v5037
    %v5130 = vpack.c.b16 %v5042, %v5038
    %v5131 = vpack.c.b16 %v5043, %v5039
    %v5132 = vpack.c.b16 %v5044, %v5040
    %v5133 = vpack.c.b16 %v5049, %v5045
    %v5134 = vpack.c.b16 %v5050, %v5046
    %v5135 = vpack.c.b16 %v5051, %v5047
    %v5136 = vpack.c.b16 %v5052, %v5048
    %v5137 = vpack.c.b16 %v5057, %v5053
    %v5138 = vpack.c.b16 %v5058, %v5054
    %v5139 = vpack.c.b16 %v5059, %v5055
    %v5140 = vpack.c.b16 %v5060, %v5056
    %v5141 = vpack.c.b16 %v5065, %v5061
    %v5142 = vpack.c.b16 %v5066, %v5062
    %v5143 = vpack.c.b16 %v5067, %v5063
    %v5144 = vpack.c.b16 %v5068, %v5064
    %v5145 = vpack.c.b16 %v5073, %v5069
    %v5146 = vpack.c.b16 %v5074, %v5070
    %v5147 = vpack.c.b16 %v5075, %v5071
    %v5148 = vpack.c.b16 %v5076, %v5072
    %v5222 = vsel %vm4596, %v4853, 0
    %v5225 = vsel %vm4596, %v4856, 0
    %5227 = vmatpush.bf16.msra.mxu0 %v5105
    %5228 = vmatpush.bf16.msra.mxu0 %v5101
    %5229 = vmatpush.bf16.msra.mxu0 %v5097
    %5230 = vmatpush.bf16.msra.mxu0 %v5093
    %5231 = vmatpush.bf16.msra.mxu0 %v5089
    %5232 = vmatpush.bf16.msra.mxu0 %v5085
    %5233 = vmatpush.bf16.msra.mxu0 %v5081
    %5234 = vmatpush.bf16.msra.mxu0 %v5077
    %5235 = vmatmul.bf16.gmra.mxu0 %v4851
    %v5236 = vpop.f32.mrf.mxu0
    %v5237 = vadd.f32 %v4651, %v5236
    %v5238 = vpop.f32.mrf.mxu0
    %v5239 = vadd.f32 %v4653, %v5238
    %5240 = vmatmul.bf16.gmra.mxu0 %v4854
    %v5241 = vpop.f32.mrf.mxu0
    %v5242 = vadd.f32 %v4656, %v5241
    %v5243 = vpop.f32.mrf.mxu0
    %v5244 = vadd.f32 %v4658, %v5243
    %5245 = vdwg.mxu0
    %5246 = vmatpush.bf16.msra.mxu0 %v5137
    %5247 = vmatpush.bf16.msra.mxu0 %v5133
    %5248 = vmatpush.bf16.msra.mxu0 %v5129
    %5249 = vmatpush.bf16.msra.mxu0 %v5125
    %5250 = vmatpush.bf16.msra.mxu0 %v5121
    %5251 = vmatpush.bf16.msra.mxu0 %v5117
    %5252 = vmatpush.bf16.msra.mxu0 %v5113
    %5253 = vmatpush.bf16.msra.mxu0 %v5109
    %5254 = vmatmul.bf16.gmra.mxu0 %v4852
    %v5255 = vpop.f32.mrf.mxu0
    %v5256 = vadd.f32 %v5237, %v5255
    %v5257 = vpop.f32.mrf.mxu0
    %v5258 = vadd.f32 %v5239, %v5257
    %5259 = vmatmul.bf16.gmra.mxu0 %v4855
    %v5260 = vpop.f32.mrf.mxu0
    %v5261 = vadd.f32 %v5242, %v5260
    %v5262 = vpop.f32.mrf.mxu0
    %v5263 = vadd.f32 %v5244, %v5262
    %5264 = vdwg.mxu0
    %5265 = vmatpush.bf16.msra.mxu0 0
    %5266 = vmatpush.bf16.msra.mxu0 0
    %5267 = vmatpush.bf16.msra.mxu0 0
    %5268 = vmatpush.bf16.msra.mxu0 0
    %5269 = vmatpush.bf16.msra.mxu0 0
    %5270 = vmatpush.bf16.msra.mxu0 0
    %5271 = vmatpush.bf16.msra.mxu0 %v5145
    %5272 = vmatpush.bf16.msra.mxu0 %v5141
    %5273 = vmatmul.bf16.gmra.mxu0 %v5222
    %v5274 = vpop.f32.mrf.mxu0
    %v5275 = vadd.f32 %v5256, %v5274
    %v5276 = vpop.f32.mrf.mxu0
    %v5277 = vadd.f32 %v5258, %v5276
    %5278 = vmatmul.bf16.gmra.mxu0 %v5225
    %v5279 = vpop.f32.mrf.mxu0
    %v5280 = vadd.f32 %v5261, %v5279
    %v5281 = vpop.f32.mrf.mxu0
    %v5282 = vadd.f32 %v5263, %v5281
    %5283 = vdwg.mxu0
    %5284 = vmatpush.bf16.msra.mxu0 %v5106
    %5285 = vmatpush.bf16.msra.mxu0 %v5102
    %5286 = vmatpush.bf16.msra.mxu0 %v5098
    %5287 = vmatpush.bf16.msra.mxu0 %v5094
    %5288 = vmatpush.bf16.msra.mxu0 %v5090
    %5289 = vmatpush.bf16.msra.mxu0 %v5086
    %5290 = vmatpush.bf16.msra.mxu0 %v5082
    %5291 = vmatpush.bf16.msra.mxu0 %v5078
    %5292 = vmatmul.bf16.gmra.mxu0 %v4851
    %v5293 = vpop.f32.mrf.mxu0
    %v5294 = vadd.f32 %v4708, %v5293
    %v5295 = vpop.f32.mrf.mxu0
    %v5296 = vadd.f32 %v4710, %v5295
    %5297 = vmatmul.bf16.gmra.mxu0 %v4854
    %v5298 = vpop.f32.mrf.mxu0
    %v5299 = vadd.f32 %v4713, %v5298
    %v5300 = vpop.f32.mrf.mxu0
    %v5301 = vadd.f32 %v4715, %v5300
    %5302 = vdwg.mxu0
    %5303 = vmatpush.bf16.msra.mxu0 %v5138
    %5304 = vmatpush.bf16.msra.mxu0 %v5134
    %5305 = vmatpush.bf16.msra.mxu0 %v5130
    %5306 = vmatpush.bf16.msra.mxu0 %v5126
    %5307 = vmatpush.bf16.msra.mxu0 %v5122
    %5308 = vmatpush.bf16.msra.mxu0 %v5118
    %5309 = vmatpush.bf16.msra.mxu0 %v5114
    %5310 = vmatpush.bf16.msra.mxu0 %v5110
    %5311 = vmatmul.bf16.gmra.mxu0 %v4852
    %v5312 = vpop.f32.mrf.mxu0
    %v5313 = vadd.f32 %v5294, %v5312
    %v5314 = vpop.f32.mrf.mxu0
    %v5315 = vadd.f32 %v5296, %v5314
    %5316 = vmatmul.bf16.gmra.mxu0 %v4855
    %v5317 = vpop.f32.mrf.mxu0
    %v5318 = vadd.f32 %v5299, %v5317
    %v5319 = vpop.f32.mrf.mxu0
    %v5320 = vadd.f32 %v5301, %v5319
    %5321 = vdwg.mxu0
    %5322 = vmatpush.bf16.msra.mxu0 0
    %5323 = vmatpush.bf16.msra.mxu0 0
    %5324 = vmatpush.bf16.msra.mxu0 0
    %5325 = vmatpush.bf16.msra.mxu0 0
    %5326 = vmatpush.bf16.msra.mxu0 0
    %5327 = vmatpush.bf16.msra.mxu0 0
    %5328 = vmatpush.bf16.msra.mxu0 %v5146
    %5329 = vmatpush.bf16.msra.mxu0 %v5142
    %5330 = vmatmul.bf16.gmra.mxu0 %v5222
    %v5331 = vpop.f32.mrf.mxu0
    %v5332 = vadd.f32 %v5313, %v5331
    %v5333 = vpop.f32.mrf.mxu0
    %v5334 = vadd.f32 %v5315, %v5333
    %5335 = vmatmul.bf16.gmra.mxu0 %v5225
    %v5336 = vpop.f32.mrf.mxu0
    %v5337 = vadd.f32 %v5318, %v5336
    %v5338 = vpop.f32.mrf.mxu0
    %v5339 = vadd.f32 %v5320, %v5338
    %5340 = vdwg.mxu0
    %5341 = vmatpush.bf16.msra.mxu0 %v5107
    %5342 = vmatpush.bf16.msra.mxu0 %v5103
    %5343 = vmatpush.bf16.msra.mxu0 %v5099
    %5344 = vmatpush.bf16.msra.mxu0 %v5095
    %5345 = vmatpush.bf16.msra.mxu0 %v5091
    %5346 = vmatpush.bf16.msra.mxu0 %v5087
    %5347 = vmatpush.bf16.msra.mxu0 %v5083
    %5348 = vmatpush.bf16.msra.mxu0 %v5079
    %5349 = vmatmul.bf16.gmra.mxu0 %v4851
    %v5350 = vpop.f32.mrf.mxu0
    %v5351 = vadd.f32 %v4765, %v5350
    %v5352 = vpop.f32.mrf.mxu0
    %v5353 = vadd.f32 %v4767, %v5352
    %5354 = vmatmul.bf16.gmra.mxu0 %v4854
    %v5355 = vpop.f32.mrf.mxu0
    %v5356 = vadd.f32 %v4770, %v5355
    %v5357 = vpop.f32.mrf.mxu0
    %v5358 = vadd.f32 %v4772, %v5357
    %5359 = vdwg.mxu0
    %5360 = vmatpush.bf16.msra.mxu0 %v5139
    %5361 = vmatpush.bf16.msra.mxu0 %v5135
    %5362 = vmatpush.bf16.msra.mxu0 %v5131
    %5363 = vmatpush.bf16.msra.mxu0 %v5127
    %5364 = vmatpush.bf16.msra.mxu0 %v5123
    %5365 = vmatpush.bf16.msra.mxu0 %v5119
    %5366 = vmatpush.bf16.msra.mxu0 %v5115
    %5367 = vmatpush.bf16.msra.mxu0 %v5111
    %5368 = vmatmul.bf16.gmra.mxu0 %v4852
    %v5369 = vpop.f32.mrf.mxu0
    %v5370 = vadd.f32 %v5351, %v5369
    %v5371 = vpop.f32.mrf.mxu0
    %v5372 = vadd.f32 %v5353, %v5371
    %5373 = vmatmul.bf16.gmra.mxu0 %v4855
    %v5374 = vpop.f32.mrf.mxu0
    %v5375 = vadd.f32 %v5356, %v5374
    %v5376 = vpop.f32.mrf.mxu0
    %v5377 = vadd.f32 %v5358, %v5376
    %5378 = vdwg.mxu0
    %5379 = vmatpush.bf16.msra.mxu0 0
    %5380 = vmatpush.bf16.msra.mxu0 0
    %5381 = vmatpush.bf16.msra.mxu0 0
    %5382 = vmatpush.bf16.msra.mxu0 0
    %5383 = vmatpush.bf16.msra.mxu0 0
    %5384 = vmatpush.bf16.msra.mxu0 0
    %5385 = vmatpush.bf16.msra.mxu0 %v5147
    %5386 = vmatpush.bf16.msra.mxu0 %v5143
    %5387 = vmatmul.bf16.gmra.mxu0 %v5222
    %v5388 = vpop.f32.mrf.mxu0
    %v5389 = vadd.f32 %v5370, %v5388
    %v5390 = vpop.f32.mrf.mxu0
    %v5391 = vadd.f32 %v5372, %v5390
    %5392 = vmatmul.bf16.gmra.mxu0 %v5225
    %v5393 = vpop.f32.mrf.mxu0
    %v5394 = vadd.f32 %v5375, %v5393
    %v5395 = vpop.f32.mrf.mxu0
    %v5396 = vadd.f32 %v5377, %v5395
    %5397 = vdwg.mxu0
    %5398 = vmatpush.bf16.msra.mxu0 %v5108
    %5399 = vmatpush.bf16.msra.mxu0 %v5104
    %5400 = vmatpush.bf16.msra.mxu0 %v5100
    %5401 = vmatpush.bf16.msra.mxu0 %v5096
    %5402 = vmatpush.bf16.msra.mxu0 %v5092
    %5403 = vmatpush.bf16.msra.mxu0 %v5088
    %5404 = vmatpush.bf16.msra.mxu0 %v5084
    %5405 = vmatpush.bf16.msra.mxu0 %v5080
    %5406 = vmatmul.bf16.gmra.mxu0 %v4851
    %v5407 = vpop.f32.mrf.mxu0
    %v5408 = vadd.f32 %v4822, %v5407
    %v5409 = vpop.f32.mrf.mxu0
    %v5410 = vadd.f32 %v4824, %v5409
    %5411 = vmatmul.bf16.gmra.mxu0 %v4854
    %v5412 = vpop.f32.mrf.mxu0
    %v5413 = vadd.f32 %v4827, %v5412
    %v5414 = vpop.f32.mrf.mxu0
    %v5415 = vadd.f32 %v4829, %v5414
    %5416 = vdwg.mxu0
    %5417 = vmatpush.bf16.msra.mxu0 %v5140
    %5418 = vmatpush.bf16.msra.mxu0 %v5136
    %5419 = vmatpush.bf16.msra.mxu0 %v5132
    %5420 = vmatpush.bf16.msra.mxu0 %v5128
    %5421 = vmatpush.bf16.msra.mxu0 %v5124
    %5422 = vmatpush.bf16.msra.mxu0 %v5120
    %5423 = vmatpush.bf16.msra.mxu0 %v5116
    %5424 = vmatpush.bf16.msra.mxu0 %v5112
    %5425 = vmatmul.bf16.gmra.mxu0 %v4852
    %v5426 = vpop.f32.mrf.mxu0
    %v5427 = vadd.f32 %v5408, %v5426
    %v5428 = vpop.f32.mrf.mxu0
    %v5429 = vadd.f32 %v5410, %v5428
    %5430 = vmatmul.bf16.gmra.mxu0 %v4855
    %v5431 = vpop.f32.mrf.mxu0
    %v5432 = vadd.f32 %v5413, %v5431
    %v5433 = vpop.f32.mrf.mxu0
    %v5434 = vadd.f32 %v5415, %v5433
    %5435 = vdwg.mxu0
    %5436 = vmatpush.bf16.msra.mxu0 0
    %5437 = vmatpush.bf16.msra.mxu0 0
    %5438 = vmatpush.bf16.msra.mxu0 0
    %5439 = vmatpush.bf16.msra.mxu0 0
    %5440 = vmatpush.bf16.msra.mxu0 0
    %5441 = vmatpush.bf16.msra.mxu0 0
    %5442 = vmatpush.bf16.msra.mxu0 %v5148
    %5443 = vmatpush.bf16.msra.mxu0 %v5144
    %5444 = vmatmul.bf16.gmra.mxu0 %v5222
    %v5445 = vpop.f32.mrf.mxu0
    %v5446 = vadd.f32 %v5427, %v5445
    %v5447 = vpop.f32.mrf.mxu0
    %v5448 = vadd.f32 %v5429, %v5447
    %5449 = vmatmul.bf16.gmra.mxu0 %v5225
    %v5450 = vpop.f32.mrf.mxu0
    %v5451 = vadd.f32 %v5432, %v5450
    %v5452 = vpop.f32.mrf.mxu0
    %v5453 = vadd.f32 %v5434, %v5452
    %5454 = vdwg.mxu0
    %v5455 = vld [vmem:[#allocation3] sm:$0xee]
    %v5456 = vld [vmem:[#allocation3 + $0x8] sm:$0xe]
    %v5457 = vld [vmem:[#allocation3 + $0x24] sm:$0xee]
    %v5458 = vld [vmem:[#allocation3 + $0x2c] sm:$0xe]
    %v5467 = vrot.slane %v5455, 5
    %v5468 = vrot.slane %v5467, 4
    %v5469 = vrot.slane %v3963, 5
    %v5470 = vsel %vm1115, %v5468, %v5469
    %v5471 = vrot.slane %v5456, 5
    %v5472 = vrot.slane %v5471, 4
    %v5473 = vrot.slane %v3964, 5
    %v5474 = vsel %vm1115, %v5472, %v5473
    %v5475 = vrot.slane %v5469, 4
    %v5476 = vrot.slane %v4041, 5
    %v5477 = vsel %vm1115, %v5475, %v5476
    %v5478 = vrot.slane %v5473, 4
    %v5479 = vrot.slane %v4042, 5
    %v5480 = vsel %vm1115, %v5478, %v5479
    %v5481 = vrot.slane %v5457, 5
    %v5482 = vrot.slane %v5481, 4
    %v5483 = vrot.slane %v3967, 5
    %v5484 = vsel %vm1115, %v5482, %v5483
    %v5485 = vrot.slane %v5458, 5
    %v5486 = vrot.slane %v5485, 4
    %v5487 = vrot.slane %v3968, 5
    %v5488 = vsel %vm1115, %v5486, %v5487
    %v5489 = vrot.slane %v5483, 4
    %v5490 = vrot.slane %v4043, 5
    %v5491 = vsel %vm1115, %v5489, %v5490
    %v5492 = vrot.slane %v5487, 4
    %v5493 = vrot.slane %v4044, 5
    %v5494 = vsel %vm1115, %v5492, %v5493
    %s5495 = scalar_lea.vmem [#allocation11], 1152
    %v5496 = vld [vmem:[%s5495] sm:$0xff]
    %v5497 = vld [vmem:[%s5495 + $0x8] sm:$0xff]
    %v5498 = vld [vmem:[%s5495 + $0x10] sm:$0xff]
    %v5499 = vld [vmem:[%s5495 + $0x18] sm:$0xff]
    %v5500 = vld [vmem:[%s5495 + $0x20] sm:$0xff]
    %v5501 = vld [vmem:[%s5495 + $0x28] sm:$0xff]
    %v5502 = vld [vmem:[%s5495 + $0x30] sm:$0xff]
    %v5503 = vld [vmem:[%s5495 + $0x38] sm:$0xff]
    %v5504 = vld [vmem:[%s5495 + $0x40] sm:$0xff]
    %v5505 = vld [vmem:[%s5495 + $0x48] sm:$0xff]
    %v5506 = vld [vmem:[%s5495 + $0x50] sm:$0xff]
    %v5507 = vld [vmem:[%s5495 + $0x58] sm:$0xff]
    %v5508 = vld [vmem:[%s5495 + $0x60] sm:$0xff]
    %v5509 = vld [vmem:[%s5495 + $0x68] sm:$0xff]
    %v5510 = vld [vmem:[%s5495 + $0x70] sm:$0xff]
    %v5511 = vld [vmem:[%s5495 + $0x78] sm:$0xff]
    %v5512 = vld [vmem:[%s5495 + $0x80] sm:$0xff]
    %v5513 = vld [vmem:[%s5495 + $0x88] sm:$0xff]
    %v5514 = vld [vmem:[%s5495 + $0x90] sm:$0xff]
    %v5515 = vld [vmem:[%s5495 + $0x98] sm:$0xff]
    %v5516 = vld [vmem:[%s5495 + $0xa0] sm:$0xff]
    %v5517 = vld [vmem:[%s5495 + $0xa8] sm:$0xff]
    %v5518 = vld [vmem:[%s5495 + $0xb0] sm:$0xff]
    %v5519 = vld [vmem:[%s5495 + $0xb8] sm:$0xff]
    %v5520 = vld [vmem:[%s5495 + $0xc0] sm:$0xff]
    %v5521 = vld [vmem:[%s5495 + $0xc8] sm:$0xff]
    %v5522 = vld [vmem:[%s5495 + $0xd0] sm:$0xff]
    %v5523 = vld [vmem:[%s5495 + $0xd8] sm:$0xff]
    %v5524 = vld [vmem:[%s5495 + $0xe0] sm:$0xff]
    %v5525 = vld [vmem:[%s5495 + $0xe8] sm:$0xff]
    %v5526 = vld [vmem:[%s5495 + $0xf0] sm:$0xff]
    %v5527 = vld [vmem:[%s5495 + $0xf8] sm:$0xff]
    %v5528 = vld [vmem:[%s5495 + $0x100] sm:$0xff]
    %v5529 = vld [vmem:[%s5495 + $0x108] sm:$0xff]
    %v5530 = vld [vmem:[%s5495 + $0x110] sm:$0xff]
    %v5531 = vld [vmem:[%s5495 + $0x118] sm:$0xff]
    %v5532 = vld [vmem:[%s5495 + $0x120] sm:$0xff]
    %v5533 = vld [vmem:[%s5495 + $0x128] sm:$0xff]
    %v5534 = vld [vmem:[%s5495 + $0x130] sm:$0xff]
    %v5535 = vld [vmem:[%s5495 + $0x138] sm:$0xff]
    %v5536 = vld [vmem:[%s5495 + $0x140] sm:$0xff]
    %v5537 = vld [vmem:[%s5495 + $0x148] sm:$0xff]
    %v5538 = vld [vmem:[%s5495 + $0x150] sm:$0xff]
    %v5539 = vld [vmem:[%s5495 + $0x158] sm:$0xff]
    %v5540 = vld [vmem:[%s5495 + $0x160] sm:$0xff]
    %v5541 = vld [vmem:[%s5495 + $0x168] sm:$0xff]
    %v5542 = vld [vmem:[%s5495 + $0x170] sm:$0xff]
    %v5543 = vld [vmem:[%s5495 + $0x178] sm:$0xff]
    %v5544 = vld [vmem:[%s5495 + $0x180] sm:$0xff]
    %v5545 = vld [vmem:[%s5495 + $0x188] sm:$0xff]
    %v5546 = vld [vmem:[%s5495 + $0x190] sm:$0xff]
    %v5547 = vld [vmem:[%s5495 + $0x198] sm:$0xff]
    %v5548 = vld [vmem:[%s5495 + $0x1a0] sm:$0xff]
    %v5549 = vld [vmem:[%s5495 + $0x1a8] sm:$0xff]
    %v5550 = vld [vmem:[%s5495 + $0x1b0] sm:$0xff]
    %v5551 = vld [vmem:[%s5495 + $0x1b8] sm:$0xff]
    %v5552 = vld [vmem:[%s5495 + $0x1c0] sm:$0xff]
    %v5553 = vld [vmem:[%s5495 + $0x1c8] sm:$0xff]
    %v5554 = vld [vmem:[%s5495 + $0x1d0] sm:$0xff]
    %v5555 = vld [vmem:[%s5495 + $0x1d8] sm:$0xff]
    %v5556 = vld [vmem:[%s5495 + $0x1e0] sm:$0xff]
    %v5557 = vld [vmem:[%s5495 + $0x1e8] sm:$0xff]
    %v5558 = vld [vmem:[%s5495 + $0x1f0] sm:$0xff]
    %v5559 = vld [vmem:[%s5495 + $0x1f8] sm:$0xff]
    %v5560 = vld [vmem:[%s5495 + $0x200] sm:$0xff]
    %v5561 = vld [vmem:[%s5495 + $0x208] sm:$0xff]
    %v5562 = vld [vmem:[%s5495 + $0x210] sm:$0xff]
    %v5563 = vld [vmem:[%s5495 + $0x218] sm:$0xff]
    %v5564 = vld [vmem:[%s5495 + $0x220] sm:$0xff]
    %v5565 = vld [vmem:[%s5495 + $0x228] sm:$0xff]
    %v5566 = vld [vmem:[%s5495 + $0x230] sm:$0xff]
    %v5567 = vld [vmem:[%s5495 + $0x238] sm:$0xff]
    %v5568 = vunpack.c.l.b16 %v5470
    %v5569 = vunpack.c.h.b16 %v5470
    %v5570 = vunpack.c.l.b16 %v5474
    %v5571 = vunpack.c.l.b16 %v5477
    %v5572 = vunpack.c.h.b16 %v5477
    %v5573 = vunpack.c.l.b16 %v5480
    %v5574 = vunpack.c.l.b16 %v5484
    %v5575 = vunpack.c.h.b16 %v5484
    %v5576 = vunpack.c.l.b16 %v5488
    %v5577 = vunpack.c.l.b16 %v5491
    %v5578 = vunpack.c.h.b16 %v5491
    %v5579 = vunpack.c.l.b16 %v5494
    %v5580 = vpack.c.b16 %v5571, %v5568
    %v5581 = vpack.c.b16 %v5572, %v5569
    %v5582 = vpack.c.b16 %v5573, %v5570
    %v5583 = vpack.c.b16 %v5577, %v5574
    %v5584 = vpack.c.b16 %v5578, %v5575
    %v5585 = vpack.c.b16 %v5579, %v5576
    %v5662 = vunpack.c.l.b16 %v5496
    %v5663 = vunpack.c.h.b16 %v5496
    %v5664 = vunpack.c.l.b16 %v5497
    %v5665 = vunpack.c.h.b16 %v5497
    %v5666 = vunpack.c.l.b16 %v5498
    %v5667 = vunpack.c.h.b16 %v5498
    %v5668 = vunpack.c.l.b16 %v5499
    %v5669 = vunpack.c.h.b16 %v5499
    %v5670 = vunpack.c.l.b16 %v5500
    %v5671 = vunpack.c.h.b16 %v5500
    %v5672 = vunpack.c.l.b16 %v5501
    %v5673 = vunpack.c.h.b16 %v5501
    %v5674 = vunpack.c.l.b16 %v5502
    %v5675 = vunpack.c.h.b16 %v5502
    %v5676 = vunpack.c.l.b16 %v5503
    %v5677 = vunpack.c.h.b16 %v5503
    %v5678 = vunpack.c.l.b16 %v5504
    %v5679 = vunpack.c.h.b16 %v5504
    %v5680 = vunpack.c.l.b16 %v5505
    %v5681 = vunpack.c.h.b16 %v5505
    %v5682 = vunpack.c.l.b16 %v5506
    %v5683 = vunpack.c.h.b16 %v5506
    %v5684 = vunpack.c.l.b16 %v5507
    %v5685 = vunpack.c.h.b16 %v5507
    %v5686 = vunpack.c.l.b16 %v5508
    %v5687 = vunpack.c.h.b16 %v5508
    %v5688 = vunpack.c.l.b16 %v5509
    %v5689 = vunpack.c.h.b16 %v5509
    %v5690 = vunpack.c.l.b16 %v5510
    %v5691 = vunpack.c.h.b16 %v5510
    %v5692 = vunpack.c.l.b16 %v5511
    %v5693 = vunpack.c.h.b16 %v5511
    %v5694 = vunpack.c.l.b16 %v5512
    %v5695 = vunpack.c.h.b16 %v5512
    %v5696 = vunpack.c.l.b16 %v5513
    %v5697 = vunpack.c.h.b16 %v5513
    %v5698 = vunpack.c.l.b16 %v5514
    %v5699 = vunpack.c.h.b16 %v5514
    %v5700 = vunpack.c.l.b16 %v5515
    %v5701 = vunpack.c.h.b16 %v5515
    %v5702 = vunpack.c.l.b16 %v5516
    %v5703 = vunpack.c.h.b16 %v5516
    %v5704 = vunpack.c.l.b16 %v5517
    %v5705 = vunpack.c.h.b16 %v5517
    %v5706 = vunpack.c.l.b16 %v5518
    %v5707 = vunpack.c.h.b16 %v5518
    %v5708 = vunpack.c.l.b16 %v5519
    %v5709 = vunpack.c.h.b16 %v5519
    %v5710 = vunpack.c.l.b16 %v5520
    %v5711 = vunpack.c.h.b16 %v5520
    %v5712 = vunpack.c.l.b16 %v5521
    %v5713 = vunpack.c.h.b16 %v5521
    %v5714 = vunpack.c.l.b16 %v5522
    %v5715 = vunpack.c.h.b16 %v5522
    %v5716 = vunpack.c.l.b16 %v5523
    %v5717 = vunpack.c.h.b16 %v5523
    %v5718 = vunpack.c.l.b16 %v5524
    %v5719 = vunpack.c.h.b16 %v5524
    %v5720 = vunpack.c.l.b16 %v5525
    %v5721 = vunpack.c.h.b16 %v5525
    %v5722 = vunpack.c.l.b16 %v5526
    %v5723 = vunpack.c.h.b16 %v5526
    %v5724 = vunpack.c.l.b16 %v5527
    %v5725 = vunpack.c.h.b16 %v5527
    %v5726 = vunpack.c.l.b16 %v5528
    %v5727 = vunpack.c.h.b16 %v5528
    %v5728 = vunpack.c.l.b16 %v5529
    %v5729 = vunpack.c.h.b16 %v5529
    %v5730 = vunpack.c.l.b16 %v5530
    %v5731 = vunpack.c.h.b16 %v5530
    %v5732 = vunpack.c.l.b16 %v5531
    %v5733 = vunpack.c.h.b16 %v5531
    %v5734 = vunpack.c.l.b16 %v5532
    %v5735 = vunpack.c.h.b16 %v5532
    %v5736 = vunpack.c.l.b16 %v5533
    %v5737 = vunpack.c.h.b16 %v5533
    %v5738 = vunpack.c.l.b16 %v5534
    %v5739 = vunpack.c.h.b16 %v5534
    %v5740 = vunpack.c.l.b16 %v5535
    %v5741 = vunpack.c.h.b16 %v5535
    %v5742 = vunpack.c.l.b16 %v5536
    %v5743 = vunpack.c.h.b16 %v5536
    %v5744 = vunpack.c.l.b16 %v5537
    %v5745 = vunpack.c.h.b16 %v5537
    %v5746 = vunpack.c.l.b16 %v5538
    %v5747 = vunpack.c.h.b16 %v5538
    %v5748 = vunpack.c.l.b16 %v5539
    %v5749 = vunpack.c.h.b16 %v5539
    %v5750 = vunpack.c.l.b16 %v5540
    %v5751 = vunpack.c.h.b16 %v5540
    %v5752 = vunpack.c.l.b16 %v5541
    %v5753 = vunpack.c.h.b16 %v5541
    %v5754 = vunpack.c.l.b16 %v5542
    %v5755 = vunpack.c.h.b16 %v5542
    %v5756 = vunpack.c.l.b16 %v5543
    %v5757 = vunpack.c.h.b16 %v5543
    %v5758 = vunpack.c.l.b16 %v5544
    %v5759 = vunpack.c.h.b16 %v5544
    %v5760 = vunpack.c.l.b16 %v5545
    %v5761 = vunpack.c.h.b16 %v5545
    %v5762 = vunpack.c.l.b16 %v5546
    %v5763 = vunpack.c.h.b16 %v5546
    %v5764 = vunpack.c.l.b16 %v5547
    %v5765 = vunpack.c.h.b16 %v5547
    %v5766 = vunpack.c.l.b16 %v5548
    %v5767 = vunpack.c.h.b16 %v5548
    %v5768 = vunpack.c.l.b16 %v5549
    %v5769 = vunpack.c.h.b16 %v5549
    %v5770 = vunpack.c.l.b16 %v5550
    %v5771 = vunpack.c.h.b16 %v5550
    %v5772 = vunpack.c.l.b16 %v5551
    %v5773 = vunpack.c.h.b16 %v5551
    %v5774 = vunpack.c.l.b16 %v5552
    %v5775 = vunpack.c.h.b16 %v5552
    %v5776 = vunpack.c.l.b16 %v5553
    %v5777 = vunpack.c.h.b16 %v5553
    %v5778 = vunpack.c.l.b16 %v5554
    %v5779 = vunpack.c.h.b16 %v5554
    %v5780 = vunpack.c.l.b16 %v5555
    %v5781 = vunpack.c.h.b16 %v5555
    %v5782 = vunpack.c.l.b16 %v5556
    %v5783 = vunpack.c.h.b16 %v5556
    %v5784 = vunpack.c.l.b16 %v5557
    %v5785 = vunpack.c.h.b16 %v5557
    %v5786 = vunpack.c.l.b16 %v5558
    %v5787 = vunpack.c.h.b16 %v5558
    %v5788 = vunpack.c.l.b16 %v5559
    %v5789 = vunpack.c.h.b16 %v5559
    %v5790 = vunpack.c.l.b16 %v5560
    %v5791 = vunpack.c.h.b16 %v5560
    %v5792 = vunpack.c.l.b16 %v5561
    %v5793 = vunpack.c.h.b16 %v5561
    %v5794 = vunpack.c.l.b16 %v5562
    %v5795 = vunpack.c.h.b16 %v5562
    %v5796 = vunpack.c.l.b16 %v5563
    %v5797 = vunpack.c.h.b16 %v5563
    %v5798 = vunpack.c.l.b16 %v5564
    %v5799 = vunpack.c.h.b16 %v5564
    %v5800 = vunpack.c.l.b16 %v5565
    %v5801 = vunpack.c.h.b16 %v5565
    %v5802 = vunpack.c.l.b16 %v5566
    %v5803 = vunpack.c.h.b16 %v5566
    %v5804 = vunpack.c.l.b16 %v5567
    %v5805 = vunpack.c.h.b16 %v5567
    %v5806 = vpack.c.b16 %v5666, %v5662
    %v5807 = vpack.c.b16 %v5667, %v5663
    %v5808 = vpack.c.b16 %v5668, %v5664
    %v5809 = vpack.c.b16 %v5669, %v5665
    %v5810 = vpack.c.b16 %v5674, %v5670
    %v5811 = vpack.c.b16 %v5675, %v5671
    %v5812 = vpack.c.b16 %v5676, %v5672
    %v5813 = vpack.c.b16 %v5677, %v5673
    %v5814 = vpack.c.b16 %v5682, %v5678
    %v5815 = vpack.c.b16 %v5683, %v5679
    %v5816 = vpack.c.b16 %v5684, %v5680
    %v5817 = vpack.c.b16 %v5685, %v5681
    %v5818 = vpack.c.b16 %v5690, %v5686
    %v5819 = vpack.c.b16 %v5691, %v5687
    %v5820 = vpack.c.b16 %v5692, %v5688
    %v5821 = vpack.c.b16 %v5693, %v5689
    %v5822 = vpack.c.b16 %v5698, %v5694
    %v5823 = vpack.c.b16 %v5699, %v5695
    %v5824 = vpack.c.b16 %v5700, %v5696
    %v5825 = vpack.c.b16 %v5701, %v5697
    %v5826 = vpack.c.b16 %v5706, %v5702
    %v5827 = vpack.c.b16 %v5707, %v5703
    %v5828 = vpack.c.b16 %v5708, %v5704
    %v5829 = vpack.c.b16 %v5709, %v5705
    %v5830 = vpack.c.b16 %v5714, %v5710
    %v5831 = vpack.c.b16 %v5715, %v5711
    %v5832 = vpack.c.b16 %v5716, %v5712
    %v5833 = vpack.c.b16 %v5717, %v5713
    %v5834 = vpack.c.b16 %v5722, %v5718
    %v5835 = vpack.c.b16 %v5723, %v5719
    %v5836 = vpack.c.b16 %v5724, %v5720
    %v5837 = vpack.c.b16 %v5725, %v5721
    %v5838 = vpack.c.b16 %v5730, %v5726
    %v5839 = vpack.c.b16 %v5731, %v5727
    %v5840 = vpack.c.b16 %v5732, %v5728
    %v5841 = vpack.c.b16 %v5733, %v5729
    %v5842 = vpack.c.b16 %v5738, %v5734
    %v5843 = vpack.c.b16 %v5739, %v5735
    %v5844 = vpack.c.b16 %v5740, %v5736
    %v5845 = vpack.c.b16 %v5741, %v5737
    %v5846 = vpack.c.b16 %v5746, %v5742
    %v5847 = vpack.c.b16 %v5747, %v5743
    %v5848 = vpack.c.b16 %v5748, %v5744
    %v5849 = vpack.c.b16 %v5749, %v5745
    %v5850 = vpack.c.b16 %v5754, %v5750
    %v5851 = vpack.c.b16 %v5755, %v5751
    %v5852 = vpack.c.b16 %v5756, %v5752
    %v5853 = vpack.c.b16 %v5757, %v5753
    %v5854 = vpack.c.b16 %v5762, %v5758
    %v5855 = vpack.c.b16 %v5763, %v5759
    %v5856 = vpack.c.b16 %v5764, %v5760
    %v5857 = vpack.c.b16 %v5765, %v5761
    %v5858 = vpack.c.b16 %v5770, %v5766
    %v5859 = vpack.c.b16 %v5771, %v5767
    %v5860 = vpack.c.b16 %v5772, %v5768
    %v5861 = vpack.c.b16 %v5773, %v5769
    %v5862 = vpack.c.b16 %v5778, %v5774
    %v5863 = vpack.c.b16 %v5779, %v5775
    %v5864 = vpack.c.b16 %v5780, %v5776
    %v5865 = vpack.c.b16 %v5781, %v5777
    %v5866 = vpack.c.b16 %v5786, %v5782
    %v5867 = vpack.c.b16 %v5787, %v5783
    %v5868 = vpack.c.b16 %v5788, %v5784
    %v5869 = vpack.c.b16 %v5789, %v5785
    %v5870 = vpack.c.b16 %v5794, %v5790
    %v5871 = vpack.c.b16 %v5795, %v5791
    %v5872 = vpack.c.b16 %v5796, %v5792
    %v5873 = vpack.c.b16 %v5797, %v5793
    %v5874 = vpack.c.b16 %v5802, %v5798
    %v5875 = vpack.c.b16 %v5803, %v5799
    %v5876 = vpack.c.b16 %v5804, %v5800
    %v5877 = vpack.c.b16 %v5805, %v5801
    %v5951 = vsel %vm4596, %v5582, 0
    %v5954 = vsel %vm4596, %v5585, 0
    %5956 = vmatpush.bf16.msra.mxu0 %v5834
    %5957 = vmatpush.bf16.msra.mxu0 %v5830
    %5958 = vmatpush.bf16.msra.mxu0 %v5826
    %5959 = vmatpush.bf16.msra.mxu0 %v5822
    %5960 = vmatpush.bf16.msra.mxu0 %v5818
    %5961 = vmatpush.bf16.msra.mxu0 %v5814
    %5962 = vmatpush.bf16.msra.mxu0 %v5810
    %5963 = vmatpush.bf16.msra.mxu0 %v5806
    %5964 = vmatmul.bf16.gmra.mxu0 %v5580
    %v5965 = vpop.f32.mrf.mxu0
    %v5966 = vadd.f32 0.0, %v5965
    %v5967 = vpop.f32.mrf.mxu0
    %v5968 = vadd.f32 0.0, %v5967
    %5969 = vmatmul.bf16.gmra.mxu0 %v5583
    %v5970 = vpop.f32.mrf.mxu0
    %v5971 = vadd.f32 0.0, %v5970
    %v5972 = vpop.f32.mrf.mxu0
    %v5973 = vadd.f32 0.0, %v5972
    %5974 = vdwg.mxu0
    %5975 = vmatpush.bf16.msra.mxu0 %v5866
    %5976 = vmatpush.bf16.msra.mxu0 %v5862
    %5977 = vmatpush.bf16.msra.mxu0 %v5858
    %5978 = vmatpush.bf16.msra.mxu0 %v5854
    %5979 = vmatpush.bf16.msra.mxu0 %v5850
    %5980 = vmatpush.bf16.msra.mxu0 %v5846
    %5981 = vmatpush.bf16.msra.mxu0 %v5842
    %5982 = vmatpush.bf16.msra.mxu0 %v5838
    %5983 = vmatmul.bf16.gmra.mxu0 %v5581
    %v5984 = vpop.f32.mrf.mxu0
    %v5985 = vadd.f32 %v5966, %v5984
    %v5986 = vpop.f32.mrf.mxu0
    %v5987 = vadd.f32 %v5968, %v5986
    %5988 = vmatmul.bf16.gmra.mxu0 %v5584
    %v5989 = vpop.f32.mrf.mxu0
    %v5990 = vadd.f32 %v5971, %v5989
    %v5991 = vpop.f32.mrf.mxu0
    %v5992 = vadd.f32 %v5973, %v5991
    %5993 = vdwg.mxu0
    %5994 = vmatpush.bf16.msra.mxu0 0
    %5995 = vmatpush.bf16.msra.mxu0 0
    %5996 = vmatpush.bf16.msra.mxu0 0
    %5997 = vmatpush.bf16.msra.mxu0 0
    %5998 = vmatpush.bf16.msra.mxu0 0
    %5999 = vmatpush.bf16.msra.mxu0 0
    %6000 = vmatpush.bf16.msra.mxu0 %v5874
    %6001 = vmatpush.bf16.msra.mxu0 %v5870
    %6002 = vmatmul.bf16.gmra.mxu0 %v5951
    %v6003 = vpop.f32.mrf.mxu0
    %v6004 = vadd.f32 %v5985, %v6003
    %v6005 = vpop.f32.mrf.mxu0
    %v6006 = vadd.f32 %v5987, %v6005
    %6007 = vmatmul.bf16.gmra.mxu0 %v5954
    %v6008 = vpop.f32.mrf.mxu0
    %v6009 = vadd.f32 %v5990, %v6008
    %v6010 = vpop.f32.mrf.mxu0
    %v6011 = vadd.f32 %v5992, %v6010
    %6012 = vdwg.mxu0
    %6013 = vmatpush.bf16.msra.mxu0 %v5835
    %6014 = vmatpush.bf16.msra.mxu0 %v5831
    %6015 = vmatpush.bf16.msra.mxu0 %v5827
    %6016 = vmatpush.bf16.msra.mxu0 %v5823
    %6017 = vmatpush.bf16.msra.mxu0 %v5819
    %6018 = vmatpush.bf16.msra.mxu0 %v5815
    %6019 = vmatpush.bf16.msra.mxu0 %v5811
    %6020 = vmatpush.bf16.msra.mxu0 %v5807
    %6021 = vmatmul.bf16.gmra.mxu0 %v5580
    %v6022 = vpop.f32.mrf.mxu0
    %v6023 = vadd.f32 0.0, %v6022
    %v6024 = vpop.f32.mrf.mxu0
    %v6025 = vadd.f32 0.0, %v6024
    %6026 = vmatmul.bf16.gmra.mxu0 %v5583
    %v6027 = vpop.f32.mrf.mxu0
    %v6028 = vadd.f32 0.0, %v6027
    %v6029 = vpop.f32.mrf.mxu0
    %v6030 = vadd.f32 0.0, %v6029
    %6031 = vdwg.mxu0
    %6032 = vmatpush.bf16.msra.mxu0 %v5867
    %6033 = vmatpush.bf16.msra.mxu0 %v5863
    %6034 = vmatpush.bf16.msra.mxu0 %v5859
    %6035 = vmatpush.bf16.msra.mxu0 %v5855
    %6036 = vmatpush.bf16.msra.mxu0 %v5851
    %6037 = vmatpush.bf16.msra.mxu0 %v5847
    %6038 = vmatpush.bf16.msra.mxu0 %v5843
    %6039 = vmatpush.bf16.msra.mxu0 %v5839
    %6040 = vmatmul.bf16.gmra.mxu0 %v5581
    %v6041 = vpop.f32.mrf.mxu0
    %v6042 = vadd.f32 %v6023, %v6041
    %v6043 = vpop.f32.mrf.mxu0
    %v6044 = vadd.f32 %v6025, %v6043
    %6045 = vmatmul.bf16.gmra.mxu0 %v5584
    %v6046 = vpop.f32.mrf.mxu0
    %v6047 = vadd.f32 %v6028, %v6046
    %v6048 = vpop.f32.mrf.mxu0
    %v6049 = vadd.f32 %v6030, %v6048
    %6050 = vdwg.mxu0
    %6051 = vmatpush.bf16.msra.mxu0 0
    %6052 = vmatpush.bf16.msra.mxu0 0
    %6053 = vmatpush.bf16.msra.mxu0 0
    %6054 = vmatpush.bf16.msra.mxu0 0
    %6055 = vmatpush.bf16.msra.mxu0 0
    %6056 = vmatpush.bf16.msra.mxu0 0
    %6057 = vmatpush.bf16.msra.mxu0 %v5875
    %6058 = vmatpush.bf16.msra.mxu0 %v5871
    %6059 = vmatmul.bf16.gmra.mxu0 %v5951
    %v6060 = vpop.f32.mrf.mxu0
    %v6061 = vadd.f32 %v6042, %v6060
    %v6062 = vpop.f32.mrf.mxu0
    %v6063 = vadd.f32 %v6044, %v6062
    %6064 = vmatmul.bf16.gmra.mxu0 %v5954
    %v6065 = vpop.f32.mrf.mxu0
    %v6066 = vadd.f32 %v6047, %v6065
    %v6067 = vpop.f32.mrf.mxu0
    %v6068 = vadd.f32 %v6049, %v6067
    %6069 = vdwg.mxu0
    %6070 = vmatpush.bf16.msra.mxu0 %v5836
    %6071 = vmatpush.bf16.msra.mxu0 %v5832
    %6072 = vmatpush.bf16.msra.mxu0 %v5828
    %6073 = vmatpush.bf16.msra.mxu0 %v5824
    %6074 = vmatpush.bf16.msra.mxu0 %v5820
    %6075 = vmatpush.bf16.msra.mxu0 %v5816
    %6076 = vmatpush.bf16.msra.mxu0 %v5812
    %6077 = vmatpush.bf16.msra.mxu0 %v5808
    %6078 = vmatmul.bf16.gmra.mxu0 %v5580
    %v6079 = vpop.f32.mrf.mxu0
    %v6080 = vadd.f32 0.0, %v6079
    %v6081 = vpop.f32.mrf.mxu0
    %v6082 = vadd.f32 0.0, %v6081
    %6083 = vmatmul.bf16.gmra.mxu0 %v5583
    %v6084 = vpop.f32.mrf.mxu0
    %v6085 = vadd.f32 0.0, %v6084
    %v6086 = vpop.f32.mrf.mxu0
    %v6087 = vadd.f32 0.0, %v6086
    %6088 = vdwg.mxu0
    %6089 = vmatpush.bf16.msra.mxu0 %v5868
    %6090 = vmatpush.bf16.msra.mxu0 %v5864
    %6091 = vmatpush.bf16.msra.mxu0 %v5860
    %6092 = vmatpush.bf16.msra.mxu0 %v5856
    %6093 = vmatpush.bf16.msra.mxu0 %v5852
    %6094 = vmatpush.bf16.msra.mxu0 %v5848
    %6095 = vmatpush.bf16.msra.mxu0 %v5844
    %6096 = vmatpush.bf16.msra.mxu0 %v5840
    %6097 = vmatmul.bf16.gmra.mxu0 %v5581
    %v6098 = vpop.f32.mrf.mxu0
    %v6099 = vadd.f32 %v6080, %v6098
    %v6100 = vpop.f32.mrf.mxu0
    %v6101 = vadd.f32 %v6082, %v6100
    %6102 = vmatmul.bf16.gmra.mxu0 %v5584
    %v6103 = vpop.f32.mrf.mxu0
    %v6104 = vadd.f32 %v6085, %v6103
    %v6105 = vpop.f32.mrf.mxu0
    %v6106 = vadd.f32 %v6087, %v6105
    %6107 = vdwg.mxu0
    %6108 = vmatpush.bf16.msra.mxu0 0
    %6109 = vmatpush.bf16.msra.mxu0 0
    %6110 = vmatpush.bf16.msra.mxu0 0
    %6111 = vmatpush.bf16.msra.mxu0 0
    %6112 = vmatpush.bf16.msra.mxu0 0
    %6113 = vmatpush.bf16.msra.mxu0 0
    %6114 = vmatpush.bf16.msra.mxu0 %v5876
    %6115 = vmatpush.bf16.msra.mxu0 %v5872
    %6116 = vmatmul.bf16.gmra.mxu0 %v5951
    %v6117 = vpop.f32.mrf.mxu0
    %v6118 = vadd.f32 %v6099, %v6117
    %v6119 = vpop.f32.mrf.mxu0
    %v6120 = vadd.f32 %v6101, %v6119
    %6121 = vmatmul.bf16.gmra.mxu0 %v5954
    %v6122 = vpop.f32.mrf.mxu0
    %v6123 = vadd.f32 %v6104, %v6122
    %v6124 = vpop.f32.mrf.mxu0
    %v6125 = vadd.f32 %v6106, %v6124
    %6126 = vdwg.mxu0
    %6127 = vmatpush.bf16.msra.mxu0 %v5837
    %6128 = vmatpush.bf16.msra.mxu0 %v5833
    %6129 = vmatpush.bf16.msra.mxu0 %v5829
    %6130 = vmatpush.bf16.msra.mxu0 %v5825
    %6131 = vmatpush.bf16.msra.mxu0 %v5821
    %6132 = vmatpush.bf16.msra.mxu0 %v5817
    %6133 = vmatpush.bf16.msra.mxu0 %v5813
    %6134 = vmatpush.bf16.msra.mxu0 %v5809
    %6135 = vmatmul.bf16.gmra.mxu0 %v5580
    %v6136 = vpop.f32.mrf.mxu0
    %v6137 = vadd.f32 0.0, %v6136
    %v6138 = vpop.f32.mrf.mxu0
    %v6139 = vadd.f32 0.0, %v6138
    %6140 = vmatmul.bf16.gmra.mxu0 %v5583
    %v6141 = vpop.f32.mrf.mxu0
    %v6142 = vadd.f32 0.0, %v6141
    %v6143 = vpop.f32.mrf.mxu0
    %v6144 = vadd.f32 0.0, %v6143
    %6145 = vdwg.mxu0
    %6146 = vmatpush.bf16.msra.mxu0 %v5869
    %6147 = vmatpush.bf16.msra.mxu0 %v5865
    %6148 = vmatpush.bf16.msra.mxu0 %v5861
    %6149 = vmatpush.bf16.msra.mxu0 %v5857
    %6150 = vmatpush.bf16.msra.mxu0 %v5853
    %6151 = vmatpush.bf16.msra.mxu0 %v5849
    %6152 = vmatpush.bf16.msra.mxu0 %v5845
    %6153 = vmatpush.bf16.msra.mxu0 %v5841
    %6154 = vmatmul.bf16.gmra.mxu0 %v5581
    %v6155 = vpop.f32.mrf.mxu0
    %v6156 = vadd.f32 %v6137, %v6155
    %v6157 = vpop.f32.mrf.mxu0
    %v6158 = vadd.f32 %v6139, %v6157
    %6159 = vmatmul.bf16.gmra.mxu0 %v5584
    %v6160 = vpop.f32.mrf.mxu0
    %v6161 = vadd.f32 %v6142, %v6160
    %v6162 = vpop.f32.mrf.mxu0
    %v6163 = vadd.f32 %v6144, %v6162
    %6164 = vdwg.mxu0
    %6165 = vmatpush.bf16.msra.mxu0 0
    %6166 = vmatpush.bf16.msra.mxu0 0
    %6167 = vmatpush.bf16.msra.mxu0 0
    %6168 = vmatpush.bf16.msra.mxu0 0
    %6169 = vmatpush.bf16.msra.mxu0 0
    %6170 = vmatpush.bf16.msra.mxu0 0
    %6171 = vmatpush.bf16.msra.mxu0 %v5877
    %6172 = vmatpush.bf16.msra.mxu0 %v5873
    %6173 = vmatmul.bf16.gmra.mxu0 %v5951
    %v6174 = vpop.f32.mrf.mxu0
    %v6175 = vadd.f32 %v6156, %v6174
    %v6176 = vpop.f32.mrf.mxu0
    %v6177 = vadd.f32 %v6158, %v6176
    %6178 = vmatmul.bf16.gmra.mxu0 %v5954
    %v6179 = vpop.f32.mrf.mxu0
    %v6180 = vadd.f32 %v6161, %v6179
    %v6181 = vpop.f32.mrf.mxu0
    %v6182 = vadd.f32 %v6163, %v6181
    %6183 = vdwg.mxu0
    %v6184 = vadd.f32 %v5275, %v6004
    %v6185 = vadd.f32 %v5332, %v6061
    %v6186 = vadd.f32 %v5389, %v6118
    %v6187 = vadd.f32 %v5446, %v6175
    %v6188 = vadd.f32 %v5277, %v6006
    %v6189 = vadd.f32 %v5334, %v6063
    %v6190 = vadd.f32 %v5391, %v6120
    %v6191 = vadd.f32 %v5448, %v6177
    %v6192 = vadd.f32 %v5280, %v6009
    %v6193 = vadd.f32 %v5337, %v6066
    %v6194 = vadd.f32 %v5394, %v6123
    %v6195 = vadd.f32 %v5451, %v6180
    %v6196 = vadd.f32 %v5282, %v6011
    %v6197 = vadd.f32 %v5339, %v6068
    %v6198 = vadd.f32 %v5396, %v6125
    %v6199 = vadd.f32 %v5453, %v6182
    %v6201 = vperm.slane %v3960, 0
    %v6202 = vperm.slane %v3960, 1
    %v6203 = vperm.slane %v3960, 2
    %v6204 = vperm.slane %v3960, 3
    %v6209 = vadd.f32 %v6184, %v6201
    %v6210 = vadd.f32 %v6185, %v6202
    %v6211 = vadd.f32 %v6186, %v6203
    %v6212 = vadd.f32 %v6187, %v6204
    %v6213 = vadd.f32 %v6188, %v6201
    %v6214 = vadd.f32 %v6189, %v6202
    %v6215 = vadd.f32 %v6190, %v6203
    %v6216 = vadd.f32 %v6191, %v6204
    %v6217 = vadd.f32 %v6192, %v6201
    %v6218 = vadd.f32 %v6193, %v6202
    %v6219 = vadd.f32 %v6194, %v6203
    %v6220 = vadd.f32 %v6195, %v6204
    %v6221 = vadd.f32 %v6196, %v6201
    %v6222 = vadd.f32 %v6197, %v6202
    %v6223 = vadd.f32 %v6198, %v6203
    %v6224 = vadd.f32 %v6199, %v6204
    %v6225 = vmax.f32 %v6209, 0.0
    %v6226 = vmax.f32 %v6210, 0.0
    %v6227 = vmax.f32 %v6211, 0.0
    %v6228 = vmax.f32 %v6212, 0.0
    %v6229 = vmax.f32 %v6213, 0.0
    %v6230 = vmax.f32 %v6214, 0.0
    %v6231 = vmax.f32 %v6215, 0.0
    %v6232 = vmax.f32 %v6216, 0.0
    %v6233 = vmax.f32 %v6217, 0.0
    %v6234 = vmax.f32 %v6218, 0.0
    %v6235 = vmax.f32 %v6219, 0.0
    %v6236 = vmax.f32 %v6220, 0.0
    %v6237 = vmax.f32 %v6221, 0.0
    %v6238 = vmax.f32 %v6222, 0.0
    %v6239 = vmax.f32 %v6223, 0.0
    %v6240 = vmax.f32 %v6224, 0.0
    %v6257 = vrot.slane %v6226, 6
    %v6258 = vrot.slane %v6227, 4
    %v6259 = vrot.slane %v6228, 2
    %v6260 = vrot.slane %v6230, 6
    %v6261 = vrot.slane %v6231, 4
    %v6262 = vrot.slane %v6232, 2
    %v6263 = vrot.slane %v6234, 6
    %v6264 = vrot.slane %v6235, 4
    %v6265 = vrot.slane %v6236, 2
    %v6266 = vrot.slane %v6238, 6
    %v6267 = vrot.slane %v6239, 4
    %v6268 = vrot.slane %v6240, 2
    %v6269 = vsel %vm1612, %v6225, %v6257
    %v6270 = vsel %vm1614, %v6258, %v6259
    %v6271 = vsel %vm1616, %v6269, %v6270
    %v6272 = vsel %vm1618, %v6225, %v6257
    %v6273 = vsel %vm1620, %v6259, %v6258
    %v6274 = vsel %vm1622, %v6272, %v6273
    %v6275 = vrot.slane %v6274, 2
    %v6276 = vsel %vm1614, %v6225, %v6257
    %v6277 = vsel %vm1612, %v6258, %v6259
    %v6278 = vsel %vm1616, %v6277, %v6276
    %v6279 = vrot.slane %v6278, 4
    %v6280 = vsel %vm1620, %v6257, %v6225
    %v6281 = vsel %vm1618, %v6258, %v6259
    %v6282 = vsel %vm1622, %v6281, %v6280
    %v6283 = vrot.slane %v6282, 6
    %v6284 = vsel %vm1612, %v6229, %v6260
    %v6285 = vsel %vm1614, %v6261, %v6262
    %v6286 = vsel %vm1616, %v6284, %v6285
    %v6287 = vsel %vm1618, %v6229, %v6260
    %v6288 = vsel %vm1620, %v6262, %v6261
    %v6289 = vsel %vm1622, %v6287, %v6288
    %v6290 = vrot.slane %v6289, 2
    %v6291 = vsel %vm1614, %v6229, %v6260
    %v6292 = vsel %vm1612, %v6261, %v6262
    %v6293 = vsel %vm1616, %v6292, %v6291
    %v6294 = vrot.slane %v6293, 4
    %v6295 = vsel %vm1620, %v6260, %v6229
    %v6296 = vsel %vm1618, %v6261, %v6262
    %v6297 = vsel %vm1622, %v6296, %v6295
    %v6298 = vrot.slane %v6297, 6
    %v6299 = vsel %vm1612, %v6233, %v6263
    %v6300 = vsel %vm1614, %v6264, %v6265
    %v6301 = vsel %vm1616, %v6299, %v6300
    %v6302 = vsel %vm1618, %v6233, %v6263
    %v6303 = vsel %vm1620, %v6265, %v6264
    %v6304 = vsel %vm1622, %v6302, %v6303
    %v6305 = vrot.slane %v6304, 2
    %v6306 = vsel %vm1614, %v6233, %v6263
    %v6307 = vsel %vm1612, %v6264, %v6265
    %v6308 = vsel %vm1616, %v6307, %v6306
    %v6309 = vrot.slane %v6308, 4
    %v6310 = vsel %vm1620, %v6263, %v6233
    %v6311 = vsel %vm1618, %v6264, %v6265
    %v6312 = vsel %vm1622, %v6311, %v6310
    %v6313 = vrot.slane %v6312, 6
    %v6314 = vsel %vm1612, %v6237, %v6266
    %v6315 = vsel %vm1614, %v6267, %v6268
    %v6316 = vsel %vm1616, %v6314, %v6315
    %v6317 = vsel %vm1618, %v6237, %v6266
    %v6318 = vsel %vm1620, %v6268, %v6267
    %v6319 = vsel %vm1622, %v6317, %v6318
    %v6320 = vrot.slane %v6319, 2
    %v6321 = vsel %vm1614, %v6237, %v6266
    %v6322 = vsel %vm1612, %v6267, %v6268
    %v6323 = vsel %vm1616, %v6322, %v6321
    %v6324 = vrot.slane %v6323, 4
    %v6325 = vsel %vm1620, %v6266, %v6237
    %v6326 = vsel %vm1618, %v6267, %v6268
    %v6327 = vsel %vm1622, %v6326, %v6325
    %v6328 = vrot.slane %v6327, 6
    %v6345 = vrot.slane %v6271, 7
    %v6346 = vrot.slane %v6345, 2
    %v6347 = vrot.slane %v6275, 7
    %v6348 = vrot.slane %v6347, 2
    %v6349 = vrot.slane %v6279, 7
    %v6350 = vrot.slane %v6349, 2
    %v6351 = vrot.slane %v6283, 7
    %v6352 = vrot.slane %v6351, 2
    %v6353 = vrot.slane %v6286, 7
    %v6354 = vrot.slane %v6353, 2
    %v6355 = vrot.slane %v6290, 7
    %v6356 = vrot.slane %v6355, 2
    %v6357 = vrot.slane %v6294, 7
    %v6358 = vrot.slane %v6357, 2
    %v6359 = vrot.slane %v6298, 7
    %v6360 = vrot.slane %v6359, 2
    %v6361 = vrot.slane %v6301, 7
    %v6362 = vrot.slane %v6361, 2
    %v6363 = vrot.slane %v6305, 7
    %v6364 = vrot.slane %v6363, 2
    %v6365 = vrot.slane %v6309, 7
    %v6366 = vrot.slane %v6365, 2
    %v6367 = vrot.slane %v6313, 7
    %v6368 = vrot.slane %v6367, 2
    %v6369 = vrot.slane %v6316, 7
    %v6370 = vrot.slane %v6369, 2
    %v6371 = vrot.slane %v6320, 7
    %v6372 = vrot.slane %v6371, 2
    %v6373 = vrot.slane %v6324, 7
    %v6374 = vrot.slane %v6373, 2
    %v6375 = vrot.slane %v6328, 7
    %v6376 = vrot.slane %v6375, 2
    %v6393 = vmax.f32 %v6271, %v6346
    %v6394 = vmax.f32 %v6275, %v6348
    %v6395 = vmax.f32 %v6279, %v6350
    %v6396 = vmax.f32 %v6283, %v6352
    %v6397 = vmax.f32 %v6286, %v6354
    %v6398 = vmax.f32 %v6290, %v6356
    %v6399 = vmax.f32 %v6294, %v6358
    %v6400 = vmax.f32 %v6298, %v6360
    %v6401 = vmax.f32 %v6301, %v6362
    %v6402 = vmax.f32 %v6305, %v6364
    %v6403 = vmax.f32 %v6309, %v6366
    %v6404 = vmax.f32 %v6313, %v6368
    %v6405 = vmax.f32 %v6316, %v6370
    %v6406 = vmax.f32 %v6320, %v6372
    %v6407 = vmax.f32 %v6324, %v6374
    %v6408 = vmax.f32 %v6328, %v6376
    %v6425 = vperm.slane %v6393, 0
    %v6426 = vperm.slane %v6393, 2
    %v6427 = vperm.slane %v6393, 4
    %v6428 = vperm.slane %v6393, 6
    %v6429 = vperm.slane %v6394, 0
    %v6430 = vperm.slane %v6394, 2
    %v6431 = vperm.slane %v6394, 4
    %v6432 = vperm.slane %v6394, 6
    %v6433 = vperm.slane %v6395, 0
    %v6434 = vperm.slane %v6395, 2
    %v6435 = vperm.slane %v6395, 4
    %v6436 = vperm.slane %v6395, 6
    %v6437 = vperm.slane %v6396, 0
    %v6438 = vperm.slane %v6396, 2
    %v6439 = vperm.slane %v6396, 4
    %v6440 = vperm.slane %v6396, 6
    %v6441 = vperm.slane %v6397, 0
    %v6442 = vperm.slane %v6397, 2
    %v6443 = vperm.slane %v6397, 4
    %v6444 = vperm.slane %v6397, 6
    %v6445 = vperm.slane %v6398, 0
    %v6446 = vperm.slane %v6398, 2
    %v6447 = vperm.slane %v6398, 4
    %v6448 = vperm.slane %v6398, 6
    %v6449 = vperm.slane %v6399, 0
    %v6450 = vperm.slane %v6399, 2
    %v6451 = vperm.slane %v6399, 4
    %v6452 = vperm.slane %v6399, 6
    %v6453 = vperm.slane %v6400, 0
    %v6454 = vperm.slane %v6400, 2
    %v6455 = vperm.slane %v6400, 4
    %v6456 = vperm.slane %v6400, 6
    %v6457 = vperm.slane %v6401, 0
    %v6458 = vperm.slane %v6401, 2
    %v6459 = vperm.slane %v6401, 4
    %v6460 = vperm.slane %v6401, 6
    %v6461 = vperm.slane %v6402, 0
    %v6462 = vperm.slane %v6402, 2
    %v6463 = vperm.slane %v6402, 4
    %v6464 = vperm.slane %v6402, 6
    %v6465 = vperm.slane %v6403, 0
    %v6466 = vperm.slane %v6403, 2
    %v6467 = vperm.slane %v6403, 4
    %v6468 = vperm.slane %v6403, 6
    %v6469 = vperm.slane %v6404, 0
    %v6470 = vperm.slane %v6404, 2
    %v6471 = vperm.slane %v6404, 4
    %v6472 = vperm.slane %v6404, 6
    %v6473 = vperm.slane %v6405, 0
    %v6474 = vperm.slane %v6405, 2
    %v6475 = vperm.slane %v6405, 4
    %v6476 = vperm.slane %v6405, 6
    %v6477 = vperm.slane %v6406, 0
    %v6478 = vperm.slane %v6406, 2
    %v6479 = vperm.slane %v6406, 4
    %v6480 = vperm.slane %v6406, 6
    %v6481 = vperm.slane %v6407, 0
    %v6482 = vperm.slane %v6407, 2
    %v6483 = vperm.slane %v6407, 4
    %v6484 = vperm.slane %v6407, 6
    %v6485 = vperm.slane %v6408, 0
    %v6486 = vperm.slane %v6408, 2
    %v6487 = vperm.slane %v6408, 4
    %v6488 = vperm.slane %v6408, 6
    %v6553 = vpack.c.bf16 %v6425, %v6425
    %v6554 = vpack.c.bf16 %v6426, %v6426
    %v6555 = vpack.c.bf16 %v6427, %v6427
    %v6556 = vpack.c.bf16 %v6428, %v6428
    %v6557 = vpack.c.bf16 %v6429, %v6429
    %v6558 = vpack.c.bf16 %v6430, %v6430
    %v6559 = vpack.c.bf16 %v6431, %v6431
    %v6560 = vpack.c.bf16 %v6432, %v6432
    %v6561 = vpack.c.bf16 %v6433, %v6433
    %v6562 = vpack.c.bf16 %v6434, %v6434
    %v6563 = vpack.c.bf16 %v6435, %v6435
    %v6564 = vpack.c.bf16 %v6436, %v6436
    %v6565 = vpack.c.bf16 %v6437, %v6437
    %v6566 = vpack.c.bf16 %v6438, %v6438
    %v6567 = vpack.c.bf16 %v6439, %v6439
    %v6568 = vpack.c.bf16 %v6440, %v6440
    %v6569 = vpack.c.bf16 %v6441, %v6441
    %v6570 = vpack.c.bf16 %v6442, %v6442
    %v6571 = vpack.c.bf16 %v6443, %v6443
    %v6572 = vpack.c.bf16 %v6444, %v6444
    %v6573 = vpack.c.bf16 %v6445, %v6445
    %v6574 = vpack.c.bf16 %v6446, %v6446
    %v6575 = vpack.c.bf16 %v6447, %v6447
    %v6576 = vpack.c.bf16 %v6448, %v6448
    %v6577 = vpack.c.bf16 %v6449, %v6449
    %v6578 = vpack.c.bf16 %v6450, %v6450
    %v6579 = vpack.c.bf16 %v6451, %v6451
    %v6580 = vpack.c.bf16 %v6452, %v6452
    %v6581 = vpack.c.bf16 %v6453, %v6453
    %v6582 = vpack.c.bf16 %v6454, %v6454
    %v6583 = vpack.c.bf16 %v6455, %v6455
    %v6584 = vpack.c.bf16 %v6456, %v6456
    %v6585 = vpack.c.bf16 %v6457, %v6457
    %v6586 = vpack.c.bf16 %v6458, %v6458
    %v6587 = vpack.c.bf16 %v6459, %v6459
    %v6588 = vpack.c.bf16 %v6460, %v6460
    %v6589 = vpack.c.bf16 %v6461, %v6461
    %v6590 = vpack.c.bf16 %v6462, %v6462
    %v6591 = vpack.c.bf16 %v6463, %v6463
    %v6592 = vpack.c.bf16 %v6464, %v6464
    %v6593 = vpack.c.bf16 %v6465, %v6465
    %v6594 = vpack.c.bf16 %v6466, %v6466
    %v6595 = vpack.c.bf16 %v6467, %v6467
    %v6596 = vpack.c.bf16 %v6468, %v6468
    %v6597 = vpack.c.bf16 %v6469, %v6469
    %v6598 = vpack.c.bf16 %v6470, %v6470
    %v6599 = vpack.c.bf16 %v6471, %v6471
    %v6600 = vpack.c.bf16 %v6472, %v6472
    %v6601 = vpack.c.bf16 %v6473, %v6473
    %v6602 = vpack.c.bf16 %v6474, %v6474
    %v6603 = vpack.c.bf16 %v6475, %v6475
    %v6604 = vpack.c.bf16 %v6476, %v6476
    %v6605 = vpack.c.bf16 %v6477, %v6477
    %v6606 = vpack.c.bf16 %v6478, %v6478
    %v6607 = vpack.c.bf16 %v6479, %v6479
    %v6608 = vpack.c.bf16 %v6480, %v6480
    %v6609 = vpack.c.bf16 %v6481, %v6481
    %v6610 = vpack.c.bf16 %v6482, %v6482
    %v6611 = vpack.c.bf16 %v6483, %v6483
    %v6612 = vpack.c.bf16 %v6484, %v6484
    %v6613 = vpack.c.bf16 %v6485, %v6485
    %v6614 = vpack.c.bf16 %v6486, %v6486
    %v6615 = vpack.c.bf16 %v6487, %v6487
    %v6616 = vpack.c.bf16 %v6488, %v6488
    %v6617 = vld [vmem:[#allocation12] sm:$0xff]
    %v6618 = vld [vmem:[#allocation12 + $0x8] sm:$0xff]
    %v6619 = vld [vmem:[#allocation12 + $0x10] sm:$0xff]
    %v6620 = vld [vmem:[#allocation12 + $0x18] sm:$0xff]
    %v6621 = vld [vmem:[#allocation12 + $0x20] sm:$0xff]
    %v6622 = vld [vmem:[#allocation12 + $0x28] sm:$0xff]
    %v6623 = vld [vmem:[#allocation12 + $0x30] sm:$0xff]
    %v6624 = vld [vmem:[#allocation12 + $0x38] sm:$0xff]
    %v6625 = vld [vmem:[#allocation12 + $0x40] sm:$0xff]
    %v6626 = vld [vmem:[#allocation12 + $0x48] sm:$0xff]
    %v6627 = vld [vmem:[#allocation12 + $0x50] sm:$0xff]
    %v6628 = vld [vmem:[#allocation12 + $0x58] sm:$0xff]
    %v6629 = vld [vmem:[#allocation12 + $0x60] sm:$0xff]
    %v6630 = vld [vmem:[#allocation12 + $0x68] sm:$0xff]
    %v6631 = vld [vmem:[#allocation12 + $0x70] sm:$0xff]
    %v6632 = vld [vmem:[#allocation12 + $0x78] sm:$0xff]
    %v6633 = vld [vmem:[#allocation12 + $0x80] sm:$0xff]
    %v6634 = vld [vmem:[#allocation12 + $0x88] sm:$0xff]
    %v6635 = vld [vmem:[#allocation12 + $0x90] sm:$0xff]
    %v6636 = vld [vmem:[#allocation12 + $0x98] sm:$0xff]
    %v6637 = vld [vmem:[#allocation12 + $0xa0] sm:$0xff]
    %v6638 = vld [vmem:[#allocation12 + $0xa8] sm:$0xff]
    %v6639 = vld [vmem:[#allocation12 + $0xb0] sm:$0xff]
    %v6640 = vld [vmem:[#allocation12 + $0xb8] sm:$0xff]
    %v6641 = vld [vmem:[#allocation12 + $0xc0] sm:$0xff]
    %v6642 = vld [vmem:[#allocation12 + $0xc8] sm:$0xff]
    %v6643 = vld [vmem:[#allocation12 + $0xd0] sm:$0xff]
    %v6644 = vld [vmem:[#allocation12 + $0xd8] sm:$0xff]
    %v6645 = vld [vmem:[#allocation12 + $0xe0] sm:$0xff]
    %v6646 = vld [vmem:[#allocation12 + $0xe8] sm:$0xff]
    %v6647 = vld [vmem:[#allocation12 + $0xf0] sm:$0xff]
    %v6648 = vld [vmem:[#allocation12 + $0xf8] sm:$0xff]
    %v6649 = vld [vmem:[#allocation12 + $0x100] sm:$0xff]
    %v6650 = vld [vmem:[#allocation12 + $0x108] sm:$0xff]
    %v6651 = vld [vmem:[#allocation12 + $0x110] sm:$0xff]
    %v6652 = vld [vmem:[#allocation12 + $0x118] sm:$0xff]
    %v6653 = vld [vmem:[#allocation12 + $0x120] sm:$0xff]
    %v6654 = vld [vmem:[#allocation12 + $0x128] sm:$0xff]
    %v6655 = vld [vmem:[#allocation12 + $0x130] sm:$0xff]
    %v6656 = vld [vmem:[#allocation12 + $0x138] sm:$0xff]
    %v6657 = vld [vmem:[#allocation12 + $0x140] sm:$0xff]
    %v6658 = vld [vmem:[#allocation12 + $0x148] sm:$0xff]
    %v6659 = vld [vmem:[#allocation12 + $0x150] sm:$0xff]
    %v6660 = vld [vmem:[#allocation12 + $0x158] sm:$0xff]
    %v6661 = vld [vmem:[#allocation12 + $0x160] sm:$0xff]
    %v6662 = vld [vmem:[#allocation12 + $0x168] sm:$0xff]
    %v6663 = vld [vmem:[#allocation12 + $0x170] sm:$0xff]
    %v6664 = vld [vmem:[#allocation12 + $0x178] sm:$0xff]
    %v6665 = vld [vmem:[#allocation12 + $0x180] sm:$0xff]
    %v6666 = vld [vmem:[#allocation12 + $0x188] sm:$0xff]
    %v6667 = vld [vmem:[#allocation12 + $0x190] sm:$0xff]
    %v6668 = vld [vmem:[#allocation12 + $0x198] sm:$0xff]
    %v6669 = vld [vmem:[#allocation12 + $0x1a0] sm:$0xff]
    %v6670 = vld [vmem:[#allocation12 + $0x1a8] sm:$0xff]
    %v6671 = vld [vmem:[#allocation12 + $0x1b0] sm:$0xff]
    %v6672 = vld [vmem:[#allocation12 + $0x1b8] sm:$0xff]
    %v6673 = vld [vmem:[#allocation12 + $0x1c0] sm:$0xff]
    %v6674 = vld [vmem:[#allocation12 + $0x1c8] sm:$0xff]
    %v6675 = vld [vmem:[#allocation12 + $0x1d0] sm:$0xff]
    %v6676 = vld [vmem:[#allocation12 + $0x1d8] sm:$0xff]
    %v6677 = vld [vmem:[#allocation12 + $0x1e0] sm:$0xff]
    %v6678 = vld [vmem:[#allocation12 + $0x1e8] sm:$0xff]
    %v6679 = vld [vmem:[#allocation12 + $0x1f0] sm:$0xff]
    %v6680 = vld [vmem:[#allocation12 + $0x1f8] sm:$0xff]
    %v6681 = vld [vmem:[#allocation12 + $0x200] sm:$0xff]
    %v6682 = vld [vmem:[#allocation12 + $0x208] sm:$0xff]
    %v6683 = vld [vmem:[#allocation12 + $0x210] sm:$0xff]
    %v6684 = vld [vmem:[#allocation12 + $0x218] sm:$0xff]
    %v6685 = vld [vmem:[#allocation12 + $0x220] sm:$0xff]
    %v6686 = vld [vmem:[#allocation12 + $0x228] sm:$0xff]
    %v6687 = vld [vmem:[#allocation12 + $0x230] sm:$0xff]
    %v6688 = vld [vmem:[#allocation12 + $0x238] sm:$0xff]
    %v6689 = vld [vmem:[#allocation12 + $0x240] sm:$0xff]
    %v6690 = vld [vmem:[#allocation12 + $0x248] sm:$0xff]
    %v6691 = vld [vmem:[#allocation12 + $0x250] sm:$0xff]
    %v6692 = vld [vmem:[#allocation12 + $0x258] sm:$0xff]
    %v6693 = vld [vmem:[#allocation12 + $0x260] sm:$0xff]
    %v6694 = vld [vmem:[#allocation12 + $0x268] sm:$0xff]
    %v6695 = vld [vmem:[#allocation12 + $0x270] sm:$0xff]
    %v6696 = vld [vmem:[#allocation12 + $0x278] sm:$0xff]
    %v6697 = vld [vmem:[#allocation12 + $0x280] sm:$0xff]
    %v6698 = vld [vmem:[#allocation12 + $0x288] sm:$0xff]
    %v6699 = vld [vmem:[#allocation12 + $0x290] sm:$0xff]
    %v6700 = vld [vmem:[#allocation12 + $0x298] sm:$0xff]
    %v6701 = vld [vmem:[#allocation12 + $0x2a0] sm:$0xff]
    %v6702 = vld [vmem:[#allocation12 + $0x2a8] sm:$0xff]
    %v6703 = vld [vmem:[#allocation12 + $0x2b0] sm:$0xff]
    %v6704 = vld [vmem:[#allocation12 + $0x2b8] sm:$0xff]
    %v6705 = vld [vmem:[#allocation12 + $0x2c0] sm:$0xff]
    %v6706 = vld [vmem:[#allocation12 + $0x2c8] sm:$0xff]
    %v6707 = vld [vmem:[#allocation12 + $0x2d0] sm:$0xff]
    %v6708 = vld [vmem:[#allocation12 + $0x2d8] sm:$0xff]
    %v6709 = vld [vmem:[#allocation12 + $0x2e0] sm:$0xff]
    %v6710 = vld [vmem:[#allocation12 + $0x2e8] sm:$0xff]
    %v6711 = vld [vmem:[#allocation12 + $0x2f0] sm:$0xff]
    %v6712 = vld [vmem:[#allocation12 + $0x2f8] sm:$0xff]
    %v6713 = vld [vmem:[#allocation12 + $0x300] sm:$0xff]
    %v6714 = vld [vmem:[#allocation12 + $0x308] sm:$0xff]
    %v6715 = vld [vmem:[#allocation12 + $0x310] sm:$0xff]
    %v6716 = vld [vmem:[#allocation12 + $0x318] sm:$0xff]
    %v6717 = vld [vmem:[#allocation12 + $0x320] sm:$0xff]
    %v6718 = vld [vmem:[#allocation12 + $0x328] sm:$0xff]
    %v6719 = vld [vmem:[#allocation12 + $0x330] sm:$0xff]
    %v6720 = vld [vmem:[#allocation12 + $0x338] sm:$0xff]
    %v6721 = vld [vmem:[#allocation12 + $0x340] sm:$0xff]
    %v6722 = vld [vmem:[#allocation12 + $0x348] sm:$0xff]
    %v6723 = vld [vmem:[#allocation12 + $0x350] sm:$0xff]
    %v6724 = vld [vmem:[#allocation12 + $0x358] sm:$0xff]
    %v6725 = vld [vmem:[#allocation12 + $0x360] sm:$0xff]
    %v6726 = vld [vmem:[#allocation12 + $0x368] sm:$0xff]
    %v6727 = vld [vmem:[#allocation12 + $0x370] sm:$0xff]
    %v6728 = vld [vmem:[#allocation12 + $0x378] sm:$0xff]
    %v6729 = vld [vmem:[#allocation12 + $0x380] sm:$0xff]
    %v6730 = vld [vmem:[#allocation12 + $0x388] sm:$0xff]
    %v6731 = vld [vmem:[#allocation12 + $0x390] sm:$0xff]
    %v6732 = vld [vmem:[#allocation12 + $0x398] sm:$0xff]
    %v6733 = vld [vmem:[#allocation12 + $0x3a0] sm:$0xff]
    %v6734 = vld [vmem:[#allocation12 + $0x3a8] sm:$0xff]
    %v6735 = vld [vmem:[#allocation12 + $0x3b0] sm:$0xff]
    %v6736 = vld [vmem:[#allocation12 + $0x3b8] sm:$0xff]
    %v6737 = vld [vmem:[#allocation12 + $0x3c0] sm:$0xff]
    %v6738 = vld [vmem:[#allocation12 + $0x3c8] sm:$0xff]
    %v6739 = vld [vmem:[#allocation12 + $0x3d0] sm:$0xff]
    %v6740 = vld [vmem:[#allocation12 + $0x3d8] sm:$0xff]
    %v6741 = vld [vmem:[#allocation12 + $0x3e0] sm:$0xff]
    %v6742 = vld [vmem:[#allocation12 + $0x3e8] sm:$0xff]
    %v6743 = vld [vmem:[#allocation12 + $0x3f0] sm:$0xff]
    %v6744 = vld [vmem:[#allocation12 + $0x3f8] sm:$0xff]
    %v6809 = vunpack.c.l.b16 %v6553
    %v6810 = vunpack.c.l.b16 %v6554
    %v6811 = vunpack.c.l.b16 %v6555
    %v6812 = vunpack.c.l.b16 %v6556
    %v6813 = vunpack.c.l.b16 %v6557
    %v6814 = vunpack.c.l.b16 %v6558
    %v6815 = vunpack.c.l.b16 %v6559
    %v6816 = vunpack.c.l.b16 %v6560
    %v6817 = vunpack.c.l.b16 %v6561
    %v6818 = vunpack.c.l.b16 %v6562
    %v6819 = vunpack.c.l.b16 %v6563
    %v6820 = vunpack.c.l.b16 %v6564
    %v6821 = vunpack.c.l.b16 %v6565
    %v6822 = vunpack.c.l.b16 %v6566
    %v6823 = vunpack.c.l.b16 %v6567
    %v6824 = vunpack.c.l.b16 %v6568
    %v6825 = vunpack.c.l.b16 %v6569
    %v6826 = vunpack.c.l.b16 %v6570
    %v6827 = vunpack.c.l.b16 %v6571
    %v6828 = vunpack.c.l.b16 %v6572
    %v6829 = vunpack.c.l.b16 %v6573
    %v6830 = vunpack.c.l.b16 %v6574
    %v6831 = vunpack.c.l.b16 %v6575
    %v6832 = vunpack.c.l.b16 %v6576
    %v6833 = vunpack.c.l.b16 %v6577
    %v6834 = vunpack.c.l.b16 %v6578
    %v6835 = vunpack.c.l.b16 %v6579
    %v6836 = vunpack.c.l.b16 %v6580
    %v6837 = vunpack.c.l.b16 %v6581
    %v6838 = vunpack.c.l.b16 %v6582
    %v6839 = vunpack.c.l.b16 %v6583
    %v6840 = vunpack.c.l.b16 %v6584
    %v6841 = vunpack.c.l.b16 %v6585
    %v6842 = vunpack.c.l.b16 %v6586
    %v6843 = vunpack.c.l.b16 %v6587
    %v6844 = vunpack.c.l.b16 %v6588
    %v6845 = vunpack.c.l.b16 %v6589
    %v6846 = vunpack.c.l.b16 %v6590
    %v6847 = vunpack.c.l.b16 %v6591
    %v6848 = vunpack.c.l.b16 %v6592
    %v6849 = vunpack.c.l.b16 %v6593
    %v6850 = vunpack.c.l.b16 %v6594
    %v6851 = vunpack.c.l.b16 %v6595
    %v6852 = vunpack.c.l.b16 %v6596
    %v6853 = vunpack.c.l.b16 %v6597
    %v6854 = vunpack.c.l.b16 %v6598
    %v6855 = vunpack.c.l.b16 %v6599
    %v6856 = vunpack.c.l.b16 %v6600
    %v6857 = vunpack.c.l.b16 %v6601
    %v6858 = vunpack.c.l.b16 %v6602
    %v6859 = vunpack.c.l.b16 %v6603
    %v6860 = vunpack.c.l.b16 %v6604
    %v6861 = vunpack.c.l.b16 %v6605
    %v6862 = vunpack.c.l.b16 %v6606
    %v6863 = vunpack.c.l.b16 %v6607
    %v6864 = vunpack.c.l.b16 %v6608
    %v6865 = vunpack.c.l.b16 %v6609
    %v6866 = vunpack.c.l.b16 %v6610
    %v6867 = vunpack.c.l.b16 %v6611
    %v6868 = vunpack.c.l.b16 %v6612
    %v6869 = vunpack.c.l.b16 %v6613
    %v6870 = vunpack.c.l.b16 %v6614
    %v6871 = vunpack.c.l.b16 %v6615
    %v6872 = vunpack.c.l.b16 %v6616
    %v6873 = vrot.slane %v6813, 7
    %v6874 = vsel %vm2699, %v6873, %v6809
    %v6875 = vrot.slane %v6817, 6
    %v6876 = vsel %vm2702, %v6875, %v6874
    %v6877 = vrot.slane %v6821, 5
    %v6878 = vsel %vm2705, %v6877, %v6876
    %v6879 = vrot.slane %v6825, 4
    %v6880 = vsel %vm2708, %v6879, %v6878
    %v6881 = vrot.slane %v6829, 3
    %v6882 = vsel %vm2711, %v6881, %v6880
    %v6883 = vrot.slane %v6833, 2
    %v6884 = vsel %vm2714, %v6883, %v6882
    %v6885 = vrot.slane %v6837, 1
    %v6886 = vsel %vm2717, %v6885, %v6884
    %v6887 = vrot.slane %v6814, 7
    %v6888 = vsel %vm2699, %v6887, %v6810
    %v6889 = vrot.slane %v6818, 6
    %v6890 = vsel %vm2702, %v6889, %v6888
    %v6891 = vrot.slane %v6822, 5
    %v6892 = vsel %vm2705, %v6891, %v6890
    %v6893 = vrot.slane %v6826, 4
    %v6894 = vsel %vm2708, %v6893, %v6892
    %v6895 = vrot.slane %v6830, 3
    %v6896 = vsel %vm2711, %v6895, %v6894
    %v6897 = vrot.slane %v6834, 2
    %v6898 = vsel %vm2714, %v6897, %v6896
    %v6899 = vrot.slane %v6838, 1
    %v6900 = vsel %vm2717, %v6899, %v6898
    %v6901 = vrot.slane %v6815, 7
    %v6902 = vsel %vm2699, %v6901, %v6811
    %v6903 = vrot.slane %v6819, 6
    %v6904 = vsel %vm2702, %v6903, %v6902
    %v6905 = vrot.slane %v6823, 5
    %v6906 = vsel %vm2705, %v6905, %v6904
    %v6907 = vrot.slane %v6827, 4
    %v6908 = vsel %vm2708, %v6907, %v6906
    %v6909 = vrot.slane %v6831, 3
    %v6910 = vsel %vm2711, %v6909, %v6908
    %v6911 = vrot.slane %v6835, 2
    %v6912 = vsel %vm2714, %v6911, %v6910
    %v6913 = vrot.slane %v6839, 1
    %v6914 = vsel %vm2717, %v6913, %v6912
    %v6915 = vrot.slane %v6816, 7
    %v6916 = vsel %vm2699, %v6915, %v6812
    %v6917 = vrot.slane %v6820, 6
    %v6918 = vsel %vm2702, %v6917, %v6916
    %v6919 = vrot.slane %v6824, 5
    %v6920 = vsel %vm2705, %v6919, %v6918
    %v6921 = vrot.slane %v6828, 4
    %v6922 = vsel %vm2708, %v6921, %v6920
    %v6923 = vrot.slane %v6832, 3
    %v6924 = vsel %vm2711, %v6923, %v6922
    %v6925 = vrot.slane %v6836, 2
    %v6926 = vsel %vm2714, %v6925, %v6924
    %v6927 = vrot.slane %v6840, 1
    %v6928 = vsel %vm2717, %v6927, %v6926
    %v6929 = vrot.slane %v6845, 7
    %v6930 = vsel %vm2699, %v6929, %v6841
    %v6931 = vrot.slane %v6849, 6
    %v6932 = vsel %vm2702, %v6931, %v6930
    %v6933 = vrot.slane %v6853, 5
    %v6934 = vsel %vm2705, %v6933, %v6932
    %v6935 = vrot.slane %v6857, 4
    %v6936 = vsel %vm2708, %v6935, %v6934
    %v6937 = vrot.slane %v6861, 3
    %v6938 = vsel %vm2711, %v6937, %v6936
    %v6939 = vrot.slane %v6865, 2
    %v6940 = vsel %vm2714, %v6939, %v6938
    %v6941 = vrot.slane %v6869, 1
    %v6942 = vsel %vm2717, %v6941, %v6940
    %v6943 = vrot.slane %v6846, 7
    %v6944 = vsel %vm2699, %v6943, %v6842
    %v6945 = vrot.slane %v6850, 6
    %v6946 = vsel %vm2702, %v6945, %v6944
    %v6947 = vrot.slane %v6854, 5
    %v6948 = vsel %vm2705, %v6947, %v6946
    %v6949 = vrot.slane %v6858, 4
    %v6950 = vsel %vm2708, %v6949, %v6948
    %v6951 = vrot.slane %v6862, 3
    %v6952 = vsel %vm2711, %v6951, %v6950
    %v6953 = vrot.slane %v6866, 2
    %v6954 = vsel %vm2714, %v6953, %v6952
    %v6955 = vrot.slane %v6870, 1
    %v6956 = vsel %vm2717, %v6955, %v6954
    %v6957 = vrot.slane %v6847, 7
    %v6958 = vsel %vm2699, %v6957, %v6843
    %v6959 = vrot.slane %v6851, 6
    %v6960 = vsel %vm2702, %v6959, %v6958
    %v6961 = vrot.slane %v6855, 5
    %v6962 = vsel %vm2705, %v6961, %v6960
    %v6963 = vrot.slane %v6859, 4
    %v6964 = vsel %vm2708, %v6963, %v6962
    %v6965 = vrot.slane %v6863, 3
    %v6966 = vsel %vm2711, %v6965, %v6964
    %v6967 = vrot.slane %v6867, 2
    %v6968 = vsel %vm2714, %v6967, %v6966
    %v6969 = vrot.slane %v6871, 1
    %v6970 = vsel %vm2717, %v6969, %v6968
    %v6971 = vrot.slane %v6848, 7
    %v6972 = vsel %vm2699, %v6971, %v6844
    %v6973 = vrot.slane %v6852, 6
    %v6974 = vsel %vm2702, %v6973, %v6972
    %v6975 = vrot.slane %v6856, 5
    %v6976 = vsel %vm2705, %v6975, %v6974
    %v6977 = vrot.slane %v6860, 4
    %v6978 = vsel %vm2708, %v6977, %v6976
    %v6979 = vrot.slane %v6864, 3
    %v6980 = vsel %vm2711, %v6979, %v6978
    %v6981 = vrot.slane %v6868, 2
    %v6982 = vsel %vm2714, %v6981, %v6980
    %v6983 = vrot.slane %v6872, 1
    %v6984 = vsel %vm2717, %v6983, %v6982
    %v6985 = vpack.c.b16 %v6942, %v6886
    %v6986 = vpack.c.b16 %v6956, %v6900
    %v6987 = vpack.c.b16 %v6970, %v6914
    %v6988 = vpack.c.b16 %v6984, %v6928
    %v7121 = vunpack.c.l.b16 %v6617
    %v7122 = vunpack.c.h.b16 %v6617
    %v7123 = vunpack.c.l.b16 %v6618
    %v7124 = vunpack.c.h.b16 %v6618
    %v7125 = vunpack.c.l.b16 %v6619
    %v7126 = vunpack.c.h.b16 %v6619
    %v7127 = vunpack.c.l.b16 %v6620
    %v7128 = vunpack.c.h.b16 %v6620
    %v7129 = vunpack.c.l.b16 %v6621
    %v7130 = vunpack.c.h.b16 %v6621
    %v7131 = vunpack.c.l.b16 %v6622
    %v7132 = vunpack.c.h.b16 %v6622
    %v7133 = vunpack.c.l.b16 %v6623
    %v7134 = vunpack.c.h.b16 %v6623
    %v7135 = vunpack.c.l.b16 %v6624
    %v7136 = vunpack.c.h.b16 %v6624
    %v7137 = vunpack.c.l.b16 %v6625
    %v7138 = vunpack.c.h.b16 %v6625
    %v7139 = vunpack.c.l.b16 %v6626
    %v7140 = vunpack.c.h.b16 %v6626
    %v7141 = vunpack.c.l.b16 %v6627
    %v7142 = vunpack.c.h.b16 %v6627
    %v7143 = vunpack.c.l.b16 %v6628
    %v7144 = vunpack.c.h.b16 %v6628
    %v7145 = vunpack.c.l.b16 %v6629
    %v7146 = vunpack.c.h.b16 %v6629
    %v7147 = vunpack.c.l.b16 %v6630
    %v7148 = vunpack.c.h.b16 %v6630
    %v7149 = vunpack.c.l.b16 %v6631
    %v7150 = vunpack.c.h.b16 %v6631
    %v7151 = vunpack.c.l.b16 %v6632
    %v7152 = vunpack.c.h.b16 %v6632
    %v7153 = vunpack.c.l.b16 %v6633
    %v7154 = vunpack.c.h.b16 %v6633
    %v7155 = vunpack.c.l.b16 %v6634
    %v7156 = vunpack.c.h.b16 %v6634
    %v7157 = vunpack.c.l.b16 %v6635
    %v7158 = vunpack.c.h.b16 %v6635
    %v7159 = vunpack.c.l.b16 %v6636
    %v7160 = vunpack.c.h.b16 %v6636
    %v7161 = vunpack.c.l.b16 %v6637
    %v7162 = vunpack.c.h.b16 %v6637
    %v7163 = vunpack.c.l.b16 %v6638
    %v7164 = vunpack.c.h.b16 %v6638
    %v7165 = vunpack.c.l.b16 %v6639
    %v7166 = vunpack.c.h.b16 %v6639
    %v7167 = vunpack.c.l.b16 %v6640
    %v7168 = vunpack.c.h.b16 %v6640
    %v7169 = vunpack.c.l.b16 %v6641
    %v7170 = vunpack.c.h.b16 %v6641
    %v7171 = vunpack.c.l.b16 %v6642
    %v7172 = vunpack.c.h.b16 %v6642
    %v7173 = vunpack.c.l.b16 %v6643
    %v7174 = vunpack.c.h.b16 %v6643
    %v7175 = vunpack.c.l.b16 %v6644
    %v7176 = vunpack.c.h.b16 %v6644
    %v7177 = vunpack.c.l.b16 %v6645
    %v7178 = vunpack.c.h.b16 %v6645
    %v7179 = vunpack.c.l.b16 %v6646
    %v7180 = vunpack.c.h.b16 %v6646
    %v7181 = vunpack.c.l.b16 %v6647
    %v7182 = vunpack.c.h.b16 %v6647
    %v7183 = vunpack.c.l.b16 %v6648
    %v7184 = vunpack.c.h.b16 %v6648
    %v7185 = vunpack.c.l.b16 %v6649
    %v7186 = vunpack.c.h.b16 %v6649
    %v7187 = vunpack.c.l.b16 %v6650
    %v7188 = vunpack.c.h.b16 %v6650
    %v7189 = vunpack.c.l.b16 %v6651
    %v7190 = vunpack.c.h.b16 %v6651
    %v7191 = vunpack.c.l.b16 %v6652
    %v7192 = vunpack.c.h.b16 %v6652
    %v7193 = vunpack.c.l.b16 %v6653
    %v7194 = vunpack.c.h.b16 %v6653
    %v7195 = vunpack.c.l.b16 %v6654
    %v7196 = vunpack.c.h.b16 %v6654
    %v7197 = vunpack.c.l.b16 %v6655
    %v7198 = vunpack.c.h.b16 %v6655
    %v7199 = vunpack.c.l.b16 %v6656
    %v7200 = vunpack.c.h.b16 %v6656
    %v7201 = vunpack.c.l.b16 %v6657
    %v7202 = vunpack.c.h.b16 %v6657
    %v7203 = vunpack.c.l.b16 %v6658
    %v7204 = vunpack.c.h.b16 %v6658
    %v7205 = vunpack.c.l.b16 %v6659
    %v7206 = vunpack.c.h.b16 %v6659
    %v7207 = vunpack.c.l.b16 %v6660
    %v7208 = vunpack.c.h.b16 %v6660
    %v7209 = vunpack.c.l.b16 %v6661
    %v7210 = vunpack.c.h.b16 %v6661
    %v7211 = vunpack.c.l.b16 %v6662
    %v7212 = vunpack.c.h.b16 %v6662
    %v7213 = vunpack.c.l.b16 %v6663
    %v7214 = vunpack.c.h.b16 %v6663
    %v7215 = vunpack.c.l.b16 %v6664
    %v7216 = vunpack.c.h.b16 %v6664
    %v7217 = vunpack.c.l.b16 %v6665
    %v7218 = vunpack.c.h.b16 %v6665
    %v7219 = vunpack.c.l.b16 %v6666
    %v7220 = vunpack.c.h.b16 %v6666
    %v7221 = vunpack.c.l.b16 %v6667
    %v7222 = vunpack.c.h.b16 %v6667
    %v7223 = vunpack.c.l.b16 %v6668
    %v7224 = vunpack.c.h.b16 %v6668
    %v7225 = vunpack.c.l.b16 %v6669
    %v7226 = vunpack.c.h.b16 %v6669
    %v7227 = vunpack.c.l.b16 %v6670
    %v7228 = vunpack.c.h.b16 %v6670
    %v7229 = vunpack.c.l.b16 %v6671
    %v7230 = vunpack.c.h.b16 %v6671
    %v7231 = vunpack.c.l.b16 %v6672
    %v7232 = vunpack.c.h.b16 %v6672
    %v7233 = vunpack.c.l.b16 %v6673
    %v7234 = vunpack.c.h.b16 %v6673
    %v7235 = vunpack.c.l.b16 %v6674
    %v7236 = vunpack.c.h.b16 %v6674
    %v7237 = vunpack.c.l.b16 %v6675
    %v7238 = vunpack.c.h.b16 %v6675
    %v7239 = vunpack.c.l.b16 %v6676
    %v7240 = vunpack.c.h.b16 %v6676
    %v7241 = vunpack.c.l.b16 %v6677
    %v7242 = vunpack.c.h.b16 %v6677
    %v7243 = vunpack.c.l.b16 %v6678
    %v7244 = vunpack.c.h.b16 %v6678
    %v7245 = vunpack.c.l.b16 %v6679
    %v7246 = vunpack.c.h.b16 %v6679
    %v7247 = vunpack.c.l.b16 %v6680
    %v7248 = vunpack.c.h.b16 %v6680
    %v7249 = vunpack.c.l.b16 %v6681
    %v7250 = vunpack.c.h.b16 %v6681
    %v7251 = vunpack.c.l.b16 %v6682
    %v7252 = vunpack.c.h.b16 %v6682
    %v7253 = vunpack.c.l.b16 %v6683
    %v7254 = vunpack.c.h.b16 %v6683
    %v7255 = vunpack.c.l.b16 %v6684
    %v7256 = vunpack.c.h.b16 %v6684
    %v7257 = vunpack.c.l.b16 %v6685
    %v7258 = vunpack.c.h.b16 %v6685
    %v7259 = vunpack.c.l.b16 %v6686
    %v7260 = vunpack.c.h.b16 %v6686
    %v7261 = vunpack.c.l.b16 %v6687
    %v7262 = vunpack.c.h.b16 %v6687
    %v7263 = vunpack.c.l.b16 %v6688
    %v7264 = vunpack.c.h.b16 %v6688
    %v7265 = vunpack.c.l.b16 %v6689
    %v7266 = vunpack.c.h.b16 %v6689
    %v7267 = vunpack.c.l.b16 %v6690
    %v7268 = vunpack.c.h.b16 %v6690
    %v7269 = vunpack.c.l.b16 %v6691
    %v7270 = vunpack.c.h.b16 %v6691
    %v7271 = vunpack.c.l.b16 %v6692
    %v7272 = vunpack.c.h.b16 %v6692
    %v7273 = vunpack.c.l.b16 %v6693
    %v7274 = vunpack.c.h.b16 %v6693
    %v7275 = vunpack.c.l.b16 %v6694
    %v7276 = vunpack.c.h.b16 %v6694
    %v7277 = vunpack.c.l.b16 %v6695
    %v7278 = vunpack.c.h.b16 %v6695
    %v7279 = vunpack.c.l.b16 %v6696
    %v7280 = vunpack.c.h.b16 %v6696
    %v7281 = vunpack.c.l.b16 %v6697
    %v7282 = vunpack.c.h.b16 %v6697
    %v7283 = vunpack.c.l.b16 %v6698
    %v7284 = vunpack.c.h.b16 %v6698
    %v7285 = vunpack.c.l.b16 %v6699
    %v7286 = vunpack.c.h.b16 %v6699
    %v7287 = vunpack.c.l.b16 %v6700
    %v7288 = vunpack.c.h.b16 %v6700
    %v7289 = vunpack.c.l.b16 %v6701
    %v7290 = vunpack.c.h.b16 %v6701
    %v7291 = vunpack.c.l.b16 %v6702
    %v7292 = vunpack.c.h.b16 %v6702
    %v7293 = vunpack.c.l.b16 %v6703
    %v7294 = vunpack.c.h.b16 %v6703
    %v7295 = vunpack.c.l.b16 %v6704
    %v7296 = vunpack.c.h.b16 %v6704
    %v7297 = vunpack.c.l.b16 %v6705
    %v7298 = vunpack.c.h.b16 %v6705
    %v7299 = vunpack.c.l.b16 %v6706
    %v7300 = vunpack.c.h.b16 %v6706
    %v7301 = vunpack.c.l.b16 %v6707
    %v7302 = vunpack.c.h.b16 %v6707
    %v7303 = vunpack.c.l.b16 %v6708
    %v7304 = vunpack.c.h.b16 %v6708
    %v7305 = vunpack.c.l.b16 %v6709
    %v7306 = vunpack.c.h.b16 %v6709
    %v7307 = vunpack.c.l.b16 %v6710
    %v7308 = vunpack.c.h.b16 %v6710
    %v7309 = vunpack.c.l.b16 %v6711
    %v7310 = vunpack.c.h.b16 %v6711
    %v7311 = vunpack.c.l.b16 %v6712
    %v7312 = vunpack.c.h.b16 %v6712
    %v7313 = vunpack.c.l.b16 %v6713
    %v7314 = vunpack.c.h.b16 %v6713
    %v7315 = vunpack.c.l.b16 %v6714
    %v7316 = vunpack.c.h.b16 %v6714
    %v7317 = vunpack.c.l.b16 %v6715
    %v7318 = vunpack.c.h.b16 %v6715
    %v7319 = vunpack.c.l.b16 %v6716
    %v7320 = vunpack.c.h.b16 %v6716
    %v7321 = vunpack.c.l.b16 %v6717
    %v7322 = vunpack.c.h.b16 %v6717
    %v7323 = vunpack.c.l.b16 %v6718
    %v7324 = vunpack.c.h.b16 %v6718
    %v7325 = vunpack.c.l.b16 %v6719
    %v7326 = vunpack.c.h.b16 %v6719
    %v7327 = vunpack.c.l.b16 %v6720
    %v7328 = vunpack.c.h.b16 %v6720
    %v7329 = vunpack.c.l.b16 %v6721
    %v7330 = vunpack.c.h.b16 %v6721
    %v7331 = vunpack.c.l.b16 %v6722
    %v7332 = vunpack.c.h.b16 %v6722
    %v7333 = vunpack.c.l.b16 %v6723
    %v7334 = vunpack.c.h.b16 %v6723
    %v7335 = vunpack.c.l.b16 %v6724
    %v7336 = vunpack.c.h.b16 %v6724
    %v7337 = vunpack.c.l.b16 %v6725
    %v7338 = vunpack.c.h.b16 %v6725
    %v7339 = vunpack.c.l.b16 %v6726
    %v7340 = vunpack.c.h.b16 %v6726
    %v7341 = vunpack.c.l.b16 %v6727
    %v7342 = vunpack.c.h.b16 %v6727
    %v7343 = vunpack.c.l.b16 %v6728
    %v7344 = vunpack.c.h.b16 %v6728
    %v7345 = vunpack.c.l.b16 %v6729
    %v7346 = vunpack.c.h.b16 %v6729
    %v7347 = vunpack.c.l.b16 %v6730
    %v7348 = vunpack.c.h.b16 %v6730
    %v7349 = vunpack.c.l.b16 %v6731
    %v7350 = vunpack.c.h.b16 %v6731
    %v7351 = vunpack.c.l.b16 %v6732
    %v7352 = vunpack.c.h.b16 %v6732
    %v7353 = vunpack.c.l.b16 %v6733
    %v7354 = vunpack.c.h.b16 %v6733
    %v7355 = vunpack.c.l.b16 %v6734
    %v7356 = vunpack.c.h.b16 %v6734
    %v7357 = vunpack.c.l.b16 %v6735
    %v7358 = vunpack.c.h.b16 %v6735
    %v7359 = vunpack.c.l.b16 %v6736
    %v7360 = vunpack.c.h.b16 %v6736
    %v7361 = vunpack.c.l.b16 %v6737
    %v7362 = vunpack.c.h.b16 %v6737
    %v7363 = vunpack.c.l.b16 %v6738
    %v7364 = vunpack.c.h.b16 %v6738
    %v7365 = vunpack.c.l.b16 %v6739
    %v7366 = vunpack.c.h.b16 %v6739
    %v7367 = vunpack.c.l.b16 %v6740
    %v7368 = vunpack.c.h.b16 %v6740
    %v7369 = vunpack.c.l.b16 %v6741
    %v7370 = vunpack.c.h.b16 %v6741
    %v7371 = vunpack.c.l.b16 %v6742
    %v7372 = vunpack.c.h.b16 %v6742
    %v7373 = vunpack.c.l.b16 %v6743
    %v7374 = vunpack.c.h.b16 %v6743
    %v7375 = vunpack.c.l.b16 %v6744
    %v7376 = vunpack.c.h.b16 %v6744
    %v7377 = vpack.c.b16 %v7125, %v7121
    %v7378 = vpack.c.b16 %v7126, %v7122
    %v7379 = vpack.c.b16 %v7127, %v7123
    %v7380 = vpack.c.b16 %v7128, %v7124
    %v7381 = vpack.c.b16 %v7133, %v7129
    %v7382 = vpack.c.b16 %v7134, %v7130
    %v7383 = vpack.c.b16 %v7135, %v7131
    %v7384 = vpack.c.b16 %v7136, %v7132
    %v7385 = vpack.c.b16 %v7141, %v7137
    %v7386 = vpack.c.b16 %v7142, %v7138
    %v7387 = vpack.c.b16 %v7143, %v7139
    %v7388 = vpack.c.b16 %v7144, %v7140
    %v7389 = vpack.c.b16 %v7149, %v7145
    %v7390 = vpack.c.b16 %v7150, %v7146
    %v7391 = vpack.c.b16 %v7151, %v7147
    %v7392 = vpack.c.b16 %v7152, %v7148
    %v7393 = vpack.c.b16 %v7157, %v7153
    %v7394 = vpack.c.b16 %v7158, %v7154
    %v7395 = vpack.c.b16 %v7159, %v7155
    %v7396 = vpack.c.b16 %v7160, %v7156
    %v7397 = vpack.c.b16 %v7165, %v7161
    %v7398 = vpack.c.b16 %v7166, %v7162
    %v7399 = vpack.c.b16 %v7167, %v7163
    %v7400 = vpack.c.b16 %v7168, %v7164
    %v7401 = vpack.c.b16 %v7173, %v7169
    %v7402 = vpack.c.b16 %v7174, %v7170
    %v7403 = vpack.c.b16 %v7175, %v7171
    %v7404 = vpack.c.b16 %v7176, %v7172
    %v7405 = vpack.c.b16 %v7181, %v7177
    %v7406 = vpack.c.b16 %v7182, %v7178
    %v7407 = vpack.c.b16 %v7183, %v7179
    %v7408 = vpack.c.b16 %v7184, %v7180
    %v7409 = vpack.c.b16 %v7189, %v7185
    %v7410 = vpack.c.b16 %v7190, %v7186
    %v7411 = vpack.c.b16 %v7191, %v7187
    %v7412 = vpack.c.b16 %v7192, %v7188
    %v7413 = vpack.c.b16 %v7197, %v7193
    %v7414 = vpack.c.b16 %v7198, %v7194
    %v7415 = vpack.c.b16 %v7199, %v7195
    %v7416 = vpack.c.b16 %v7200, %v7196
    %v7417 = vpack.c.b16 %v7205, %v7201
    %v7418 = vpack.c.b16 %v7206, %v7202
    %v7419 = vpack.c.b16 %v7207, %v7203
    %v7420 = vpack.c.b16 %v7208, %v7204
    %v7421 = vpack.c.b16 %v7213, %v7209
    %v7422 = vpack.c.b16 %v7214, %v7210
    %v7423 = vpack.c.b16 %v7215, %v7211
    %v7424 = vpack.c.b16 %v7216, %v7212
    %v7425 = vpack.c.b16 %v7221, %v7217
    %v7426 = vpack.c.b16 %v7222, %v7218
    %v7427 = vpack.c.b16 %v7223, %v7219
    %v7428 = vpack.c.b16 %v7224, %v7220
    %v7429 = vpack.c.b16 %v7229, %v7225
    %v7430 = vpack.c.b16 %v7230, %v7226
    %v7431 = vpack.c.b16 %v7231, %v7227
    %v7432 = vpack.c.b16 %v7232, %v7228
    %v7433 = vpack.c.b16 %v7237, %v7233
    %v7434 = vpack.c.b16 %v7238, %v7234
    %v7435 = vpack.c.b16 %v7239, %v7235
    %v7436 = vpack.c.b16 %v7240, %v7236
    %v7437 = vpack.c.b16 %v7245, %v7241
    %v7438 = vpack.c.b16 %v7246, %v7242
    %v7439 = vpack.c.b16 %v7247, %v7243
    %v7440 = vpack.c.b16 %v7248, %v7244
    %v7441 = vpack.c.b16 %v7253, %v7249
    %v7442 = vpack.c.b16 %v7254, %v7250
    %v7443 = vpack.c.b16 %v7255, %v7251
    %v7444 = vpack.c.b16 %v7256, %v7252
    %v7445 = vpack.c.b16 %v7261, %v7257
    %v7446 = vpack.c.b16 %v7262, %v7258
    %v7447 = vpack.c.b16 %v7263, %v7259
    %v7448 = vpack.c.b16 %v7264, %v7260
    %v7449 = vpack.c.b16 %v7269, %v7265
    %v7450 = vpack.c.b16 %v7270, %v7266
    %v7451 = vpack.c.b16 %v7271, %v7267
    %v7452 = vpack.c.b16 %v7272, %v7268
    %v7453 = vpack.c.b16 %v7277, %v7273
    %v7454 = vpack.c.b16 %v7278, %v7274
    %v7455 = vpack.c.b16 %v7279, %v7275
    %v7456 = vpack.c.b16 %v7280, %v7276
    %v7457 = vpack.c.b16 %v7285, %v7281
    %v7458 = vpack.c.b16 %v7286, %v7282
    %v7459 = vpack.c.b16 %v7287, %v7283
    %v7460 = vpack.c.b16 %v7288, %v7284
    %v7461 = vpack.c.b16 %v7293, %v7289
    %v7462 = vpack.c.b16 %v7294, %v7290
    %v7463 = vpack.c.b16 %v7295, %v7291
    %v7464 = vpack.c.b16 %v7296, %v7292
    %v7465 = vpack.c.b16 %v7301, %v7297
    %v7466 = vpack.c.b16 %v7302, %v7298
    %v7467 = vpack.c.b16 %v7303, %v7299
    %v7468 = vpack.c.b16 %v7304, %v7300
    %v7469 = vpack.c.b16 %v7309, %v7305
    %v7470 = vpack.c.b16 %v7310, %v7306
    %v7471 = vpack.c.b16 %v7311, %v7307
    %v7472 = vpack.c.b16 %v7312, %v7308
    %v7473 = vpack.c.b16 %v7317, %v7313
    %v7474 = vpack.c.b16 %v7318, %v7314
    %v7475 = vpack.c.b16 %v7319, %v7315
    %v7476 = vpack.c.b16 %v7320, %v7316
    %v7477 = vpack.c.b16 %v7325, %v7321
    %v7478 = vpack.c.b16 %v7326, %v7322
    %v7479 = vpack.c.b16 %v7327, %v7323
    %v7480 = vpack.c.b16 %v7328, %v7324
    %v7481 = vpack.c.b16 %v7333, %v7329
    %v7482 = vpack.c.b16 %v7334, %v7330
    %v7483 = vpack.c.b16 %v7335, %v7331
    %v7484 = vpack.c.b16 %v7336, %v7332
    %v7485 = vpack.c.b16 %v7341, %v7337
    %v7486 = vpack.c.b16 %v7342, %v7338
    %v7487 = vpack.c.b16 %v7343, %v7339
    %v7488 = vpack.c.b16 %v7344, %v7340
    %v7489 = vpack.c.b16 %v7349, %v7345
    %v7490 = vpack.c.b16 %v7350, %v7346
    %v7491 = vpack.c.b16 %v7351, %v7347
    %v7492 = vpack.c.b16 %v7352, %v7348
    %v7493 = vpack.c.b16 %v7357, %v7353
    %v7494 = vpack.c.b16 %v7358, %v7354
    %v7495 = vpack.c.b16 %v7359, %v7355
    %v7496 = vpack.c.b16 %v7360, %v7356
    %v7497 = vpack.c.b16 %v7365, %v7361
    %v7498 = vpack.c.b16 %v7366, %v7362
    %v7499 = vpack.c.b16 %v7367, %v7363
    %v7500 = vpack.c.b16 %v7368, %v7364
    %v7501 = vpack.c.b16 %v7373, %v7369
    %v7502 = vpack.c.b16 %v7374, %v7370
    %v7503 = vpack.c.b16 %v7375, %v7371
    %v7504 = vpack.c.b16 %v7376, %v7372
    %7633 = vmatpush.bf16.msra.mxu0 %v7405
    %7634 = vmatpush.bf16.msra.mxu0 %v7401
    %7635 = vmatpush.bf16.msra.mxu0 %v7397
    %7636 = vmatpush.bf16.msra.mxu0 %v7393
    %7637 = vmatpush.bf16.msra.mxu0 %v7389
    %7638 = vmatpush.bf16.msra.mxu0 %v7385
    %7639 = vmatpush.bf16.msra.mxu0 %v7381
    %7640 = vmatpush.bf16.msra.mxu0 %v7377
    %7641 = vmatmul.bf16.gmra.mxu0 %v6985
    %v7642 = vpop.f32.mrf.mxu0
    %v7643 = vadd.f32 0.0, %v7642
    %v7644 = vpop.f32.mrf.mxu0
    %v7645 = vadd.f32 0.0, %v7644
    %7646 = vdwg.mxu0
    %7647 = vmatpush.bf16.msra.mxu0 %v7437
    %7648 = vmatpush.bf16.msra.mxu0 %v7433
    %7649 = vmatpush.bf16.msra.mxu0 %v7429
    %7650 = vmatpush.bf16.msra.mxu0 %v7425
    %7651 = vmatpush.bf16.msra.mxu0 %v7421
    %7652 = vmatpush.bf16.msra.mxu0 %v7417
    %7653 = vmatpush.bf16.msra.mxu0 %v7413
    %7654 = vmatpush.bf16.msra.mxu0 %v7409
    %7655 = vmatmul.bf16.gmra.mxu0 %v6986
    %v7656 = vpop.f32.mrf.mxu0
    %v7657 = vadd.f32 %v7643, %v7656
    %v7658 = vpop.f32.mrf.mxu0
    %v7659 = vadd.f32 %v7645, %v7658
    %7660 = vdwg.mxu0
    %7661 = vmatpush.bf16.msra.mxu0 %v7469
    %7662 = vmatpush.bf16.msra.mxu0 %v7465
    %7663 = vmatpush.bf16.msra.mxu0 %v7461
    %7664 = vmatpush.bf16.msra.mxu0 %v7457
    %7665 = vmatpush.bf16.msra.mxu0 %v7453
    %7666 = vmatpush.bf16.msra.mxu0 %v7449
    %7667 = vmatpush.bf16.msra.mxu0 %v7445
    %7668 = vmatpush.bf16.msra.mxu0 %v7441
    %7669 = vmatmul.bf16.gmra.mxu0 %v6987
    %v7670 = vpop.f32.mrf.mxu0
    %v7671 = vadd.f32 %v7657, %v7670
    %v7672 = vpop.f32.mrf.mxu0
    %v7673 = vadd.f32 %v7659, %v7672
    %7674 = vdwg.mxu0
    %7675 = vmatpush.bf16.msra.mxu0 %v7501
    %7676 = vmatpush.bf16.msra.mxu0 %v7497
    %7677 = vmatpush.bf16.msra.mxu0 %v7493
    %7678 = vmatpush.bf16.msra.mxu0 %v7489
    %7679 = vmatpush.bf16.msra.mxu0 %v7485
    %7680 = vmatpush.bf16.msra.mxu0 %v7481
    %7681 = vmatpush.bf16.msra.mxu0 %v7477
    %7682 = vmatpush.bf16.msra.mxu0 %v7473
    %7683 = vmatmul.bf16.gmra.mxu0 %v6988
    %v7684 = vpop.f32.mrf.mxu0
    %v7685 = vadd.f32 %v7671, %v7684
    %v7686 = vpop.f32.mrf.mxu0
    %v7687 = vadd.f32 %v7673, %v7686
    %7688 = vdwg.mxu0
    %7689 = vmatpush.bf16.msra.mxu0 %v7406
    %7690 = vmatpush.bf16.msra.mxu0 %v7402
    %7691 = vmatpush.bf16.msra.mxu0 %v7398
    %7692 = vmatpush.bf16.msra.mxu0 %v7394
    %7693 = vmatpush.bf16.msra.mxu0 %v7390
    %7694 = vmatpush.bf16.msra.mxu0 %v7386
    %7695 = vmatpush.bf16.msra.mxu0 %v7382
    %7696 = vmatpush.bf16.msra.mxu0 %v7378
    %7697 = vmatmul.bf16.gmra.mxu0 %v6985
    %v7698 = vpop.f32.mrf.mxu0
    %v7699 = vadd.f32 0.0, %v7698
    %v7700 = vpop.f32.mrf.mxu0
    %v7701 = vadd.f32 0.0, %v7700
    %7702 = vdwg.mxu0
    %7703 = vmatpush.bf16.msra.mxu0 %v7438
    %7704 = vmatpush.bf16.msra.mxu0 %v7434
    %7705 = vmatpush.bf16.msra.mxu0 %v7430
    %7706 = vmatpush.bf16.msra.mxu0 %v7426
    %7707 = vmatpush.bf16.msra.mxu0 %v7422
    %7708 = vmatpush.bf16.msra.mxu0 %v7418
    %7709 = vmatpush.bf16.msra.mxu0 %v7414
    %7710 = vmatpush.bf16.msra.mxu0 %v7410
    %7711 = vmatmul.bf16.gmra.mxu0 %v6986
    %v7712 = vpop.f32.mrf.mxu0
    %v7713 = vadd.f32 %v7699, %v7712
    %v7714 = vpop.f32.mrf.mxu0
    %v7715 = vadd.f32 %v7701, %v7714
    %7716 = vdwg.mxu0
    %7717 = vmatpush.bf16.msra.mxu0 %v7470
    %7718 = vmatpush.bf16.msra.mxu0 %v7466
    %7719 = vmatpush.bf16.msra.mxu0 %v7462
    %7720 = vmatpush.bf16.msra.mxu0 %v7458
    %7721 = vmatpush.bf16.msra.mxu0 %v7454
    %7722 = vmatpush.bf16.msra.mxu0 %v7450
    %7723 = vmatpush.bf16.msra.mxu0 %v7446
    %7724 = vmatpush.bf16.msra.mxu0 %v7442
    %7725 = vmatmul.bf16.gmra.mxu0 %v6987
    %v7726 = vpop.f32.mrf.mxu0
    %v7727 = vadd.f32 %v7713, %v7726
    %v7728 = vpop.f32.mrf.mxu0
    %v7729 = vadd.f32 %v7715, %v7728
    %7730 = vdwg.mxu0
    %7731 = vmatpush.bf16.msra.mxu0 %v7502
    %7732 = vmatpush.bf16.msra.mxu0 %v7498
    %7733 = vmatpush.bf16.msra.mxu0 %v7494
    %7734 = vmatpush.bf16.msra.mxu0 %v7490
    %7735 = vmatpush.bf16.msra.mxu0 %v7486
    %7736 = vmatpush.bf16.msra.mxu0 %v7482
    %7737 = vmatpush.bf16.msra.mxu0 %v7478
    %7738 = vmatpush.bf16.msra.mxu0 %v7474
    %7739 = vmatmul.bf16.gmra.mxu0 %v6988
    %v7740 = vpop.f32.mrf.mxu0
    %v7741 = vadd.f32 %v7727, %v7740
    %v7742 = vpop.f32.mrf.mxu0
    %v7743 = vadd.f32 %v7729, %v7742
    %7744 = vdwg.mxu0
    %7745 = vmatpush.bf16.msra.mxu0 %v7407
    %7746 = vmatpush.bf16.msra.mxu0 %v7403
    %7747 = vmatpush.bf16.msra.mxu0 %v7399
    %7748 = vmatpush.bf16.msra.mxu0 %v7395
    %7749 = vmatpush.bf16.msra.mxu0 %v7391
    %7750 = vmatpush.bf16.msra.mxu0 %v7387
    %7751 = vmatpush.bf16.msra.mxu0 %v7383
    %7752 = vmatpush.bf16.msra.mxu0 %v7379
    %7753 = vmatmul.bf16.gmra.mxu0 %v6985
    %v7754 = vpop.f32.mrf.mxu0
    %v7755 = vadd.f32 0.0, %v7754
    %v7756 = vpop.f32.mrf.mxu0
    %v7757 = vadd.f32 0.0, %v7756
    %7758 = vdwg.mxu0
    %7759 = vmatpush.bf16.msra.mxu0 %v7439
    %7760 = vmatpush.bf16.msra.mxu0 %v7435
    %7761 = vmatpush.bf16.msra.mxu0 %v7431
    %7762 = vmatpush.bf16.msra.mxu0 %v7427
    %7763 = vmatpush.bf16.msra.mxu0 %v7423
    %7764 = vmatpush.bf16.msra.mxu0 %v7419
    %7765 = vmatpush.bf16.msra.mxu0 %v7415
    %7766 = vmatpush.bf16.msra.mxu0 %v7411
    %7767 = vmatmul.bf16.gmra.mxu0 %v6986
    %v7768 = vpop.f32.mrf.mxu0
    %v7769 = vadd.f32 %v7755, %v7768
    %v7770 = vpop.f32.mrf.mxu0
    %v7771 = vadd.f32 %v7757, %v7770
    %7772 = vdwg.mxu0
    %7773 = vmatpush.bf16.msra.mxu0 %v7471
    %7774 = vmatpush.bf16.msra.mxu0 %v7467
    %7775 = vmatpush.bf16.msra.mxu0 %v7463
    %7776 = vmatpush.bf16.msra.mxu0 %v7459
    %7777 = vmatpush.bf16.msra.mxu0 %v7455
    %7778 = vmatpush.bf16.msra.mxu0 %v7451
    %7779 = vmatpush.bf16.msra.mxu0 %v7447
    %7780 = vmatpush.bf16.msra.mxu0 %v7443
    %7781 = vmatmul.bf16.gmra.mxu0 %v6987
    %v7782 = vpop.f32.mrf.mxu0
    %v7783 = vadd.f32 %v7769, %v7782
    %v7784 = vpop.f32.mrf.mxu0
    %v7785 = vadd.f32 %v7771, %v7784
    %7786 = vdwg.mxu0
    %7787 = vmatpush.bf16.msra.mxu0 %v7503
    %7788 = vmatpush.bf16.msra.mxu0 %v7499
    %7789 = vmatpush.bf16.msra.mxu0 %v7495
    %7790 = vmatpush.bf16.msra.mxu0 %v7491
    %7791 = vmatpush.bf16.msra.mxu0 %v7487
    %7792 = vmatpush.bf16.msra.mxu0 %v7483
    %7793 = vmatpush.bf16.msra.mxu0 %v7479
    %7794 = vmatpush.bf16.msra.mxu0 %v7475
    %7795 = vmatmul.bf16.gmra.mxu0 %v6988
    %v7796 = vpop.f32.mrf.mxu0
    %v7797 = vadd.f32 %v7783, %v7796
    %v7798 = vpop.f32.mrf.mxu0
    %v7799 = vadd.f32 %v7785, %v7798
    %7800 = vdwg.mxu0
    %7801 = vmatpush.bf16.msra.mxu0 %v7408
    %7802 = vmatpush.bf16.msra.mxu0 %v7404
    %7803 = vmatpush.bf16.msra.mxu0 %v7400
    %7804 = vmatpush.bf16.msra.mxu0 %v7396
    %7805 = vmatpush.bf16.msra.mxu0 %v7392
    %7806 = vmatpush.bf16.msra.mxu0 %v7388
    %7807 = vmatpush.bf16.msra.mxu0 %v7384
    %7808 = vmatpush.bf16.msra.mxu0 %v7380
    %7809 = vmatmul.bf16.gmra.mxu0 %v6985
    %v7810 = vpop.f32.mrf.mxu0
    %v7811 = vadd.f32 0.0, %v7810
    %v7812 = vpop.f32.mrf.mxu0
    %v7813 = vadd.f32 0.0, %v7812
    %7814 = vdwg.mxu0
    %7815 = vmatpush.bf16.msra.mxu0 %v7440
    %7816 = vmatpush.bf16.msra.mxu0 %v7436
    %7817 = vmatpush.bf16.msra.mxu0 %v7432
    %7818 = vmatpush.bf16.msra.mxu0 %v7428
    %7819 = vmatpush.bf16.msra.mxu0 %v7424
    %7820 = vmatpush.bf16.msra.mxu0 %v7420
    %7821 = vmatpush.bf16.msra.mxu0 %v7416
    %7822 = vmatpush.bf16.msra.mxu0 %v7412
    %7823 = vmatmul.bf16.gmra.mxu0 %v6986
    %v7824 = vpop.f32.mrf.mxu0
    %v7825 = vadd.f32 %v7811, %v7824
    %v7826 = vpop.f32.mrf.mxu0
    %v7827 = vadd.f32 %v7813, %v7826
    %7828 = vdwg.mxu0
    %7829 = vmatpush.bf16.msra.mxu0 %v7472
    %7830 = vmatpush.bf16.msra.mxu0 %v7468
    %7831 = vmatpush.bf16.msra.mxu0 %v7464
    %7832 = vmatpush.bf16.msra.mxu0 %v7460
    %7833 = vmatpush.bf16.msra.mxu0 %v7456
    %7834 = vmatpush.bf16.msra.mxu0 %v7452
    %7835 = vmatpush.bf16.msra.mxu0 %v7448
    %7836 = vmatpush.bf16.msra.mxu0 %v7444
    %7837 = vmatmul.bf16.gmra.mxu0 %v6987
    %v7838 = vpop.f32.mrf.mxu0
    %v7839 = vadd.f32 %v7825, %v7838
    %v7840 = vpop.f32.mrf.mxu0
    %v7841 = vadd.f32 %v7827, %v7840
    %7842 = vdwg.mxu0
    %7843 = vmatpush.bf16.msra.mxu0 %v7504
    %7844 = vmatpush.bf16.msra.mxu0 %v7500
    %7845 = vmatpush.bf16.msra.mxu0 %v7496
    %7846 = vmatpush.bf16.msra.mxu0 %v7492
    %7847 = vmatpush.bf16.msra.mxu0 %v7488
    %7848 = vmatpush.bf16.msra.mxu0 %v7484
    %7849 = vmatpush.bf16.msra.mxu0 %v7480
    %7850 = vmatpush.bf16.msra.mxu0 %v7476
    %7851 = vmatmul.bf16.gmra.mxu0 %v6988
    %v7852 = vpop.f32.mrf.mxu0
    %v7853 = vadd.f32 %v7839, %v7852
    %v7854 = vpop.f32.mrf.mxu0
    %v7855 = vadd.f32 %v7841, %v7854
    %7856 = vdwg.mxu0
    %v7857 = vmax.f32 %v7685, %v7797
    %v7858 = vmax.f32 %v7741, %v7853
    %v7859 = vmax.f32 %v7687, %v7799
    %v7860 = vmax.f32 %v7743, %v7855
    %v7861 = vpack.c.bf16 %v7858, %v7857
    %v7862 = vpack.c.bf16 %v7860, %v7859
    %v7864 = vshrl.u32 %v7861, 16
    %v7866 = vrot.slane %v7864, 7
    %v7867 = vshll.u32 %v7861, 16
    %v7869 = vor.u32 %v7866, %v7867
    %v7870 = vrot.slane %v7866, 4
    %v7872 = vshrl.u32 %v7862, 16
    %v7874 = vrot.slane %v7872, 7
    %v7875 = vshll.u32 %v7862, 16
    %v7877 = vor.u32 %v7874, %v7875
    %v7878 = vrot.slane %v7874, 4
    %v7883 = vld [vmem:[#allocation4] sm:$0xff]
    %v7884 = vsel %vm3945, %v7869, %v7883
    %7885 = vst [vmem:[#allocation4] sm:$0xff] %v7884
    %v7886 = vld [vmem:[#allocation4 + $0xc] sm:$0x11]
    %v7887 = vsel %vm192, %v7870, %v7886
    %7888 = vst [vmem:[#allocation4 + $0xc] sm:$0x11] %v7887
    %v7889 = vld [vmem:[#allocation4 + $0x18] sm:$0xff]
    %v7890 = vsel %vm3945, %v7877, %v7889
    %7891 = vst [vmem:[#allocation4 + $0x18] sm:$0xff] %v7890
    %v7892 = vld [vmem:[#allocation4 + $0x24] sm:$0x11]
    %v7893 = vsel %vm192, %v7878, %v7892
    %7894 = vst [vmem:[#allocation4 + $0x24] sm:$0x11] %v7893
    %v7895 = vld [vmem:[%s8] sm:$0xf]
    %v7896 = vld [vmem:[#allocation4] sm:$0xff]
    %v7897 = vld [vmem:[#allocation4 + $0x8] sm:$0xf]
    %v7898 = vld [vmem:[#allocation4 + $0x18] sm:$0xff]
    %v7899 = vld [vmem:[#allocation4 + $0x20] sm:$0xf]
    %v7900 = vld [vmem:[#allocation14] sm:$0xff]
    %v7901 = vld [vmem:[#allocation14 + $0x8] sm:$0xff]
    %v7902 = vld [vmem:[#allocation14 + $0x10] sm:$0xff]
    %v7903 = vld [vmem:[#allocation14 + $0x18] sm:$0xff]
    %v7904 = vld [vmem:[#allocation14 + $0x20] sm:$0xff]
    %v7905 = vld [vmem:[#allocation14 + $0x28] sm:$0xff]
    %v7906 = vld [vmem:[#allocation14 + $0x30] sm:$0xff]
    %v7907 = vld [vmem:[#allocation14 + $0x38] sm:$0xff]
    %v7908 = vld [vmem:[#allocation14 + $0x40] sm:$0xff]
    %v7909 = vld [vmem:[#allocation14 + $0x48] sm:$0xff]
    %v7910 = vld [vmem:[#allocation14 + $0x50] sm:$0xff]
    %v7911 = vld [vmem:[#allocation14 + $0x58] sm:$0xff]
    %v7912 = vld [vmem:[#allocation14 + $0x60] sm:$0xff]
    %v7913 = vld [vmem:[#allocation14 + $0x68] sm:$0xff]
    %v7914 = vld [vmem:[#allocation14 + $0x70] sm:$0xff]
    %v7915 = vld [vmem:[#allocation14 + $0x78] sm:$0xff]
    %v7916 = vld [vmem:[#allocation14 + $0x80] sm:$0xff]
    %v7917 = vld [vmem:[#allocation14 + $0x88] sm:$0xff]
    %v7918 = vld [vmem:[#allocation14 + $0x90] sm:$0xff]
    %v7919 = vld [vmem:[#allocation14 + $0x98] sm:$0xff]
    %v7920 = vld [vmem:[#allocation14 + $0xa0] sm:$0xff]
    %v7921 = vld [vmem:[#allocation14 + $0xa8] sm:$0xff]
    %v7922 = vld [vmem:[#allocation14 + $0xb0] sm:$0xff]
    %v7923 = vld [vmem:[#allocation14 + $0xb8] sm:$0xff]
    %v7924 = vld [vmem:[#allocation14 + $0xc0] sm:$0xff]
    %v7925 = vld [vmem:[#allocation14 + $0xc8] sm:$0xff]
    %v7926 = vld [vmem:[#allocation14 + $0xd0] sm:$0xff]
    %v7927 = vld [vmem:[#allocation14 + $0xd8] sm:$0xff]
    %v7928 = vld [vmem:[#allocation14 + $0xe0] sm:$0xff]
    %v7929 = vld [vmem:[#allocation14 + $0xe8] sm:$0xff]
    %v7930 = vld [vmem:[#allocation14 + $0xf0] sm:$0xff]
    %v7931 = vld [vmem:[#allocation14 + $0xf8] sm:$0xff]
    %v7932 = vld [vmem:[#allocation14 + $0x100] sm:$0xff]
    %v7933 = vld [vmem:[#allocation14 + $0x108] sm:$0xff]
    %v7934 = vld [vmem:[#allocation14 + $0x110] sm:$0xff]
    %v7935 = vld [vmem:[#allocation14 + $0x118] sm:$0xff]
    %v7936 = vld [vmem:[#allocation14 + $0x120] sm:$0xff]
    %v7937 = vld [vmem:[#allocation14 + $0x128] sm:$0xff]
    %v7938 = vld [vmem:[#allocation14 + $0x130] sm:$0xff]
    %v7939 = vld [vmem:[#allocation14 + $0x138] sm:$0xff]
    %v7940 = vld [vmem:[#allocation14 + $0x140] sm:$0xff]
    %v7941 = vld [vmem:[#allocation14 + $0x148] sm:$0xff]
    %v7942 = vld [vmem:[#allocation14 + $0x150] sm:$0xff]
    %v7943 = vld [vmem:[#allocation14 + $0x158] sm:$0xff]
    %v7944 = vld [vmem:[#allocation14 + $0x160] sm:$0xff]
    %v7945 = vld [vmem:[#allocation14 + $0x168] sm:$0xff]
    %v7946 = vld [vmem:[#allocation14 + $0x170] sm:$0xff]
    %v7947 = vld [vmem:[#allocation14 + $0x178] sm:$0xff]
    %v7948 = vld [vmem:[#allocation14 + $0x180] sm:$0xff]
    %v7949 = vld [vmem:[#allocation14 + $0x188] sm:$0xff]
    %v7950 = vld [vmem:[#allocation14 + $0x190] sm:$0xff]
    %v7951 = vld [vmem:[#allocation14 + $0x198] sm:$0xff]
    %v7952 = vld [vmem:[#allocation14 + $0x1a0] sm:$0xff]
    %v7953 = vld [vmem:[#allocation14 + $0x1a8] sm:$0xff]
    %v7954 = vld [vmem:[#allocation14 + $0x1b0] sm:$0xff]
    %v7955 = vld [vmem:[#allocation14 + $0x1b8] sm:$0xff]
    %v7956 = vld [vmem:[#allocation14 + $0x1c0] sm:$0xff]
    %v7957 = vld [vmem:[#allocation14 + $0x1c8] sm:$0xff]
    %v7958 = vld [vmem:[#allocation14 + $0x1d0] sm:$0xff]
    %v7959 = vld [vmem:[#allocation14 + $0x1d8] sm:$0xff]
    %v7960 = vld [vmem:[#allocation14 + $0x1e0] sm:$0xff]
    %v7961 = vld [vmem:[#allocation14 + $0x1e8] sm:$0xff]
    %v7962 = vld [vmem:[#allocation14 + $0x1f0] sm:$0xff]
    %v7963 = vld [vmem:[#allocation14 + $0x1f8] sm:$0xff]
    %v7964 = vld [vmem:[#allocation14 + $0x200] sm:$0xff]
    %v7965 = vld [vmem:[#allocation14 + $0x208] sm:$0xff]
    %v7966 = vld [vmem:[#allocation14 + $0x210] sm:$0xff]
    %v7967 = vld [vmem:[#allocation14 + $0x218] sm:$0xff]
    %v7968 = vld [vmem:[#allocation14 + $0x220] sm:$0xff]
    %v7969 = vld [vmem:[#allocation14 + $0x228] sm:$0xff]
    %v7970 = vld [vmem:[#allocation14 + $0x230] sm:$0xff]
    %v7971 = vld [vmem:[#allocation14 + $0x238] sm:$0xff]
    %v7972 = vld [vmem:[#allocation14 + $0x240] sm:$0xff]
    %v7973 = vld [vmem:[#allocation14 + $0x248] sm:$0xff]
    %v7974 = vld [vmem:[#allocation14 + $0x250] sm:$0xff]
    %v7975 = vld [vmem:[#allocation14 + $0x258] sm:$0xff]
    %v7976 = vld [vmem:[#allocation14 + $0x260] sm:$0xff]
    %v7977 = vld [vmem:[#allocation14 + $0x268] sm:$0xff]
    %v7978 = vld [vmem:[#allocation14 + $0x270] sm:$0xff]
    %v7979 = vld [vmem:[#allocation14 + $0x278] sm:$0xff]
    %v7980 = vld [vmem:[#allocation4 + $0xc] sm:$0x11]
    %v7981 = vld [vmem:[#allocation4 + $0x14] sm:$0x1]
    %v7982 = vld [vmem:[#allocation4 + $0x24] sm:$0x11]
    %v7983 = vld [vmem:[#allocation4 + $0x2c] sm:$0x1]
    %v7985 = vshrl.u32 %v7896, 16
    %v7987 = vrot.slane %v7985, 4
    %v7988 = vshll.u32 %v7896, 16
    %v7990 = vrot.slane %v7988, 5
    %v7991 = vor.u32 %v7987, %v7990
    %v7992 = vrot.slane %v7991, 4
    %v7994 = vshll.u32 %v7980, 16
    %v7996 = vrot.slane %v7994, 5
    %v7997 = vsel %vm417, %v7992, %v7996
    %v7999 = vshrl.u32 %v7897, 16
    %v8001 = vrot.slane %v7999, 4
    %v8002 = vshll.u32 %v7897, 16
    %v8004 = vrot.slane %v8002, 5
    %v8005 = vor.u32 %v8001, %v8004
    %v8006 = vrot.slane %v8005, 4
    %v8008 = vshll.u32 %v7981, 16
    %v8010 = vrot.slane %v8008, 5
    %v8011 = vsel %vm417, %v8006, %v8010
    %v8013 = vshrl.u32 %v7898, 16
    %v8015 = vrot.slane %v8013, 4
    %v8016 = vshll.u32 %v7898, 16
    %v8018 = vrot.slane %v8016, 5
    %v8019 = vor.u32 %v8015, %v8018
    %v8020 = vrot.slane %v8019, 4
    %v8022 = vshll.u32 %v7982, 16
    %v8024 = vrot.slane %v8022, 5
    %v8025 = vsel %vm417, %v8020, %v8024
    %v8027 = vshrl.u32 %v7899, 16
    %v8029 = vrot.slane %v8027, 4
    %v8030 = vshll.u32 %v7899, 16
    %v8032 = vrot.slane %v8030, 5
    %v8033 = vor.u32 %v8029, %v8032
    %v8034 = vrot.slane %v8033, 4
    %v8036 = vshll.u32 %v7983, 16
    %v8038 = vrot.slane %v8036, 5
    %v8039 = vsel %vm417, %v8034, %v8038
    %s8040 = scalar_lea.vmem [#allocation14], 640
    %v8041 = vld [vmem:[%s8040] sm:$0xff]
    %v8042 = vld [vmem:[%s8040 + $0x8] sm:$0xff]
    %v8043 = vld [vmem:[%s8040 + $0x10] sm:$0xff]
    %v8044 = vld [vmem:[%s8040 + $0x18] sm:$0xff]
    %v8045 = vld [vmem:[%s8040 + $0x20] sm:$0xff]
    %v8046 = vld [vmem:[%s8040 + $0x28] sm:$0xff]
    %v8047 = vld [vmem:[%s8040 + $0x30] sm:$0xff]
    %v8048 = vld [vmem:[%s8040 + $0x38] sm:$0xff]
    %v8049 = vld [vmem:[%s8040 + $0x40] sm:$0xff]
    %v8050 = vld [vmem:[%s8040 + $0x48] sm:$0xff]
    %v8051 = vld [vmem:[%s8040 + $0x50] sm:$0xff]
    %v8052 = vld [vmem:[%s8040 + $0x58] sm:$0xff]
    %v8053 = vld [vmem:[%s8040 + $0x60] sm:$0xff]
    %v8054 = vld [vmem:[%s8040 + $0x68] sm:$0xff]
    %v8055 = vld [vmem:[%s8040 + $0x70] sm:$0xff]
    %v8056 = vld [vmem:[%s8040 + $0x78] sm:$0xff]
    %v8057 = vld [vmem:[%s8040 + $0x80] sm:$0xff]
    %v8058 = vld [vmem:[%s8040 + $0x88] sm:$0xff]
    %v8059 = vld [vmem:[%s8040 + $0x90] sm:$0xff]
    %v8060 = vld [vmem:[%s8040 + $0x98] sm:$0xff]
    %v8061 = vld [vmem:[%s8040 + $0xa0] sm:$0xff]
    %v8062 = vld [vmem:[%s8040 + $0xa8] sm:$0xff]
    %v8063 = vld [vmem:[%s8040 + $0xb0] sm:$0xff]
    %v8064 = vld [vmem:[%s8040 + $0xb8] sm:$0xff]
    %v8065 = vld [vmem:[%s8040 + $0xc0] sm:$0xff]
    %v8066 = vld [vmem:[%s8040 + $0xc8] sm:$0xff]
    %v8067 = vld [vmem:[%s8040 + $0xd0] sm:$0xff]
    %v8068 = vld [vmem:[%s8040 + $0xd8] sm:$0xff]
    %v8069 = vld [vmem:[%s8040 + $0xe0] sm:$0xff]
    %v8070 = vld [vmem:[%s8040 + $0xe8] sm:$0xff]
    %v8071 = vld [vmem:[%s8040 + $0xf0] sm:$0xff]
    %v8072 = vld [vmem:[%s8040 + $0xf8] sm:$0xff]
    %v8073 = vld [vmem:[%s8040 + $0x100] sm:$0xff]
    %v8074 = vld [vmem:[%s8040 + $0x108] sm:$0xff]
    %v8075 = vld [vmem:[%s8040 + $0x110] sm:$0xff]
    %v8076 = vld [vmem:[%s8040 + $0x118] sm:$0xff]
    %v8077 = vld [vmem:[%s8040 + $0x120] sm:$0xff]
    %v8078 = vld [vmem:[%s8040 + $0x128] sm:$0xff]
    %v8079 = vld [vmem:[%s8040 + $0x130] sm:$0xff]
    %v8080 = vld [vmem:[%s8040 + $0x138] sm:$0xff]
    %v8081 = vld [vmem:[%s8040 + $0x140] sm:$0xff]
    %v8082 = vld [vmem:[%s8040 + $0x148] sm:$0xff]
    %v8083 = vld [vmem:[%s8040 + $0x150] sm:$0xff]
    %v8084 = vld [vmem:[%s8040 + $0x158] sm:$0xff]
    %v8085 = vld [vmem:[%s8040 + $0x160] sm:$0xff]
    %v8086 = vld [vmem:[%s8040 + $0x168] sm:$0xff]
    %v8087 = vld [vmem:[%s8040 + $0x170] sm:$0xff]
    %v8088 = vld [vmem:[%s8040 + $0x178] sm:$0xff]
    %v8089 = vld [vmem:[%s8040 + $0x180] sm:$0xff]
    %v8090 = vld [vmem:[%s8040 + $0x188] sm:$0xff]
    %v8091 = vld [vmem:[%s8040 + $0x190] sm:$0xff]
    %v8092 = vld [vmem:[%s8040 + $0x198] sm:$0xff]
    %v8093 = vld [vmem:[%s8040 + $0x1a0] sm:$0xff]
    %v8094 = vld [vmem:[%s8040 + $0x1a8] sm:$0xff]
    %v8095 = vld [vmem:[%s8040 + $0x1b0] sm:$0xff]
    %v8096 = vld [vmem:[%s8040 + $0x1b8] sm:$0xff]
    %v8097 = vld [vmem:[%s8040 + $0x1c0] sm:$0xff]
    %v8098 = vld [vmem:[%s8040 + $0x1c8] sm:$0xff]
    %v8099 = vld [vmem:[%s8040 + $0x1d0] sm:$0xff]
    %v8100 = vld [vmem:[%s8040 + $0x1d8] sm:$0xff]
    %v8101 = vld [vmem:[%s8040 + $0x1e0] sm:$0xff]
    %v8102 = vld [vmem:[%s8040 + $0x1e8] sm:$0xff]
    %v8103 = vld [vmem:[%s8040 + $0x1f0] sm:$0xff]
    %v8104 = vld [vmem:[%s8040 + $0x1f8] sm:$0xff]
    %v8105 = vld [vmem:[%s8040 + $0x200] sm:$0xff]
    %v8106 = vld [vmem:[%s8040 + $0x208] sm:$0xff]
    %v8107 = vld [vmem:[%s8040 + $0x210] sm:$0xff]
    %v8108 = vld [vmem:[%s8040 + $0x218] sm:$0xff]
    %v8109 = vld [vmem:[%s8040 + $0x220] sm:$0xff]
    %v8110 = vld [vmem:[%s8040 + $0x228] sm:$0xff]
    %v8111 = vld [vmem:[%s8040 + $0x230] sm:$0xff]
    %v8112 = vld [vmem:[%s8040 + $0x238] sm:$0xff]
    %v8113 = vld [vmem:[%s8040 + $0x240] sm:$0xff]
    %v8114 = vld [vmem:[%s8040 + $0x248] sm:$0xff]
    %v8115 = vld [vmem:[%s8040 + $0x250] sm:$0xff]
    %v8116 = vld [vmem:[%s8040 + $0x258] sm:$0xff]
    %v8117 = vld [vmem:[%s8040 + $0x260] sm:$0xff]
    %v8118 = vld [vmem:[%s8040 + $0x268] sm:$0xff]
    %v8119 = vld [vmem:[%s8040 + $0x270] sm:$0xff]
    %v8120 = vld [vmem:[%s8040 + $0x278] sm:$0xff]
    %v8121 = vunpack.c.l.b16 %v7997
    %v8122 = vunpack.c.h.b16 %v7997
    %v8123 = vunpack.c.l.b16 %v8011
    %v8124 = vunpack.c.l.b16 %v8025
    %v8125 = vunpack.c.h.b16 %v8025
    %v8126 = vunpack.c.l.b16 %v8039
    %v8127 = vpack.c.b16 %v8124, %v8121
    %v8128 = vpack.c.b16 %v8125, %v8122
    %v8129 = vpack.c.b16 %v8126, %v8123
    %v8212 = vunpack.c.l.b16 %v8041
    %v8213 = vunpack.c.h.b16 %v8041
    %v8214 = vunpack.c.l.b16 %v8042
    %v8215 = vunpack.c.h.b16 %v8042
    %v8216 = vunpack.c.l.b16 %v8043
    %v8217 = vunpack.c.h.b16 %v8043
    %v8218 = vunpack.c.l.b16 %v8044
    %v8219 = vunpack.c.h.b16 %v8044
    %v8220 = vunpack.c.l.b16 %v8045
    %v8221 = vunpack.c.h.b16 %v8045
    %v8222 = vunpack.c.l.b16 %v8046
    %v8223 = vunpack.c.h.b16 %v8046
    %v8224 = vunpack.c.l.b16 %v8047
    %v8225 = vunpack.c.h.b16 %v8047
    %v8226 = vunpack.c.l.b16 %v8048
    %v8227 = vunpack.c.h.b16 %v8048
    %v8228 = vunpack.c.l.b16 %v8049
    %v8229 = vunpack.c.h.b16 %v8049
    %v8230 = vunpack.c.l.b16 %v8050
    %v8231 = vunpack.c.h.b16 %v8050
    %v8232 = vunpack.c.l.b16 %v8051
    %v8233 = vunpack.c.h.b16 %v8051
    %v8234 = vunpack.c.l.b16 %v8052
    %v8235 = vunpack.c.h.b16 %v8052
    %v8236 = vunpack.c.l.b16 %v8053
    %v8237 = vunpack.c.h.b16 %v8053
    %v8238 = vunpack.c.l.b16 %v8054
    %v8239 = vunpack.c.h.b16 %v8054
    %v8240 = vunpack.c.l.b16 %v8055
    %v8241 = vunpack.c.h.b16 %v8055
    %v8242 = vunpack.c.l.b16 %v8056
    %v8243 = vunpack.c.h.b16 %v8056
    %v8244 = vunpack.c.l.b16 %v8057
    %v8245 = vunpack.c.h.b16 %v8057
    %v8246 = vunpack.c.l.b16 %v8058
    %v8247 = vunpack.c.h.b16 %v8058
    %v8248 = vunpack.c.l.b16 %v8059
    %v8249 = vunpack.c.h.b16 %v8059
    %v8250 = vunpack.c.l.b16 %v8060
    %v8251 = vunpack.c.h.b16 %v8060
    %v8252 = vunpack.c.l.b16 %v8061
    %v8253 = vunpack.c.h.b16 %v8061
    %v8254 = vunpack.c.l.b16 %v8062
    %v8255 = vunpack.c.h.b16 %v8062
    %v8256 = vunpack.c.l.b16 %v8063
    %v8257 = vunpack.c.h.b16 %v8063
    %v8258 = vunpack.c.l.b16 %v8064
    %v8259 = vunpack.c.h.b16 %v8064
    %v8260 = vunpack.c.l.b16 %v8065
    %v8261 = vunpack.c.h.b16 %v8065
    %v8262 = vunpack.c.l.b16 %v8066
    %v8263 = vunpack.c.h.b16 %v8066
    %v8264 = vunpack.c.l.b16 %v8067
    %v8265 = vunpack.c.h.b16 %v8067
    %v8266 = vunpack.c.l.b16 %v8068
    %v8267 = vunpack.c.h.b16 %v8068
    %v8268 = vunpack.c.l.b16 %v8069
    %v8269 = vunpack.c.h.b16 %v8069
    %v8270 = vunpack.c.l.b16 %v8070
    %v8271 = vunpack.c.h.b16 %v8070
    %v8272 = vunpack.c.l.b16 %v8071
    %v8273 = vunpack.c.h.b16 %v8071
    %v8274 = vunpack.c.l.b16 %v8072
    %v8275 = vunpack.c.h.b16 %v8072
    %v8276 = vunpack.c.l.b16 %v8073
    %v8277 = vunpack.c.h.b16 %v8073
    %v8278 = vunpack.c.l.b16 %v8074
    %v8279 = vunpack.c.h.b16 %v8074
    %v8280 = vunpack.c.l.b16 %v8075
    %v8281 = vunpack.c.h.b16 %v8075
    %v8282 = vunpack.c.l.b16 %v8076
    %v8283 = vunpack.c.h.b16 %v8076
    %v8284 = vunpack.c.l.b16 %v8077
    %v8285 = vunpack.c.h.b16 %v8077
    %v8286 = vunpack.c.l.b16 %v8078
    %v8287 = vunpack.c.h.b16 %v8078
    %v8288 = vunpack.c.l.b16 %v8079
    %v8289 = vunpack.c.h.b16 %v8079
    %v8290 = vunpack.c.l.b16 %v8080
    %v8291 = vunpack.c.h.b16 %v8080
    %v8292 = vunpack.c.l.b16 %v8081
    %v8293 = vunpack.c.h.b16 %v8081
    %v8294 = vunpack.c.l.b16 %v8082
    %v8295 = vunpack.c.h.b16 %v8082
    %v8296 = vunpack.c.l.b16 %v8083
    %v8297 = vunpack.c.h.b16 %v8083
    %v8298 = vunpack.c.l.b16 %v8084
    %v8299 = vunpack.c.h.b16 %v8084
    %v8300 = vunpack.c.l.b16 %v8085
    %v8301 = vunpack.c.h.b16 %v8085
    %v8302 = vunpack.c.l.b16 %v8086
    %v8303 = vunpack.c.h.b16 %v8086
    %v8304 = vunpack.c.l.b16 %v8087
    %v8305 = vunpack.c.h.b16 %v8087
    %v8306 = vunpack.c.l.b16 %v8088
    %v8307 = vunpack.c.h.b16 %v8088
    %v8308 = vunpack.c.l.b16 %v8089
    %v8309 = vunpack.c.h.b16 %v8089
    %v8310 = vunpack.c.l.b16 %v8090
    %v8311 = vunpack.c.h.b16 %v8090
    %v8312 = vunpack.c.l.b16 %v8091
    %v8313 = vunpack.c.h.b16 %v8091
    %v8314 = vunpack.c.l.b16 %v8092
    %v8315 = vunpack.c.h.b16 %v8092
    %v8316 = vunpack.c.l.b16 %v8093
    %v8317 = vunpack.c.h.b16 %v8093
    %v8318 = vunpack.c.l.b16 %v8094
    %v8319 = vunpack.c.h.b16 %v8094
    %v8320 = vunpack.c.l.b16 %v8095
    %v8321 = vunpack.c.h.b16 %v8095
    %v8322 = vunpack.c.l.b16 %v8096
    %v8323 = vunpack.c.h.b16 %v8096
    %v8324 = vunpack.c.l.b16 %v8097
    %v8325 = vunpack.c.h.b16 %v8097
    %v8326 = vunpack.c.l.b16 %v8098
    %v8327 = vunpack.c.h.b16 %v8098
    %v8328 = vunpack.c.l.b16 %v8099
    %v8329 = vunpack.c.h.b16 %v8099
    %v8330 = vunpack.c.l.b16 %v8100
    %v8331 = vunpack.c.h.b16 %v8100
    %v8332 = vunpack.c.l.b16 %v8101
    %v8333 = vunpack.c.h.b16 %v8101
    %v8334 = vunpack.c.l.b16 %v8102
    %v8335 = vunpack.c.h.b16 %v8102
    %v8336 = vunpack.c.l.b16 %v8103
    %v8337 = vunpack.c.h.b16 %v8103
    %v8338 = vunpack.c.l.b16 %v8104
    %v8339 = vunpack.c.h.b16 %v8104
    %v8340 = vunpack.c.l.b16 %v8105
    %v8341 = vunpack.c.h.b16 %v8105
    %v8342 = vunpack.c.l.b16 %v8106
    %v8343 = vunpack.c.h.b16 %v8106
    %v8344 = vunpack.c.l.b16 %v8107
    %v8345 = vunpack.c.h.b16 %v8107
    %v8346 = vunpack.c.l.b16 %v8108
    %v8347 = vunpack.c.h.b16 %v8108
    %v8348 = vunpack.c.l.b16 %v8109
    %v8349 = vunpack.c.h.b16 %v8109
    %v8350 = vunpack.c.l.b16 %v8110
    %v8351 = vunpack.c.h.b16 %v8110
    %v8352 = vunpack.c.l.b16 %v8111
    %v8353 = vunpack.c.h.b16 %v8111
    %v8354 = vunpack.c.l.b16 %v8112
    %v8355 = vunpack.c.h.b16 %v8112
    %v8356 = vunpack.c.l.b16 %v8113
    %v8357 = vunpack.c.h.b16 %v8113
    %v8358 = vunpack.c.l.b16 %v8114
    %v8359 = vunpack.c.h.b16 %v8114
    %v8360 = vunpack.c.l.b16 %v8115
    %v8361 = vunpack.c.h.b16 %v8115
    %v8362 = vunpack.c.l.b16 %v8116
    %v8363 = vunpack.c.h.b16 %v8116
    %v8364 = vunpack.c.l.b16 %v8117
    %v8365 = vunpack.c.h.b16 %v8117
    %v8366 = vunpack.c.l.b16 %v8118
    %v8367 = vunpack.c.h.b16 %v8118
    %v8368 = vunpack.c.l.b16 %v8119
    %v8369 = vunpack.c.h.b16 %v8119
    %v8370 = vunpack.c.l.b16 %v8120
    %v8371 = vunpack.c.h.b16 %v8120
    %v8372 = vpack.c.b16 %v8216, %v8212
    %v8373 = vpack.c.b16 %v8217, %v8213
    %v8374 = vpack.c.b16 %v8218, %v8214
    %v8375 = vpack.c.b16 %v8219, %v8215
    %v8376 = vpack.c.b16 %v8224, %v8220
    %v8377 = vpack.c.b16 %v8225, %v8221
    %v8378 = vpack.c.b16 %v8226, %v8222
    %v8379 = vpack.c.b16 %v8227, %v8223
    %v8380 = vpack.c.b16 %v8232, %v8228
    %v8381 = vpack.c.b16 %v8233, %v8229
    %v8382 = vpack.c.b16 %v8234, %v8230
    %v8383 = vpack.c.b16 %v8235, %v8231
    %v8384 = vpack.c.b16 %v8240, %v8236
    %v8385 = vpack.c.b16 %v8241, %v8237
    %v8386 = vpack.c.b16 %v8242, %v8238
    %v8387 = vpack.c.b16 %v8243, %v8239
    %v8388 = vpack.c.b16 %v8248, %v8244
    %v8389 = vpack.c.b16 %v8249, %v8245
    %v8390 = vpack.c.b16 %v8250, %v8246
    %v8391 = vpack.c.b16 %v8251, %v8247
    %v8392 = vpack.c.b16 %v8256, %v8252
    %v8393 = vpack.c.b16 %v8257, %v8253
    %v8394 = vpack.c.b16 %v8258, %v8254
    %v8395 = vpack.c.b16 %v8259, %v8255
    %v8396 = vpack.c.b16 %v8264, %v8260
    %v8397 = vpack.c.b16 %v8265, %v8261
    %v8398 = vpack.c.b16 %v8266, %v8262
    %v8399 = vpack.c.b16 %v8267, %v8263
    %v8400 = vpack.c.b16 %v8272, %v8268
    %v8401 = vpack.c.b16 %v8273, %v8269
    %v8402 = vpack.c.b16 %v8274, %v8270
    %v8403 = vpack.c.b16 %v8275, %v8271
    %v8404 = vpack.c.b16 %v8280, %v8276
    %v8405 = vpack.c.b16 %v8281, %v8277
    %v8406 = vpack.c.b16 %v8282, %v8278
    %v8407 = vpack.c.b16 %v8283, %v8279
    %v8408 = vpack.c.b16 %v8288, %v8284
    %v8409 = vpack.c.b16 %v8289, %v8285
    %v8410 = vpack.c.b16 %v8290, %v8286
    %v8411 = vpack.c.b16 %v8291, %v8287
    %v8412 = vpack.c.b16 %v8296, %v8292
    %v8413 = vpack.c.b16 %v8297, %v8293
    %v8414 = vpack.c.b16 %v8298, %v8294
    %v8415 = vpack.c.b16 %v8299, %v8295
    %v8416 = vpack.c.b16 %v8304, %v8300
    %v8417 = vpack.c.b16 %v8305, %v8301
    %v8418 = vpack.c.b16 %v8306, %v8302
    %v8419 = vpack.c.b16 %v8307, %v8303
    %v8420 = vpack.c.b16 %v8312, %v8308
    %v8421 = vpack.c.b16 %v8313, %v8309
    %v8422 = vpack.c.b16 %v8314, %v8310
    %v8423 = vpack.c.b16 %v8315, %v8311
    %v8424 = vpack.c.b16 %v8320, %v8316
    %v8425 = vpack.c.b16 %v8321, %v8317
    %v8426 = vpack.c.b16 %v8322, %v8318
    %v8427 = vpack.c.b16 %v8323, %v8319
    %v8428 = vpack.c.b16 %v8328, %v8324
    %v8429 = vpack.c.b16 %v8329, %v8325
    %v8430 = vpack.c.b16 %v8330, %v8326
    %v8431 = vpack.c.b16 %v8331, %v8327
    %v8432 = vpack.c.b16 %v8336, %v8332
    %v8433 = vpack.c.b16 %v8337, %v8333
    %v8434 = vpack.c.b16 %v8338, %v8334
    %v8435 = vpack.c.b16 %v8339, %v8335
    %v8436 = vpack.c.b16 %v8344, %v8340
    %v8437 = vpack.c.b16 %v8345, %v8341
    %v8438 = vpack.c.b16 %v8346, %v8342
    %v8439 = vpack.c.b16 %v8347, %v8343
    %v8440 = vpack.c.b16 %v8352, %v8348
    %v8441 = vpack.c.b16 %v8353, %v8349
    %v8442 = vpack.c.b16 %v8354, %v8350
    %v8443 = vpack.c.b16 %v8355, %v8351
    %v8444 = vpack.c.b16 %v8360, %v8356
    %v8445 = vpack.c.b16 %v8361, %v8357
    %v8446 = vpack.c.b16 %v8362, %v8358
    %v8447 = vpack.c.b16 %v8363, %v8359
    %v8448 = vpack.c.b16 %v8368, %v8364
    %v8449 = vpack.c.b16 %v8369, %v8365
    %v8450 = vpack.c.b16 %v8370, %v8366
    %v8451 = vpack.c.b16 %v8371, %v8367
    %vm8532 = vcmask 523264
    %v8534 = vsel %vm8532, %v8129, 0
    %8536 = vmatpush.bf16.msra.mxu0 %v8400
    %8537 = vmatpush.bf16.msra.mxu0 %v8396
    %8538 = vmatpush.bf16.msra.mxu0 %v8392
    %8539 = vmatpush.bf16.msra.mxu0 %v8388
    %8540 = vmatpush.bf16.msra.mxu0 %v8384
    %8541 = vmatpush.bf16.msra.mxu0 %v8380
    %8542 = vmatpush.bf16.msra.mxu0 %v8376
    %8543 = vmatpush.bf16.msra.mxu0 %v8372
    %8544 = vmatmul.bf16.gmra.mxu0 %v8127
    %v8545 = vpop.f32.mrf.mxu0
    %v8546 = vadd.f32 0.0, %v8545
    %v8547 = vpop.f32.mrf.mxu0
    %v8548 = vadd.f32 0.0, %v8547
    %8549 = vdwg.mxu0
    %8550 = vmatpush.bf16.msra.mxu0 %v8432
    %8551 = vmatpush.bf16.msra.mxu0 %v8428
    %8552 = vmatpush.bf16.msra.mxu0 %v8424
    %8553 = vmatpush.bf16.msra.mxu0 %v8420
    %8554 = vmatpush.bf16.msra.mxu0 %v8416
    %8555 = vmatpush.bf16.msra.mxu0 %v8412
    %8556 = vmatpush.bf16.msra.mxu0 %v8408
    %8557 = vmatpush.bf16.msra.mxu0 %v8404
    %8558 = vmatmul.bf16.gmra.mxu0 %v8128
    %v8559 = vpop.f32.mrf.mxu0
    %v8560 = vadd.f32 %v8546, %v8559
    %v8561 = vpop.f32.mrf.mxu0
    %v8562 = vadd.f32 %v8548, %v8561
    %8563 = vdwg.mxu0
    %8564 = vmatpush.bf16.msra.mxu0 0
    %8565 = vmatpush.bf16.msra.mxu0 0
    %8566 = vmatpush.bf16.msra.mxu0 0
    %8567 = vmatpush.bf16.msra.mxu0 0
    %8568 = vmatpush.bf16.msra.mxu0 %v8448
    %8569 = vmatpush.bf16.msra.mxu0 %v8444
    %8570 = vmatpush.bf16.msra.mxu0 %v8440
    %8571 = vmatpush.bf16.msra.mxu0 %v8436
    %8572 = vmatmul.bf16.gmra.mxu0 %v8534
    %v8573 = vpop.f32.mrf.mxu0
    %v8574 = vadd.f32 %v8560, %v8573
    %v8575 = vpop.f32.mrf.mxu0
    %v8576 = vadd.f32 %v8562, %v8575
    %8577 = vdwg.mxu0
    %8578 = vmatpush.bf16.msra.mxu0 %v8401
    %8579 = vmatpush.bf16.msra.mxu0 %v8397
    %8580 = vmatpush.bf16.msra.mxu0 %v8393
    %8581 = vmatpush.bf16.msra.mxu0 %v8389
    %8582 = vmatpush.bf16.msra.mxu0 %v8385
    %8583 = vmatpush.bf16.msra.mxu0 %v8381
    %8584 = vmatpush.bf16.msra.mxu0 %v8377
    %8585 = vmatpush.bf16.msra.mxu0 %v8373
    %8586 = vmatmul.bf16.gmra.mxu0 %v8127
    %v8587 = vpop.f32.mrf.mxu0
    %v8588 = vadd.f32 0.0, %v8587
    %v8589 = vpop.f32.mrf.mxu0
    %v8590 = vadd.f32 0.0, %v8589
    %8591 = vdwg.mxu0
    %8592 = vmatpush.bf16.msra.mxu0 %v8433
    %8593 = vmatpush.bf16.msra.mxu0 %v8429
    %8594 = vmatpush.bf16.msra.mxu0 %v8425
    %8595 = vmatpush.bf16.msra.mxu0 %v8421
    %8596 = vmatpush.bf16.msra.mxu0 %v8417
    %8597 = vmatpush.bf16.msra.mxu0 %v8413
    %8598 = vmatpush.bf16.msra.mxu0 %v8409
    %8599 = vmatpush.bf16.msra.mxu0 %v8405
    %8600 = vmatmul.bf16.gmra.mxu0 %v8128
    %v8601 = vpop.f32.mrf.mxu0
    %v8602 = vadd.f32 %v8588, %v8601
    %v8603 = vpop.f32.mrf.mxu0
    %v8604 = vadd.f32 %v8590, %v8603
    %8605 = vdwg.mxu0
    %8606 = vmatpush.bf16.msra.mxu0 0
    %8607 = vmatpush.bf16.msra.mxu0 0
    %8608 = vmatpush.bf16.msra.mxu0 0
    %8609 = vmatpush.bf16.msra.mxu0 0
    %8610 = vmatpush.bf16.msra.mxu0 %v8449
    %8611 = vmatpush.bf16.msra.mxu0 %v8445
    %8612 = vmatpush.bf16.msra.mxu0 %v8441
    %8613 = vmatpush.bf16.msra.mxu0 %v8437
    %8614 = vmatmul.bf16.gmra.mxu0 %v8534
    %v8615 = vpop.f32.mrf.mxu0
    %v8616 = vadd.f32 %v8602, %v8615
    %v8617 = vpop.f32.mrf.mxu0
    %v8618 = vadd.f32 %v8604, %v8617
    %8619 = vdwg.mxu0
    %8620 = vmatpush.bf16.msra.mxu0 %v8402
    %8621 = vmatpush.bf16.msra.mxu0 %v8398
    %8622 = vmatpush.bf16.msra.mxu0 %v8394
    %8623 = vmatpush.bf16.msra.mxu0 %v8390
    %8624 = vmatpush.bf16.msra.mxu0 %v8386
    %8625 = vmatpush.bf16.msra.mxu0 %v8382
    %8626 = vmatpush.bf16.msra.mxu0 %v8378
    %8627 = vmatpush.bf16.msra.mxu0 %v8374
    %8628 = vmatmul.bf16.gmra.mxu0 %v8127
    %v8629 = vpop.f32.mrf.mxu0
    %v8630 = vadd.f32 0.0, %v8629
    %v8631 = vpop.f32.mrf.mxu0
    %v8632 = vadd.f32 0.0, %v8631
    %8633 = vdwg.mxu0
    %8634 = vmatpush.bf16.msra.mxu0 %v8434
    %8635 = vmatpush.bf16.msra.mxu0 %v8430
    %8636 = vmatpush.bf16.msra.mxu0 %v8426
    %8637 = vmatpush.bf16.msra.mxu0 %v8422
    %8638 = vmatpush.bf16.msra.mxu0 %v8418
    %8639 = vmatpush.bf16.msra.mxu0 %v8414
    %8640 = vmatpush.bf16.msra.mxu0 %v8410
    %8641 = vmatpush.bf16.msra.mxu0 %v8406
    %8642 = vmatmul.bf16.gmra.mxu0 %v8128
    %v8643 = vpop.f32.mrf.mxu0
    %v8644 = vadd.f32 %v8630, %v8643
    %v8645 = vpop.f32.mrf.mxu0
    %v8646 = vadd.f32 %v8632, %v8645
    %8647 = vdwg.mxu0
    %8648 = vmatpush.bf16.msra.mxu0 0
    %8649 = vmatpush.bf16.msra.mxu0 0
    %8650 = vmatpush.bf16.msra.mxu0 0
    %8651 = vmatpush.bf16.msra.mxu0 0
    %8652 = vmatpush.bf16.msra.mxu0 %v8450
    %8653 = vmatpush.bf16.msra.mxu0 %v8446
    %8654 = vmatpush.bf16.msra.mxu0 %v8442
    %8655 = vmatpush.bf16.msra.mxu0 %v8438
    %8656 = vmatmul.bf16.gmra.mxu0 %v8534
    %v8657 = vpop.f32.mrf.mxu0
    %v8658 = vadd.f32 %v8644, %v8657
    %v8659 = vpop.f32.mrf.mxu0
    %v8660 = vadd.f32 %v8646, %v8659
    %8661 = vdwg.mxu0
    %8662 = vmatpush.bf16.msra.mxu0 %v8403
    %8663 = vmatpush.bf16.msra.mxu0 %v8399
    %8664 = vmatpush.bf16.msra.mxu0 %v8395
    %8665 = vmatpush.bf16.msra.mxu0 %v8391
    %8666 = vmatpush.bf16.msra.mxu0 %v8387
    %8667 = vmatpush.bf16.msra.mxu0 %v8383
    %8668 = vmatpush.bf16.msra.mxu0 %v8379
    %8669 = vmatpush.bf16.msra.mxu0 %v8375
    %8670 = vmatmul.bf16.gmra.mxu0 %v8127
    %v8671 = vpop.f32.mrf.mxu0
    %v8672 = vadd.f32 0.0, %v8671
    %v8673 = vpop.f32.mrf.mxu0
    %v8674 = vadd.f32 0.0, %v8673
    %8675 = vdwg.mxu0
    %8676 = vmatpush.bf16.msra.mxu0 %v8435
    %8677 = vmatpush.bf16.msra.mxu0 %v8431
    %8678 = vmatpush.bf16.msra.mxu0 %v8427
    %8679 = vmatpush.bf16.msra.mxu0 %v8423
    %8680 = vmatpush.bf16.msra.mxu0 %v8419
    %8681 = vmatpush.bf16.msra.mxu0 %v8415
    %8682 = vmatpush.bf16.msra.mxu0 %v8411
    %8683 = vmatpush.bf16.msra.mxu0 %v8407
    %8684 = vmatmul.bf16.gmra.mxu0 %v8128
    %v8685 = vpop.f32.mrf.mxu0
    %v8686 = vadd.f32 %v8672, %v8685
    %v8687 = vpop.f32.mrf.mxu0
    %v8688 = vadd.f32 %v8674, %v8687
    %8689 = vdwg.mxu0
    %8690 = vmatpush.bf16.msra.mxu0 0
    %8691 = vmatpush.bf16.msra.mxu0 0
    %8692 = vmatpush.bf16.msra.mxu0 0
    %8693 = vmatpush.bf16.msra.mxu0 0
    %8694 = vmatpush.bf16.msra.mxu0 %v8451
    %8695 = vmatpush.bf16.msra.mxu0 %v8447
    %8696 = vmatpush.bf16.msra.mxu0 %v8443
    %8697 = vmatpush.bf16.msra.mxu0 %v8439
    %8698 = vmatmul.bf16.gmra.mxu0 %v8534
    %v8699 = vpop.f32.mrf.mxu0
    %v8700 = vadd.f32 %v8686, %v8699
    %v8701 = vpop.f32.mrf.mxu0
    %v8702 = vadd.f32 %v8688, %v8701
    %8703 = vdwg.mxu0
    %v8708 = vunpack.c.l.b16 %v7896
    %v8709 = vunpack.c.h.b16 %v7896
    %v8710 = vunpack.c.l.b16 %v7897
    %v8711 = vunpack.c.l.b16 %v7898
    %v8712 = vunpack.c.h.b16 %v7898
    %v8713 = vunpack.c.l.b16 %v7899
    %v8714 = vpack.c.b16 %v8711, %v8708
    %v8715 = vpack.c.b16 %v8712, %v8709
    %v8716 = vpack.c.b16 %v8713, %v8710
    %v8799 = vunpack.c.l.b16 %v7900
    %v8800 = vunpack.c.h.b16 %v7900
    %v8801 = vunpack.c.l.b16 %v7901
    %v8802 = vunpack.c.h.b16 %v7901
    %v8803 = vunpack.c.l.b16 %v7902
    %v8804 = vunpack.c.h.b16 %v7902
    %v8805 = vunpack.c.l.b16 %v7903
    %v8806 = vunpack.c.h.b16 %v7903
    %v8807 = vunpack.c.l.b16 %v7904
    %v8808 = vunpack.c.h.b16 %v7904
    %v8809 = vunpack.c.l.b16 %v7905
    %v8810 = vunpack.c.h.b16 %v7905
    %v8811 = vunpack.c.l.b16 %v7906
    %v8812 = vunpack.c.h.b16 %v7906
    %v8813 = vunpack.c.l.b16 %v7907
    %v8814 = vunpack.c.h.b16 %v7907
    %v8815 = vunpack.c.l.b16 %v7908
    %v8816 = vunpack.c.h.b16 %v7908
    %v8817 = vunpack.c.l.b16 %v7909
    %v8818 = vunpack.c.h.b16 %v7909
    %v8819 = vunpack.c.l.b16 %v7910
    %v8820 = vunpack.c.h.b16 %v7910
    %v8821 = vunpack.c.l.b16 %v7911
    %v8822 = vunpack.c.h.b16 %v7911
    %v8823 = vunpack.c.l.b16 %v7912
    %v8824 = vunpack.c.h.b16 %v7912
    %v8825 = vunpack.c.l.b16 %v7913
    %v8826 = vunpack.c.h.b16 %v7913
    %v8827 = vunpack.c.l.b16 %v7914
    %v8828 = vunpack.c.h.b16 %v7914
    %v8829 = vunpack.c.l.b16 %v7915
    %v8830 = vunpack.c.h.b16 %v7915
    %v8831 = vunpack.c.l.b16 %v7916
    %v8832 = vunpack.c.h.b16 %v7916
    %v8833 = vunpack.c.l.b16 %v7917
    %v8834 = vunpack.c.h.b16 %v7917
    %v8835 = vunpack.c.l.b16 %v7918
    %v8836 = vunpack.c.h.b16 %v7918
    %v8837 = vunpack.c.l.b16 %v7919
    %v8838 = vunpack.c.h.b16 %v7919
    %v8839 = vunpack.c.l.b16 %v7920
    %v8840 = vunpack.c.h.b16 %v7920
    %v8841 = vunpack.c.l.b16 %v7921
    %v8842 = vunpack.c.h.b16 %v7921
    %v8843 = vunpack.c.l.b16 %v7922
    %v8844 = vunpack.c.h.b16 %v7922
    %v8845 = vunpack.c.l.b16 %v7923
    %v8846 = vunpack.c.h.b16 %v7923
    %v8847 = vunpack.c.l.b16 %v7924
    %v8848 = vunpack.c.h.b16 %v7924
    %v8849 = vunpack.c.l.b16 %v7925
    %v8850 = vunpack.c.h.b16 %v7925
    %v8851 = vunpack.c.l.b16 %v7926
    %v8852 = vunpack.c.h.b16 %v7926
    %v8853 = vunpack.c.l.b16 %v7927
    %v8854 = vunpack.c.h.b16 %v7927
    %v8855 = vunpack.c.l.b16 %v7928
    %v8856 = vunpack.c.h.b16 %v7928
    %v8857 = vunpack.c.l.b16 %v7929
    %v8858 = vunpack.c.h.b16 %v7929
    %v8859 = vunpack.c.l.b16 %v7930
    %v8860 = vunpack.c.h.b16 %v7930
    %v8861 = vunpack.c.l.b16 %v7931
    %v8862 = vunpack.c.h.b16 %v7931
    %v8863 = vunpack.c.l.b16 %v7932
    %v8864 = vunpack.c.h.b16 %v7932
    %v8865 = vunpack.c.l.b16 %v7933
    %v8866 = vunpack.c.h.b16 %v7933
    %v8867 = vunpack.c.l.b16 %v7934
    %v8868 = vunpack.c.h.b16 %v7934
    %v8869 = vunpack.c.l.b16 %v7935
    %v8870 = vunpack.c.h.b16 %v7935
    %v8871 = vunpack.c.l.b16 %v7936
    %v8872 = vunpack.c.h.b16 %v7936
    %v8873 = vunpack.c.l.b16 %v7937
    %v8874 = vunpack.c.h.b16 %v7937
    %v8875 = vunpack.c.l.b16 %v7938
    %v8876 = vunpack.c.h.b16 %v7938
    %v8877 = vunpack.c.l.b16 %v7939
    %v8878 = vunpack.c.h.b16 %v7939
    %v8879 = vunpack.c.l.b16 %v7940
    %v8880 = vunpack.c.h.b16 %v7940
    %v8881 = vunpack.c.l.b16 %v7941
    %v8882 = vunpack.c.h.b16 %v7941
    %v8883 = vunpack.c.l.b16 %v7942
    %v8884 = vunpack.c.h.b16 %v7942
    %v8885 = vunpack.c.l.b16 %v7943
    %v8886 = vunpack.c.h.b16 %v7943
    %v8887 = vunpack.c.l.b16 %v7944
    %v8888 = vunpack.c.h.b16 %v7944
    %v8889 = vunpack.c.l.b16 %v7945
    %v8890 = vunpack.c.h.b16 %v7945
    %v8891 = vunpack.c.l.b16 %v7946
    %v8892 = vunpack.c.h.b16 %v7946
    %v8893 = vunpack.c.l.b16 %v7947
    %v8894 = vunpack.c.h.b16 %v7947
    %v8895 = vunpack.c.l.b16 %v7948
    %v8896 = vunpack.c.h.b16 %v7948
    %v8897 = vunpack.c.l.b16 %v7949
    %v8898 = vunpack.c.h.b16 %v7949
    %v8899 = vunpack.c.l.b16 %v7950
    %v8900 = vunpack.c.h.b16 %v7950
    %v8901 = vunpack.c.l.b16 %v7951
    %v8902 = vunpack.c.h.b16 %v7951
    %v8903 = vunpack.c.l.b16 %v7952
    %v8904 = vunpack.c.h.b16 %v7952
    %v8905 = vunpack.c.l.b16 %v7953
    %v8906 = vunpack.c.h.b16 %v7953
    %v8907 = vunpack.c.l.b16 %v7954
    %v8908 = vunpack.c.h.b16 %v7954
    %v8909 = vunpack.c.l.b16 %v7955
    %v8910 = vunpack.c.h.b16 %v7955
    %v8911 = vunpack.c.l.b16 %v7956
    %v8912 = vunpack.c.h.b16 %v7956
    %v8913 = vunpack.c.l.b16 %v7957
    %v8914 = vunpack.c.h.b16 %v7957
    %v8915 = vunpack.c.l.b16 %v7958
    %v8916 = vunpack.c.h.b16 %v7958
    %v8917 = vunpack.c.l.b16 %v7959
    %v8918 = vunpack.c.h.b16 %v7959
    %v8919 = vunpack.c.l.b16 %v7960
    %v8920 = vunpack.c.h.b16 %v7960
    %v8921 = vunpack.c.l.b16 %v7961
    %v8922 = vunpack.c.h.b16 %v7961
    %v8923 = vunpack.c.l.b16 %v7962
    %v8924 = vunpack.c.h.b16 %v7962
    %v8925 = vunpack.c.l.b16 %v7963
    %v8926 = vunpack.c.h.b16 %v7963
    %v8927 = vunpack.c.l.b16 %v7964
    %v8928 = vunpack.c.h.b16 %v7964
    %v8929 = vunpack.c.l.b16 %v7965
    %v8930 = vunpack.c.h.b16 %v7965
    %v8931 = vunpack.c.l.b16 %v7966
    %v8932 = vunpack.c.h.b16 %v7966
    %v8933 = vunpack.c.l.b16 %v7967
    %v8934 = vunpack.c.h.b16 %v7967
    %v8935 = vunpack.c.l.b16 %v7968
    %v8936 = vunpack.c.h.b16 %v7968
    %v8937 = vunpack.c.l.b16 %v7969
    %v8938 = vunpack.c.h.b16 %v7969
    %v8939 = vunpack.c.l.b16 %v7970
    %v8940 = vunpack.c.h.b16 %v7970
    %v8941 = vunpack.c.l.b16 %v7971
    %v8942 = vunpack.c.h.b16 %v7971
    %v8943 = vunpack.c.l.b16 %v7972
    %v8944 = vunpack.c.h.b16 %v7972
    %v8945 = vunpack.c.l.b16 %v7973
    %v8946 = vunpack.c.h.b16 %v7973
    %v8947 = vunpack.c.l.b16 %v7974
    %v8948 = vunpack.c.h.b16 %v7974
    %v8949 = vunpack.c.l.b16 %v7975
    %v8950 = vunpack.c.h.b16 %v7975
    %v8951 = vunpack.c.l.b16 %v7976
    %v8952 = vunpack.c.h.b16 %v7976
    %v8953 = vunpack.c.l.b16 %v7977
    %v8954 = vunpack.c.h.b16 %v7977
    %v8955 = vunpack.c.l.b16 %v7978
    %v8956 = vunpack.c.h.b16 %v7978
    %v8957 = vunpack.c.l.b16 %v7979
    %v8958 = vunpack.c.h.b16 %v7979
    %v8959 = vpack.c.b16 %v8803, %v8799
    %v8960 = vpack.c.b16 %v8804, %v8800
    %v8961 = vpack.c.b16 %v8805, %v8801
    %v8962 = vpack.c.b16 %v8806, %v8802
    %v8963 = vpack.c.b16 %v8811, %v8807
    %v8964 = vpack.c.b16 %v8812, %v8808
    %v8965 = vpack.c.b16 %v8813, %v8809
    %v8966 = vpack.c.b16 %v8814, %v8810
    %v8967 = vpack.c.b16 %v8819, %v8815
    %v8968 = vpack.c.b16 %v8820, %v8816
    %v8969 = vpack.c.b16 %v8821, %v8817
    %v8970 = vpack.c.b16 %v8822, %v8818
    %v8971 = vpack.c.b16 %v8827, %v8823
    %v8972 = vpack.c.b16 %v8828, %v8824
    %v8973 = vpack.c.b16 %v8829, %v8825
    %v8974 = vpack.c.b16 %v8830, %v8826
    %v8975 = vpack.c.b16 %v8835, %v8831
    %v8976 = vpack.c.b16 %v8836, %v8832
    %v8977 = vpack.c.b16 %v8837, %v8833
    %v8978 = vpack.c.b16 %v8838, %v8834
    %v8979 = vpack.c.b16 %v8843, %v8839
    %v8980 = vpack.c.b16 %v8844, %v8840
    %v8981 = vpack.c.b16 %v8845, %v8841
    %v8982 = vpack.c.b16 %v8846, %v8842
    %v8983 = vpack.c.b16 %v8851, %v8847
    %v8984 = vpack.c.b16 %v8852, %v8848
    %v8985 = vpack.c.b16 %v8853, %v8849
    %v8986 = vpack.c.b16 %v8854, %v8850
    %v8987 = vpack.c.b16 %v8859, %v8855
    %v8988 = vpack.c.b16 %v8860, %v8856
    %v8989 = vpack.c.b16 %v8861, %v8857
    %v8990 = vpack.c.b16 %v8862, %v8858
    %v8991 = vpack.c.b16 %v8867, %v8863
    %v8992 = vpack.c.b16 %v8868, %v8864
    %v8993 = vpack.c.b16 %v8869, %v8865
    %v8994 = vpack.c.b16 %v8870, %v8866
    %v8995 = vpack.c.b16 %v8875, %v8871
    %v8996 = vpack.c.b16 %v8876, %v8872
    %v8997 = vpack.c.b16 %v8877, %v8873
    %v8998 = vpack.c.b16 %v8878, %v8874
    %v8999 = vpack.c.b16 %v8883, %v8879
    %v9000 = vpack.c.b16 %v8884, %v8880
    %v9001 = vpack.c.b16 %v8885, %v8881
    %v9002 = vpack.c.b16 %v8886, %v8882
    %v9003 = vpack.c.b16 %v8891, %v8887
    %v9004 = vpack.c.b16 %v8892, %v8888
    %v9005 = vpack.c.b16 %v8893, %v8889
    %v9006 = vpack.c.b16 %v8894, %v8890
    %v9007 = vpack.c.b16 %v8899, %v8895
    %v9008 = vpack.c.b16 %v8900, %v8896
    %v9009 = vpack.c.b16 %v8901, %v8897
    %v9010 = vpack.c.b16 %v8902, %v8898
    %v9011 = vpack.c.b16 %v8907, %v8903
    %v9012 = vpack.c.b16 %v8908, %v8904
    %v9013 = vpack.c.b16 %v8909, %v8905
    %v9014 = vpack.c.b16 %v8910, %v8906
    %v9015 = vpack.c.b16 %v8915, %v8911
    %v9016 = vpack.c.b16 %v8916, %v8912
    %v9017 = vpack.c.b16 %v8917, %v8913
    %v9018 = vpack.c.b16 %v8918, %v8914
    %v9019 = vpack.c.b16 %v8923, %v8919
    %v9020 = vpack.c.b16 %v8924, %v8920
    %v9021 = vpack.c.b16 %v8925, %v8921
    %v9022 = vpack.c.b16 %v8926, %v8922
    %v9023 = vpack.c.b16 %v8931, %v8927
    %v9024 = vpack.c.b16 %v8932, %v8928
    %v9025 = vpack.c.b16 %v8933, %v8929
    %v9026 = vpack.c.b16 %v8934, %v8930
    %v9027 = vpack.c.b16 %v8939, %v8935
    %v9028 = vpack.c.b16 %v8940, %v8936
    %v9029 = vpack.c.b16 %v8941, %v8937
    %v9030 = vpack.c.b16 %v8942, %v8938
    %v9031 = vpack.c.b16 %v8947, %v8943
    %v9032 = vpack.c.b16 %v8948, %v8944
    %v9033 = vpack.c.b16 %v8949, %v8945
    %v9034 = vpack.c.b16 %v8950, %v8946
    %v9035 = vpack.c.b16 %v8955, %v8951
    %v9036 = vpack.c.b16 %v8956, %v8952
    %v9037 = vpack.c.b16 %v8957, %v8953
    %v9038 = vpack.c.b16 %v8958, %v8954
    %v9120 = vsel %vm8532, %v8716, 0
    %9122 = vmatpush.bf16.msra.mxu0 %v8987
    %9123 = vmatpush.bf16.msra.mxu0 %v8983
    %9124 = vmatpush.bf16.msra.mxu0 %v8979
    %9125 = vmatpush.bf16.msra.mxu0 %v8975
    %9126 = vmatpush.bf16.msra.mxu0 %v8971
    %9127 = vmatpush.bf16.msra.mxu0 %v8967
    %9128 = vmatpush.bf16.msra.mxu0 %v8963
    %9129 = vmatpush.bf16.msra.mxu0 %v8959
    %9130 = vmatmul.bf16.gmra.mxu0 %v8714
    %v9131 = vpop.f32.mrf.mxu0
    %v9132 = vadd.f32 %v8574, %v9131
    %v9133 = vpop.f32.mrf.mxu0
    %v9134 = vadd.f32 %v8576, %v9133
    %9135 = vdwg.mxu0
    %9136 = vmatpush.bf16.msra.mxu0 %v9019
    %9137 = vmatpush.bf16.msra.mxu0 %v9015
    %9138 = vmatpush.bf16.msra.mxu0 %v9011
    %9139 = vmatpush.bf16.msra.mxu0 %v9007
    %9140 = vmatpush.bf16.msra.mxu0 %v9003
    %9141 = vmatpush.bf16.msra.mxu0 %v8999
    %9142 = vmatpush.bf16.msra.mxu0 %v8995
    %9143 = vmatpush.bf16.msra.mxu0 %v8991
    %9144 = vmatmul.bf16.gmra.mxu0 %v8715
    %v9145 = vpop.f32.mrf.mxu0
    %v9146 = vadd.f32 %v9132, %v9145
    %v9147 = vpop.f32.mrf.mxu0
    %v9148 = vadd.f32 %v9134, %v9147
    %9149 = vdwg.mxu0
    %9150 = vmatpush.bf16.msra.mxu0 0
    %9151 = vmatpush.bf16.msra.mxu0 0
    %9152 = vmatpush.bf16.msra.mxu0 0
    %9153 = vmatpush.bf16.msra.mxu0 0
    %9154 = vmatpush.bf16.msra.mxu0 %v9035
    %9155 = vmatpush.bf16.msra.mxu0 %v9031
    %9156 = vmatpush.bf16.msra.mxu0 %v9027
    %9157 = vmatpush.bf16.msra.mxu0 %v9023
    %9158 = vmatmul.bf16.gmra.mxu0 %v9120
    %v9159 = vpop.f32.mrf.mxu0
    %v9160 = vadd.f32 %v9146, %v9159
    %v9161 = vpop.f32.mrf.mxu0
    %v9162 = vadd.f32 %v9148, %v9161
    %9163 = vdwg.mxu0
    %9164 = vmatpush.bf16.msra.mxu0 %v8988
    %9165 = vmatpush.bf16.msra.mxu0 %v8984
    %9166 = vmatpush.bf16.msra.mxu0 %v8980
    %9167 = vmatpush.bf16.msra.mxu0 %v8976
    %9168 = vmatpush.bf16.msra.mxu0 %v8972
    %9169 = vmatpush.bf16.msra.mxu0 %v8968
    %9170 = vmatpush.bf16.msra.mxu0 %v8964
    %9171 = vmatpush.bf16.msra.mxu0 %v8960
    %9172 = vmatmul.bf16.gmra.mxu0 %v8714
    %v9173 = vpop.f32.mrf.mxu0
    %v9174 = vadd.f32 %v8616, %v9173
    %v9175 = vpop.f32.mrf.mxu0
    %v9176 = vadd.f32 %v8618, %v9175
    %9177 = vdwg.mxu0
    %9178 = vmatpush.bf16.msra.mxu0 %v9020
    %9179 = vmatpush.bf16.msra.mxu0 %v9016
    %9180 = vmatpush.bf16.msra.mxu0 %v9012
    %9181 = vmatpush.bf16.msra.mxu0 %v9008
    %9182 = vmatpush.bf16.msra.mxu0 %v9004
    %9183 = vmatpush.bf16.msra.mxu0 %v9000
    %9184 = vmatpush.bf16.msra.mxu0 %v8996
    %9185 = vmatpush.bf16.msra.mxu0 %v8992
    %9186 = vmatmul.bf16.gmra.mxu0 %v8715
    %v9187 = vpop.f32.mrf.mxu0
    %v9188 = vadd.f32 %v9174, %v9187
    %v9189 = vpop.f32.mrf.mxu0
    %v9190 = vadd.f32 %v9176, %v9189
    %9191 = vdwg.mxu0
    %9192 = vmatpush.bf16.msra.mxu0 0
    %9193 = vmatpush.bf16.msra.mxu0 0
    %9194 = vmatpush.bf16.msra.mxu0 0
    %9195 = vmatpush.bf16.msra.mxu0 0
    %9196 = vmatpush.bf16.msra.mxu0 %v9036
    %9197 = vmatpush.bf16.msra.mxu0 %v9032
    %9198 = vmatpush.bf16.msra.mxu0 %v9028
    %9199 = vmatpush.bf16.msra.mxu0 %v9024
    %9200 = vmatmul.bf16.gmra.mxu0 %v9120
    %v9201 = vpop.f32.mrf.mxu0
    %v9202 = vadd.f32 %v9188, %v9201
    %v9203 = vpop.f32.mrf.mxu0
    %v9204 = vadd.f32 %v9190, %v9203
    %9205 = vdwg.mxu0
    %9206 = vmatpush.bf16.msra.mxu0 %v8989
    %9207 = vmatpush.bf16.msra.mxu0 %v8985
    %9208 = vmatpush.bf16.msra.mxu0 %v8981
    %9209 = vmatpush.bf16.msra.mxu0 %v8977
    %9210 = vmatpush.bf16.msra.mxu0 %v8973
    %9211 = vmatpush.bf16.msra.mxu0 %v8969
    %9212 = vmatpush.bf16.msra.mxu0 %v8965
    %9213 = vmatpush.bf16.msra.mxu0 %v8961
    %9214 = vmatmul.bf16.gmra.mxu0 %v8714
    %v9215 = vpop.f32.mrf.mxu0
    %v9216 = vadd.f32 %v8658, %v9215
    %v9217 = vpop.f32.mrf.mxu0
    %v9218 = vadd.f32 %v8660, %v9217
    %9219 = vdwg.mxu0
    %9220 = vmatpush.bf16.msra.mxu0 %v9021
    %9221 = vmatpush.bf16.msra.mxu0 %v9017
    %9222 = vmatpush.bf16.msra.mxu0 %v9013
    %9223 = vmatpush.bf16.msra.mxu0 %v9009
    %9224 = vmatpush.bf16.msra.mxu0 %v9005
    %9225 = vmatpush.bf16.msra.mxu0 %v9001
    %9226 = vmatpush.bf16.msra.mxu0 %v8997
    %9227 = vmatpush.bf16.msra.mxu0 %v8993
    %9228 = vmatmul.bf16.gmra.mxu0 %v8715
    %v9229 = vpop.f32.mrf.mxu0
    %v9230 = vadd.f32 %v9216, %v9229
    %v9231 = vpop.f32.mrf.mxu0
    %v9232 = vadd.f32 %v9218, %v9231
    %9233 = vdwg.mxu0
    %9234 = vmatpush.bf16.msra.mxu0 0
    %9235 = vmatpush.bf16.msra.mxu0 0
    %9236 = vmatpush.bf16.msra.mxu0 0
    %9237 = vmatpush.bf16.msra.mxu0 0
    %9238 = vmatpush.bf16.msra.mxu0 %v9037
    %9239 = vmatpush.bf16.msra.mxu0 %v9033
    %9240 = vmatpush.bf16.msra.mxu0 %v9029
    %9241 = vmatpush.bf16.msra.mxu0 %v9025
    %9242 = vmatmul.bf16.gmra.mxu0 %v9120
    %v9243 = vpop.f32.mrf.mxu0
    %v9244 = vadd.f32 %v9230, %v9243
    %v9245 = vpop.f32.mrf.mxu0
    %v9246 = vadd.f32 %v9232, %v9245
    %9247 = vdwg.mxu0
    %9248 = vmatpush.bf16.msra.mxu0 %v8990
    %9249 = vmatpush.bf16.msra.mxu0 %v8986
    %9250 = vmatpush.bf16.msra.mxu0 %v8982
    %9251 = vmatpush.bf16.msra.mxu0 %v8978
    %9252 = vmatpush.bf16.msra.mxu0 %v8974
    %9253 = vmatpush.bf16.msra.mxu0 %v8970
    %9254 = vmatpush.bf16.msra.mxu0 %v8966
    %9255 = vmatpush.bf16.msra.mxu0 %v8962
    %9256 = vmatmul.bf16.gmra.mxu0 %v8714
    %v9257 = vpop.f32.mrf.mxu0
    %v9258 = vadd.f32 %v8700, %v9257
    %v9259 = vpop.f32.mrf.mxu0
    %v9260 = vadd.f32 %v8702, %v9259
    %9261 = vdwg.mxu0
    %9262 = vmatpush.bf16.msra.mxu0 %v9022
    %9263 = vmatpush.bf16.msra.mxu0 %v9018
    %9264 = vmatpush.bf16.msra.mxu0 %v9014
    %9265 = vmatpush.bf16.msra.mxu0 %v9010
    %9266 = vmatpush.bf16.msra.mxu0 %v9006
    %9267 = vmatpush.bf16.msra.mxu0 %v9002
    %9268 = vmatpush.bf16.msra.mxu0 %v8998
    %9269 = vmatpush.bf16.msra.mxu0 %v8994
    %9270 = vmatmul.bf16.gmra.mxu0 %v8715
    %v9271 = vpop.f32.mrf.mxu0
    %v9272 = vadd.f32 %v9258, %v9271
    %v9273 = vpop.f32.mrf.mxu0
    %v9274 = vadd.f32 %v9260, %v9273
    %9275 = vdwg.mxu0
    %9276 = vmatpush.bf16.msra.mxu0 0
    %9277 = vmatpush.bf16.msra.mxu0 0
    %9278 = vmatpush.bf16.msra.mxu0 0
    %9279 = vmatpush.bf16.msra.mxu0 0
    %9280 = vmatpush.bf16.msra.mxu0 %v9038
    %9281 = vmatpush.bf16.msra.mxu0 %v9034
    %9282 = vmatpush.bf16.msra.mxu0 %v9030
    %9283 = vmatpush.bf16.msra.mxu0 %v9026
    %9284 = vmatmul.bf16.gmra.mxu0 %v9120
    %v9285 = vpop.f32.mrf.mxu0
    %v9286 = vadd.f32 %v9272, %v9285
    %v9287 = vpop.f32.mrf.mxu0
    %v9288 = vadd.f32 %v9274, %v9287
    %9289 = vdwg.mxu0
    %v9290 = vld [vmem:[#allocation4] sm:$0xee]
    %v9291 = vld [vmem:[#allocation4 + $0x8] sm:$0xe]
    %v9292 = vld [vmem:[#allocation4 + $0x18] sm:$0xee]
    %v9293 = vld [vmem:[#allocation4 + $0x20] sm:$0xe]
    %v9302 = vrot.slane %v9290, 5
    %v9303 = vrot.slane %v9302, 4
    %v9304 = vrot.slane %v7980, 5
    %v9305 = vsel %vm1115, %v9303, %v9304
    %v9306 = vrot.slane %v9291, 5
    %v9307 = vrot.slane %v9306, 4
    %v9308 = vrot.slane %v7981, 5
    %v9309 = vsel %vm1115, %v9307, %v9308
    %v9310 = vrot.slane %v9292, 5
    %v9311 = vrot.slane %v9310, 4
    %v9312 = vrot.slane %v7982, 5
    %v9313 = vsel %vm1115, %v9311, %v9312
    %v9314 = vrot.slane %v9293, 5
    %v9315 = vrot.slane %v9314, 4
    %v9316 = vrot.slane %v7983, 5
    %v9317 = vsel %vm1115, %v9315, %v9316
    %s9318 = scalar_lea.vmem [#allocation14], 1280
    %v9319 = vld [vmem:[%s9318] sm:$0xff]
    %v9320 = vld [vmem:[%s9318 + $0x8] sm:$0xff]
    %v9321 = vld [vmem:[%s9318 + $0x10] sm:$0xff]
    %v9322 = vld [vmem:[%s9318 + $0x18] sm:$0xff]
    %v9323 = vld [vmem:[%s9318 + $0x20] sm:$0xff]
    %v9324 = vld [vmem:[%s9318 + $0x28] sm:$0xff]
    %v9325 = vld [vmem:[%s9318 + $0x30] sm:$0xff]
    %v9326 = vld [vmem:[%s9318 + $0x38] sm:$0xff]
    %v9327 = vld [vmem:[%s9318 + $0x40] sm:$0xff]
    %v9328 = vld [vmem:[%s9318 + $0x48] sm:$0xff]
    %v9329 = vld [vmem:[%s9318 + $0x50] sm:$0xff]
    %v9330 = vld [vmem:[%s9318 + $0x58] sm:$0xff]
    %v9331 = vld [vmem:[%s9318 + $0x60] sm:$0xff]
    %v9332 = vld [vmem:[%s9318 + $0x68] sm:$0xff]
    %v9333 = vld [vmem:[%s9318 + $0x70] sm:$0xff]
    %v9334 = vld [vmem:[%s9318 + $0x78] sm:$0xff]
    %v9335 = vld [vmem:[%s9318 + $0x80] sm:$0xff]
    %v9336 = vld [vmem:[%s9318 + $0x88] sm:$0xff]
    %v9337 = vld [vmem:[%s9318 + $0x90] sm:$0xff]
    %v9338 = vld [vmem:[%s9318 + $0x98] sm:$0xff]
    %v9339 = vld [vmem:[%s9318 + $0xa0] sm:$0xff]
    %v9340 = vld [vmem:[%s9318 + $0xa8] sm:$0xff]
    %v9341 = vld [vmem:[%s9318 + $0xb0] sm:$0xff]
    %v9342 = vld [vmem:[%s9318 + $0xb8] sm:$0xff]
    %v9343 = vld [vmem:[%s9318 + $0xc0] sm:$0xff]
    %v9344 = vld [vmem:[%s9318 + $0xc8] sm:$0xff]
    %v9345 = vld [vmem:[%s9318 + $0xd0] sm:$0xff]
    %v9346 = vld [vmem:[%s9318 + $0xd8] sm:$0xff]
    %v9347 = vld [vmem:[%s9318 + $0xe0] sm:$0xff]
    %v9348 = vld [vmem:[%s9318 + $0xe8] sm:$0xff]
    %v9349 = vld [vmem:[%s9318 + $0xf0] sm:$0xff]
    %v9350 = vld [vmem:[%s9318 + $0xf8] sm:$0xff]
    %v9351 = vld [vmem:[%s9318 + $0x100] sm:$0xff]
    %v9352 = vld [vmem:[%s9318 + $0x108] sm:$0xff]
    %v9353 = vld [vmem:[%s9318 + $0x110] sm:$0xff]
    %v9354 = vld [vmem:[%s9318 + $0x118] sm:$0xff]
    %v9355 = vld [vmem:[%s9318 + $0x120] sm:$0xff]
    %v9356 = vld [vmem:[%s9318 + $0x128] sm:$0xff]
    %v9357 = vld [vmem:[%s9318 + $0x130] sm:$0xff]
    %v9358 = vld [vmem:[%s9318 + $0x138] sm:$0xff]
    %v9359 = vld [vmem:[%s9318 + $0x140] sm:$0xff]
    %v9360 = vld [vmem:[%s9318 + $0x148] sm:$0xff]
    %v9361 = vld [vmem:[%s9318 + $0x150] sm:$0xff]
    %v9362 = vld [vmem:[%s9318 + $0x158] sm:$0xff]
    %v9363 = vld [vmem:[%s9318 + $0x160] sm:$0xff]
    %v9364 = vld [vmem:[%s9318 + $0x168] sm:$0xff]
    %v9365 = vld [vmem:[%s9318 + $0x170] sm:$0xff]
    %v9366 = vld [vmem:[%s9318 + $0x178] sm:$0xff]
    %v9367 = vld [vmem:[%s9318 + $0x180] sm:$0xff]
    %v9368 = vld [vmem:[%s9318 + $0x188] sm:$0xff]
    %v9369 = vld [vmem:[%s9318 + $0x190] sm:$0xff]
    %v9370 = vld [vmem:[%s9318 + $0x198] sm:$0xff]
    %v9371 = vld [vmem:[%s9318 + $0x1a0] sm:$0xff]
    %v9372 = vld [vmem:[%s9318 + $0x1a8] sm:$0xff]
    %v9373 = vld [vmem:[%s9318 + $0x1b0] sm:$0xff]
    %v9374 = vld [vmem:[%s9318 + $0x1b8] sm:$0xff]
    %v9375 = vld [vmem:[%s9318 + $0x1c0] sm:$0xff]
    %v9376 = vld [vmem:[%s9318 + $0x1c8] sm:$0xff]
    %v9377 = vld [vmem:[%s9318 + $0x1d0] sm:$0xff]
    %v9378 = vld [vmem:[%s9318 + $0x1d8] sm:$0xff]
    %v9379 = vld [vmem:[%s9318 + $0x1e0] sm:$0xff]
    %v9380 = vld [vmem:[%s9318 + $0x1e8] sm:$0xff]
    %v9381 = vld [vmem:[%s9318 + $0x1f0] sm:$0xff]
    %v9382 = vld [vmem:[%s9318 + $0x1f8] sm:$0xff]
    %v9383 = vld [vmem:[%s9318 + $0x200] sm:$0xff]
    %v9384 = vld [vmem:[%s9318 + $0x208] sm:$0xff]
    %v9385 = vld [vmem:[%s9318 + $0x210] sm:$0xff]
    %v9386 = vld [vmem:[%s9318 + $0x218] sm:$0xff]
    %v9387 = vld [vmem:[%s9318 + $0x220] sm:$0xff]
    %v9388 = vld [vmem:[%s9318 + $0x228] sm:$0xff]
    %v9389 = vld [vmem:[%s9318 + $0x230] sm:$0xff]
    %v9390 = vld [vmem:[%s9318 + $0x238] sm:$0xff]
    %v9391 = vld [vmem:[%s9318 + $0x240] sm:$0xff]
    %v9392 = vld [vmem:[%s9318 + $0x248] sm:$0xff]
    %v9393 = vld [vmem:[%s9318 + $0x250] sm:$0xff]
    %v9394 = vld [vmem:[%s9318 + $0x258] sm:$0xff]
    %v9395 = vld [vmem:[%s9318 + $0x260] sm:$0xff]
    %v9396 = vld [vmem:[%s9318 + $0x268] sm:$0xff]
    %v9397 = vld [vmem:[%s9318 + $0x270] sm:$0xff]
    %v9398 = vld [vmem:[%s9318 + $0x278] sm:$0xff]
    %v9399 = vunpack.c.l.b16 %v9305
    %v9400 = vunpack.c.h.b16 %v9305
    %v9401 = vunpack.c.l.b16 %v9309
    %v9402 = vunpack.c.l.b16 %v9313
    %v9403 = vunpack.c.h.b16 %v9313
    %v9404 = vunpack.c.l.b16 %v9317
    %v9405 = vpack.c.b16 %v9402, %v9399
    %v9406 = vpack.c.b16 %v9403, %v9400
    %v9407 = vpack.c.b16 %v9404, %v9401
    %v9490 = vunpack.c.l.b16 %v9319
    %v9491 = vunpack.c.h.b16 %v9319
    %v9492 = vunpack.c.l.b16 %v9320
    %v9493 = vunpack.c.h.b16 %v9320
    %v9494 = vunpack.c.l.b16 %v9321
    %v9495 = vunpack.c.h.b16 %v9321
    %v9496 = vunpack.c.l.b16 %v9322
    %v9497 = vunpack.c.h.b16 %v9322
    %v9498 = vunpack.c.l.b16 %v9323
    %v9499 = vunpack.c.h.b16 %v9323
    %v9500 = vunpack.c.l.b16 %v9324
    %v9501 = vunpack.c.h.b16 %v9324
    %v9502 = vunpack.c.l.b16 %v9325
    %v9503 = vunpack.c.h.b16 %v9325
    %v9504 = vunpack.c.l.b16 %v9326
    %v9505 = vunpack.c.h.b16 %v9326
    %v9506 = vunpack.c.l.b16 %v9327
    %v9507 = vunpack.c.h.b16 %v9327
    %v9508 = vunpack.c.l.b16 %v9328
    %v9509 = vunpack.c.h.b16 %v9328
    %v9510 = vunpack.c.l.b16 %v9329
    %v9511 = vunpack.c.h.b16 %v9329
    %v9512 = vunpack.c.l.b16 %v9330
    %v9513 = vunpack.c.h.b16 %v9330
    %v9514 = vunpack.c.l.b16 %v9331
    %v9515 = vunpack.c.h.b16 %v9331
    %v9516 = vunpack.c.l.b16 %v9332
    %v9517 = vunpack.c.h.b16 %v9332
    %v9518 = vunpack.c.l.b16 %v9333
    %v9519 = vunpack.c.h.b16 %v9333
    %v9520 = vunpack.c.l.b16 %v9334
    %v9521 = vunpack.c.h.b16 %v9334
    %v9522 = vunpack.c.l.b16 %v9335
    %v9523 = vunpack.c.h.b16 %v9335
    %v9524 = vunpack.c.l.b16 %v9336
    %v9525 = vunpack.c.h.b16 %v9336
    %v9526 = vunpack.c.l.b16 %v9337
    %v9527 = vunpack.c.h.b16 %v9337
    %v9528 = vunpack.c.l.b16 %v9338
    %v9529 = vunpack.c.h.b16 %v9338
    %v9530 = vunpack.c.l.b16 %v9339
    %v9531 = vunpack.c.h.b16 %v9339
    %v9532 = vunpack.c.l.b16 %v9340
    %v9533 = vunpack.c.h.b16 %v9340
    %v9534 = vunpack.c.l.b16 %v9341
    %v9535 = vunpack.c.h.b16 %v9341
    %v9536 = vunpack.c.l.b16 %v9342
    %v9537 = vunpack.c.h.b16 %v9342
    %v9538 = vunpack.c.l.b16 %v9343
    %v9539 = vunpack.c.h.b16 %v9343
    %v9540 = vunpack.c.l.b16 %v9344
    %v9541 = vunpack.c.h.b16 %v9344
    %v9542 = vunpack.c.l.b16 %v9345
    %v9543 = vunpack.c.h.b16 %v9345
    %v9544 = vunpack.c.l.b16 %v9346
    %v9545 = vunpack.c.h.b16 %v9346
    %v9546 = vunpack.c.l.b16 %v9347
    %v9547 = vunpack.c.h.b16 %v9347
    %v9548 = vunpack.c.l.b16 %v9348
    %v9549 = vunpack.c.h.b16 %v9348
    %v9550 = vunpack.c.l.b16 %v9349
    %v9551 = vunpack.c.h.b16 %v9349
    %v9552 = vunpack.c.l.b16 %v9350
    %v9553 = vunpack.c.h.b16 %v9350
    %v9554 = vunpack.c.l.b16 %v9351
    %v9555 = vunpack.c.h.b16 %v9351
    %v9556 = vunpack.c.l.b16 %v9352
    %v9557 = vunpack.c.h.b16 %v9352
    %v9558 = vunpack.c.l.b16 %v9353
    %v9559 = vunpack.c.h.b16 %v9353
    %v9560 = vunpack.c.l.b16 %v9354
    %v9561 = vunpack.c.h.b16 %v9354
    %v9562 = vunpack.c.l.b16 %v9355
    %v9563 = vunpack.c.h.b16 %v9355
    %v9564 = vunpack.c.l.b16 %v9356
    %v9565 = vunpack.c.h.b16 %v9356
    %v9566 = vunpack.c.l.b16 %v9357
    %v9567 = vunpack.c.h.b16 %v9357
    %v9568 = vunpack.c.l.b16 %v9358
    %v9569 = vunpack.c.h.b16 %v9358
    %v9570 = vunpack.c.l.b16 %v9359
    %v9571 = vunpack.c.h.b16 %v9359
    %v9572 = vunpack.c.l.b16 %v9360
    %v9573 = vunpack.c.h.b16 %v9360
    %v9574 = vunpack.c.l.b16 %v9361
    %v9575 = vunpack.c.h.b16 %v9361
    %v9576 = vunpack.c.l.b16 %v9362
    %v9577 = vunpack.c.h.b16 %v9362
    %v9578 = vunpack.c.l.b16 %v9363
    %v9579 = vunpack.c.h.b16 %v9363
    %v9580 = vunpack.c.l.b16 %v9364
    %v9581 = vunpack.c.h.b16 %v9364
    %v9582 = vunpack.c.l.b16 %v9365
    %v9583 = vunpack.c.h.b16 %v9365
    %v9584 = vunpack.c.l.b16 %v9366
    %v9585 = vunpack.c.h.b16 %v9366
    %v9586 = vunpack.c.l.b16 %v9367
    %v9587 = vunpack.c.h.b16 %v9367
    %v9588 = vunpack.c.l.b16 %v9368
    %v9589 = vunpack.c.h.b16 %v9368
    %v9590 = vunpack.c.l.b16 %v9369
    %v9591 = vunpack.c.h.b16 %v9369
    %v9592 = vunpack.c.l.b16 %v9370
    %v9593 = vunpack.c.h.b16 %v9370
    %v9594 = vunpack.c.l.b16 %v9371
    %v9595 = vunpack.c.h.b16 %v9371
    %v9596 = vunpack.c.l.b16 %v9372
    %v9597 = vunpack.c.h.b16 %v9372
    %v9598 = vunpack.c.l.b16 %v9373
    %v9599 = vunpack.c.h.b16 %v9373
    %v9600 = vunpack.c.l.b16 %v9374
    %v9601 = vunpack.c.h.b16 %v9374
    %v9602 = vunpack.c.l.b16 %v9375
    %v9603 = vunpack.c.h.b16 %v9375
    %v9604 = vunpack.c.l.b16 %v9376
    %v9605 = vunpack.c.h.b16 %v9376
    %v9606 = vunpack.c.l.b16 %v9377
    %v9607 = vunpack.c.h.b16 %v9377
    %v9608 = vunpack.c.l.b16 %v9378
    %v9609 = vunpack.c.h.b16 %v9378
    %v9610 = vunpack.c.l.b16 %v9379
    %v9611 = vunpack.c.h.b16 %v9379
    %v9612 = vunpack.c.l.b16 %v9380
    %v9613 = vunpack.c.h.b16 %v9380
    %v9614 = vunpack.c.l.b16 %v9381
    %v9615 = vunpack.c.h.b16 %v9381
    %v9616 = vunpack.c.l.b16 %v9382
    %v9617 = vunpack.c.h.b16 %v9382
    %v9618 = vunpack.c.l.b16 %v9383
    %v9619 = vunpack.c.h.b16 %v9383
    %v9620 = vunpack.c.l.b16 %v9384
    %v9621 = vunpack.c.h.b16 %v9384
    %v9622 = vunpack.c.l.b16 %v9385
    %v9623 = vunpack.c.h.b16 %v9385
    %v9624 = vunpack.c.l.b16 %v9386
    %v9625 = vunpack.c.h.b16 %v9386
    %v9626 = vunpack.c.l.b16 %v9387
    %v9627 = vunpack.c.h.b16 %v9387
    %v9628 = vunpack.c.l.b16 %v9388
    %v9629 = vunpack.c.h.b16 %v9388
    %v9630 = vunpack.c.l.b16 %v9389
    %v9631 = vunpack.c.h.b16 %v9389
    %v9632 = vunpack.c.l.b16 %v9390
    %v9633 = vunpack.c.h.b16 %v9390
    %v9634 = vunpack.c.l.b16 %v9391
    %v9635 = vunpack.c.h.b16 %v9391
    %v9636 = vunpack.c.l.b16 %v9392
    %v9637 = vunpack.c.h.b16 %v9392
    %v9638 = vunpack.c.l.b16 %v9393
    %v9639 = vunpack.c.h.b16 %v9393
    %v9640 = vunpack.c.l.b16 %v9394
    %v9641 = vunpack.c.h.b16 %v9394
    %v9642 = vunpack.c.l.b16 %v9395
    %v9643 = vunpack.c.h.b16 %v9395
    %v9644 = vunpack.c.l.b16 %v9396
    %v9645 = vunpack.c.h.b16 %v9396
    %v9646 = vunpack.c.l.b16 %v9397
    %v9647 = vunpack.c.h.b16 %v9397
    %v9648 = vunpack.c.l.b16 %v9398
    %v9649 = vunpack.c.h.b16 %v9398
    %v9650 = vpack.c.b16 %v9494, %v9490
    %v9651 = vpack.c.b16 %v9495, %v9491
    %v9652 = vpack.c.b16 %v9496, %v9492
    %v9653 = vpack.c.b16 %v9497, %v9493
    %v9654 = vpack.c.b16 %v9502, %v9498
    %v9655 = vpack.c.b16 %v9503, %v9499
    %v9656 = vpack.c.b16 %v9504, %v9500
    %v9657 = vpack.c.b16 %v9505, %v9501
    %v9658 = vpack.c.b16 %v9510, %v9506
    %v9659 = vpack.c.b16 %v9511, %v9507
    %v9660 = vpack.c.b16 %v9512, %v9508
    %v9661 = vpack.c.b16 %v9513, %v9509
    %v9662 = vpack.c.b16 %v9518, %v9514
    %v9663 = vpack.c.b16 %v9519, %v9515
    %v9664 = vpack.c.b16 %v9520, %v9516
    %v9665 = vpack.c.b16 %v9521, %v9517
    %v9666 = vpack.c.b16 %v9526, %v9522
    %v9667 = vpack.c.b16 %v9527, %v9523
    %v9668 = vpack.c.b16 %v9528, %v9524
    %v9669 = vpack.c.b16 %v9529, %v9525
    %v9670 = vpack.c.b16 %v9534, %v9530
    %v9671 = vpack.c.b16 %v9535, %v9531
    %v9672 = vpack.c.b16 %v9536, %v9532
    %v9673 = vpack.c.b16 %v9537, %v9533
    %v9674 = vpack.c.b16 %v9542, %v9538
    %v9675 = vpack.c.b16 %v9543, %v9539
    %v9676 = vpack.c.b16 %v9544, %v9540
    %v9677 = vpack.c.b16 %v9545, %v9541
    %v9678 = vpack.c.b16 %v9550, %v9546
    %v9679 = vpack.c.b16 %v9551, %v9547
    %v9680 = vpack.c.b16 %v9552, %v9548
    %v9681 = vpack.c.b16 %v9553, %v9549
    %v9682 = vpack.c.b16 %v9558, %v9554
    %v9683 = vpack.c.b16 %v9559, %v9555
    %v9684 = vpack.c.b16 %v9560, %v9556
    %v9685 = vpack.c.b16 %v9561, %v9557
    %v9686 = vpack.c.b16 %v9566, %v9562
    %v9687 = vpack.c.b16 %v9567, %v9563
    %v9688 = vpack.c.b16 %v9568, %v9564
    %v9689 = vpack.c.b16 %v9569, %v9565
    %v9690 = vpack.c.b16 %v9574, %v9570
    %v9691 = vpack.c.b16 %v9575, %v9571
    %v9692 = vpack.c.b16 %v9576, %v9572
    %v9693 = vpack.c.b16 %v9577, %v9573
    %v9694 = vpack.c.b16 %v9582, %v9578
    %v9695 = vpack.c.b16 %v9583, %v9579
    %v9696 = vpack.c.b16 %v9584, %v9580
    %v9697 = vpack.c.b16 %v9585, %v9581
    %v9698 = vpack.c.b16 %v9590, %v9586
    %v9699 = vpack.c.b16 %v9591, %v9587
    %v9700 = vpack.c.b16 %v9592, %v9588
    %v9701 = vpack.c.b16 %v9593, %v9589
    %v9702 = vpack.c.b16 %v9598, %v9594
    %v9703 = vpack.c.b16 %v9599, %v9595
    %v9704 = vpack.c.b16 %v9600, %v9596
    %v9705 = vpack.c.b16 %v9601, %v9597
    %v9706 = vpack.c.b16 %v9606, %v9602
    %v9707 = vpack.c.b16 %v9607, %v9603
    %v9708 = vpack.c.b16 %v9608, %v9604
    %v9709 = vpack.c.b16 %v9609, %v9605
    %v9710 = vpack.c.b16 %v9614, %v9610
    %v9711 = vpack.c.b16 %v9615, %v9611
    %v9712 = vpack.c.b16 %v9616, %v9612
    %v9713 = vpack.c.b16 %v9617, %v9613
    %v9714 = vpack.c.b16 %v9622, %v9618
    %v9715 = vpack.c.b16 %v9623, %v9619
    %v9716 = vpack.c.b16 %v9624, %v9620
    %v9717 = vpack.c.b16 %v9625, %v9621
    %v9718 = vpack.c.b16 %v9630, %v9626
    %v9719 = vpack.c.b16 %v9631, %v9627
    %v9720 = vpack.c.b16 %v9632, %v9628
    %v9721 = vpack.c.b16 %v9633, %v9629
    %v9722 = vpack.c.b16 %v9638, %v9634
    %v9723 = vpack.c.b16 %v9639, %v9635
    %v9724 = vpack.c.b16 %v9640, %v9636
    %v9725 = vpack.c.b16 %v9641, %v9637
    %v9726 = vpack.c.b16 %v9646, %v9642
    %v9727 = vpack.c.b16 %v9647, %v9643
    %v9728 = vpack.c.b16 %v9648, %v9644
    %v9729 = vpack.c.b16 %v9649, %v9645
    %v9811 = vsel %vm8532, %v9407, 0
    %9813 = vmatpush.bf16.msra.mxu0 %v9678
    %9814 = vmatpush.bf16.msra.mxu0 %v9674
    %9815 = vmatpush.bf16.msra.mxu0 %v9670
    %9816 = vmatpush.bf16.msra.mxu0 %v9666
    %9817 = vmatpush.bf16.msra.mxu0 %v9662
    %9818 = vmatpush.bf16.msra.mxu0 %v9658
    %9819 = vmatpush.bf16.msra.mxu0 %v9654
    %9820 = vmatpush.bf16.msra.mxu0 %v9650
    %9821 = vmatmul.bf16.gmra.mxu0 %v9405
    %v9822 = vpop.f32.mrf.mxu0
    %v9823 = vadd.f32 0.0, %v9822
    %v9824 = vpop.f32.mrf.mxu0
    %v9825 = vadd.f32 0.0, %v9824
    %9826 = vdwg.mxu0
    %9827 = vmatpush.bf16.msra.mxu0 %v9710
    %9828 = vmatpush.bf16.msra.mxu0 %v9706
    %9829 = vmatpush.bf16.msra.mxu0 %v9702
    %9830 = vmatpush.bf16.msra.mxu0 %v9698
    %9831 = vmatpush.bf16.msra.mxu0 %v9694
    %9832 = vmatpush.bf16.msra.mxu0 %v9690
    %9833 = vmatpush.bf16.msra.mxu0 %v9686
    %9834 = vmatpush.bf16.msra.mxu0 %v9682
    %9835 = vmatmul.bf16.gmra.mxu0 %v9406
    %v9836 = vpop.f32.mrf.mxu0
    %v9837 = vadd.f32 %v9823, %v9836
    %v9838 = vpop.f32.mrf.mxu0
    %v9839 = vadd.f32 %v9825, %v9838
    %9840 = vdwg.mxu0
    %9841 = vmatpush.bf16.msra.mxu0 0
    %9842 = vmatpush.bf16.msra.mxu0 0
    %9843 = vmatpush.bf16.msra.mxu0 0
    %9844 = vmatpush.bf16.msra.mxu0 0
    %9845 = vmatpush.bf16.msra.mxu0 %v9726
    %9846 = vmatpush.bf16.msra.mxu0 %v9722
    %9847 = vmatpush.bf16.msra.mxu0 %v9718
    %9848 = vmatpush.bf16.msra.mxu0 %v9714
    %9849 = vmatmul.bf16.gmra.mxu0 %v9811
    %v9850 = vpop.f32.mrf.mxu0
    %v9851 = vadd.f32 %v9837, %v9850
    %v9852 = vpop.f32.mrf.mxu0
    %v9853 = vadd.f32 %v9839, %v9852
    %9854 = vdwg.mxu0
    %9855 = vmatpush.bf16.msra.mxu0 %v9679
    %9856 = vmatpush.bf16.msra.mxu0 %v9675
    %9857 = vmatpush.bf16.msra.mxu0 %v9671
    %9858 = vmatpush.bf16.msra.mxu0 %v9667
    %9859 = vmatpush.bf16.msra.mxu0 %v9663
    %9860 = vmatpush.bf16.msra.mxu0 %v9659
    %9861 = vmatpush.bf16.msra.mxu0 %v9655
    %9862 = vmatpush.bf16.msra.mxu0 %v9651
    %9863 = vmatmul.bf16.gmra.mxu0 %v9405
    %v9864 = vpop.f32.mrf.mxu0
    %v9865 = vadd.f32 0.0, %v9864
    %v9866 = vpop.f32.mrf.mxu0
    %v9867 = vadd.f32 0.0, %v9866
    %9868 = vdwg.mxu0
    %9869 = vmatpush.bf16.msra.mxu0 %v9711
    %9870 = vmatpush.bf16.msra.mxu0 %v9707
    %9871 = vmatpush.bf16.msra.mxu0 %v9703
    %9872 = vmatpush.bf16.msra.mxu0 %v9699
    %9873 = vmatpush.bf16.msra.mxu0 %v9695
    %9874 = vmatpush.bf16.msra.mxu0 %v9691
    %9875 = vmatpush.bf16.msra.mxu0 %v9687
    %9876 = vmatpush.bf16.msra.mxu0 %v9683
    %9877 = vmatmul.bf16.gmra.mxu0 %v9406
    %v9878 = vpop.f32.mrf.mxu0
    %v9879 = vadd.f32 %v9865, %v9878
    %v9880 = vpop.f32.mrf.mxu0
    %v9881 = vadd.f32 %v9867, %v9880
    %9882 = vdwg.mxu0
    %9883 = vmatpush.bf16.msra.mxu0 0
    %9884 = vmatpush.bf16.msra.mxu0 0
    %9885 = vmatpush.bf16.msra.mxu0 0
    %9886 = vmatpush.bf16.msra.mxu0 0
    %9887 = vmatpush.bf16.msra.mxu0 %v9727
    %9888 = vmatpush.bf16.msra.mxu0 %v9723
    %9889 = vmatpush.bf16.msra.mxu0 %v9719
    %9890 = vmatpush.bf16.msra.mxu0 %v9715
    %9891 = vmatmul.bf16.gmra.mxu0 %v9811
    %v9892 = vpop.f32.mrf.mxu0
    %v9893 = vadd.f32 %v9879, %v9892
    %v9894 = vpop.f32.mrf.mxu0
    %v9895 = vadd.f32 %v9881, %v9894
    %9896 = vdwg.mxu0
    %9897 = vmatpush.bf16.msra.mxu0 %v9680
    %9898 = vmatpush.bf16.msra.mxu0 %v9676
    %9899 = vmatpush.bf16.msra.mxu0 %v9672
    %9900 = vmatpush.bf16.msra.mxu0 %v9668
    %9901 = vmatpush.bf16.msra.mxu0 %v9664
    %9902 = vmatpush.bf16.msra.mxu0 %v9660
    %9903 = vmatpush.bf16.msra.mxu0 %v9656
    %9904 = vmatpush.bf16.msra.mxu0 %v9652
    %9905 = vmatmul.bf16.gmra.mxu0 %v9405
    %v9906 = vpop.f32.mrf.mxu0
    %v9907 = vadd.f32 0.0, %v9906
    %v9908 = vpop.f32.mrf.mxu0
    %v9909 = vadd.f32 0.0, %v9908
    %9910 = vdwg.mxu0
    %9911 = vmatpush.bf16.msra.mxu0 %v9712
    %9912 = vmatpush.bf16.msra.mxu0 %v9708
    %9913 = vmatpush.bf16.msra.mxu0 %v9704
    %9914 = vmatpush.bf16.msra.mxu0 %v9700
    %9915 = vmatpush.bf16.msra.mxu0 %v9696
    %9916 = vmatpush.bf16.msra.mxu0 %v9692
    %9917 = vmatpush.bf16.msra.mxu0 %v9688
    %9918 = vmatpush.bf16.msra.mxu0 %v9684
    %9919 = vmatmul.bf16.gmra.mxu0 %v9406
    %v9920 = vpop.f32.mrf.mxu0
    %v9921 = vadd.f32 %v9907, %v9920
    %v9922 = vpop.f32.mrf.mxu0
    %v9923 = vadd.f32 %v9909, %v9922
    %9924 = vdwg.mxu0
    %9925 = vmatpush.bf16.msra.mxu0 0
    %9926 = vmatpush.bf16.msra.mxu0 0
    %9927 = vmatpush.bf16.msra.mxu0 0
    %9928 = vmatpush.bf16.msra.mxu0 0
    %9929 = vmatpush.bf16.msra.mxu0 %v9728
    %9930 = vmatpush.bf16.msra.mxu0 %v9724
    %9931 = vmatpush.bf16.msra.mxu0 %v9720
    %9932 = vmatpush.bf16.msra.mxu0 %v9716
    %9933 = vmatmul.bf16.gmra.mxu0 %v9811
    %v9934 = vpop.f32.mrf.mxu0
    %v9935 = vadd.f32 %v9921, %v9934
    %v9936 = vpop.f32.mrf.mxu0
    %v9937 = vadd.f32 %v9923, %v9936
    %9938 = vdwg.mxu0
    %9939 = vmatpush.bf16.msra.mxu0 %v9681
    %9940 = vmatpush.bf16.msra.mxu0 %v9677
    %9941 = vmatpush.bf16.msra.mxu0 %v9673
    %9942 = vmatpush.bf16.msra.mxu0 %v9669
    %9943 = vmatpush.bf16.msra.mxu0 %v9665
    %9944 = vmatpush.bf16.msra.mxu0 %v9661
    %9945 = vmatpush.bf16.msra.mxu0 %v9657
    %9946 = vmatpush.bf16.msra.mxu0 %v9653
    %9947 = vmatmul.bf16.gmra.mxu0 %v9405
    %v9948 = vpop.f32.mrf.mxu0
    %v9949 = vadd.f32 0.0, %v9948
    %v9950 = vpop.f32.mrf.mxu0
    %v9951 = vadd.f32 0.0, %v9950
    %9952 = vdwg.mxu0
    %9953 = vmatpush.bf16.msra.mxu0 %v9713
    %9954 = vmatpush.bf16.msra.mxu0 %v9709
    %9955 = vmatpush.bf16.msra.mxu0 %v9705
    %9956 = vmatpush.bf16.msra.mxu0 %v9701
    %9957 = vmatpush.bf16.msra.mxu0 %v9697
    %9958 = vmatpush.bf16.msra.mxu0 %v9693
    %9959 = vmatpush.bf16.msra.mxu0 %v9689
    %9960 = vmatpush.bf16.msra.mxu0 %v9685
    %9961 = vmatmul.bf16.gmra.mxu0 %v9406
    %v9962 = vpop.f32.mrf.mxu0
    %v9963 = vadd.f32 %v9949, %v9962
    %v9964 = vpop.f32.mrf.mxu0
    %v9965 = vadd.f32 %v9951, %v9964
    %9966 = vdwg.mxu0
    %9967 = vmatpush.bf16.msra.mxu0 0
    %9968 = vmatpush.bf16.msra.mxu0 0
    %9969 = vmatpush.bf16.msra.mxu0 0
    %9970 = vmatpush.bf16.msra.mxu0 0
    %9971 = vmatpush.bf16.msra.mxu0 %v9729
    %9972 = vmatpush.bf16.msra.mxu0 %v9725
    %9973 = vmatpush.bf16.msra.mxu0 %v9721
    %9974 = vmatpush.bf16.msra.mxu0 %v9717
    %9975 = vmatmul.bf16.gmra.mxu0 %v9811
    %v9976 = vpop.f32.mrf.mxu0
    %v9977 = vadd.f32 %v9963, %v9976
    %v9978 = vpop.f32.mrf.mxu0
    %v9979 = vadd.f32 %v9965, %v9978
    %9980 = vdwg.mxu0
    %v9981 = vadd.f32 %v9160, %v9851
    %v9982 = vadd.f32 %v9202, %v9893
    %v9983 = vadd.f32 %v9244, %v9935
    %v9984 = vadd.f32 %v9286, %v9977
    %v9985 = vadd.f32 %v9162, %v9853
    %v9986 = vadd.f32 %v9204, %v9895
    %v9987 = vadd.f32 %v9246, %v9937
    %v9988 = vadd.f32 %v9288, %v9979
    %v9990 = vperm.slane %v7895, 0
    %v9991 = vperm.slane %v7895, 1
    %v9992 = vperm.slane %v7895, 2
    %v9993 = vperm.slane %v7895, 3
    %v9998 = vadd.f32 %v9981, %v9990
    %v9999 = vadd.f32 %v9982, %v9991
    %v10000 = vadd.f32 %v9983, %v9992
    %v10001 = vadd.f32 %v9984, %v9993
    %v10002 = vadd.f32 %v9985, %v9990
    %v10003 = vadd.f32 %v9986, %v9991
    %v10004 = vadd.f32 %v9987, %v9992
    %v10005 = vadd.f32 %v9988, %v9993
    %v10006 = vmax.f32 %v9998, 0.0
    %v10007 = vmax.f32 %v9999, 0.0
    %v10008 = vmax.f32 %v10000, 0.0
    %v10009 = vmax.f32 %v10001, 0.0
    %v10010 = vmax.f32 %v10002, 0.0
    %v10011 = vmax.f32 %v10003, 0.0
    %v10012 = vmax.f32 %v10004, 0.0
    %v10013 = vmax.f32 %v10005, 0.0
    %v10022 = vrot.slane %v10007, 6
    %v10023 = vrot.slane %v10008, 4
    %v10024 = vrot.slane %v10009, 2
    %v10025 = vrot.slane %v10011, 6
    %v10026 = vrot.slane %v10012, 4
    %v10027 = vrot.slane %v10013, 2
    %v10028 = vsel %vm1612, %v10006, %v10022
    %v10029 = vsel %vm1614, %v10023, %v10024
    %v10030 = vsel %vm1616, %v10028, %v10029
    %v10031 = vsel %vm1618, %v10006, %v10022
    %v10032 = vsel %vm1620, %v10024, %v10023
    %v10033 = vsel %vm1622, %v10031, %v10032
    %v10034 = vrot.slane %v10033, 2
    %v10035 = vsel %vm1614, %v10006, %v10022
    %v10036 = vsel %vm1612, %v10023, %v10024
    %v10037 = vsel %vm1616, %v10036, %v10035
    %v10038 = vrot.slane %v10037, 4
    %v10039 = vsel %vm1620, %v10022, %v10006
    %v10040 = vsel %vm1618, %v10023, %v10024
    %v10041 = vsel %vm1622, %v10040, %v10039
    %v10042 = vrot.slane %v10041, 6
    %v10043 = vsel %vm1612, %v10010, %v10025
    %v10044 = vsel %vm1614, %v10026, %v10027
    %v10045 = vsel %vm1616, %v10043, %v10044
    %v10046 = vsel %vm1618, %v10010, %v10025
    %v10047 = vsel %vm1620, %v10027, %v10026
    %v10048 = vsel %vm1622, %v10046, %v10047
    %v10049 = vrot.slane %v10048, 2
    %v10050 = vsel %vm1614, %v10010, %v10025
    %v10051 = vsel %vm1612, %v10026, %v10027
    %v10052 = vsel %vm1616, %v10051, %v10050
    %v10053 = vrot.slane %v10052, 4
    %v10054 = vsel %vm1620, %v10025, %v10010
    %v10055 = vsel %vm1618, %v10026, %v10027
    %v10056 = vsel %vm1622, %v10055, %v10054
    %v10057 = vrot.slane %v10056, 6
    %v10066 = vrot.slane %v10030, 7
    %v10067 = vrot.slane %v10066, 2
    %v10068 = vrot.slane %v10034, 7
    %v10069 = vrot.slane %v10068, 2
    %v10070 = vrot.slane %v10038, 7
    %v10071 = vrot.slane %v10070, 2
    %v10072 = vrot.slane %v10042, 7
    %v10073 = vrot.slane %v10072, 2
    %v10074 = vrot.slane %v10045, 7
    %v10075 = vrot.slane %v10074, 2
    %v10076 = vrot.slane %v10049, 7
    %v10077 = vrot.slane %v10076, 2
    %v10078 = vrot.slane %v10053, 7
    %v10079 = vrot.slane %v10078, 2
    %v10080 = vrot.slane %v10057, 7
    %v10081 = vrot.slane %v10080, 2
    %v10090 = vmax.f32 %v10030, %v10067
    %v10091 = vmax.f32 %v10034, %v10069
    %v10092 = vmax.f32 %v10038, %v10071
    %v10093 = vmax.f32 %v10042, %v10073
    %v10094 = vmax.f32 %v10045, %v10075
    %v10095 = vmax.f32 %v10049, %v10077
    %v10096 = vmax.f32 %v10053, %v10079
    %v10097 = vmax.f32 %v10057, %v10081
    %v10106 = vperm.slane %v10090, 0
    %v10107 = vperm.slane %v10090, 2
    %v10108 = vperm.slane %v10090, 4
    %v10109 = vperm.slane %v10090, 6
    %v10110 = vperm.slane %v10091, 0
    %v10111 = vperm.slane %v10091, 2
    %v10112 = vperm.slane %v10091, 4
    %v10113 = vperm.slane %v10091, 6
    %v10114 = vperm.slane %v10092, 0
    %v10115 = vperm.slane %v10092, 2
    %v10116 = vperm.slane %v10092, 4
    %v10117 = vperm.slane %v10092, 6
    %v10118 = vperm.slane %v10093, 0
    %v10119 = vperm.slane %v10093, 2
    %v10120 = vperm.slane %v10093, 4
    %v10121 = vperm.slane %v10093, 6
    %v10122 = vperm.slane %v10094, 0
    %v10123 = vperm.slane %v10094, 2
    %v10124 = vperm.slane %v10094, 4
    %v10125 = vperm.slane %v10094, 6
    %v10126 = vperm.slane %v10095, 0
    %v10127 = vperm.slane %v10095, 2
    %v10128 = vperm.slane %v10095, 4
    %v10129 = vperm.slane %v10095, 6
    %v10130 = vperm.slane %v10096, 0
    %v10131 = vperm.slane %v10096, 2
    %v10132 = vperm.slane %v10096, 4
    %v10133 = vperm.slane %v10096, 6
    %v10134 = vperm.slane %v10097, 0
    %v10135 = vperm.slane %v10097, 2
    %v10136 = vperm.slane %v10097, 4
    %v10137 = vperm.slane %v10097, 6
    %v10170 = vpack.c.bf16 %v10106, %v10106
    %v10171 = vpack.c.bf16 %v10107, %v10107
    %v10172 = vpack.c.bf16 %v10108, %v10108
    %v10173 = vpack.c.bf16 %v10109, %v10109
    %v10174 = vpack.c.bf16 %v10110, %v10110
    %v10175 = vpack.c.bf16 %v10111, %v10111
    %v10176 = vpack.c.bf16 %v10112, %v10112
    %v10177 = vpack.c.bf16 %v10113, %v10113
    %v10178 = vpack.c.bf16 %v10114, %v10114
    %v10179 = vpack.c.bf16 %v10115, %v10115
    %v10180 = vpack.c.bf16 %v10116, %v10116
    %v10181 = vpack.c.bf16 %v10117, %v10117
    %v10182 = vpack.c.bf16 %v10118, %v10118
    %v10183 = vpack.c.bf16 %v10119, %v10119
    %v10184 = vpack.c.bf16 %v10120, %v10120
    %v10185 = vpack.c.bf16 %v10121, %v10121
    %v10186 = vpack.c.bf16 %v10122, %v10122
    %v10187 = vpack.c.bf16 %v10123, %v10123
    %v10188 = vpack.c.bf16 %v10124, %v10124
    %v10189 = vpack.c.bf16 %v10125, %v10125
    %v10190 = vpack.c.bf16 %v10126, %v10126
    %v10191 = vpack.c.bf16 %v10127, %v10127
    %v10192 = vpack.c.bf16 %v10128, %v10128
    %v10193 = vpack.c.bf16 %v10129, %v10129
    %v10194 = vpack.c.bf16 %v10130, %v10130
    %v10195 = vpack.c.bf16 %v10131, %v10131
    %v10196 = vpack.c.bf16 %v10132, %v10132
    %v10197 = vpack.c.bf16 %v10133, %v10133
    %v10198 = vpack.c.bf16 %v10134, %v10134
    %v10199 = vpack.c.bf16 %v10135, %v10135
    %v10200 = vpack.c.bf16 %v10136, %v10136
    %v10201 = vpack.c.bf16 %v10137, %v10137
    %v10202 = vld [vmem:[#allocation15] sm:$0xff]
    %v10203 = vld [vmem:[#allocation15 + $0x8] sm:$0xff]
    %v10204 = vld [vmem:[#allocation15 + $0x10] sm:$0xff]
    %v10205 = vld [vmem:[#allocation15 + $0x18] sm:$0xff]
    %v10206 = vld [vmem:[#allocation15 + $0x20] sm:$0xff]
    %v10207 = vld [vmem:[#allocation15 + $0x28] sm:$0xff]
    %v10208 = vld [vmem:[#allocation15 + $0x30] sm:$0xff]
    %v10209 = vld [vmem:[#allocation15 + $0x38] sm:$0xff]
    %v10210 = vld [vmem:[#allocation15 + $0x40] sm:$0xff]
    %v10211 = vld [vmem:[#allocation15 + $0x48] sm:$0xff]
    %v10212 = vld [vmem:[#allocation15 + $0x50] sm:$0xff]
    %v10213 = vld [vmem:[#allocation15 + $0x58] sm:$0xff]
    %v10214 = vld [vmem:[#allocation15 + $0x60] sm:$0xff]
    %v10215 = vld [vmem:[#allocation15 + $0x68] sm:$0xff]
    %v10216 = vld [vmem:[#allocation15 + $0x70] sm:$0xff]
    %v10217 = vld [vmem:[#allocation15 + $0x78] sm:$0xff]
    %v10218 = vld [vmem:[#allocation15 + $0x80] sm:$0xff]
    %v10219 = vld [vmem:[#allocation15 + $0x88] sm:$0xff]
    %v10220 = vld [vmem:[#allocation15 + $0x90] sm:$0xff]
    %v10221 = vld [vmem:[#allocation15 + $0x98] sm:$0xff]
    %v10222 = vld [vmem:[#allocation15 + $0xa0] sm:$0xff]
    %v10223 = vld [vmem:[#allocation15 + $0xa8] sm:$0xff]
    %v10224 = vld [vmem:[#allocation15 + $0xb0] sm:$0xff]
    %v10225 = vld [vmem:[#allocation15 + $0xb8] sm:$0xff]
    %v10226 = vld [vmem:[#allocation15 + $0xc0] sm:$0xff]
    %v10227 = vld [vmem:[#allocation15 + $0xc8] sm:$0xff]
    %v10228 = vld [vmem:[#allocation15 + $0xd0] sm:$0xff]
    %v10229 = vld [vmem:[#allocation15 + $0xd8] sm:$0xff]
    %v10230 = vld [vmem:[#allocation15 + $0xe0] sm:$0xff]
    %v10231 = vld [vmem:[#allocation15 + $0xe8] sm:$0xff]
    %v10232 = vld [vmem:[#allocation15 + $0xf0] sm:$0xff]
    %v10233 = vld [vmem:[#allocation15 + $0xf8] sm:$0xff]
    %v10234 = vld [vmem:[#allocation15 + $0x100] sm:$0xff]
    %v10235 = vld [vmem:[#allocation15 + $0x108] sm:$0xff]
    %v10236 = vld [vmem:[#allocation15 + $0x110] sm:$0xff]
    %v10237 = vld [vmem:[#allocation15 + $0x118] sm:$0xff]
    %v10238 = vld [vmem:[#allocation15 + $0x120] sm:$0xff]
    %v10239 = vld [vmem:[#allocation15 + $0x128] sm:$0xff]
    %v10240 = vld [vmem:[#allocation15 + $0x130] sm:$0xff]
    %v10241 = vld [vmem:[#allocation15 + $0x138] sm:$0xff]
    %v10242 = vld [vmem:[#allocation15 + $0x140] sm:$0xff]
    %v10243 = vld [vmem:[#allocation15 + $0x148] sm:$0xff]
    %v10244 = vld [vmem:[#allocation15 + $0x150] sm:$0xff]
    %v10245 = vld [vmem:[#allocation15 + $0x158] sm:$0xff]
    %v10246 = vld [vmem:[#allocation15 + $0x160] sm:$0xff]
    %v10247 = vld [vmem:[#allocation15 + $0x168] sm:$0xff]
    %v10248 = vld [vmem:[#allocation15 + $0x170] sm:$0xff]
    %v10249 = vld [vmem:[#allocation15 + $0x178] sm:$0xff]
    %v10250 = vld [vmem:[#allocation15 + $0x180] sm:$0xff]
    %v10251 = vld [vmem:[#allocation15 + $0x188] sm:$0xff]
    %v10252 = vld [vmem:[#allocation15 + $0x190] sm:$0xff]
    %v10253 = vld [vmem:[#allocation15 + $0x198] sm:$0xff]
    %v10254 = vld [vmem:[#allocation15 + $0x1a0] sm:$0xff]
    %v10255 = vld [vmem:[#allocation15 + $0x1a8] sm:$0xff]
    %v10256 = vld [vmem:[#allocation15 + $0x1b0] sm:$0xff]
    %v10257 = vld [vmem:[#allocation15 + $0x1b8] sm:$0xff]
    %v10258 = vld [vmem:[#allocation15 + $0x1c0] sm:$0xff]
    %v10259 = vld [vmem:[#allocation15 + $0x1c8] sm:$0xff]
    %v10260 = vld [vmem:[#allocation15 + $0x1d0] sm:$0xff]
    %v10261 = vld [vmem:[#allocation15 + $0x1d8] sm:$0xff]
    %v10262 = vld [vmem:[#allocation15 + $0x1e0] sm:$0xff]
    %v10263 = vld [vmem:[#allocation15 + $0x1e8] sm:$0xff]
    %v10264 = vld [vmem:[#allocation15 + $0x1f0] sm:$0xff]
    %v10265 = vld [vmem:[#allocation15 + $0x1f8] sm:$0xff]
    %v10266 = vld [vmem:[#allocation15 + $0x200] sm:$0xff]
    %v10267 = vld [vmem:[#allocation15 + $0x208] sm:$0xff]
    %v10268 = vld [vmem:[#allocation15 + $0x210] sm:$0xff]
    %v10269 = vld [vmem:[#allocation15 + $0x218] sm:$0xff]
    %v10270 = vld [vmem:[#allocation15 + $0x220] sm:$0xff]
    %v10271 = vld [vmem:[#allocation15 + $0x228] sm:$0xff]
    %v10272 = vld [vmem:[#allocation15 + $0x230] sm:$0xff]
    %v10273 = vld [vmem:[#allocation15 + $0x238] sm:$0xff]
    %v10274 = vld [vmem:[#allocation15 + $0x240] sm:$0xff]
    %v10275 = vld [vmem:[#allocation15 + $0x248] sm:$0xff]
    %v10276 = vld [vmem:[#allocation15 + $0x250] sm:$0xff]
    %v10277 = vld [vmem:[#allocation15 + $0x258] sm:$0xff]
    %v10278 = vld [vmem:[#allocation15 + $0x260] sm:$0xff]
    %v10279 = vld [vmem:[#allocation15 + $0x268] sm:$0xff]
    %v10280 = vld [vmem:[#allocation15 + $0x270] sm:$0xff]
    %v10281 = vld [vmem:[#allocation15 + $0x278] sm:$0xff]
    %v10282 = vld [vmem:[#allocation15 + $0x280] sm:$0xff]
    %v10283 = vld [vmem:[#allocation15 + $0x288] sm:$0xff]
    %v10284 = vld [vmem:[#allocation15 + $0x290] sm:$0xff]
    %v10285 = vld [vmem:[#allocation15 + $0x298] sm:$0xff]
    %v10286 = vld [vmem:[#allocation15 + $0x2a0] sm:$0xff]
    %v10287 = vld [vmem:[#allocation15 + $0x2a8] sm:$0xff]
    %v10288 = vld [vmem:[#allocation15 + $0x2b0] sm:$0xff]
    %v10289 = vld [vmem:[#allocation15 + $0x2b8] sm:$0xff]
    %v10290 = vld [vmem:[#allocation15 + $0x2c0] sm:$0xff]
    %v10291 = vld [vmem:[#allocation15 + $0x2c8] sm:$0xff]
    %v10292 = vld [vmem:[#allocation15 + $0x2d0] sm:$0xff]
    %v10293 = vld [vmem:[#allocation15 + $0x2d8] sm:$0xff]
    %v10294 = vld [vmem:[#allocation15 + $0x2e0] sm:$0xff]
    %v10295 = vld [vmem:[#allocation15 + $0x2e8] sm:$0xff]
    %v10296 = vld [vmem:[#allocation15 + $0x2f0] sm:$0xff]
    %v10297 = vld [vmem:[#allocation15 + $0x2f8] sm:$0xff]
    %v10298 = vld [vmem:[#allocation15 + $0x300] sm:$0xff]
    %v10299 = vld [vmem:[#allocation15 + $0x308] sm:$0xff]
    %v10300 = vld [vmem:[#allocation15 + $0x310] sm:$0xff]
    %v10301 = vld [vmem:[#allocation15 + $0x318] sm:$0xff]
    %v10302 = vld [vmem:[#allocation15 + $0x320] sm:$0xff]
    %v10303 = vld [vmem:[#allocation15 + $0x328] sm:$0xff]
    %v10304 = vld [vmem:[#allocation15 + $0x330] sm:$0xff]
    %v10305 = vld [vmem:[#allocation15 + $0x338] sm:$0xff]
    %v10306 = vld [vmem:[#allocation15 + $0x340] sm:$0xff]
    %v10307 = vld [vmem:[#allocation15 + $0x348] sm:$0xff]
    %v10308 = vld [vmem:[#allocation15 + $0x350] sm:$0xff]
    %v10309 = vld [vmem:[#allocation15 + $0x358] sm:$0xff]
    %v10310 = vld [vmem:[#allocation15 + $0x360] sm:$0xff]
    %v10311 = vld [vmem:[#allocation15 + $0x368] sm:$0xff]
    %v10312 = vld [vmem:[#allocation15 + $0x370] sm:$0xff]
    %v10313 = vld [vmem:[#allocation15 + $0x378] sm:$0xff]
    %v10314 = vld [vmem:[#allocation15 + $0x380] sm:$0xff]
    %v10315 = vld [vmem:[#allocation15 + $0x388] sm:$0xff]
    %v10316 = vld [vmem:[#allocation15 + $0x390] sm:$0xff]
    %v10317 = vld [vmem:[#allocation15 + $0x398] sm:$0xff]
    %v10318 = vld [vmem:[#allocation15 + $0x3a0] sm:$0xff]
    %v10319 = vld [vmem:[#allocation15 + $0x3a8] sm:$0xff]
    %v10320 = vld [vmem:[#allocation15 + $0x3b0] sm:$0xff]
    %v10321 = vld [vmem:[#allocation15 + $0x3b8] sm:$0xff]
    %v10322 = vld [vmem:[#allocation15 + $0x3c0] sm:$0xff]
    %v10323 = vld [vmem:[#allocation15 + $0x3c8] sm:$0xff]
    %v10324 = vld [vmem:[#allocation15 + $0x3d0] sm:$0xff]
    %v10325 = vld [vmem:[#allocation15 + $0x3d8] sm:$0xff]
    %v10326 = vld [vmem:[#allocation15 + $0x3e0] sm:$0xff]
    %v10327 = vld [vmem:[#allocation15 + $0x3e8] sm:$0xff]
    %v10328 = vld [vmem:[#allocation15 + $0x3f0] sm:$0xff]
    %v10329 = vld [vmem:[#allocation15 + $0x3f8] sm:$0xff]
    %v10362 = vunpack.c.l.b16 %v10170
    %v10363 = vunpack.c.l.b16 %v10171
    %v10364 = vunpack.c.l.b16 %v10172
    %v10365 = vunpack.c.l.b16 %v10173
    %v10366 = vunpack.c.l.b16 %v10174
    %v10367 = vunpack.c.l.b16 %v10175
    %v10368 = vunpack.c.l.b16 %v10176
    %v10369 = vunpack.c.l.b16 %v10177
    %v10370 = vunpack.c.l.b16 %v10178
    %v10371 = vunpack.c.l.b16 %v10179
    %v10372 = vunpack.c.l.b16 %v10180
    %v10373 = vunpack.c.l.b16 %v10181
    %v10374 = vunpack.c.l.b16 %v10182
    %v10375 = vunpack.c.l.b16 %v10183
    %v10376 = vunpack.c.l.b16 %v10184
    %v10377 = vunpack.c.l.b16 %v10185
    %v10378 = vunpack.c.l.b16 %v10186
    %v10379 = vunpack.c.l.b16 %v10187
    %v10380 = vunpack.c.l.b16 %v10188
    %v10381 = vunpack.c.l.b16 %v10189
    %v10382 = vunpack.c.l.b16 %v10190
    %v10383 = vunpack.c.l.b16 %v10191
    %v10384 = vunpack.c.l.b16 %v10192
    %v10385 = vunpack.c.l.b16 %v10193
    %v10386 = vunpack.c.l.b16 %v10194
    %v10387 = vunpack.c.l.b16 %v10195
    %v10388 = vunpack.c.l.b16 %v10196
    %v10389 = vunpack.c.l.b16 %v10197
    %v10390 = vunpack.c.l.b16 %v10198
    %v10391 = vunpack.c.l.b16 %v10199
    %v10392 = vunpack.c.l.b16 %v10200
    %v10393 = vunpack.c.l.b16 %v10201
    %v10394 = vrot.slane %v10366, 7
    %v10395 = vsel %vm2699, %v10394, %v10362
    %v10396 = vrot.slane %v10370, 6
    %v10397 = vsel %vm2702, %v10396, %v10395
    %v10398 = vrot.slane %v10374, 5
    %v10399 = vsel %vm2705, %v10398, %v10397
    %v10400 = vrot.slane %v10378, 4
    %v10401 = vsel %vm2708, %v10400, %v10399
    %v10402 = vrot.slane %v10382, 3
    %v10403 = vsel %vm2711, %v10402, %v10401
    %v10404 = vrot.slane %v10386, 2
    %v10405 = vsel %vm2714, %v10404, %v10403
    %v10406 = vrot.slane %v10390, 1
    %v10407 = vsel %vm2717, %v10406, %v10405
    %v10408 = vrot.slane %v10367, 7
    %v10409 = vsel %vm2699, %v10408, %v10363
    %v10410 = vrot.slane %v10371, 6
    %v10411 = vsel %vm2702, %v10410, %v10409
    %v10412 = vrot.slane %v10375, 5
    %v10413 = vsel %vm2705, %v10412, %v10411
    %v10414 = vrot.slane %v10379, 4
    %v10415 = vsel %vm2708, %v10414, %v10413
    %v10416 = vrot.slane %v10383, 3
    %v10417 = vsel %vm2711, %v10416, %v10415
    %v10418 = vrot.slane %v10387, 2
    %v10419 = vsel %vm2714, %v10418, %v10417
    %v10420 = vrot.slane %v10391, 1
    %v10421 = vsel %vm2717, %v10420, %v10419
    %v10422 = vrot.slane %v10368, 7
    %v10423 = vsel %vm2699, %v10422, %v10364
    %v10424 = vrot.slane %v10372, 6
    %v10425 = vsel %vm2702, %v10424, %v10423
    %v10426 = vrot.slane %v10376, 5
    %v10427 = vsel %vm2705, %v10426, %v10425
    %v10428 = vrot.slane %v10380, 4
    %v10429 = vsel %vm2708, %v10428, %v10427
    %v10430 = vrot.slane %v10384, 3
    %v10431 = vsel %vm2711, %v10430, %v10429
    %v10432 = vrot.slane %v10388, 2
    %v10433 = vsel %vm2714, %v10432, %v10431
    %v10434 = vrot.slane %v10392, 1
    %v10435 = vsel %vm2717, %v10434, %v10433
    %v10436 = vrot.slane %v10369, 7
    %v10437 = vsel %vm2699, %v10436, %v10365
    %v10438 = vrot.slane %v10373, 6
    %v10439 = vsel %vm2702, %v10438, %v10437
    %v10440 = vrot.slane %v10377, 5
    %v10441 = vsel %vm2705, %v10440, %v10439
    %v10442 = vrot.slane %v10381, 4
    %v10443 = vsel %vm2708, %v10442, %v10441
    %v10444 = vrot.slane %v10385, 3
    %v10445 = vsel %vm2711, %v10444, %v10443
    %v10446 = vrot.slane %v10389, 2
    %v10447 = vsel %vm2714, %v10446, %v10445
    %v10448 = vrot.slane %v10393, 1
    %v10449 = vsel %vm2717, %v10448, %v10447
    %v10450 = vpack.c.b16 %v10407, %v10407
    %v10451 = vpack.c.b16 %v10421, %v10421
    %v10452 = vpack.c.b16 %v10435, %v10435
    %v10453 = vpack.c.b16 %v10449, %v10449
    %v10586 = vunpack.c.l.b16 %v10202
    %v10587 = vunpack.c.h.b16 %v10202
    %v10588 = vunpack.c.l.b16 %v10203
    %v10589 = vunpack.c.h.b16 %v10203
    %v10590 = vunpack.c.l.b16 %v10204
    %v10591 = vunpack.c.h.b16 %v10204
    %v10592 = vunpack.c.l.b16 %v10205
    %v10593 = vunpack.c.h.b16 %v10205
    %v10594 = vunpack.c.l.b16 %v10206
    %v10595 = vunpack.c.h.b16 %v10206
    %v10596 = vunpack.c.l.b16 %v10207
    %v10597 = vunpack.c.h.b16 %v10207
    %v10598 = vunpack.c.l.b16 %v10208
    %v10599 = vunpack.c.h.b16 %v10208
    %v10600 = vunpack.c.l.b16 %v10209
    %v10601 = vunpack.c.h.b16 %v10209
    %v10602 = vunpack.c.l.b16 %v10210
    %v10603 = vunpack.c.h.b16 %v10210
    %v10604 = vunpack.c.l.b16 %v10211
    %v10605 = vunpack.c.h.b16 %v10211
    %v10606 = vunpack.c.l.b16 %v10212
    %v10607 = vunpack.c.h.b16 %v10212
    %v10608 = vunpack.c.l.b16 %v10213
    %v10609 = vunpack.c.h.b16 %v10213
    %v10610 = vunpack.c.l.b16 %v10214
    %v10611 = vunpack.c.h.b16 %v10214
    %v10612 = vunpack.c.l.b16 %v10215
    %v10613 = vunpack.c.h.b16 %v10215
    %v10614 = vunpack.c.l.b16 %v10216
    %v10615 = vunpack.c.h.b16 %v10216
    %v10616 = vunpack.c.l.b16 %v10217
    %v10617 = vunpack.c.h.b16 %v10217
    %v10618 = vunpack.c.l.b16 %v10218
    %v10619 = vunpack.c.h.b16 %v10218
    %v10620 = vunpack.c.l.b16 %v10219
    %v10621 = vunpack.c.h.b16 %v10219
    %v10622 = vunpack.c.l.b16 %v10220
    %v10623 = vunpack.c.h.b16 %v10220
    %v10624 = vunpack.c.l.b16 %v10221
    %v10625 = vunpack.c.h.b16 %v10221
    %v10626 = vunpack.c.l.b16 %v10222
    %v10627 = vunpack.c.h.b16 %v10222
    %v10628 = vunpack.c.l.b16 %v10223
    %v10629 = vunpack.c.h.b16 %v10223
    %v10630 = vunpack.c.l.b16 %v10224
    %v10631 = vunpack.c.h.b16 %v10224
    %v10632 = vunpack.c.l.b16 %v10225
    %v10633 = vunpack.c.h.b16 %v10225
    %v10634 = vunpack.c.l.b16 %v10226
    %v10635 = vunpack.c.h.b16 %v10226
    %v10636 = vunpack.c.l.b16 %v10227
    %v10637 = vunpack.c.h.b16 %v10227
    %v10638 = vunpack.c.l.b16 %v10228
    %v10639 = vunpack.c.h.b16 %v10228
    %v10640 = vunpack.c.l.b16 %v10229
    %v10641 = vunpack.c.h.b16 %v10229
    %v10642 = vunpack.c.l.b16 %v10230
    %v10643 = vunpack.c.h.b16 %v10230
    %v10644 = vunpack.c.l.b16 %v10231
    %v10645 = vunpack.c.h.b16 %v10231
    %v10646 = vunpack.c.l.b16 %v10232
    %v10647 = vunpack.c.h.b16 %v10232
    %v10648 = vunpack.c.l.b16 %v10233
    %v10649 = vunpack.c.h.b16 %v10233
    %v10650 = vunpack.c.l.b16 %v10234
    %v10651 = vunpack.c.h.b16 %v10234
    %v10652 = vunpack.c.l.b16 %v10235
    %v10653 = vunpack.c.h.b16 %v10235
    %v10654 = vunpack.c.l.b16 %v10236
    %v10655 = vunpack.c.h.b16 %v10236
    %v10656 = vunpack.c.l.b16 %v10237
    %v10657 = vunpack.c.h.b16 %v10237
    %v10658 = vunpack.c.l.b16 %v10238
    %v10659 = vunpack.c.h.b16 %v10238
    %v10660 = vunpack.c.l.b16 %v10239
    %v10661 = vunpack.c.h.b16 %v10239
    %v10662 = vunpack.c.l.b16 %v10240
    %v10663 = vunpack.c.h.b16 %v10240
    %v10664 = vunpack.c.l.b16 %v10241
    %v10665 = vunpack.c.h.b16 %v10241
    %v10666 = vunpack.c.l.b16 %v10242
    %v10667 = vunpack.c.h.b16 %v10242
    %v10668 = vunpack.c.l.b16 %v10243
    %v10669 = vunpack.c.h.b16 %v10243
    %v10670 = vunpack.c.l.b16 %v10244
    %v10671 = vunpack.c.h.b16 %v10244
    %v10672 = vunpack.c.l.b16 %v10245
    %v10673 = vunpack.c.h.b16 %v10245
    %v10674 = vunpack.c.l.b16 %v10246
    %v10675 = vunpack.c.h.b16 %v10246
    %v10676 = vunpack.c.l.b16 %v10247
    %v10677 = vunpack.c.h.b16 %v10247
    %v10678 = vunpack.c.l.b16 %v10248
    %v10679 = vunpack.c.h.b16 %v10248
    %v10680 = vunpack.c.l.b16 %v10249
    %v10681 = vunpack.c.h.b16 %v10249
    %v10682 = vunpack.c.l.b16 %v10250
    %v10683 = vunpack.c.h.b16 %v10250
    %v10684 = vunpack.c.l.b16 %v10251
    %v10685 = vunpack.c.h.b16 %v10251
    %v10686 = vunpack.c.l.b16 %v10252
    %v10687 = vunpack.c.h.b16 %v10252
    %v10688 = vunpack.c.l.b16 %v10253
    %v10689 = vunpack.c.h.b16 %v10253
    %v10690 = vunpack.c.l.b16 %v10254
    %v10691 = vunpack.c.h.b16 %v10254
    %v10692 = vunpack.c.l.b16 %v10255
    %v10693 = vunpack.c.h.b16 %v10255
    %v10694 = vunpack.c.l.b16 %v10256
    %v10695 = vunpack.c.h.b16 %v10256
    %v10696 = vunpack.c.l.b16 %v10257
    %v10697 = vunpack.c.h.b16 %v10257
    %v10698 = vunpack.c.l.b16 %v10258
    %v10699 = vunpack.c.h.b16 %v10258
    %v10700 = vunpack.c.l.b16 %v10259
    %v10701 = vunpack.c.h.b16 %v10259
    %v10702 = vunpack.c.l.b16 %v10260
    %v10703 = vunpack.c.h.b16 %v10260
    %v10704 = vunpack.c.l.b16 %v10261
    %v10705 = vunpack.c.h.b16 %v10261
    %v10706 = vunpack.c.l.b16 %v10262
    %v10707 = vunpack.c.h.b16 %v10262
    %v10708 = vunpack.c.l.b16 %v10263
    %v10709 = vunpack.c.h.b16 %v10263
    %v10710 = vunpack.c.l.b16 %v10264
    %v10711 = vunpack.c.h.b16 %v10264
    %v10712 = vunpack.c.l.b16 %v10265
    %v10713 = vunpack.c.h.b16 %v10265
    %v10714 = vunpack.c.l.b16 %v10266
    %v10715 = vunpack.c.h.b16 %v10266
    %v10716 = vunpack.c.l.b16 %v10267
    %v10717 = vunpack.c.h.b16 %v10267
    %v10718 = vunpack.c.l.b16 %v10268
    %v10719 = vunpack.c.h.b16 %v10268
    %v10720 = vunpack.c.l.b16 %v10269
    %v10721 = vunpack.c.h.b16 %v10269
    %v10722 = vunpack.c.l.b16 %v10270
    %v10723 = vunpack.c.h.b16 %v10270
    %v10724 = vunpack.c.l.b16 %v10271
    %v10725 = vunpack.c.h.b16 %v10271
    %v10726 = vunpack.c.l.b16 %v10272
    %v10727 = vunpack.c.h.b16 %v10272
    %v10728 = vunpack.c.l.b16 %v10273
    %v10729 = vunpack.c.h.b16 %v10273
    %v10730 = vunpack.c.l.b16 %v10274
    %v10731 = vunpack.c.h.b16 %v10274
    %v10732 = vunpack.c.l.b16 %v10275
    %v10733 = vunpack.c.h.b16 %v10275
    %v10734 = vunpack.c.l.b16 %v10276
    %v10735 = vunpack.c.h.b16 %v10276
    %v10736 = vunpack.c.l.b16 %v10277
    %v10737 = vunpack.c.h.b16 %v10277
    %v10738 = vunpack.c.l.b16 %v10278
    %v10739 = vunpack.c.h.b16 %v10278
    %v10740 = vunpack.c.l.b16 %v10279
    %v10741 = vunpack.c.h.b16 %v10279
    %v10742 = vunpack.c.l.b16 %v10280
    %v10743 = vunpack.c.h.b16 %v10280
    %v10744 = vunpack.c.l.b16 %v10281
    %v10745 = vunpack.c.h.b16 %v10281
    %v10746 = vunpack.c.l.b16 %v10282
    %v10747 = vunpack.c.h.b16 %v10282
    %v10748 = vunpack.c.l.b16 %v10283
    %v10749 = vunpack.c.h.b16 %v10283
    %v10750 = vunpack.c.l.b16 %v10284
    %v10751 = vunpack.c.h.b16 %v10284
    %v10752 = vunpack.c.l.b16 %v10285
    %v10753 = vunpack.c.h.b16 %v10285
    %v10754 = vunpack.c.l.b16 %v10286
    %v10755 = vunpack.c.h.b16 %v10286
    %v10756 = vunpack.c.l.b16 %v10287
    %v10757 = vunpack.c.h.b16 %v10287
    %v10758 = vunpack.c.l.b16 %v10288
    %v10759 = vunpack.c.h.b16 %v10288
    %v10760 = vunpack.c.l.b16 %v10289
    %v10761 = vunpack.c.h.b16 %v10289
    %v10762 = vunpack.c.l.b16 %v10290
    %v10763 = vunpack.c.h.b16 %v10290
    %v10764 = vunpack.c.l.b16 %v10291
    %v10765 = vunpack.c.h.b16 %v10291
    %v10766 = vunpack.c.l.b16 %v10292
    %v10767 = vunpack.c.h.b16 %v10292
    %v10768 = vunpack.c.l.b16 %v10293
    %v10769 = vunpack.c.h.b16 %v10293
    %v10770 = vunpack.c.l.b16 %v10294
    %v10771 = vunpack.c.h.b16 %v10294
    %v10772 = vunpack.c.l.b16 %v10295
    %v10773 = vunpack.c.h.b16 %v10295
    %v10774 = vunpack.c.l.b16 %v10296
    %v10775 = vunpack.c.h.b16 %v10296
    %v10776 = vunpack.c.l.b16 %v10297
    %v10777 = vunpack.c.h.b16 %v10297
    %v10778 = vunpack.c.l.b16 %v10298
    %v10779 = vunpack.c.h.b16 %v10298
    %v10780 = vunpack.c.l.b16 %v10299
    %v10781 = vunpack.c.h.b16 %v10299
    %v10782 = vunpack.c.l.b16 %v10300
    %v10783 = vunpack.c.h.b16 %v10300
    %v10784 = vunpack.c.l.b16 %v10301
    %v10785 = vunpack.c.h.b16 %v10301
    %v10786 = vunpack.c.l.b16 %v10302
    %v10787 = vunpack.c.h.b16 %v10302
    %v10788 = vunpack.c.l.b16 %v10303
    %v10789 = vunpack.c.h.b16 %v10303
    %v10790 = vunpack.c.l.b16 %v10304
    %v10791 = vunpack.c.h.b16 %v10304
    %v10792 = vunpack.c.l.b16 %v10305
    %v10793 = vunpack.c.h.b16 %v10305
    %v10794 = vunpack.c.l.b16 %v10306
    %v10795 = vunpack.c.h.b16 %v10306
    %v10796 = vunpack.c.l.b16 %v10307
    %v10797 = vunpack.c.h.b16 %v10307
    %v10798 = vunpack.c.l.b16 %v10308
    %v10799 = vunpack.c.h.b16 %v10308
    %v10800 = vunpack.c.l.b16 %v10309
    %v10801 = vunpack.c.h.b16 %v10309
    %v10802 = vunpack.c.l.b16 %v10310
    %v10803 = vunpack.c.h.b16 %v10310
    %v10804 = vunpack.c.l.b16 %v10311
    %v10805 = vunpack.c.h.b16 %v10311
    %v10806 = vunpack.c.l.b16 %v10312
    %v10807 = vunpack.c.h.b16 %v10312
    %v10808 = vunpack.c.l.b16 %v10313
    %v10809 = vunpack.c.h.b16 %v10313
    %v10810 = vunpack.c.l.b16 %v10314
    %v10811 = vunpack.c.h.b16 %v10314
    %v10812 = vunpack.c.l.b16 %v10315
    %v10813 = vunpack.c.h.b16 %v10315
    %v10814 = vunpack.c.l.b16 %v10316
    %v10815 = vunpack.c.h.b16 %v10316
    %v10816 = vunpack.c.l.b16 %v10317
    %v10817 = vunpack.c.h.b16 %v10317
    %v10818 = vunpack.c.l.b16 %v10318
    %v10819 = vunpack.c.h.b16 %v10318
    %v10820 = vunpack.c.l.b16 %v10319
    %v10821 = vunpack.c.h.b16 %v10319
    %v10822 = vunpack.c.l.b16 %v10320
    %v10823 = vunpack.c.h.b16 %v10320
    %v10824 = vunpack.c.l.b16 %v10321
    %v10825 = vunpack.c.h.b16 %v10321
    %v10826 = vunpack.c.l.b16 %v10322
    %v10827 = vunpack.c.h.b16 %v10322
    %v10828 = vunpack.c.l.b16 %v10323
    %v10829 = vunpack.c.h.b16 %v10323
    %v10830 = vunpack.c.l.b16 %v10324
    %v10831 = vunpack.c.h.b16 %v10324
    %v10832 = vunpack.c.l.b16 %v10325
    %v10833 = vunpack.c.h.b16 %v10325
    %v10834 = vunpack.c.l.b16 %v10326
    %v10835 = vunpack.c.h.b16 %v10326
    %v10836 = vunpack.c.l.b16 %v10327
    %v10837 = vunpack.c.h.b16 %v10327
    %v10838 = vunpack.c.l.b16 %v10328
    %v10839 = vunpack.c.h.b16 %v10328
    %v10840 = vunpack.c.l.b16 %v10329
    %v10841 = vunpack.c.h.b16 %v10329
    %v10842 = vpack.c.b16 %v10590, %v10586
    %v10843 = vpack.c.b16 %v10591, %v10587
    %v10844 = vpack.c.b16 %v10592, %v10588
    %v10845 = vpack.c.b16 %v10593, %v10589
    %v10846 = vpack.c.b16 %v10598, %v10594
    %v10847 = vpack.c.b16 %v10599, %v10595
    %v10848 = vpack.c.b16 %v10600, %v10596
    %v10849 = vpack.c.b16 %v10601, %v10597
    %v10850 = vpack.c.b16 %v10606, %v10602
    %v10851 = vpack.c.b16 %v10607, %v10603
    %v10852 = vpack.c.b16 %v10608, %v10604
    %v10853 = vpack.c.b16 %v10609, %v10605
    %v10854 = vpack.c.b16 %v10614, %v10610
    %v10855 = vpack.c.b16 %v10615, %v10611
    %v10856 = vpack.c.b16 %v10616, %v10612
    %v10857 = vpack.c.b16 %v10617, %v10613
    %v10858 = vpack.c.b16 %v10622, %v10618
    %v10859 = vpack.c.b16 %v10623, %v10619
    %v10860 = vpack.c.b16 %v10624, %v10620
    %v10861 = vpack.c.b16 %v10625, %v10621
    %v10862 = vpack.c.b16 %v10630, %v10626
    %v10863 = vpack.c.b16 %v10631, %v10627
    %v10864 = vpack.c.b16 %v10632, %v10628
    %v10865 = vpack.c.b16 %v10633, %v10629
    %v10866 = vpack.c.b16 %v10638, %v10634
    %v10867 = vpack.c.b16 %v10639, %v10635
    %v10868 = vpack.c.b16 %v10640, %v10636
    %v10869 = vpack.c.b16 %v10641, %v10637
    %v10870 = vpack.c.b16 %v10646, %v10642
    %v10871 = vpack.c.b16 %v10647, %v10643
    %v10872 = vpack.c.b16 %v10648, %v10644
    %v10873 = vpack.c.b16 %v10649, %v10645
    %v10874 = vpack.c.b16 %v10654, %v10650
    %v10875 = vpack.c.b16 %v10655, %v10651
    %v10876 = vpack.c.b16 %v10656, %v10652
    %v10877 = vpack.c.b16 %v10657, %v10653
    %v10878 = vpack.c.b16 %v10662, %v10658
    %v10879 = vpack.c.b16 %v10663, %v10659
    %v10880 = vpack.c.b16 %v10664, %v10660
    %v10881 = vpack.c.b16 %v10665, %v10661
    %v10882 = vpack.c.b16 %v10670, %v10666
    %v10883 = vpack.c.b16 %v10671, %v10667
    %v10884 = vpack.c.b16 %v10672, %v10668
    %v10885 = vpack.c.b16 %v10673, %v10669
    %v10886 = vpack.c.b16 %v10678, %v10674
    %v10887 = vpack.c.b16 %v10679, %v10675
    %v10888 = vpack.c.b16 %v10680, %v10676
    %v10889 = vpack.c.b16 %v10681, %v10677
    %v10890 = vpack.c.b16 %v10686, %v10682
    %v10891 = vpack.c.b16 %v10687, %v10683
    %v10892 = vpack.c.b16 %v10688, %v10684
    %v10893 = vpack.c.b16 %v10689, %v10685
    %v10894 = vpack.c.b16 %v10694, %v10690
    %v10895 = vpack.c.b16 %v10695, %v10691
    %v10896 = vpack.c.b16 %v10696, %v10692
    %v10897 = vpack.c.b16 %v10697, %v10693
    %v10898 = vpack.c.b16 %v10702, %v10698
    %v10899 = vpack.c.b16 %v10703, %v10699
    %v10900 = vpack.c.b16 %v10704, %v10700
    %v10901 = vpack.c.b16 %v10705, %v10701
    %v10902 = vpack.c.b16 %v10710, %v10706
    %v10903 = vpack.c.b16 %v10711, %v10707
    %v10904 = vpack.c.b16 %v10712, %v10708
    %v10905 = vpack.c.b16 %v10713, %v10709
    %v10906 = vpack.c.b16 %v10718, %v10714
    %v10907 = vpack.c.b16 %v10719, %v10715
    %v10908 = vpack.c.b16 %v10720, %v10716
    %v10909 = vpack.c.b16 %v10721, %v10717
    %v10910 = vpack.c.b16 %v10726, %v10722
    %v10911 = vpack.c.b16 %v10727, %v10723
    %v10912 = vpack.c.b16 %v10728, %v10724
    %v10913 = vpack.c.b16 %v10729, %v10725
    %v10914 = vpack.c.b16 %v10734, %v10730
    %v10915 = vpack.c.b16 %v10735, %v10731
    %v10916 = vpack.c.b16 %v10736, %v10732
    %v10917 = vpack.c.b16 %v10737, %v10733
    %v10918 = vpack.c.b16 %v10742, %v10738
    %v10919 = vpack.c.b16 %v10743, %v10739
    %v10920 = vpack.c.b16 %v10744, %v10740
    %v10921 = vpack.c.b16 %v10745, %v10741
    %v10922 = vpack.c.b16 %v10750, %v10746
    %v10923 = vpack.c.b16 %v10751, %v10747
    %v10924 = vpack.c.b16 %v10752, %v10748
    %v10925 = vpack.c.b16 %v10753, %v10749
    %v10926 = vpack.c.b16 %v10758, %v10754
    %v10927 = vpack.c.b16 %v10759, %v10755
    %v10928 = vpack.c.b16 %v10760, %v10756
    %v10929 = vpack.c.b16 %v10761, %v10757
    %v10930 = vpack.c.b16 %v10766, %v10762
    %v10931 = vpack.c.b16 %v10767, %v10763
    %v10932 = vpack.c.b16 %v10768, %v10764
    %v10933 = vpack.c.b16 %v10769, %v10765
    %v10934 = vpack.c.b16 %v10774, %v10770
    %v10935 = vpack.c.b16 %v10775, %v10771
    %v10936 = vpack.c.b16 %v10776, %v10772
    %v10937 = vpack.c.b16 %v10777, %v10773
    %v10938 = vpack.c.b16 %v10782, %v10778
    %v10939 = vpack.c.b16 %v10783, %v10779
    %v10940 = vpack.c.b16 %v10784, %v10780
    %v10941 = vpack.c.b16 %v10785, %v10781
    %v10942 = vpack.c.b16 %v10790, %v10786
    %v10943 = vpack.c.b16 %v10791, %v10787
    %v10944 = vpack.c.b16 %v10792, %v10788
    %v10945 = vpack.c.b16 %v10793, %v10789
    %v10946 = vpack.c.b16 %v10798, %v10794
    %v10947 = vpack.c.b16 %v10799, %v10795
    %v10948 = vpack.c.b16 %v10800, %v10796
    %v10949 = vpack.c.b16 %v10801, %v10797
    %v10950 = vpack.c.b16 %v10806, %v10802
    %v10951 = vpack.c.b16 %v10807, %v10803
    %v10952 = vpack.c.b16 %v10808, %v10804
    %v10953 = vpack.c.b16 %v10809, %v10805
    %v10954 = vpack.c.b16 %v10814, %v10810
    %v10955 = vpack.c.b16 %v10815, %v10811
    %v10956 = vpack.c.b16 %v10816, %v10812
    %v10957 = vpack.c.b16 %v10817, %v10813
    %v10958 = vpack.c.b16 %v10822, %v10818
    %v10959 = vpack.c.b16 %v10823, %v10819
    %v10960 = vpack.c.b16 %v10824, %v10820
    %v10961 = vpack.c.b16 %v10825, %v10821
    %v10962 = vpack.c.b16 %v10830, %v10826
    %v10963 = vpack.c.b16 %v10831, %v10827
    %v10964 = vpack.c.b16 %v10832, %v10828
    %v10965 = vpack.c.b16 %v10833, %v10829
    %v10966 = vpack.c.b16 %v10838, %v10834
    %v10967 = vpack.c.b16 %v10839, %v10835
    %v10968 = vpack.c.b16 %v10840, %v10836
    %v10969 = vpack.c.b16 %v10841, %v10837
    %11098 = vmatpush.bf16.msra.mxu0 %v10870
    %11099 = vmatpush.bf16.msra.mxu0 %v10866
    %11100 = vmatpush.bf16.msra.mxu0 %v10862
    %11101 = vmatpush.bf16.msra.mxu0 %v10858
    %11102 = vmatpush.bf16.msra.mxu0 %v10854
    %11103 = vmatpush.bf16.msra.mxu0 %v10850
    %11104 = vmatpush.bf16.msra.mxu0 %v10846
    %11105 = vmatpush.bf16.msra.mxu0 %v10842
    %11106 = vmatmul.bf16.gmra.mxu0 %v10450
    %v11107 = vpop.f32.mrf.mxu0
    %v11108 = vadd.f32 0.0, %v11107
    %v11109 = vpop.f32.mrf.mxu0
    %11110 = vdwg.mxu0
    %11111 = vmatpush.bf16.msra.mxu0 %v10902
    %11112 = vmatpush.bf16.msra.mxu0 %v10898
    %11113 = vmatpush.bf16.msra.mxu0 %v10894
    %11114 = vmatpush.bf16.msra.mxu0 %v10890
    %11115 = vmatpush.bf16.msra.mxu0 %v10886
    %11116 = vmatpush.bf16.msra.mxu0 %v10882
    %11117 = vmatpush.bf16.msra.mxu0 %v10878
    %11118 = vmatpush.bf16.msra.mxu0 %v10874
    %11119 = vmatmul.bf16.gmra.mxu0 %v10451
    %v11120 = vpop.f32.mrf.mxu0
    %v11121 = vadd.f32 %v11108, %v11120
    %v11122 = vpop.f32.mrf.mxu0
    %11123 = vdwg.mxu0
    %11124 = vmatpush.bf16.msra.mxu0 %v10934
    %11125 = vmatpush.bf16.msra.mxu0 %v10930
    %11126 = vmatpush.bf16.msra.mxu0 %v10926
    %11127 = vmatpush.bf16.msra.mxu0 %v10922
    %11128 = vmatpush.bf16.msra.mxu0 %v10918
    %11129 = vmatpush.bf16.msra.mxu0 %v10914
    %11130 = vmatpush.bf16.msra.mxu0 %v10910
    %11131 = vmatpush.bf16.msra.mxu0 %v10906
    %11132 = vmatmul.bf16.gmra.mxu0 %v10452
    %v11133 = vpop.f32.mrf.mxu0
    %v11134 = vadd.f32 %v11121, %v11133
    %v11135 = vpop.f32.mrf.mxu0
    %11136 = vdwg.mxu0
    %11137 = vmatpush.bf16.msra.mxu0 %v10966
    %11138 = vmatpush.bf16.msra.mxu0 %v10962
    %11139 = vmatpush.bf16.msra.mxu0 %v10958
    %11140 = vmatpush.bf16.msra.mxu0 %v10954
    %11141 = vmatpush.bf16.msra.mxu0 %v10950
    %11142 = vmatpush.bf16.msra.mxu0 %v10946
    %11143 = vmatpush.bf16.msra.mxu0 %v10942
    %11144 = vmatpush.bf16.msra.mxu0 %v10938
    %11145 = vmatmul.bf16.gmra.mxu0 %v10453
    %v11146 = vpop.f32.mrf.mxu0
    %v11147 = vadd.f32 %v11134, %v11146
    %v11148 = vpop.f32.mrf.mxu0
    %11149 = vdwg.mxu0
    %11150 = vmatpush.bf16.msra.mxu0 %v10871
    %11151 = vmatpush.bf16.msra.mxu0 %v10867
    %11152 = vmatpush.bf16.msra.mxu0 %v10863
    %11153 = vmatpush.bf16.msra.mxu0 %v10859
    %11154 = vmatpush.bf16.msra.mxu0 %v10855
    %11155 = vmatpush.bf16.msra.mxu0 %v10851
    %11156 = vmatpush.bf16.msra.mxu0 %v10847
    %11157 = vmatpush.bf16.msra.mxu0 %v10843
    %11158 = vmatmul.bf16.gmra.mxu0 %v10450
    %v11159 = vpop.f32.mrf.mxu0
    %v11160 = vadd.f32 0.0, %v11159
    %v11161 = vpop.f32.mrf.mxu0
    %11162 = vdwg.mxu0
    %11163 = vmatpush.bf16.msra.mxu0 %v10903
    %11164 = vmatpush.bf16.msra.mxu0 %v10899
    %11165 = vmatpush.bf16.msra.mxu0 %v10895
    %11166 = vmatpush.bf16.msra.mxu0 %v10891
    %11167 = vmatpush.bf16.msra.mxu0 %v10887
    %11168 = vmatpush.bf16.msra.mxu0 %v10883
    %11169 = vmatpush.bf16.msra.mxu0 %v10879
    %11170 = vmatpush.bf16.msra.mxu0 %v10875
    %11171 = vmatmul.bf16.gmra.mxu0 %v10451
    %v11172 = vpop.f32.mrf.mxu0
    %v11173 = vadd.f32 %v11160, %v11172
    %v11174 = vpop.f32.mrf.mxu0
    %11175 = vdwg.mxu0
    %11176 = vmatpush.bf16.msra.mxu0 %v10935
    %11177 = vmatpush.bf16.msra.mxu0 %v10931
    %11178 = vmatpush.bf16.msra.mxu0 %v10927
    %11179 = vmatpush.bf16.msra.mxu0 %v10923
    %11180 = vmatpush.bf16.msra.mxu0 %v10919
    %11181 = vmatpush.bf16.msra.mxu0 %v10915
    %11182 = vmatpush.bf16.msra.mxu0 %v10911
    %11183 = vmatpush.bf16.msra.mxu0 %v10907
    %11184 = vmatmul.bf16.gmra.mxu0 %v10452
    %v11185 = vpop.f32.mrf.mxu0
    %v11186 = vadd.f32 %v11173, %v11185
    %v11187 = vpop.f32.mrf.mxu0
    %11188 = vdwg.mxu0
    %11189 = vmatpush.bf16.msra.mxu0 %v10967
    %11190 = vmatpush.bf16.msra.mxu0 %v10963
    %11191 = vmatpush.bf16.msra.mxu0 %v10959
    %11192 = vmatpush.bf16.msra.mxu0 %v10955
    %11193 = vmatpush.bf16.msra.mxu0 %v10951
    %11194 = vmatpush.bf16.msra.mxu0 %v10947
    %11195 = vmatpush.bf16.msra.mxu0 %v10943
    %11196 = vmatpush.bf16.msra.mxu0 %v10939
    %11197 = vmatmul.bf16.gmra.mxu0 %v10453
    %v11198 = vpop.f32.mrf.mxu0
    %v11199 = vadd.f32 %v11186, %v11198
    %v11200 = vpop.f32.mrf.mxu0
    %11201 = vdwg.mxu0
    %11202 = vmatpush.bf16.msra.mxu0 %v10872
    %11203 = vmatpush.bf16.msra.mxu0 %v10868
    %11204 = vmatpush.bf16.msra.mxu0 %v10864
    %11205 = vmatpush.bf16.msra.mxu0 %v10860
    %11206 = vmatpush.bf16.msra.mxu0 %v10856
    %11207 = vmatpush.bf16.msra.mxu0 %v10852
    %11208 = vmatpush.bf16.msra.mxu0 %v10848
    %11209 = vmatpush.bf16.msra.mxu0 %v10844
    %11210 = vmatmul.bf16.gmra.mxu0 %v10450
    %v11211 = vpop.f32.mrf.mxu0
    %v11212 = vadd.f32 0.0, %v11211
    %v11213 = vpop.f32.mrf.mxu0
    %11214 = vdwg.mxu0
    %11215 = vmatpush.bf16.msra.mxu0 %v10904
    %11216 = vmatpush.bf16.msra.mxu0 %v10900
    %11217 = vmatpush.bf16.msra.mxu0 %v10896
    %11218 = vmatpush.bf16.msra.mxu0 %v10892
    %11219 = vmatpush.bf16.msra.mxu0 %v10888
    %11220 = vmatpush.bf16.msra.mxu0 %v10884
    %11221 = vmatpush.bf16.msra.mxu0 %v10880
    %11222 = vmatpush.bf16.msra.mxu0 %v10876
    %11223 = vmatmul.bf16.gmra.mxu0 %v10451
    %v11224 = vpop.f32.mrf.mxu0
    %v11225 = vadd.f32 %v11212, %v11224
    %v11226 = vpop.f32.mrf.mxu0
    %11227 = vdwg.mxu0
    %11228 = vmatpush.bf16.msra.mxu0 %v10936
    %11229 = vmatpush.bf16.msra.mxu0 %v10932
    %11230 = vmatpush.bf16.msra.mxu0 %v10928
    %11231 = vmatpush.bf16.msra.mxu0 %v10924
    %11232 = vmatpush.bf16.msra.mxu0 %v10920
    %11233 = vmatpush.bf16.msra.mxu0 %v10916
    %11234 = vmatpush.bf16.msra.mxu0 %v10912
    %11235 = vmatpush.bf16.msra.mxu0 %v10908
    %11236 = vmatmul.bf16.gmra.mxu0 %v10452
    %v11237 = vpop.f32.mrf.mxu0
    %v11238 = vadd.f32 %v11225, %v11237
    %v11239 = vpop.f32.mrf.mxu0
    %11240 = vdwg.mxu0
    %11241 = vmatpush.bf16.msra.mxu0 %v10968
    %11242 = vmatpush.bf16.msra.mxu0 %v10964
    %11243 = vmatpush.bf16.msra.mxu0 %v10960
    %11244 = vmatpush.bf16.msra.mxu0 %v10956
    %11245 = vmatpush.bf16.msra.mxu0 %v10952
    %11246 = vmatpush.bf16.msra.mxu0 %v10948
    %11247 = vmatpush.bf16.msra.mxu0 %v10944
    %11248 = vmatpush.bf16.msra.mxu0 %v10940
    %11249 = vmatmul.bf16.gmra.mxu0 %v10453
    %v11250 = vpop.f32.mrf.mxu0
    %v11251 = vadd.f32 %v11238, %v11250
    %v11252 = vpop.f32.mrf.mxu0
    %11253 = vdwg.mxu0
    %11254 = vmatpush.bf16.msra.mxu0 %v10873
    %11255 = vmatpush.bf16.msra.mxu0 %v10869
    %11256 = vmatpush.bf16.msra.mxu0 %v10865
    %11257 = vmatpush.bf16.msra.mxu0 %v10861
    %11258 = vmatpush.bf16.msra.mxu0 %v10857
    %11259 = vmatpush.bf16.msra.mxu0 %v10853
    %11260 = vmatpush.bf16.msra.mxu0 %v10849
    %11261 = vmatpush.bf16.msra.mxu0 %v10845
    %11262 = vmatmul.bf16.gmra.mxu0 %v10450
    %v11263 = vpop.f32.mrf.mxu0
    %v11264 = vadd.f32 0.0, %v11263
    %v11265 = vpop.f32.mrf.mxu0
    %11266 = vdwg.mxu0
    %11267 = vmatpush.bf16.msra.mxu0 %v10905
    %11268 = vmatpush.bf16.msra.mxu0 %v10901
    %11269 = vmatpush.bf16.msra.mxu0 %v10897
    %11270 = vmatpush.bf16.msra.mxu0 %v10893
    %11271 = vmatpush.bf16.msra.mxu0 %v10889
    %11272 = vmatpush.bf16.msra.mxu0 %v10885
    %11273 = vmatpush.bf16.msra.mxu0 %v10881
    %11274 = vmatpush.bf16.msra.mxu0 %v10877
    %11275 = vmatmul.bf16.gmra.mxu0 %v10451
    %v11276 = vpop.f32.mrf.mxu0
    %v11277 = vadd.f32 %v11264, %v11276
    %v11278 = vpop.f32.mrf.mxu0
    %11279 = vdwg.mxu0
    %11280 = vmatpush.bf16.msra.mxu0 %v10937
    %11281 = vmatpush.bf16.msra.mxu0 %v10933
    %11282 = vmatpush.bf16.msra.mxu0 %v10929
    %11283 = vmatpush.bf16.msra.mxu0 %v10925
    %11284 = vmatpush.bf16.msra.mxu0 %v10921
    %11285 = vmatpush.bf16.msra.mxu0 %v10917
    %11286 = vmatpush.bf16.msra.mxu0 %v10913
    %11287 = vmatpush.bf16.msra.mxu0 %v10909
    %11288 = vmatmul.bf16.gmra.mxu0 %v10452
    %v11289 = vpop.f32.mrf.mxu0
    %v11290 = vadd.f32 %v11277, %v11289
    %v11291 = vpop.f32.mrf.mxu0
    %11292 = vdwg.mxu0
    %11293 = vmatpush.bf16.msra.mxu0 %v10969
    %11294 = vmatpush.bf16.msra.mxu0 %v10965
    %11295 = vmatpush.bf16.msra.mxu0 %v10961
    %11296 = vmatpush.bf16.msra.mxu0 %v10957
    %11297 = vmatpush.bf16.msra.mxu0 %v10953
    %11298 = vmatpush.bf16.msra.mxu0 %v10949
    %11299 = vmatpush.bf16.msra.mxu0 %v10945
    %11300 = vmatpush.bf16.msra.mxu0 %v10941
    %11301 = vmatmul.bf16.gmra.mxu0 %v10453
    %v11302 = vpop.f32.mrf.mxu0
    %v11303 = vadd.f32 %v11290, %v11302
    %v11304 = vpop.f32.mrf.mxu0
    %11305 = vdwg.mxu0
    %v11306 = vmax.f32 %v11147, %v11251
    %v11307 = vmax.f32 %v11199, %v11303
    %v11310 = vrot.slane %v11307, 4
    %v11311 = vsel %vm1616, %v11306, %v11310
    %v11312 = vsel %vm1616, %v11310, %v11306
    %v11313 = vrot.slane %v11312, 4
    %11314 = vst [vmem:[#allocation1] ss:$2 sm:$0xff] %v11311
    %v11315 = vld.sshfl [vmem:[#allocation1] sm:$0xff pattern:$0x75316420]
    %v11316 = vld.sshfl [vmem:[#allocation1 + $0x8] sm:$0xff pattern:$0x75316420]
    %s11317 = scalar_lea.vmem [#allocation1], 16
    %11318 = vst [vmem:[%s11317] ss:$2 sm:$0xff] %v11313
    %v11319 = vld.sshfl [vmem:[#allocation1 + $0x10] sm:$0xff pattern:$0x75316420]
    %v11320 = vld.sshfl [vmem:[#allocation1 + $0x18] sm:$0xff pattern:$0x75316420]
    %v11325 = vpack.c.bf16 %v11316, %v11315
    %v11326 = vpack.c.bf16 %v11320, %v11319
    %v11329 = vrot.slane %v11325, 2
    %v11330 = vrot.slane %v11326, 2
    %v11333 = vsel %vm1612, %v11325, %v11329
    %v11336 = vsel %vm1612, %v11326, %v11330
    %11339 = vst [vmem:[#allocation5] sm:$0xf] %v11333
    %11340 = vst [vmem:[#allocation5 + $0x4] sm:$0xf] %v11336
    %v11341 = vld [vmem:[#allocation5] sm:$0x5]
    %v11342 = vld [vmem:[#allocation5 + $0x4] sm:$0x5]
    %v11343 = vld [vmem:[#allocation17] sm:$0xff]
    %v11344 = vld [vmem:[#allocation17 + $0x8] sm:$0xff]
    %v11345 = vld [vmem:[#allocation17 + $0x10] sm:$0xff]
    %v11346 = vld [vmem:[#allocation17 + $0x18] sm:$0xff]
    %v11347 = vld [vmem:[#allocation17 + $0x20] sm:$0xff]
    %v11348 = vld [vmem:[#allocation17 + $0x28] sm:$0xff]
    %v11349 = vld [vmem:[#allocation17 + $0x30] sm:$0xff]
    %v11350 = vld [vmem:[#allocation17 + $0x38] sm:$0xff]
    %v11351 = vld [vmem:[#allocation17 + $0x40] sm:$0xff]
    %v11352 = vld [vmem:[#allocation17 + $0x48] sm:$0xff]
    %v11353 = vld [vmem:[#allocation17 + $0x50] sm:$0xff]
    %v11354 = vld [vmem:[#allocation17 + $0x58] sm:$0xff]
    %v11355 = vld [vmem:[#allocation17 + $0x60] sm:$0xff]
    %v11356 = vld [vmem:[#allocation17 + $0x68] sm:$0xff]
    %v11357 = vld [vmem:[#allocation17 + $0x70] sm:$0xff]
    %v11358 = vld [vmem:[#allocation17 + $0x78] sm:$0xff]
    %v11359 = vld [vmem:[#allocation17 + $0x80] sm:$0xff]
    %v11360 = vld [vmem:[#allocation17 + $0x88] sm:$0xff]
    %v11361 = vld [vmem:[#allocation17 + $0x90] sm:$0xff]
    %v11362 = vld [vmem:[#allocation17 + $0x98] sm:$0xff]
    %v11363 = vld [vmem:[#allocation17 + $0xa0] sm:$0xff]
    %v11364 = vld [vmem:[#allocation17 + $0xa8] sm:$0xff]
    %v11365 = vld [vmem:[#allocation17 + $0xb0] sm:$0xff]
    %v11366 = vld [vmem:[#allocation17 + $0xb8] sm:$0xff]
    %v11367 = vld [vmem:[#allocation17 + $0xc0] sm:$0xff]
    %v11368 = vld [vmem:[#allocation17 + $0xc8] sm:$0xff]
    %v11369 = vld [vmem:[#allocation17 + $0xd0] sm:$0xff]
    %v11370 = vld [vmem:[#allocation17 + $0xd8] sm:$0xff]
    %v11371 = vld [vmem:[#allocation17 + $0xe0] sm:$0xff]
    %v11372 = vld [vmem:[#allocation17 + $0xe8] sm:$0xff]
    %v11373 = vld [vmem:[#allocation17 + $0xf0] sm:$0xff]
    %v11374 = vld [vmem:[#allocation17 + $0xf8] sm:$0xff]
    %v11375 = vld [vmem:[#allocation17 + $0x100] sm:$0xff]
    %v11376 = vld [vmem:[#allocation17 + $0x108] sm:$0xff]
    %v11377 = vld [vmem:[#allocation17 + $0x110] sm:$0xff]
    %v11378 = vld [vmem:[#allocation17 + $0x118] sm:$0xff]
    %v11379 = vld [vmem:[#allocation17 + $0x120] sm:$0xff]
    %v11380 = vld [vmem:[#allocation17 + $0x128] sm:$0xff]
    %v11381 = vld [vmem:[#allocation17 + $0x130] sm:$0xff]
    %v11382 = vld [vmem:[#allocation17 + $0x138] sm:$0xff]
    %v11383 = vld [vmem:[#allocation17 + $0x140] sm:$0xff]
    %v11384 = vld [vmem:[#allocation17 + $0x148] sm:$0xff]
    %v11385 = vld [vmem:[#allocation17 + $0x150] sm:$0xff]
    %v11386 = vld [vmem:[#allocation17 + $0x158] sm:$0xff]
    %v11387 = vld [vmem:[#allocation17 + $0x160] sm:$0xff]
    %v11388 = vld [vmem:[#allocation17 + $0x168] sm:$0xff]
    %v11389 = vld [vmem:[#allocation17 + $0x170] sm:$0xff]
    %v11390 = vld [vmem:[#allocation17 + $0x178] sm:$0xff]
    %v11391 = vld [vmem:[#allocation17 + $0x180] sm:$0xff]
    %v11392 = vld [vmem:[#allocation17 + $0x188] sm:$0xff]
    %v11393 = vld [vmem:[#allocation17 + $0x190] sm:$0xff]
    %v11394 = vld [vmem:[#allocation17 + $0x198] sm:$0xff]
    %v11395 = vld [vmem:[#allocation17 + $0x1a0] sm:$0xff]
    %v11396 = vld [vmem:[#allocation17 + $0x1a8] sm:$0xff]
    %v11397 = vld [vmem:[#allocation17 + $0x1b0] sm:$0xff]
    %v11398 = vld [vmem:[#allocation17 + $0x1b8] sm:$0xff]
    %v11399 = vld [vmem:[#allocation17 + $0x1c0] sm:$0xff]
    %v11400 = vld [vmem:[#allocation17 + $0x1c8] sm:$0xff]
    %v11401 = vld [vmem:[#allocation17 + $0x1d0] sm:$0xff]
    %v11402 = vld [vmem:[#allocation17 + $0x1d8] sm:$0xff]
    %v11403 = vld [vmem:[#allocation17 + $0x1e0] sm:$0xff]
    %v11404 = vld [vmem:[#allocation17 + $0x1e8] sm:$0xff]
    %v11405 = vld [vmem:[#allocation17 + $0x1f0] sm:$0xff]
    %v11406 = vld [vmem:[#allocation17 + $0x1f8] sm:$0xff]
    %s11407 = scalar_lea.vmem [#allocation17], 512
    %v11408 = vld [vmem:[%s11407] sm:$0xff]
    %v11409 = vld [vmem:[%s11407 + $0x8] sm:$0xff]
    %v11410 = vld [vmem:[%s11407 + $0x10] sm:$0xff]
    %v11411 = vld [vmem:[%s11407 + $0x18] sm:$0xff]
    %v11412 = vld [vmem:[%s11407 + $0x20] sm:$0xff]
    %v11413 = vld [vmem:[%s11407 + $0x28] sm:$0xff]
    %v11414 = vld [vmem:[%s11407 + $0x30] sm:$0xff]
    %v11415 = vld [vmem:[%s11407 + $0x38] sm:$0xff]
    %v11416 = vld [vmem:[%s11407 + $0x40] sm:$0xff]
    %v11417 = vld [vmem:[%s11407 + $0x48] sm:$0xff]
    %v11418 = vld [vmem:[%s11407 + $0x50] sm:$0xff]
    %v11419 = vld [vmem:[%s11407 + $0x58] sm:$0xff]
    %v11420 = vld [vmem:[%s11407 + $0x60] sm:$0xff]
    %v11421 = vld [vmem:[%s11407 + $0x68] sm:$0xff]
    %v11422 = vld [vmem:[%s11407 + $0x70] sm:$0xff]
    %v11423 = vld [vmem:[%s11407 + $0x78] sm:$0xff]
    %v11424 = vld [vmem:[%s11407 + $0x80] sm:$0xff]
    %v11425 = vld [vmem:[%s11407 + $0x88] sm:$0xff]
    %v11426 = vld [vmem:[%s11407 + $0x90] sm:$0xff]
    %v11427 = vld [vmem:[%s11407 + $0x98] sm:$0xff]
    %v11428 = vld [vmem:[%s11407 + $0xa0] sm:$0xff]
    %v11429 = vld [vmem:[%s11407 + $0xa8] sm:$0xff]
    %v11430 = vld [vmem:[%s11407 + $0xb0] sm:$0xff]
    %v11431 = vld [vmem:[%s11407 + $0xb8] sm:$0xff]
    %v11432 = vld [vmem:[%s11407 + $0xc0] sm:$0xff]
    %v11433 = vld [vmem:[%s11407 + $0xc8] sm:$0xff]
    %v11434 = vld [vmem:[%s11407 + $0xd0] sm:$0xff]
    %v11435 = vld [vmem:[%s11407 + $0xd8] sm:$0xff]
    %v11436 = vld [vmem:[%s11407 + $0xe0] sm:$0xff]
    %v11437 = vld [vmem:[%s11407 + $0xe8] sm:$0xff]
    %v11438 = vld [vmem:[%s11407 + $0xf0] sm:$0xff]
    %v11439 = vld [vmem:[%s11407 + $0xf8] sm:$0xff]
    %v11440 = vld [vmem:[%s11407 + $0x100] sm:$0xff]
    %v11441 = vld [vmem:[%s11407 + $0x108] sm:$0xff]
    %v11442 = vld [vmem:[%s11407 + $0x110] sm:$0xff]
    %v11443 = vld [vmem:[%s11407 + $0x118] sm:$0xff]
    %v11444 = vld [vmem:[%s11407 + $0x120] sm:$0xff]
    %v11445 = vld [vmem:[%s11407 + $0x128] sm:$0xff]
    %v11446 = vld [vmem:[%s11407 + $0x130] sm:$0xff]
    %v11447 = vld [vmem:[%s11407 + $0x138] sm:$0xff]
    %v11448 = vld [vmem:[%s11407 + $0x140] sm:$0xff]
    %v11449 = vld [vmem:[%s11407 + $0x148] sm:$0xff]
    %v11450 = vld [vmem:[%s11407 + $0x150] sm:$0xff]
    %v11451 = vld [vmem:[%s11407 + $0x158] sm:$0xff]
    %v11452 = vld [vmem:[%s11407 + $0x160] sm:$0xff]
    %v11453 = vld [vmem:[%s11407 + $0x168] sm:$0xff]
    %v11454 = vld [vmem:[%s11407 + $0x170] sm:$0xff]
    %v11455 = vld [vmem:[%s11407 + $0x178] sm:$0xff]
    %v11456 = vld [vmem:[%s11407 + $0x180] sm:$0xff]
    %v11457 = vld [vmem:[%s11407 + $0x188] sm:$0xff]
    %v11458 = vld [vmem:[%s11407 + $0x190] sm:$0xff]
    %v11459 = vld [vmem:[%s11407 + $0x198] sm:$0xff]
    %v11460 = vld [vmem:[%s11407 + $0x1a0] sm:$0xff]
    %v11461 = vld [vmem:[%s11407 + $0x1a8] sm:$0xff]
    %v11462 = vld [vmem:[%s11407 + $0x1b0] sm:$0xff]
    %v11463 = vld [vmem:[%s11407 + $0x1b8] sm:$0xff]
    %v11464 = vld [vmem:[%s11407 + $0x1c0] sm:$0xff]
    %v11465 = vld [vmem:[%s11407 + $0x1c8] sm:$0xff]
    %v11466 = vld [vmem:[%s11407 + $0x1d0] sm:$0xff]
    %v11467 = vld [vmem:[%s11407 + $0x1d8] sm:$0xff]
    %v11468 = vld [vmem:[%s11407 + $0x1e0] sm:$0xff]
    %v11469 = vld [vmem:[%s11407 + $0x1e8] sm:$0xff]
    %v11470 = vld [vmem:[%s11407 + $0x1f0] sm:$0xff]
    %v11471 = vld [vmem:[%s11407 + $0x1f8] sm:$0xff]
    %11473 = vst [vmem:[#allocation1] ss:$4 sm:$0xff] %v11341
    %v11474 = vld.sshfl [vmem:[#allocation1] sm:$0xff pattern:$0x73625140]
    %v11476 = vld.sshfl [vmem:[#allocation1 + $0x8] sm:$0xff pattern:$0x73625140]
    %s11479 = scalar_lea.vmem [#allocation1], 32
    %11480 = vst [vmem:[%s11479] ss:$4 sm:$0xff] %v11342
    %v11481 = vld.sshfl [vmem:[#allocation1 + $0x20] sm:$0xff pattern:$0x73625140]
    %v11483 = vld.sshfl [vmem:[#allocation1 + $0x28] sm:$0xff pattern:$0x73625140]
    %v11485 = vunpack.c.l.b16 %v11474
    %v11486 = vunpack.c.l.b16 %v11476
    %v11487 = vunpack.c.l.b16 %v11481
    %v11488 = vunpack.c.l.b16 %v11483
    %v11489 = vrot.slane %v11485, 1
    %v11490 = vsel %vm2699, %v11487, %v11489
    %v11491 = vrot.slane %v11486, 1
    %v11492 = vsel %vm2699, %v11488, %v11491
    %v11493 = vpack.c.b16 %v11490, %v11490
    %v11494 = vpack.c.b16 %v11492, %v11492
    %v11561 = vunpack.c.l.b16 %v11408
    %v11562 = vunpack.c.h.b16 %v11408
    %v11563 = vunpack.c.l.b16 %v11409
    %v11564 = vunpack.c.h.b16 %v11409
    %v11565 = vunpack.c.l.b16 %v11410
    %v11566 = vunpack.c.h.b16 %v11410
    %v11567 = vunpack.c.l.b16 %v11411
    %v11568 = vunpack.c.h.b16 %v11411
    %v11569 = vunpack.c.l.b16 %v11412
    %v11570 = vunpack.c.h.b16 %v11412
    %v11571 = vunpack.c.l.b16 %v11413
    %v11572 = vunpack.c.h.b16 %v11413
    %v11573 = vunpack.c.l.b16 %v11414
    %v11574 = vunpack.c.h.b16 %v11414
    %v11575 = vunpack.c.l.b16 %v11415
    %v11576 = vunpack.c.h.b16 %v11415
    %v11577 = vunpack.c.l.b16 %v11416
    %v11578 = vunpack.c.h.b16 %v11416
    %v11579 = vunpack.c.l.b16 %v11417
    %v11580 = vunpack.c.h.b16 %v11417
    %v11581 = vunpack.c.l.b16 %v11418
    %v11582 = vunpack.c.h.b16 %v11418
    %v11583 = vunpack.c.l.b16 %v11419
    %v11584 = vunpack.c.h.b16 %v11419
    %v11585 = vunpack.c.l.b16 %v11420
    %v11586 = vunpack.c.h.b16 %v11420
    %v11587 = vunpack.c.l.b16 %v11421
    %v11588 = vunpack.c.h.b16 %v11421
    %v11589 = vunpack.c.l.b16 %v11422
    %v11590 = vunpack.c.h.b16 %v11422
    %v11591 = vunpack.c.l.b16 %v11423
    %v11592 = vunpack.c.h.b16 %v11423
    %v11593 = vunpack.c.l.b16 %v11424
    %v11594 = vunpack.c.h.b16 %v11424
    %v11595 = vunpack.c.l.b16 %v11425
    %v11596 = vunpack.c.h.b16 %v11425
    %v11597 = vunpack.c.l.b16 %v11426
    %v11598 = vunpack.c.h.b16 %v11426
    %v11599 = vunpack.c.l.b16 %v11427
    %v11600 = vunpack.c.h.b16 %v11427
    %v11601 = vunpack.c.l.b16 %v11428
    %v11602 = vunpack.c.h.b16 %v11428
    %v11603 = vunpack.c.l.b16 %v11429
    %v11604 = vunpack.c.h.b16 %v11429
    %v11605 = vunpack.c.l.b16 %v11430
    %v11606 = vunpack.c.h.b16 %v11430
    %v11607 = vunpack.c.l.b16 %v11431
    %v11608 = vunpack.c.h.b16 %v11431
    %v11609 = vunpack.c.l.b16 %v11432
    %v11610 = vunpack.c.h.b16 %v11432
    %v11611 = vunpack.c.l.b16 %v11433
    %v11612 = vunpack.c.h.b16 %v11433
    %v11613 = vunpack.c.l.b16 %v11434
    %v11614 = vunpack.c.h.b16 %v11434
    %v11615 = vunpack.c.l.b16 %v11435
    %v11616 = vunpack.c.h.b16 %v11435
    %v11617 = vunpack.c.l.b16 %v11436
    %v11618 = vunpack.c.h.b16 %v11436
    %v11619 = vunpack.c.l.b16 %v11437
    %v11620 = vunpack.c.h.b16 %v11437
    %v11621 = vunpack.c.l.b16 %v11438
    %v11622 = vunpack.c.h.b16 %v11438
    %v11623 = vunpack.c.l.b16 %v11439
    %v11624 = vunpack.c.h.b16 %v11439
    %v11625 = vunpack.c.l.b16 %v11440
    %v11626 = vunpack.c.h.b16 %v11440
    %v11627 = vunpack.c.l.b16 %v11441
    %v11628 = vunpack.c.h.b16 %v11441
    %v11629 = vunpack.c.l.b16 %v11442
    %v11630 = vunpack.c.h.b16 %v11442
    %v11631 = vunpack.c.l.b16 %v11443
    %v11632 = vunpack.c.h.b16 %v11443
    %v11633 = vunpack.c.l.b16 %v11444
    %v11634 = vunpack.c.h.b16 %v11444
    %v11635 = vunpack.c.l.b16 %v11445
    %v11636 = vunpack.c.h.b16 %v11445
    %v11637 = vunpack.c.l.b16 %v11446
    %v11638 = vunpack.c.h.b16 %v11446
    %v11639 = vunpack.c.l.b16 %v11447
    %v11640 = vunpack.c.h.b16 %v11447
    %v11641 = vunpack.c.l.b16 %v11448
    %v11642 = vunpack.c.h.b16 %v11448
    %v11643 = vunpack.c.l.b16 %v11449
    %v11644 = vunpack.c.h.b16 %v11449
    %v11645 = vunpack.c.l.b16 %v11450
    %v11646 = vunpack.c.h.b16 %v11450
    %v11647 = vunpack.c.l.b16 %v11451
    %v11648 = vunpack.c.h.b16 %v11451
    %v11649 = vunpack.c.l.b16 %v11452
    %v11650 = vunpack.c.h.b16 %v11452
    %v11651 = vunpack.c.l.b16 %v11453
    %v11652 = vunpack.c.h.b16 %v11453
    %v11653 = vunpack.c.l.b16 %v11454
    %v11654 = vunpack.c.h.b16 %v11454
    %v11655 = vunpack.c.l.b16 %v11455
    %v11656 = vunpack.c.h.b16 %v11455
    %v11657 = vunpack.c.l.b16 %v11456
    %v11658 = vunpack.c.h.b16 %v11456
    %v11659 = vunpack.c.l.b16 %v11457
    %v11660 = vunpack.c.h.b16 %v11457
    %v11661 = vunpack.c.l.b16 %v11458
    %v11662 = vunpack.c.h.b16 %v11458
    %v11663 = vunpack.c.l.b16 %v11459
    %v11664 = vunpack.c.h.b16 %v11459
    %v11665 = vunpack.c.l.b16 %v11460
    %v11666 = vunpack.c.h.b16 %v11460
    %v11667 = vunpack.c.l.b16 %v11461
    %v11668 = vunpack.c.h.b16 %v11461
    %v11669 = vunpack.c.l.b16 %v11462
    %v11670 = vunpack.c.h.b16 %v11462
    %v11671 = vunpack.c.l.b16 %v11463
    %v11672 = vunpack.c.h.b16 %v11463
    %v11673 = vunpack.c.l.b16 %v11464
    %v11674 = vunpack.c.h.b16 %v11464
    %v11675 = vunpack.c.l.b16 %v11465
    %v11676 = vunpack.c.h.b16 %v11465
    %v11677 = vunpack.c.l.b16 %v11466
    %v11678 = vunpack.c.h.b16 %v11466
    %v11679 = vunpack.c.l.b16 %v11467
    %v11680 = vunpack.c.h.b16 %v11467
    %v11681 = vunpack.c.l.b16 %v11468
    %v11682 = vunpack.c.h.b16 %v11468
    %v11683 = vunpack.c.l.b16 %v11469
    %v11684 = vunpack.c.h.b16 %v11469
    %v11685 = vunpack.c.l.b16 %v11470
    %v11686 = vunpack.c.h.b16 %v11470
    %v11687 = vunpack.c.l.b16 %v11471
    %v11688 = vunpack.c.h.b16 %v11471
    %v11689 = vpack.c.b16 %v11565, %v11561
    %v11690 = vpack.c.b16 %v11566, %v11562
    %v11691 = vpack.c.b16 %v11567, %v11563
    %v11692 = vpack.c.b16 %v11568, %v11564
    %v11693 = vpack.c.b16 %v11573, %v11569
    %v11694 = vpack.c.b16 %v11574, %v11570
    %v11695 = vpack.c.b16 %v11575, %v11571
    %v11696 = vpack.c.b16 %v11576, %v11572
    %v11697 = vpack.c.b16 %v11581, %v11577
    %v11698 = vpack.c.b16 %v11582, %v11578
    %v11699 = vpack.c.b16 %v11583, %v11579
    %v11700 = vpack.c.b16 %v11584, %v11580
    %v11701 = vpack.c.b16 %v11589, %v11585
    %v11702 = vpack.c.b16 %v11590, %v11586
    %v11703 = vpack.c.b16 %v11591, %v11587
    %v11704 = vpack.c.b16 %v11592, %v11588
    %v11705 = vpack.c.b16 %v11597, %v11593
    %v11706 = vpack.c.b16 %v11598, %v11594
    %v11707 = vpack.c.b16 %v11599, %v11595
    %v11708 = vpack.c.b16 %v11600, %v11596
    %v11709 = vpack.c.b16 %v11605, %v11601
    %v11710 = vpack.c.b16 %v11606, %v11602
    %v11711 = vpack.c.b16 %v11607, %v11603
    %v11712 = vpack.c.b16 %v11608, %v11604
    %v11713 = vpack.c.b16 %v11613, %v11609
    %v11714 = vpack.c.b16 %v11614, %v11610
    %v11715 = vpack.c.b16 %v11615, %v11611
    %v11716 = vpack.c.b16 %v11616, %v11612
    %v11717 = vpack.c.b16 %v11621, %v11617
    %v11718 = vpack.c.b16 %v11622, %v11618
    %v11719 = vpack.c.b16 %v11623, %v11619
    %v11720 = vpack.c.b16 %v11624, %v11620
    %v11721 = vpack.c.b16 %v11629, %v11625
    %v11722 = vpack.c.b16 %v11630, %v11626
    %v11723 = vpack.c.b16 %v11631, %v11627
    %v11724 = vpack.c.b16 %v11632, %v11628
    %v11725 = vpack.c.b16 %v11637, %v11633
    %v11726 = vpack.c.b16 %v11638, %v11634
    %v11727 = vpack.c.b16 %v11639, %v11635
    %v11728 = vpack.c.b16 %v11640, %v11636
    %v11729 = vpack.c.b16 %v11645, %v11641
    %v11730 = vpack.c.b16 %v11646, %v11642
    %v11731 = vpack.c.b16 %v11647, %v11643
    %v11732 = vpack.c.b16 %v11648, %v11644
    %v11733 = vpack.c.b16 %v11653, %v11649
    %v11734 = vpack.c.b16 %v11654, %v11650
    %v11735 = vpack.c.b16 %v11655, %v11651
    %v11736 = vpack.c.b16 %v11656, %v11652
    %v11737 = vpack.c.b16 %v11661, %v11657
    %v11738 = vpack.c.b16 %v11662, %v11658
    %v11739 = vpack.c.b16 %v11663, %v11659
    %v11740 = vpack.c.b16 %v11664, %v11660
    %v11741 = vpack.c.b16 %v11669, %v11665
    %v11742 = vpack.c.b16 %v11670, %v11666
    %v11743 = vpack.c.b16 %v11671, %v11667
    %v11744 = vpack.c.b16 %v11672, %v11668
    %v11745 = vpack.c.b16 %v11677, %v11673
    %v11746 = vpack.c.b16 %v11678, %v11674
    %v11747 = vpack.c.b16 %v11679, %v11675
    %v11748 = vpack.c.b16 %v11680, %v11676
    %v11749 = vpack.c.b16 %v11685, %v11681
    %v11750 = vpack.c.b16 %v11686, %v11682
    %v11751 = vpack.c.b16 %v11687, %v11683
    %v11752 = vpack.c.b16 %v11688, %v11684
    %11817 = vmatpush.bf16.msra.mxu0 %v11717
    %11818 = vmatpush.bf16.msra.mxu0 %v11713
    %11819 = vmatpush.bf16.msra.mxu0 %v11709
    %11820 = vmatpush.bf16.msra.mxu0 %v11705
    %11821 = vmatpush.bf16.msra.mxu0 %v11701
    %11822 = vmatpush.bf16.msra.mxu0 %v11697
    %11823 = vmatpush.bf16.msra.mxu0 %v11693
    %11824 = vmatpush.bf16.msra.mxu0 %v11689
    %11825 = vmatmul.bf16.gmra.mxu0 %v11493
    %v11826 = vpop.f32.mrf.mxu0
    %v11827 = vadd.f32 0.0, %v11826
    %v11828 = vpop.f32.mrf.mxu0
    %11829 = vdwg.mxu0
    %11830 = vmatpush.bf16.msra.mxu0 %v11749
    %11831 = vmatpush.bf16.msra.mxu0 %v11745
    %11832 = vmatpush.bf16.msra.mxu0 %v11741
    %11833 = vmatpush.bf16.msra.mxu0 %v11737
    %11834 = vmatpush.bf16.msra.mxu0 %v11733
    %11835 = vmatpush.bf16.msra.mxu0 %v11729
    %11836 = vmatpush.bf16.msra.mxu0 %v11725
    %11837 = vmatpush.bf16.msra.mxu0 %v11721
    %11838 = vmatmul.bf16.gmra.mxu0 %v11494
    %v11839 = vpop.f32.mrf.mxu0
    %v11840 = vadd.f32 %v11827, %v11839
    %v11841 = vpop.f32.mrf.mxu0
    %11842 = vdwg.mxu0
    %11843 = vmatpush.bf16.msra.mxu0 %v11718
    %11844 = vmatpush.bf16.msra.mxu0 %v11714
    %11845 = vmatpush.bf16.msra.mxu0 %v11710
    %11846 = vmatpush.bf16.msra.mxu0 %v11706
    %11847 = vmatpush.bf16.msra.mxu0 %v11702
    %11848 = vmatpush.bf16.msra.mxu0 %v11698
    %11849 = vmatpush.bf16.msra.mxu0 %v11694
    %11850 = vmatpush.bf16.msra.mxu0 %v11690
    %11851 = vmatmul.bf16.gmra.mxu0 %v11493
    %v11852 = vpop.f32.mrf.mxu0
    %v11853 = vadd.f32 0.0, %v11852
    %v11854 = vpop.f32.mrf.mxu0
    %11855 = vdwg.mxu0
    %11856 = vmatpush.bf16.msra.mxu0 %v11750
    %11857 = vmatpush.bf16.msra.mxu0 %v11746
    %11858 = vmatpush.bf16.msra.mxu0 %v11742
    %11859 = vmatpush.bf16.msra.mxu0 %v11738
    %11860 = vmatpush.bf16.msra.mxu0 %v11734
    %11861 = vmatpush.bf16.msra.mxu0 %v11730
    %11862 = vmatpush.bf16.msra.mxu0 %v11726
    %11863 = vmatpush.bf16.msra.mxu0 %v11722
    %11864 = vmatmul.bf16.gmra.mxu0 %v11494
    %v11865 = vpop.f32.mrf.mxu0
    %v11866 = vadd.f32 %v11853, %v11865
    %v11867 = vpop.f32.mrf.mxu0
    %11868 = vdwg.mxu0
    %11869 = vmatpush.bf16.msra.mxu0 %v11719
    %11870 = vmatpush.bf16.msra.mxu0 %v11715
    %11871 = vmatpush.bf16.msra.mxu0 %v11711
    %11872 = vmatpush.bf16.msra.mxu0 %v11707
    %11873 = vmatpush.bf16.msra.mxu0 %v11703
    %11874 = vmatpush.bf16.msra.mxu0 %v11699
    %11875 = vmatpush.bf16.msra.mxu0 %v11695
    %11876 = vmatpush.bf16.msra.mxu0 %v11691
    %11877 = vmatmul.bf16.gmra.mxu0 %v11493
    %v11878 = vpop.f32.mrf.mxu0
    %v11879 = vadd.f32 0.0, %v11878
    %v11880 = vpop.f32.mrf.mxu0
    %11881 = vdwg.mxu0
    %11882 = vmatpush.bf16.msra.mxu0 %v11751
    %11883 = vmatpush.bf16.msra.mxu0 %v11747
    %11884 = vmatpush.bf16.msra.mxu0 %v11743
    %11885 = vmatpush.bf16.msra.mxu0 %v11739
    %11886 = vmatpush.bf16.msra.mxu0 %v11735
    %11887 = vmatpush.bf16.msra.mxu0 %v11731
    %11888 = vmatpush.bf16.msra.mxu0 %v11727
    %11889 = vmatpush.bf16.msra.mxu0 %v11723
    %11890 = vmatmul.bf16.gmra.mxu0 %v11494
    %v11891 = vpop.f32.mrf.mxu0
    %v11892 = vadd.f32 %v11879, %v11891
    %v11893 = vpop.f32.mrf.mxu0
    %11894 = vdwg.mxu0
    %11895 = vmatpush.bf16.msra.mxu0 %v11720
    %11896 = vmatpush.bf16.msra.mxu0 %v11716
    %11897 = vmatpush.bf16.msra.mxu0 %v11712
    %11898 = vmatpush.bf16.msra.mxu0 %v11708
    %11899 = vmatpush.bf16.msra.mxu0 %v11704
    %11900 = vmatpush.bf16.msra.mxu0 %v11700
    %11901 = vmatpush.bf16.msra.mxu0 %v11696
    %11902 = vmatpush.bf16.msra.mxu0 %v11692
    %11903 = vmatmul.bf16.gmra.mxu0 %v11493
    %v11904 = vpop.f32.mrf.mxu0
    %v11905 = vadd.f32 0.0, %v11904
    %v11906 = vpop.f32.mrf.mxu0
    %11907 = vdwg.mxu0
    %11908 = vmatpush.bf16.msra.mxu0 %v11752
    %11909 = vmatpush.bf16.msra.mxu0 %v11748
    %11910 = vmatpush.bf16.msra.mxu0 %v11744
    %11911 = vmatpush.bf16.msra.mxu0 %v11740
    %11912 = vmatpush.bf16.msra.mxu0 %v11736
    %11913 = vmatpush.bf16.msra.mxu0 %v11732
    %11914 = vmatpush.bf16.msra.mxu0 %v11728
    %11915 = vmatpush.bf16.msra.mxu0 %v11724
    %11916 = vmatmul.bf16.gmra.mxu0 %v11494
    %v11917 = vpop.f32.mrf.mxu0
    %v11918 = vadd.f32 %v11905, %v11917
    %v11919 = vpop.f32.mrf.mxu0
    %11920 = vdwg.mxu0
    %11921 = vst [vmem:[#allocation1] ss:$4 sm:$0xff] %v11341
    %v11922 = vld.sshfl [vmem:[#allocation1] sm:$0xff pattern:$0x73625140]
    %v11924 = vld.sshfl [vmem:[#allocation1 + $0x8] sm:$0xff pattern:$0x73625140]
    %s11926 = scalar_lea.vmem [#allocation1], 32
    %11927 = vst [vmem:[%s11926] ss:$4 sm:$0xff] %v11342
    %v11928 = vld.sshfl [vmem:[#allocation1 + $0x20] sm:$0xff pattern:$0x73625140]
    %v11930 = vld.sshfl [vmem:[#allocation1 + $0x28] sm:$0xff pattern:$0x73625140]
    %v11932 = vunpack.c.l.b16 %v11922
    %v11933 = vunpack.c.l.b16 %v11924
    %v11934 = vunpack.c.l.b16 %v11928
    %v11935 = vunpack.c.l.b16 %v11930
    %v11936 = vrot.slane %v11934, 7
    %v11937 = vsel %vm2699, %v11936, %v11932
    %v11938 = vrot.slane %v11935, 7
    %v11939 = vsel %vm2699, %v11938, %v11933
    %v11940 = vpack.c.b16 %v11937, %v11937
    %v11941 = vpack.c.b16 %v11939, %v11939
    %v12008 = vunpack.c.l.b16 %v11343
    %v12009 = vunpack.c.h.b16 %v11343
    %v12010 = vunpack.c.l.b16 %v11344
    %v12011 = vunpack.c.h.b16 %v11344
    %v12012 = vunpack.c.l.b16 %v11345
    %v12013 = vunpack.c.h.b16 %v11345
    %v12014 = vunpack.c.l.b16 %v11346
    %v12015 = vunpack.c.h.b16 %v11346
    %v12016 = vunpack.c.l.b16 %v11347
    %v12017 = vunpack.c.h.b16 %v11347
    %v12018 = vunpack.c.l.b16 %v11348
    %v12019 = vunpack.c.h.b16 %v11348
    %v12020 = vunpack.c.l.b16 %v11349
    %v12021 = vunpack.c.h.b16 %v11349
    %v12022 = vunpack.c.l.b16 %v11350
    %v12023 = vunpack.c.h.b16 %v11350
    %v12024 = vunpack.c.l.b16 %v11351
    %v12025 = vunpack.c.h.b16 %v11351
    %v12026 = vunpack.c.l.b16 %v11352
    %v12027 = vunpack.c.h.b16 %v11352
    %v12028 = vunpack.c.l.b16 %v11353
    %v12029 = vunpack.c.h.b16 %v11353
    %v12030 = vunpack.c.l.b16 %v11354
    %v12031 = vunpack.c.h.b16 %v11354
    %v12032 = vunpack.c.l.b16 %v11355
    %v12033 = vunpack.c.h.b16 %v11355
    %v12034 = vunpack.c.l.b16 %v11356
    %v12035 = vunpack.c.h.b16 %v11356
    %v12036 = vunpack.c.l.b16 %v11357
    %v12037 = vunpack.c.h.b16 %v11357
    %v12038 = vunpack.c.l.b16 %v11358
    %v12039 = vunpack.c.h.b16 %v11358
    %v12040 = vunpack.c.l.b16 %v11359
    %v12041 = vunpack.c.h.b16 %v11359
    %v12042 = vunpack.c.l.b16 %v11360
    %v12043 = vunpack.c.h.b16 %v11360
    %v12044 = vunpack.c.l.b16 %v11361
    %v12045 = vunpack.c.h.b16 %v11361
    %v12046 = vunpack.c.l.b16 %v11362
    %v12047 = vunpack.c.h.b16 %v11362
    %v12048 = vunpack.c.l.b16 %v11363
    %v12049 = vunpack.c.h.b16 %v11363
    %v12050 = vunpack.c.l.b16 %v11364
    %v12051 = vunpack.c.h.b16 %v11364
    %v12052 = vunpack.c.l.b16 %v11365
    %v12053 = vunpack.c.h.b16 %v11365
    %v12054 = vunpack.c.l.b16 %v11366
    %v12055 = vunpack.c.h.b16 %v11366
    %v12056 = vunpack.c.l.b16 %v11367
    %v12057 = vunpack.c.h.b16 %v11367
    %v12058 = vunpack.c.l.b16 %v11368
    %v12059 = vunpack.c.h.b16 %v11368
    %v12060 = vunpack.c.l.b16 %v11369
    %v12061 = vunpack.c.h.b16 %v11369
    %v12062 = vunpack.c.l.b16 %v11370
    %v12063 = vunpack.c.h.b16 %v11370
    %v12064 = vunpack.c.l.b16 %v11371
    %v12065 = vunpack.c.h.b16 %v11371
    %v12066 = vunpack.c.l.b16 %v11372
    %v12067 = vunpack.c.h.b16 %v11372
    %v12068 = vunpack.c.l.b16 %v11373
    %v12069 = vunpack.c.h.b16 %v11373
    %v12070 = vunpack.c.l.b16 %v11374
    %v12071 = vunpack.c.h.b16 %v11374
    %v12072 = vunpack.c.l.b16 %v11375
    %v12073 = vunpack.c.h.b16 %v11375
    %v12074 = vunpack.c.l.b16 %v11376
    %v12075 = vunpack.c.h.b16 %v11376
    %v12076 = vunpack.c.l.b16 %v11377
    %v12077 = vunpack.c.h.b16 %v11377
    %v12078 = vunpack.c.l.b16 %v11378
    %v12079 = vunpack.c.h.b16 %v11378
    %v12080 = vunpack.c.l.b16 %v11379
    %v12081 = vunpack.c.h.b16 %v11379
    %v12082 = vunpack.c.l.b16 %v11380
    %v12083 = vunpack.c.h.b16 %v11380
    %v12084 = vunpack.c.l.b16 %v11381
    %v12085 = vunpack.c.h.b16 %v11381
    %v12086 = vunpack.c.l.b16 %v11382
    %v12087 = vunpack.c.h.b16 %v11382
    %v12088 = vunpack.c.l.b16 %v11383
    %v12089 = vunpack.c.h.b16 %v11383
    %v12090 = vunpack.c.l.b16 %v11384
    %v12091 = vunpack.c.h.b16 %v11384
    %v12092 = vunpack.c.l.b16 %v11385
    %v12093 = vunpack.c.h.b16 %v11385
    %v12094 = vunpack.c.l.b16 %v11386
    %v12095 = vunpack.c.h.b16 %v11386
    %v12096 = vunpack.c.l.b16 %v11387
    %v12097 = vunpack.c.h.b16 %v11387
    %v12098 = vunpack.c.l.b16 %v11388
    %v12099 = vunpack.c.h.b16 %v11388
    %v12100 = vunpack.c.l.b16 %v11389
    %v12101 = vunpack.c.h.b16 %v11389
    %v12102 = vunpack.c.l.b16 %v11390
    %v12103 = vunpack.c.h.b16 %v11390
    %v12104 = vunpack.c.l.b16 %v11391
    %v12105 = vunpack.c.h.b16 %v11391
    %v12106 = vunpack.c.l.b16 %v11392
    %v12107 = vunpack.c.h.b16 %v11392
    %v12108 = vunpack.c.l.b16 %v11393
    %v12109 = vunpack.c.h.b16 %v11393
    %v12110 = vunpack.c.l.b16 %v11394
    %v12111 = vunpack.c.h.b16 %v11394
    %v12112 = vunpack.c.l.b16 %v11395
    %v12113 = vunpack.c.h.b16 %v11395
    %v12114 = vunpack.c.l.b16 %v11396
    %v12115 = vunpack.c.h.b16 %v11396
    %v12116 = vunpack.c.l.b16 %v11397
    %v12117 = vunpack.c.h.b16 %v11397
    %v12118 = vunpack.c.l.b16 %v11398
    %v12119 = vunpack.c.h.b16 %v11398
    %v12120 = vunpack.c.l.b16 %v11399
    %v12121 = vunpack.c.h.b16 %v11399
    %v12122 = vunpack.c.l.b16 %v11400
    %v12123 = vunpack.c.h.b16 %v11400
    %v12124 = vunpack.c.l.b16 %v11401
    %v12125 = vunpack.c.h.b16 %v11401
    %v12126 = vunpack.c.l.b16 %v11402
    %v12127 = vunpack.c.h.b16 %v11402
    %v12128 = vunpack.c.l.b16 %v11403
    %v12129 = vunpack.c.h.b16 %v11403
    %v12130 = vunpack.c.l.b16 %v11404
    %v12131 = vunpack.c.h.b16 %v11404
    %v12132 = vunpack.c.l.b16 %v11405
    %v12133 = vunpack.c.h.b16 %v11405
    %v12134 = vunpack.c.l.b16 %v11406
    %v12135 = vunpack.c.h.b16 %v11406
    %v12136 = vpack.c.b16 %v12012, %v12008
    %v12137 = vpack.c.b16 %v12013, %v12009
    %v12138 = vpack.c.b16 %v12014, %v12010
    %v12139 = vpack.c.b16 %v12015, %v12011
    %v12140 = vpack.c.b16 %v12020, %v12016
    %v12141 = vpack.c.b16 %v12021, %v12017
    %v12142 = vpack.c.b16 %v12022, %v12018
    %v12143 = vpack.c.b16 %v12023, %v12019
    %v12144 = vpack.c.b16 %v12028, %v12024
    %v12145 = vpack.c.b16 %v12029, %v12025
    %v12146 = vpack.c.b16 %v12030, %v12026
    %v12147 = vpack.c.b16 %v12031, %v12027
    %v12148 = vpack.c.b16 %v12036, %v12032
    %v12149 = vpack.c.b16 %v12037, %v12033
    %v12150 = vpack.c.b16 %v12038, %v12034
    %v12151 = vpack.c.b16 %v12039, %v12035
    %v12152 = vpack.c.b16 %v12044, %v12040
    %v12153 = vpack.c.b16 %v12045, %v12041
    %v12154 = vpack.c.b16 %v12046, %v12042
    %v12155 = vpack.c.b16 %v12047, %v12043
    %v12156 = vpack.c.b16 %v12052, %v12048
    %v12157 = vpack.c.b16 %v12053, %v12049
    %v12158 = vpack.c.b16 %v12054, %v12050
    %v12159 = vpack.c.b16 %v12055, %v12051
    %v12160 = vpack.c.b16 %v12060, %v12056
    %v12161 = vpack.c.b16 %v12061, %v12057
    %v12162 = vpack.c.b16 %v12062, %v12058
    %v12163 = vpack.c.b16 %v12063, %v12059
    %v12164 = vpack.c.b16 %v12068, %v12064
    %v12165 = vpack.c.b16 %v12069, %v12065
    %v12166 = vpack.c.b16 %v12070, %v12066
    %v12167 = vpack.c.b16 %v12071, %v12067
    %v12168 = vpack.c.b16 %v12076, %v12072
    %v12169 = vpack.c.b16 %v12077, %v12073
    %v12170 = vpack.c.b16 %v12078, %v12074
    %v12171 = vpack.c.b16 %v12079, %v12075
    %v12172 = vpack.c.b16 %v12084, %v12080
    %v12173 = vpack.c.b16 %v12085, %v12081
    %v12174 = vpack.c.b16 %v12086, %v12082
    %v12175 = vpack.c.b16 %v12087, %v12083
    %v12176 = vpack.c.b16 %v12092, %v12088
    %v12177 = vpack.c.b16 %v12093, %v12089
    %v12178 = vpack.c.b16 %v12094, %v12090
    %v12179 = vpack.c.b16 %v12095, %v12091
    %v12180 = vpack.c.b16 %v12100, %v12096
    %v12181 = vpack.c.b16 %v12101, %v12097
    %v12182 = vpack.c.b16 %v12102, %v12098
    %v12183 = vpack.c.b16 %v12103, %v12099
    %v12184 = vpack.c.b16 %v12108, %v12104
    %v12185 = vpack.c.b16 %v12109, %v12105
    %v12186 = vpack.c.b16 %v12110, %v12106
    %v12187 = vpack.c.b16 %v12111, %v12107
    %v12188 = vpack.c.b16 %v12116, %v12112
    %v12189 = vpack.c.b16 %v12117, %v12113
    %v12190 = vpack.c.b16 %v12118, %v12114
    %v12191 = vpack.c.b16 %v12119, %v12115
    %v12192 = vpack.c.b16 %v12124, %v12120
    %v12193 = vpack.c.b16 %v12125, %v12121
    %v12194 = vpack.c.b16 %v12126, %v12122
    %v12195 = vpack.c.b16 %v12127, %v12123
    %v12196 = vpack.c.b16 %v12132, %v12128
    %v12197 = vpack.c.b16 %v12133, %v12129
    %v12198 = vpack.c.b16 %v12134, %v12130
    %v12199 = vpack.c.b16 %v12135, %v12131
    %12264 = vmatpush.bf16.msra.mxu0 %v12164
    %12265 = vmatpush.bf16.msra.mxu0 %v12160
    %12266 = vmatpush.bf16.msra.mxu0 %v12156
    %12267 = vmatpush.bf16.msra.mxu0 %v12152
    %12268 = vmatpush.bf16.msra.mxu0 %v12148
    %12269 = vmatpush.bf16.msra.mxu0 %v12144
    %12270 = vmatpush.bf16.msra.mxu0 %v12140
    %12271 = vmatpush.bf16.msra.mxu0 %v12136
    %12272 = vmatmul.bf16.gmra.mxu0 %v11940
    %v12273 = vpop.f32.mrf.mxu0
    %v12274 = vadd.f32 %v11840, %v12273
    %v12275 = vpop.f32.mrf.mxu0
    %12276 = vdwg.mxu0
    %12277 = vmatpush.bf16.msra.mxu0 %v12196
    %12278 = vmatpush.bf16.msra.mxu0 %v12192
    %12279 = vmatpush.bf16.msra.mxu0 %v12188
    %12280 = vmatpush.bf16.msra.mxu0 %v12184
    %12281 = vmatpush.bf16.msra.mxu0 %v12180
    %12282 = vmatpush.bf16.msra.mxu0 %v12176
    %12283 = vmatpush.bf16.msra.mxu0 %v12172
    %12284 = vmatpush.bf16.msra.mxu0 %v12168
    %12285 = vmatmul.bf16.gmra.mxu0 %v11941
    %v12286 = vpop.f32.mrf.mxu0
    %v12287 = vadd.f32 %v12274, %v12286
    %v12288 = vpop.f32.mrf.mxu0
    %12289 = vdwg.mxu0
    %12290 = vmatpush.bf16.msra.mxu0 %v12165
    %12291 = vmatpush.bf16.msra.mxu0 %v12161
    %12292 = vmatpush.bf16.msra.mxu0 %v12157
    %12293 = vmatpush.bf16.msra.mxu0 %v12153
    %12294 = vmatpush.bf16.msra.mxu0 %v12149
    %12295 = vmatpush.bf16.msra.mxu0 %v12145
    %12296 = vmatpush.bf16.msra.mxu0 %v12141
    %12297 = vmatpush.bf16.msra.mxu0 %v12137
    %12298 = vmatmul.bf16.gmra.mxu0 %v11940
    %v12299 = vpop.f32.mrf.mxu0
    %v12300 = vadd.f32 %v11866, %v12299
    %v12301 = vpop.f32.mrf.mxu0
    %12302 = vdwg.mxu0
    %12303 = vmatpush.bf16.msra.mxu0 %v12197
    %12304 = vmatpush.bf16.msra.mxu0 %v12193
    %12305 = vmatpush.bf16.msra.mxu0 %v12189
    %12306 = vmatpush.bf16.msra.mxu0 %v12185
    %12307 = vmatpush.bf16.msra.mxu0 %v12181
    %12308 = vmatpush.bf16.msra.mxu0 %v12177
    %12309 = vmatpush.bf16.msra.mxu0 %v12173
    %12310 = vmatpush.bf16.msra.mxu0 %v12169
    %12311 = vmatmul.bf16.gmra.mxu0 %v11941
    %v12312 = vpop.f32.mrf.mxu0
    %v12313 = vadd.f32 %v12300, %v12312
    %v12314 = vpop.f32.mrf.mxu0
    %12315 = vdwg.mxu0
    %12316 = vmatpush.bf16.msra.mxu0 %v12166
    %12317 = vmatpush.bf16.msra.mxu0 %v12162
    %12318 = vmatpush.bf16.msra.mxu0 %v12158
    %12319 = vmatpush.bf16.msra.mxu0 %v12154
    %12320 = vmatpush.bf16.msra.mxu0 %v12150
    %12321 = vmatpush.bf16.msra.mxu0 %v12146
    %12322 = vmatpush.bf16.msra.mxu0 %v12142
    %12323 = vmatpush.bf16.msra.mxu0 %v12138
    %12324 = vmatmul.bf16.gmra.mxu0 %v11940
    %v12325 = vpop.f32.mrf.mxu0
    %v12326 = vadd.f32 %v11892, %v12325
    %v12327 = vpop.f32.mrf.mxu0
    %12328 = vdwg.mxu0
    %12329 = vmatpush.bf16.msra.mxu0 %v12198
    %12330 = vmatpush.bf16.msra.mxu0 %v12194
    %12331 = vmatpush.bf16.msra.mxu0 %v12190
    %12332 = vmatpush.bf16.msra.mxu0 %v12186
    %12333 = vmatpush.bf16.msra.mxu0 %v12182
    %12334 = vmatpush.bf16.msra.mxu0 %v12178
    %12335 = vmatpush.bf16.msra.mxu0 %v12174
    %12336 = vmatpush.bf16.msra.mxu0 %v12170
    %12337 = vmatmul.bf16.gmra.mxu0 %v11941
    %v12338 = vpop.f32.mrf.mxu0
    %v12339 = vadd.f32 %v12326, %v12338
    %v12340 = vpop.f32.mrf.mxu0
    %12341 = vdwg.mxu0
    %12342 = vmatpush.bf16.msra.mxu0 %v12167
    %12343 = vmatpush.bf16.msra.mxu0 %v12163
    %12344 = vmatpush.bf16.msra.mxu0 %v12159
    %12345 = vmatpush.bf16.msra.mxu0 %v12155
    %12346 = vmatpush.bf16.msra.mxu0 %v12151
    %12347 = vmatpush.bf16.msra.mxu0 %v12147
    %12348 = vmatpush.bf16.msra.mxu0 %v12143
    %12349 = vmatpush.bf16.msra.mxu0 %v12139
    %12350 = vmatmul.bf16.gmra.mxu0 %v11940
    %v12351 = vpop.f32.mrf.mxu0
    %v12352 = vadd.f32 %v11918, %v12351
    %v12353 = vpop.f32.mrf.mxu0
    %12354 = vdwg.mxu0
    %12355 = vmatpush.bf16.msra.mxu0 %v12199
    %12356 = vmatpush.bf16.msra.mxu0 %v12195
    %12357 = vmatpush.bf16.msra.mxu0 %v12191
    %12358 = vmatpush.bf16.msra.mxu0 %v12187
    %12359 = vmatpush.bf16.msra.mxu0 %v12183
    %12360 = vmatpush.bf16.msra.mxu0 %v12179
    %12361 = vmatpush.bf16.msra.mxu0 %v12175
    %12362 = vmatpush.bf16.msra.mxu0 %v12171
    %12363 = vmatmul.bf16.gmra.mxu0 %v11941
    %v12364 = vpop.f32.mrf.mxu0
    %v12365 = vadd.f32 %v12352, %v12364
    %v12366 = vpop.f32.mrf.mxu0
    %12367 = vdwg.mxu0
    %v12368 = vld [vmem:[#allocation5] sm:$0xa]
    %v12369 = vld [vmem:[#allocation5 + $0x4] sm:$0xa]
    %s12370 = scalar_lea.vmem [#allocation17], 1024
    %v12371 = vld [vmem:[%s12370] sm:$0xff]
    %v12372 = vld [vmem:[%s12370 + $0x8] sm:$0xff]
    %v12373 = vld [vmem:[%s12370 + $0x10] sm:$0xff]
    %v12374 = vld [vmem:[%s12370 + $0x18] sm:$0xff]
    %v12375 = vld [vmem:[%s12370 + $0x20] sm:$0xff]
    %v12376 = vld [vmem:[%s12370 + $0x28] sm:$0xff]
    %v12377 = vld [vmem:[%s12370 + $0x30] sm:$0xff]
    %v12378 = vld [vmem:[%s12370 + $0x38] sm:$0xff]
    %v12379 = vld [vmem:[%s12370 + $0x40] sm:$0xff]
    %v12380 = vld [vmem:[%s12370 + $0x48] sm:$0xff]
    %v12381 = vld [vmem:[%s12370 + $0x50] sm:$0xff]
    %v12382 = vld [vmem:[%s12370 + $0x58] sm:$0xff]
    %v12383 = vld [vmem:[%s12370 + $0x60] sm:$0xff]
    %v12384 = vld [vmem:[%s12370 + $0x68] sm:$0xff]
    %v12385 = vld [vmem:[%s12370 + $0x70] sm:$0xff]
    %v12386 = vld [vmem:[%s12370 + $0x78] sm:$0xff]
    %v12387 = vld [vmem:[%s12370 + $0x80] sm:$0xff]
    %v12388 = vld [vmem:[%s12370 + $0x88] sm:$0xff]
    %v12389 = vld [vmem:[%s12370 + $0x90] sm:$0xff]
    %v12390 = vld [vmem:[%s12370 + $0x98] sm:$0xff]
    %v12391 = vld [vmem:[%s12370 + $0xa0] sm:$0xff]
    %v12392 = vld [vmem:[%s12370 + $0xa8] sm:$0xff]
    %v12393 = vld [vmem:[%s12370 + $0xb0] sm:$0xff]
    %v12394 = vld [vmem:[%s12370 + $0xb8] sm:$0xff]
    %v12395 = vld [vmem:[%s12370 + $0xc0] sm:$0xff]
    %v12396 = vld [vmem:[%s12370 + $0xc8] sm:$0xff]
    %v12397 = vld [vmem:[%s12370 + $0xd0] sm:$0xff]
    %v12398 = vld [vmem:[%s12370 + $0xd8] sm:$0xff]
    %v12399 = vld [vmem:[%s12370 + $0xe0] sm:$0xff]
    %v12400 = vld [vmem:[%s12370 + $0xe8] sm:$0xff]
    %v12401 = vld [vmem:[%s12370 + $0xf0] sm:$0xff]
    %v12402 = vld [vmem:[%s12370 + $0xf8] sm:$0xff]
    %v12403 = vld [vmem:[%s12370 + $0x100] sm:$0xff]
    %v12404 = vld [vmem:[%s12370 + $0x108] sm:$0xff]
    %v12405 = vld [vmem:[%s12370 + $0x110] sm:$0xff]
    %v12406 = vld [vmem:[%s12370 + $0x118] sm:$0xff]
    %v12407 = vld [vmem:[%s12370 + $0x120] sm:$0xff]
    %v12408 = vld [vmem:[%s12370 + $0x128] sm:$0xff]
    %v12409 = vld [vmem:[%s12370 + $0x130] sm:$0xff]
    %v12410 = vld [vmem:[%s12370 + $0x138] sm:$0xff]
    %v12411 = vld [vmem:[%s12370 + $0x140] sm:$0xff]
    %v12412 = vld [vmem:[%s12370 + $0x148] sm:$0xff]
    %v12413 = vld [vmem:[%s12370 + $0x150] sm:$0xff]
    %v12414 = vld [vmem:[%s12370 + $0x158] sm:$0xff]
    %v12415 = vld [vmem:[%s12370 + $0x160] sm:$0xff]
    %v12416 = vld [vmem:[%s12370 + $0x168] sm:$0xff]
    %v12417 = vld [vmem:[%s12370 + $0x170] sm:$0xff]
    %v12418 = vld [vmem:[%s12370 + $0x178] sm:$0xff]
    %v12419 = vld [vmem:[%s12370 + $0x180] sm:$0xff]
    %v12420 = vld [vmem:[%s12370 + $0x188] sm:$0xff]
    %v12421 = vld [vmem:[%s12370 + $0x190] sm:$0xff]
    %v12422 = vld [vmem:[%s12370 + $0x198] sm:$0xff]
    %v12423 = vld [vmem:[%s12370 + $0x1a0] sm:$0xff]
    %v12424 = vld [vmem:[%s12370 + $0x1a8] sm:$0xff]
    %v12425 = vld [vmem:[%s12370 + $0x1b0] sm:$0xff]
    %v12426 = vld [vmem:[%s12370 + $0x1b8] sm:$0xff]
    %v12427 = vld [vmem:[%s12370 + $0x1c0] sm:$0xff]
    %v12428 = vld [vmem:[%s12370 + $0x1c8] sm:$0xff]
    %v12429 = vld [vmem:[%s12370 + $0x1d0] sm:$0xff]
    %v12430 = vld [vmem:[%s12370 + $0x1d8] sm:$0xff]
    %v12431 = vld [vmem:[%s12370 + $0x1e0] sm:$0xff]
    %v12432 = vld [vmem:[%s12370 + $0x1e8] sm:$0xff]
    %v12433 = vld [vmem:[%s12370 + $0x1f0] sm:$0xff]
    %v12434 = vld [vmem:[%s12370 + $0x1f8] sm:$0xff]
    %12436 = vst [vmem:[#allocation1] ss:$4 sm:$0xff] %v12368
    %v12437 = vld.sshfl [vmem:[#allocation1] sm:$0xff pattern:$0x73625140]
    %v12439 = vld.sshfl [vmem:[#allocation1 + $0x8] sm:$0xff pattern:$0x73625140]
    %s12442 = scalar_lea.vmem [#allocation1], 32
    %12443 = vst [vmem:[%s12442] ss:$4 sm:$0xff] %v12369
    %v12444 = vld.sshfl [vmem:[#allocation1 + $0x20] sm:$0xff pattern:$0x73625140]
    %v12446 = vld.sshfl [vmem:[#allocation1 + $0x28] sm:$0xff pattern:$0x73625140]
    %v12448 = vunpack.c.l.b16 %v12437
    %v12449 = vunpack.c.l.b16 %v12439
    %v12450 = vunpack.c.l.b16 %v12444
    %v12451 = vunpack.c.l.b16 %v12446
    %v12452 = vrot.slane %v12448, 2
    %v12453 = vrot.slane %v12450, 1
    %v12454 = vsel %vm2699, %v12453, %v12452
    %v12455 = vrot.slane %v12449, 2
    %v12456 = vrot.slane %v12451, 1
    %v12457 = vsel %vm2699, %v12456, %v12455
    %v12458 = vpack.c.b16 %v12454, %v12454
    %v12459 = vpack.c.b16 %v12457, %v12457
    %v12526 = vunpack.c.l.b16 %v12371
    %v12527 = vunpack.c.h.b16 %v12371
    %v12528 = vunpack.c.l.b16 %v12372
    %v12529 = vunpack.c.h.b16 %v12372
    %v12530 = vunpack.c.l.b16 %v12373
    %v12531 = vunpack.c.h.b16 %v12373
    %v12532 = vunpack.c.l.b16 %v12374
    %v12533 = vunpack.c.h.b16 %v12374
    %v12534 = vunpack.c.l.b16 %v12375
    %v12535 = vunpack.c.h.b16 %v12375
    %v12536 = vunpack.c.l.b16 %v12376
    %v12537 = vunpack.c.h.b16 %v12376
    %v12538 = vunpack.c.l.b16 %v12377
    %v12539 = vunpack.c.h.b16 %v12377
    %v12540 = vunpack.c.l.b16 %v12378
    %v12541 = vunpack.c.h.b16 %v12378
    %v12542 = vunpack.c.l.b16 %v12379
    %v12543 = vunpack.c.h.b16 %v12379
    %v12544 = vunpack.c.l.b16 %v12380
    %v12545 = vunpack.c.h.b16 %v12380
    %v12546 = vunpack.c.l.b16 %v12381
    %v12547 = vunpack.c.h.b16 %v12381
    %v12548 = vunpack.c.l.b16 %v12382
    %v12549 = vunpack.c.h.b16 %v12382
    %v12550 = vunpack.c.l.b16 %v12383
    %v12551 = vunpack.c.h.b16 %v12383
    %v12552 = vunpack.c.l.b16 %v12384
    %v12553 = vunpack.c.h.b16 %v12384
    %v12554 = vunpack.c.l.b16 %v12385
    %v12555 = vunpack.c.h.b16 %v12385
    %v12556 = vunpack.c.l.b16 %v12386
    %v12557 = vunpack.c.h.b16 %v12386
    %v12558 = vunpack.c.l.b16 %v12387
    %v12559 = vunpack.c.h.b16 %v12387
    %v12560 = vunpack.c.l.b16 %v12388
    %v12561 = vunpack.c.h.b16 %v12388
    %v12562 = vunpack.c.l.b16 %v12389
    %v12563 = vunpack.c.h.b16 %v12389
    %v12564 = vunpack.c.l.b16 %v12390
    %v12565 = vunpack.c.h.b16 %v12390
    %v12566 = vunpack.c.l.b16 %v12391
    %v12567 = vunpack.c.h.b16 %v12391
    %v12568 = vunpack.c.l.b16 %v12392
    %v12569 = vunpack.c.h.b16 %v12392
    %v12570 = vunpack.c.l.b16 %v12393
    %v12571 = vunpack.c.h.b16 %v12393
    %v12572 = vunpack.c.l.b16 %v12394
    %v12573 = vunpack.c.h.b16 %v12394
    %v12574 = vunpack.c.l.b16 %v12395
    %v12575 = vunpack.c.h.b16 %v12395
    %v12576 = vunpack.c.l.b16 %v12396
    %v12577 = vunpack.c.h.b16 %v12396
    %v12578 = vunpack.c.l.b16 %v12397
    %v12579 = vunpack.c.h.b16 %v12397
    %v12580 = vunpack.c.l.b16 %v12398
    %v12581 = vunpack.c.h.b16 %v12398
    %v12582 = vunpack.c.l.b16 %v12399
    %v12583 = vunpack.c.h.b16 %v12399
    %v12584 = vunpack.c.l.b16 %v12400
    %v12585 = vunpack.c.h.b16 %v12400
    %v12586 = vunpack.c.l.b16 %v12401
    %v12587 = vunpack.c.h.b16 %v12401
    %v12588 = vunpack.c.l.b16 %v12402
    %v12589 = vunpack.c.h.b16 %v12402
    %v12590 = vunpack.c.l.b16 %v12403
    %v12591 = vunpack.c.h.b16 %v12403
    %v12592 = vunpack.c.l.b16 %v12404
    %v12593 = vunpack.c.h.b16 %v12404
    %v12594 = vunpack.c.l.b16 %v12405
    %v12595 = vunpack.c.h.b16 %v12405
    %v12596 = vunpack.c.l.b16 %v12406
    %v12597 = vunpack.c.h.b16 %v12406
    %v12598 = vunpack.c.l.b16 %v12407
    %v12599 = vunpack.c.h.b16 %v12407
    %v12600 = vunpack.c.l.b16 %v12408
    %v12601 = vunpack.c.h.b16 %v12408
    %v12602 = vunpack.c.l.b16 %v12409
    %v12603 = vunpack.c.h.b16 %v12409
    %v12604 = vunpack.c.l.b16 %v12410
    %v12605 = vunpack.c.h.b16 %v12410
    %v12606 = vunpack.c.l.b16 %v12411
    %v12607 = vunpack.c.h.b16 %v12411
    %v12608 = vunpack.c.l.b16 %v12412
    %v12609 = vunpack.c.h.b16 %v12412
    %v12610 = vunpack.c.l.b16 %v12413
    %v12611 = vunpack.c.h.b16 %v12413
    %v12612 = vunpack.c.l.b16 %v12414
    %v12613 = vunpack.c.h.b16 %v12414
    %v12614 = vunpack.c.l.b16 %v12415
    %v12615 = vunpack.c.h.b16 %v12415
    %v12616 = vunpack.c.l.b16 %v12416
    %v12617 = vunpack.c.h.b16 %v12416
    %v12618 = vunpack.c.l.b16 %v12417
    %v12619 = vunpack.c.h.b16 %v12417
    %v12620 = vunpack.c.l.b16 %v12418
    %v12621 = vunpack.c.h.b16 %v12418
    %v12622 = vunpack.c.l.b16 %v12419
    %v12623 = vunpack.c.h.b16 %v12419
    %v12624 = vunpack.c.l.b16 %v12420
    %v12625 = vunpack.c.h.b16 %v12420
    %v12626 = vunpack.c.l.b16 %v12421
    %v12627 = vunpack.c.h.b16 %v12421
    %v12628 = vunpack.c.l.b16 %v12422
    %v12629 = vunpack.c.h.b16 %v12422
    %v12630 = vunpack.c.l.b16 %v12423
    %v12631 = vunpack.c.h.b16 %v12423
    %v12632 = vunpack.c.l.b16 %v12424
    %v12633 = vunpack.c.h.b16 %v12424
    %v12634 = vunpack.c.l.b16 %v12425
    %v12635 = vunpack.c.h.b16 %v12425
    %v12636 = vunpack.c.l.b16 %v12426
    %v12637 = vunpack.c.h.b16 %v12426
    %v12638 = vunpack.c.l.b16 %v12427
    %v12639 = vunpack.c.h.b16 %v12427
    %v12640 = vunpack.c.l.b16 %v12428
    %v12641 = vunpack.c.h.b16 %v12428
    %v12642 = vunpack.c.l.b16 %v12429
    %v12643 = vunpack.c.h.b16 %v12429
    %v12644 = vunpack.c.l.b16 %v12430
    %v12645 = vunpack.c.h.b16 %v12430
    %v12646 = vunpack.c.l.b16 %v12431
    %v12647 = vunpack.c.h.b16 %v12431
    %v12648 = vunpack.c.l.b16 %v12432
    %v12649 = vunpack.c.h.b16 %v12432
    %v12650 = vunpack.c.l.b16 %v12433
    %v12651 = vunpack.c.h.b16 %v12433
    %v12652 = vunpack.c.l.b16 %v12434
    %v12653 = vunpack.c.h.b16 %v12434
    %v12654 = vpack.c.b16 %v12530, %v12526
    %v12655 = vpack.c.b16 %v12531, %v12527
    %v12656 = vpack.c.b16 %v12532, %v12528
    %v12657 = vpack.c.b16 %v12533, %v12529
    %v12658 = vpack.c.b16 %v12538, %v12534
    %v12659 = vpack.c.b16 %v12539, %v12535
    %v12660 = vpack.c.b16 %v12540, %v12536
    %v12661 = vpack.c.b16 %v12541, %v12537
    %v12662 = vpack.c.b16 %v12546, %v12542
    %v12663 = vpack.c.b16 %v12547, %v12543
    %v12664 = vpack.c.b16 %v12548, %v12544
    %v12665 = vpack.c.b16 %v12549, %v12545
    %v12666 = vpack.c.b16 %v12554, %v12550
    %v12667 = vpack.c.b16 %v12555, %v12551
    %v12668 = vpack.c.b16 %v12556, %v12552
    %v12669 = vpack.c.b16 %v12557, %v12553
    %v12670 = vpack.c.b16 %v12562, %v12558
    %v12671 = vpack.c.b16 %v12563, %v12559
    %v12672 = vpack.c.b16 %v12564, %v12560
    %v12673 = vpack.c.b16 %v12565, %v12561
    %v12674 = vpack.c.b16 %v12570, %v12566
    %v12675 = vpack.c.b16 %v12571, %v12567
    %v12676 = vpack.c.b16 %v12572, %v12568
    %v12677 = vpack.c.b16 %v12573, %v12569
    %v12678 = vpack.c.b16 %v12578, %v12574
    %v12679 = vpack.c.b16 %v12579, %v12575
    %v12680 = vpack.c.b16 %v12580, %v12576
    %v12681 = vpack.c.b16 %v12581, %v12577
    %v12682 = vpack.c.b16 %v12586, %v12582
    %v12683 = vpack.c.b16 %v12587, %v12583
    %v12684 = vpack.c.b16 %v12588, %v12584
    %v12685 = vpack.c.b16 %v12589, %v12585
    %v12686 = vpack.c.b16 %v12594, %v12590
    %v12687 = vpack.c.b16 %v12595, %v12591
    %v12688 = vpack.c.b16 %v12596, %v12592
    %v12689 = vpack.c.b16 %v12597, %v12593
    %v12690 = vpack.c.b16 %v12602, %v12598
    %v12691 = vpack.c.b16 %v12603, %v12599
    %v12692 = vpack.c.b16 %v12604, %v12600
    %v12693 = vpack.c.b16 %v12605, %v12601
    %v12694 = vpack.c.b16 %v12610, %v12606
    %v12695 = vpack.c.b16 %v12611, %v12607
    %v12696 = vpack.c.b16 %v12612, %v12608
    %v12697 = vpack.c.b16 %v12613, %v12609
    %v12698 = vpack.c.b16 %v12618, %v12614
    %v12699 = vpack.c.b16 %v12619, %v12615
    %v12700 = vpack.c.b16 %v12620, %v12616
    %v12701 = vpack.c.b16 %v12621, %v12617
    %v12702 = vpack.c.b16 %v12626, %v12622
    %v12703 = vpack.c.b16 %v12627, %v12623
    %v12704 = vpack.c.b16 %v12628, %v12624
    %v12705 = vpack.c.b16 %v12629, %v12625
    %v12706 = vpack.c.b16 %v12634, %v12630
    %v12707 = vpack.c.b16 %v12635, %v12631
    %v12708 = vpack.c.b16 %v12636, %v12632
    %v12709 = vpack.c.b16 %v12637, %v12633
    %v12710 = vpack.c.b16 %v12642, %v12638
    %v12711 = vpack.c.b16 %v12643, %v12639
    %v12712 = vpack.c.b16 %v12644, %v12640
    %v12713 = vpack.c.b16 %v12645, %v12641
    %v12714 = vpack.c.b16 %v12650, %v12646
    %v12715 = vpack.c.b16 %v12651, %v12647
    %v12716 = vpack.c.b16 %v12652, %v12648
    %v12717 = vpack.c.b16 %v12653, %v12649
    %12782 = vmatpush.bf16.msra.mxu0 %v12682
    %12783 = vmatpush.bf16.msra.mxu0 %v12678
    %12784 = vmatpush.bf16.msra.mxu0 %v12674
    %12785 = vmatpush.bf16.msra.mxu0 %v12670
    %12786 = vmatpush.bf16.msra.mxu0 %v12666
    %12787 = vmatpush.bf16.msra.mxu0 %v12662
    %12788 = vmatpush.bf16.msra.mxu0 %v12658
    %12789 = vmatpush.bf16.msra.mxu0 %v12654
    %12790 = vmatmul.bf16.gmra.mxu0 %v12458
    %v12791 = vpop.f32.mrf.mxu0
    %v12792 = vadd.f32 0.0, %v12791
    %v12793 = vpop.f32.mrf.mxu0
    %12794 = vdwg.mxu0
    %12795 = vmatpush.bf16.msra.mxu0 %v12714
    %12796 = vmatpush.bf16.msra.mxu0 %v12710
    %12797 = vmatpush.bf16.msra.mxu0 %v12706
    %12798 = vmatpush.bf16.msra.mxu0 %v12702
    %12799 = vmatpush.bf16.msra.mxu0 %v12698
    %12800 = vmatpush.bf16.msra.mxu0 %v12694
    %12801 = vmatpush.bf16.msra.mxu0 %v12690
    %12802 = vmatpush.bf16.msra.mxu0 %v12686
    %12803 = vmatmul.bf16.gmra.mxu0 %v12459
    %v12804 = vpop.f32.mrf.mxu0
    %v12805 = vadd.f32 %v12792, %v12804
    %v12806 = vpop.f32.mrf.mxu0
    %12807 = vdwg.mxu0
    %12808 = vmatpush.bf16.msra.mxu0 %v12683
    %12809 = vmatpush.bf16.msra.mxu0 %v12679
    %12810 = vmatpush.bf16.msra.mxu0 %v12675
    %12811 = vmatpush.bf16.msra.mxu0 %v12671
    %12812 = vmatpush.bf16.msra.mxu0 %v12667
    %12813 = vmatpush.bf16.msra.mxu0 %v12663
    %12814 = vmatpush.bf16.msra.mxu0 %v12659
    %12815 = vmatpush.bf16.msra.mxu0 %v12655
    %12816 = vmatmul.bf16.gmra.mxu0 %v12458
    %v12817 = vpop.f32.mrf.mxu0
    %v12818 = vadd.f32 0.0, %v12817
    %v12819 = vpop.f32.mrf.mxu0
    %12820 = vdwg.mxu0
    %12821 = vmatpush.bf16.msra.mxu0 %v12715
    %12822 = vmatpush.bf16.msra.mxu0 %v12711
    %12823 = vmatpush.bf16.msra.mxu0 %v12707
    %12824 = vmatpush.bf16.msra.mxu0 %v12703
    %12825 = vmatpush.bf16.msra.mxu0 %v12699
    %12826 = vmatpush.bf16.msra.mxu0 %v12695
    %12827 = vmatpush.bf16.msra.mxu0 %v12691
    %12828 = vmatpush.bf16.msra.mxu0 %v12687
    %12829 = vmatmul.bf16.gmra.mxu0 %v12459
    %v12830 = vpop.f32.mrf.mxu0
    %v12831 = vadd.f32 %v12818, %v12830
    %v12832 = vpop.f32.mrf.mxu0
    %12833 = vdwg.mxu0
    %12834 = vmatpush.bf16.msra.mxu0 %v12684
    %12835 = vmatpush.bf16.msra.mxu0 %v12680
    %12836 = vmatpush.bf16.msra.mxu0 %v12676
    %12837 = vmatpush.bf16.msra.mxu0 %v12672
    %12838 = vmatpush.bf16.msra.mxu0 %v12668
    %12839 = vmatpush.bf16.msra.mxu0 %v12664
    %12840 = vmatpush.bf16.msra.mxu0 %v12660
    %12841 = vmatpush.bf16.msra.mxu0 %v12656
    %12842 = vmatmul.bf16.gmra.mxu0 %v12458
    %v12843 = vpop.f32.mrf.mxu0
    %v12844 = vadd.f32 0.0, %v12843
    %v12845 = vpop.f32.mrf.mxu0
    %12846 = vdwg.mxu0
    %12847 = vmatpush.bf16.msra.mxu0 %v12716
    %12848 = vmatpush.bf16.msra.mxu0 %v12712
    %12849 = vmatpush.bf16.msra.mxu0 %v12708
    %12850 = vmatpush.bf16.msra.mxu0 %v12704
    %12851 = vmatpush.bf16.msra.mxu0 %v12700
    %12852 = vmatpush.bf16.msra.mxu0 %v12696
    %12853 = vmatpush.bf16.msra.mxu0 %v12692
    %12854 = vmatpush.bf16.msra.mxu0 %v12688
    %12855 = vmatmul.bf16.gmra.mxu0 %v12459
    %v12856 = vpop.f32.mrf.mxu0
    %v12857 = vadd.f32 %v12844, %v12856
    %v12858 = vpop.f32.mrf.mxu0
    %12859 = vdwg.mxu0
    %12860 = vmatpush.bf16.msra.mxu0 %v12685
    %12861 = vmatpush.bf16.msra.mxu0 %v12681
    %12862 = vmatpush.bf16.msra.mxu0 %v12677
    %12863 = vmatpush.bf16.msra.mxu0 %v12673
    %12864 = vmatpush.bf16.msra.mxu0 %v12669
    %12865 = vmatpush.bf16.msra.mxu0 %v12665
    %12866 = vmatpush.bf16.msra.mxu0 %v12661
    %12867 = vmatpush.bf16.msra.mxu0 %v12657
    %12868 = vmatmul.bf16.gmra.mxu0 %v12458
    %v12869 = vpop.f32.mrf.mxu0
    %v12870 = vadd.f32 0.0, %v12869
    %v12871 = vpop.f32.mrf.mxu0
    %12872 = vdwg.mxu0
    %12873 = vmatpush.bf16.msra.mxu0 %v12717
    %12874 = vmatpush.bf16.msra.mxu0 %v12713
    %12875 = vmatpush.bf16.msra.mxu0 %v12709
    %12876 = vmatpush.bf16.msra.mxu0 %v12705
    %12877 = vmatpush.bf16.msra.mxu0 %v12701
    %12878 = vmatpush.bf16.msra.mxu0 %v12697
    %12879 = vmatpush.bf16.msra.mxu0 %v12693
    %12880 = vmatpush.bf16.msra.mxu0 %v12689
    %12881 = vmatmul.bf16.gmra.mxu0 %v12459
    %v12882 = vpop.f32.mrf.mxu0
    %v12883 = vadd.f32 %v12870, %v12882
    %v12884 = vpop.f32.mrf.mxu0
    %12885 = vdwg.mxu0
    %v12886 = vadd.f32 %v12287, %v12805
    %v12887 = vadd.f32 %v12313, %v12831
    %v12888 = vadd.f32 %v12339, %v12857
    %v12889 = vadd.f32 %v12365, %v12883
    %v12890 = vld [vmem:[#allocation5] sm:$0xa]
    %v12891 = vld [vmem:[#allocation5 + $0x4] sm:$0xa]
    %s12892 = scalar_lea.vmem [#allocation17], 1536
    %v12893 = vld [vmem:[%s12892] sm:$0xff]
    %v12894 = vld [vmem:[%s12892 + $0x8] sm:$0xff]
    %v12895 = vld [vmem:[%s12892 + $0x10] sm:$0xff]
    %v12896 = vld [vmem:[%s12892 + $0x18] sm:$0xff]
    %v12897 = vld [vmem:[%s12892 + $0x20] sm:$0xff]
    %v12898 = vld [vmem:[%s12892 + $0x28] sm:$0xff]
    %v12899 = vld [vmem:[%s12892 + $0x30] sm:$0xff]
    %v12900 = vld [vmem:[%s12892 + $0x38] sm:$0xff]
    %v12901 = vld [vmem:[%s12892 + $0x40] sm:$0xff]
    %v12902 = vld [vmem:[%s12892 + $0x48] sm:$0xff]
    %v12903 = vld [vmem:[%s12892 + $0x50] sm:$0xff]
    %v12904 = vld [vmem:[%s12892 + $0x58] sm:$0xff]
    %v12905 = vld [vmem:[%s12892 + $0x60] sm:$0xff]
    %v12906 = vld [vmem:[%s12892 + $0x68] sm:$0xff]
    %v12907 = vld [vmem:[%s12892 + $0x70] sm:$0xff]
    %v12908 = vld [vmem:[%s12892 + $0x78] sm:$0xff]
    %v12909 = vld [vmem:[%s12892 + $0x80] sm:$0xff]
    %v12910 = vld [vmem:[%s12892 + $0x88] sm:$0xff]
    %v12911 = vld [vmem:[%s12892 + $0x90] sm:$0xff]
    %v12912 = vld [vmem:[%s12892 + $0x98] sm:$0xff]
    %v12913 = vld [vmem:[%s12892 + $0xa0] sm:$0xff]
    %v12914 = vld [vmem:[%s12892 + $0xa8] sm:$0xff]
    %v12915 = vld [vmem:[%s12892 + $0xb0] sm:$0xff]
    %v12916 = vld [vmem:[%s12892 + $0xb8] sm:$0xff]
    %v12917 = vld [vmem:[%s12892 + $0xc0] sm:$0xff]
    %v12918 = vld [vmem:[%s12892 + $0xc8] sm:$0xff]
    %v12919 = vld [vmem:[%s12892 + $0xd0] sm:$0xff]
    %v12920 = vld [vmem:[%s12892 + $0xd8] sm:$0xff]
    %v12921 = vld [vmem:[%s12892 + $0xe0] sm:$0xff]
    %v12922 = vld [vmem:[%s12892 + $0xe8] sm:$0xff]
    %v12923 = vld [vmem:[%s12892 + $0xf0] sm:$0xff]
    %v12924 = vld [vmem:[%s12892 + $0xf8] sm:$0xff]
    %v12925 = vld [vmem:[%s12892 + $0x100] sm:$0xff]
    %v12926 = vld [vmem:[%s12892 + $0x108] sm:$0xff]
    %v12927 = vld [vmem:[%s12892 + $0x110] sm:$0xff]
    %v12928 = vld [vmem:[%s12892 + $0x118] sm:$0xff]
    %v12929 = vld [vmem:[%s12892 + $0x120] sm:$0xff]
    %v12930 = vld [vmem:[%s12892 + $0x128] sm:$0xff]
    %v12931 = vld [vmem:[%s12892 + $0x130] sm:$0xff]
    %v12932 = vld [vmem:[%s12892 + $0x138] sm:$0xff]
    %v12933 = vld [vmem:[%s12892 + $0x140] sm:$0xff]
    %v12934 = vld [vmem:[%s12892 + $0x148] sm:$0xff]
    %v12935 = vld [vmem:[%s12892 + $0x150] sm:$0xff]
    %v12936 = vld [vmem:[%s12892 + $0x158] sm:$0xff]
    %v12937 = vld [vmem:[%s12892 + $0x160] sm:$0xff]
    %v12938 = vld [vmem:[%s12892 + $0x168] sm:$0xff]
    %v12939 = vld [vmem:[%s12892 + $0x170] sm:$0xff]
    %v12940 = vld [vmem:[%s12892 + $0x178] sm:$0xff]
    %v12941 = vld [vmem:[%s12892 + $0x180] sm:$0xff]
    %v12942 = vld [vmem:[%s12892 + $0x188] sm:$0xff]
    %v12943 = vld [vmem:[%s12892 + $0x190] sm:$0xff]
    %v12944 = vld [vmem:[%s12892 + $0x198] sm:$0xff]
    %v12945 = vld [vmem:[%s12892 + $0x1a0] sm:$0xff]
    %v12946 = vld [vmem:[%s12892 + $0x1a8] sm:$0xff]
    %v12947 = vld [vmem:[%s12892 + $0x1b0] sm:$0xff]
    %v12948 = vld [vmem:[%s12892 + $0x1b8] sm:$0xff]
    %v12949 = vld [vmem:[%s12892 + $0x1c0] sm:$0xff]
    %v12950 = vld [vmem:[%s12892 + $0x1c8] sm:$0xff]
    %v12951 = vld [vmem:[%s12892 + $0x1d0] sm:$0xff]
    %v12952 = vld [vmem:[%s12892 + $0x1d8] sm:$0xff]
    %v12953 = vld [vmem:[%s12892 + $0x1e0] sm:$0xff]
    %v12954 = vld [vmem:[%s12892 + $0x1e8] sm:$0xff]
    %v12955 = vld [vmem:[%s12892 + $0x1f0] sm:$0xff]
    %v12956 = vld [vmem:[%s12892 + $0x1f8] sm:$0xff]
    %12958 = vst [vmem:[#allocation1] ss:$4 sm:$0xff] %v12890
    %v12959 = vld.sshfl [vmem:[#allocation1] sm:$0xff pattern:$0x73625140]
    %v12961 = vld.sshfl [vmem:[#allocation1 + $0x8] sm:$0xff pattern:$0x73625140]
    %s12964 = scalar_lea.vmem [#allocation1], 32
    %12965 = vst [vmem:[%s12964] ss:$4 sm:$0xff] %v12891
    %v12966 = vld.sshfl [vmem:[#allocation1 + $0x20] sm:$0xff pattern:$0x73625140]
    %v12968 = vld.sshfl [vmem:[#allocation1 + $0x28] sm:$0xff pattern:$0x73625140]
    %v12970 = vunpack.c.l.b16 %v12959
    %v12971 = vunpack.c.l.b16 %v12961
    %v12972 = vunpack.c.l.b16 %v12966
    %v12973 = vunpack.c.l.b16 %v12968
    %v12974 = vrot.slane %v12970, 3
    %v12975 = vrot.slane %v12972, 2
    %v12976 = vsel %vm2699, %v12975, %v12974
    %v12977 = vrot.slane %v12971, 3
    %v12978 = vrot.slane %v12973, 2
    %v12979 = vsel %vm2699, %v12978, %v12977
    %v12980 = vpack.c.b16 %v12976, %v12976
    %v12981 = vpack.c.b16 %v12979, %v12979
    %v13048 = vunpack.c.l.b16 %v12893
    %v13049 = vunpack.c.h.b16 %v12893
    %v13050 = vunpack.c.l.b16 %v12894
    %v13051 = vunpack.c.h.b16 %v12894
    %v13052 = vunpack.c.l.b16 %v12895
    %v13053 = vunpack.c.h.b16 %v12895
    %v13054 = vunpack.c.l.b16 %v12896
    %v13055 = vunpack.c.h.b16 %v12896
    %v13056 = vunpack.c.l.b16 %v12897
    %v13057 = vunpack.c.h.b16 %v12897
    %v13058 = vunpack.c.l.b16 %v12898
    %v13059 = vunpack.c.h.b16 %v12898
    %v13060 = vunpack.c.l.b16 %v12899
    %v13061 = vunpack.c.h.b16 %v12899
    %v13062 = vunpack.c.l.b16 %v12900
    %v13063 = vunpack.c.h.b16 %v12900
    %v13064 = vunpack.c.l.b16 %v12901
    %v13065 = vunpack.c.h.b16 %v12901
    %v13066 = vunpack.c.l.b16 %v12902
    %v13067 = vunpack.c.h.b16 %v12902
    %v13068 = vunpack.c.l.b16 %v12903
    %v13069 = vunpack.c.h.b16 %v12903
    %v13070 = vunpack.c.l.b16 %v12904
    %v13071 = vunpack.c.h.b16 %v12904
    %v13072 = vunpack.c.l.b16 %v12905
    %v13073 = vunpack.c.h.b16 %v12905
    %v13074 = vunpack.c.l.b16 %v12906
    %v13075 = vunpack.c.h.b16 %v12906
    %v13076 = vunpack.c.l.b16 %v12907
    %v13077 = vunpack.c.h.b16 %v12907
    %v13078 = vunpack.c.l.b16 %v12908
    %v13079 = vunpack.c.h.b16 %v12908
    %v13080 = vunpack.c.l.b16 %v12909
    %v13081 = vunpack.c.h.b16 %v12909
    %v13082 = vunpack.c.l.b16 %v12910
    %v13083 = vunpack.c.h.b16 %v12910
    %v13084 = vunpack.c.l.b16 %v12911
    %v13085 = vunpack.c.h.b16 %v12911
    %v13086 = vunpack.c.l.b16 %v12912
    %v13087 = vunpack.c.h.b16 %v12912
    %v13088 = vunpack.c.l.b16 %v12913
    %v13089 = vunpack.c.h.b16 %v12913
    %v13090 = vunpack.c.l.b16 %v12914
    %v13091 = vunpack.c.h.b16 %v12914
    %v13092 = vunpack.c.l.b16 %v12915
    %v13093 = vunpack.c.h.b16 %v12915
    %v13094 = vunpack.c.l.b16 %v12916
    %v13095 = vunpack.c.h.b16 %v12916
    %v13096 = vunpack.c.l.b16 %v12917
    %v13097 = vunpack.c.h.b16 %v12917
    %v13098 = vunpack.c.l.b16 %v12918
    %v13099 = vunpack.c.h.b16 %v12918
    %v13100 = vunpack.c.l.b16 %v12919
    %v13101 = vunpack.c.h.b16 %v12919
    %v13102 = vunpack.c.l.b16 %v12920
    %v13103 = vunpack.c.h.b16 %v12920
    %v13104 = vunpack.c.l.b16 %v12921
    %v13105 = vunpack.c.h.b16 %v12921
    %v13106 = vunpack.c.l.b16 %v12922
    %v13107 = vunpack.c.h.b16 %v12922
    %v13108 = vunpack.c.l.b16 %v12923
    %v13109 = vunpack.c.h.b16 %v12923
    %v13110 = vunpack.c.l.b16 %v12924
    %v13111 = vunpack.c.h.b16 %v12924
    %v13112 = vunpack.c.l.b16 %v12925
    %v13113 = vunpack.c.h.b16 %v12925
    %v13114 = vunpack.c.l.b16 %v12926
    %v13115 = vunpack.c.h.b16 %v12926
    %v13116 = vunpack.c.l.b16 %v12927
    %v13117 = vunpack.c.h.b16 %v12927
    %v13118 = vunpack.c.l.b16 %v12928
    %v13119 = vunpack.c.h.b16 %v12928
    %v13120 = vunpack.c.l.b16 %v12929
    %v13121 = vunpack.c.h.b16 %v12929
    %v13122 = vunpack.c.l.b16 %v12930
    %v13123 = vunpack.c.h.b16 %v12930
    %v13124 = vunpack.c.l.b16 %v12931
    %v13125 = vunpack.c.h.b16 %v12931
    %v13126 = vunpack.c.l.b16 %v12932
    %v13127 = vunpack.c.h.b16 %v12932
    %v13128 = vunpack.c.l.b16 %v12933
    %v13129 = vunpack.c.h.b16 %v12933
    %v13130 = vunpack.c.l.b16 %v12934
    %v13131 = vunpack.c.h.b16 %v12934
    %v13132 = vunpack.c.l.b16 %v12935
    %v13133 = vunpack.c.h.b16 %v12935
    %v13134 = vunpack.c.l.b16 %v12936
    %v13135 = vunpack.c.h.b16 %v12936
    %v13136 = vunpack.c.l.b16 %v12937
    %v13137 = vunpack.c.h.b16 %v12937
    %v13138 = vunpack.c.l.b16 %v12938
    %v13139 = vunpack.c.h.b16 %v12938
    %v13140 = vunpack.c.l.b16 %v12939
    %v13141 = vunpack.c.h.b16 %v12939
    %v13142 = vunpack.c.l.b16 %v12940
    %v13143 = vunpack.c.h.b16 %v12940
    %v13144 = vunpack.c.l.b16 %v12941
    %v13145 = vunpack.c.h.b16 %v12941
    %v13146 = vunpack.c.l.b16 %v12942
    %v13147 = vunpack.c.h.b16 %v12942
    %v13148 = vunpack.c.l.b16 %v12943
    %v13149 = vunpack.c.h.b16 %v12943
    %v13150 = vunpack.c.l.b16 %v12944
    %v13151 = vunpack.c.h.b16 %v12944
    %v13152 = vunpack.c.l.b16 %v12945
    %v13153 = vunpack.c.h.b16 %v12945
    %v13154 = vunpack.c.l.b16 %v12946
    %v13155 = vunpack.c.h.b16 %v12946
    %v13156 = vunpack.c.l.b16 %v12947
    %v13157 = vunpack.c.h.b16 %v12947
    %v13158 = vunpack.c.l.b16 %v12948
    %v13159 = vunpack.c.h.b16 %v12948
    %v13160 = vunpack.c.l.b16 %v12949
    %v13161 = vunpack.c.h.b16 %v12949
    %v13162 = vunpack.c.l.b16 %v12950
    %v13163 = vunpack.c.h.b16 %v12950
    %v13164 = vunpack.c.l.b16 %v12951
    %v13165 = vunpack.c.h.b16 %v12951
    %v13166 = vunpack.c.l.b16 %v12952
    %v13167 = vunpack.c.h.b16 %v12952
    %v13168 = vunpack.c.l.b16 %v12953
    %v13169 = vunpack.c.h.b16 %v12953
    %v13170 = vunpack.c.l.b16 %v12954
    %v13171 = vunpack.c.h.b16 %v12954
    %v13172 = vunpack.c.l.b16 %v12955
    %v13173 = vunpack.c.h.b16 %v12955
    %v13174 = vunpack.c.l.b16 %v12956
    %v13175 = vunpack.c.h.b16 %v12956
    %v13176 = vpack.c.b16 %v13052, %v13048
    %v13177 = vpack.c.b16 %v13053, %v13049
    %v13178 = vpack.c.b16 %v13054, %v13050
    %v13179 = vpack.c.b16 %v13055, %v13051
    %v13180 = vpack.c.b16 %v13060, %v13056
    %v13181 = vpack.c.b16 %v13061, %v13057
    %v13182 = vpack.c.b16 %v13062, %v13058
    %v13183 = vpack.c.b16 %v13063, %v13059
    %v13184 = vpack.c.b16 %v13068, %v13064
    %v13185 = vpack.c.b16 %v13069, %v13065
    %v13186 = vpack.c.b16 %v13070, %v13066
    %v13187 = vpack.c.b16 %v13071, %v13067
    %v13188 = vpack.c.b16 %v13076, %v13072
    %v13189 = vpack.c.b16 %v13077, %v13073
    %v13190 = vpack.c.b16 %v13078, %v13074
    %v13191 = vpack.c.b16 %v13079, %v13075
    %v13192 = vpack.c.b16 %v13084, %v13080
    %v13193 = vpack.c.b16 %v13085, %v13081
    %v13194 = vpack.c.b16 %v13086, %v13082
    %v13195 = vpack.c.b16 %v13087, %v13083
    %v13196 = vpack.c.b16 %v13092, %v13088
    %v13197 = vpack.c.b16 %v13093, %v13089
    %v13198 = vpack.c.b16 %v13094, %v13090
    %v13199 = vpack.c.b16 %v13095, %v13091
    %v13200 = vpack.c.b16 %v13100, %v13096
    %v13201 = vpack.c.b16 %v13101, %v13097
    %v13202 = vpack.c.b16 %v13102, %v13098
    %v13203 = vpack.c.b16 %v13103, %v13099
    %v13204 = vpack.c.b16 %v13108, %v13104
    %v13205 = vpack.c.b16 %v13109, %v13105
    %v13206 = vpack.c.b16 %v13110, %v13106
    %v13207 = vpack.c.b16 %v13111, %v13107
    %v13208 = vpack.c.b16 %v13116, %v13112
    %v13209 = vpack.c.b16 %v13117, %v13113
    %v13210 = vpack.c.b16 %v13118, %v13114
    %v13211 = vpack.c.b16 %v13119, %v13115
    %v13212 = vpack.c.b16 %v13124, %v13120
    %v13213 = vpack.c.b16 %v13125, %v13121
    %v13214 = vpack.c.b16 %v13126, %v13122
    %v13215 = vpack.c.b16 %v13127, %v13123
    %v13216 = vpack.c.b16 %v13132, %v13128
    %v13217 = vpack.c.b16 %v13133, %v13129
    %v13218 = vpack.c.b16 %v13134, %v13130
    %v13219 = vpack.c.b16 %v13135, %v13131
    %v13220 = vpack.c.b16 %v13140, %v13136
    %v13221 = vpack.c.b16 %v13141, %v13137
    %v13222 = vpack.c.b16 %v13142, %v13138
    %v13223 = vpack.c.b16 %v13143, %v13139
    %v13224 = vpack.c.b16 %v13148, %v13144
    %v13225 = vpack.c.b16 %v13149, %v13145
    %v13226 = vpack.c.b16 %v13150, %v13146
    %v13227 = vpack.c.b16 %v13151, %v13147
    %v13228 = vpack.c.b16 %v13156, %v13152
    %v13229 = vpack.c.b16 %v13157, %v13153
    %v13230 = vpack.c.b16 %v13158, %v13154
    %v13231 = vpack.c.b16 %v13159, %v13155
    %v13232 = vpack.c.b16 %v13164, %v13160
    %v13233 = vpack.c.b16 %v13165, %v13161
    %v13234 = vpack.c.b16 %v13166, %v13162
    %v13235 = vpack.c.b16 %v13167, %v13163
    %v13236 = vpack.c.b16 %v13172, %v13168
    %v13237 = vpack.c.b16 %v13173, %v13169
    %v13238 = vpack.c.b16 %v13174, %v13170
    %v13239 = vpack.c.b16 %v13175, %v13171
    %13304 = vmatpush.bf16.msra.mxu0 %v13204
    %13305 = vmatpush.bf16.msra.mxu0 %v13200
    %13306 = vmatpush.bf16.msra.mxu0 %v13196
    %13307 = vmatpush.bf16.msra.mxu0 %v13192
    %13308 = vmatpush.bf16.msra.mxu0 %v13188
    %13309 = vmatpush.bf16.msra.mxu0 %v13184
    %13310 = vmatpush.bf16.msra.mxu0 %v13180
    %13311 = vmatpush.bf16.msra.mxu0 %v13176
    %13312 = vmatmul.bf16.gmra.mxu0 %v12980
    %v13313 = vpop.f32.mrf.mxu0
    %v13314 = vadd.f32 0.0, %v13313
    %v13315 = vpop.f32.mrf.mxu0
    %13316 = vdwg.mxu0
    %13317 = vmatpush.bf16.msra.mxu0 %v13236
    %13318 = vmatpush.bf16.msra.mxu0 %v13232
    %13319 = vmatpush.bf16.msra.mxu0 %v13228
    %13320 = vmatpush.bf16.msra.mxu0 %v13224
    %13321 = vmatpush.bf16.msra.mxu0 %v13220
    %13322 = vmatpush.bf16.msra.mxu0 %v13216
    %13323 = vmatpush.bf16.msra.mxu0 %v13212
    %13324 = vmatpush.bf16.msra.mxu0 %v13208
    %13325 = vmatmul.bf16.gmra.mxu0 %v12981
    %v13326 = vpop.f32.mrf.mxu0
    %v13327 = vadd.f32 %v13314, %v13326
    %v13328 = vpop.f32.mrf.mxu0
    %13329 = vdwg.mxu0
    %13330 = vmatpush.bf16.msra.mxu0 %v13205
    %13331 = vmatpush.bf16.msra.mxu0 %v13201
    %13332 = vmatpush.bf16.msra.mxu0 %v13197
    %13333 = vmatpush.bf16.msra.mxu0 %v13193
    %13334 = vmatpush.bf16.msra.mxu0 %v13189
    %13335 = vmatpush.bf16.msra.mxu0 %v13185
    %13336 = vmatpush.bf16.msra.mxu0 %v13181
    %13337 = vmatpush.bf16.msra.mxu0 %v13177
    %13338 = vmatmul.bf16.gmra.mxu0 %v12980
    %v13339 = vpop.f32.mrf.mxu0
    %v13340 = vadd.f32 0.0, %v13339
    %v13341 = vpop.f32.mrf.mxu0
    %13342 = vdwg.mxu0
    %13343 = vmatpush.bf16.msra.mxu0 %v13237
    %13344 = vmatpush.bf16.msra.mxu0 %v13233
    %13345 = vmatpush.bf16.msra.mxu0 %v13229
    %13346 = vmatpush.bf16.msra.mxu0 %v13225
    %13347 = vmatpush.bf16.msra.mxu0 %v13221
    %13348 = vmatpush.bf16.msra.mxu0 %v13217
    %13349 = vmatpush.bf16.msra.mxu0 %v13213
    %13350 = vmatpush.bf16.msra.mxu0 %v13209
    %13351 = vmatmul.bf16.gmra.mxu0 %v12981
    %v13352 = vpop.f32.mrf.mxu0
    %v13353 = vadd.f32 %v13340, %v13352
    %v13354 = vpop.f32.mrf.mxu0
    %13355 = vdwg.mxu0
    %13356 = vmatpush.bf16.msra.mxu0 %v13206
    %13357 = vmatpush.bf16.msra.mxu0 %v13202
    %13358 = vmatpush.bf16.msra.mxu0 %v13198
    %13359 = vmatpush.bf16.msra.mxu0 %v13194
    %13360 = vmatpush.bf16.msra.mxu0 %v13190
    %13361 = vmatpush.bf16.msra.mxu0 %v13186
    %13362 = vmatpush.bf16.msra.mxu0 %v13182
    %13363 = vmatpush.bf16.msra.mxu0 %v13178
    %13364 = vmatmul.bf16.gmra.mxu0 %v12980
    %v13365 = vpop.f32.mrf.mxu0
    %v13366 = vadd.f32 0.0, %v13365
    %v13367 = vpop.f32.mrf.mxu0
    %13368 = vdwg.mxu0
    %13369 = vmatpush.bf16.msra.mxu0 %v13238
    %13370 = vmatpush.bf16.msra.mxu0 %v13234
    %13371 = vmatpush.bf16.msra.mxu0 %v13230
    %13372 = vmatpush.bf16.msra.mxu0 %v13226
    %13373 = vmatpush.bf16.msra.mxu0 %v13222
    %13374 = vmatpush.bf16.msra.mxu0 %v13218
    %13375 = vmatpush.bf16.msra.mxu0 %v13214
    %13376 = vmatpush.bf16.msra.mxu0 %v13210
    %13377 = vmatmul.bf16.gmra.mxu0 %v12981
    %v13378 = vpop.f32.mrf.mxu0
    %v13379 = vadd.f32 %v13366, %v13378
    %v13380 = vpop.f32.mrf.mxu0
    %13381 = vdwg.mxu0
    %13382 = vmatpush.bf16.msra.mxu0 %v13207
    %13383 = vmatpush.bf16.msra.mxu0 %v13203
    %13384 = vmatpush.bf16.msra.mxu0 %v13199
    %13385 = vmatpush.bf16.msra.mxu0 %v13195
    %13386 = vmatpush.bf16.msra.mxu0 %v13191
    %13387 = vmatpush.bf16.msra.mxu0 %v13187
    %13388 = vmatpush.bf16.msra.mxu0 %v13183
    %13389 = vmatpush.bf16.msra.mxu0 %v13179
    %13390 = vmatmul.bf16.gmra.mxu0 %v12980
    %v13391 = vpop.f32.mrf.mxu0
    %v13392 = vadd.f32 0.0, %v13391
    %v13393 = vpop.f32.mrf.mxu0
    %13394 = vdwg.mxu0
    %13395 = vmatpush.bf16.msra.mxu0 %v13239
    %13396 = vmatpush.bf16.msra.mxu0 %v13235
    %13397 = vmatpush.bf16.msra.mxu0 %v13231
    %13398 = vmatpush.bf16.msra.mxu0 %v13227
    %13399 = vmatpush.bf16.msra.mxu0 %v13223
    %13400 = vmatpush.bf16.msra.mxu0 %v13219
    %13401 = vmatpush.bf16.msra.mxu0 %v13215
    %13402 = vmatpush.bf16.msra.mxu0 %v13211
    %13403 = vmatmul.bf16.gmra.mxu0 %v12981
    %v13404 = vpop.f32.mrf.mxu0
    %v13405 = vadd.f32 %v13392, %v13404
    %v13406 = vpop.f32.mrf.mxu0
    %13407 = vdwg.mxu0
    %v13408 = vadd.f32 %v12886, %v13327
    %v13409 = vadd.f32 %v12887, %v13353
    %v13410 = vadd.f32 %v12888, %v13379
    %v13411 = vadd.f32 %v12889, %v13405
    %v13412 = vld [vmem:[%s11] sm:$0xf]
    %v13414 = vperm.slane %v13412, 0
    %v13415 = vperm.slane %v13412, 1
    %v13416 = vperm.slane %v13412, 2
    %v13417 = vperm.slane %v13412, 3
    %v13422 = vadd.f32 %v13408, %v13414
    %v13423 = vadd.f32 %v13409, %v13415
    %v13424 = vadd.f32 %v13410, %v13416
    %v13425 = vadd.f32 %v13411, %v13417
    %v13426 = vmax.f32 %v13422, 0.0
    %v13427 = vmax.f32 %v13423, 0.0
    %v13428 = vmax.f32 %v13424, 0.0
    %v13429 = vmax.f32 %v13425, 0.0
    %v13430 = vpack.c.bf16 %v13426, %v13426
    %v13431 = vpack.c.bf16 %v13427, %v13427
    %v13432 = vpack.c.bf16 %v13428, %v13428
    %v13433 = vpack.c.bf16 %v13429, %v13429
    %v13434 = vld [vmem:[%s12] sm:$0xf]
    %v13435 = vld [vmem:[%s12 + $0x4] sm:$0xf]
    %v13436 = vld [vmem:[%s12 + $0x8] sm:$0xf]
    %v13437 = vld [vmem:[%s12 + $0xc] sm:$0xf]
    %v13438 = vld [vmem:[%s12 + $0x10] sm:$0xf]
    %v13439 = vld [vmem:[%s12 + $0x14] sm:$0xf]
    %v13440 = vld [vmem:[%s12 + $0x18] sm:$0xf]
    %v13441 = vld [vmem:[%s12 + $0x1c] sm:$0xf]
    %v13442 = vld [vmem:[%s12 + $0x20] sm:$0xf]
    %v13443 = vld [vmem:[%s12 + $0x24] sm:$0xf]
    %v13444 = vld [vmem:[%s12 + $0x28] sm:$0xf]
    %v13445 = vld [vmem:[%s12 + $0x2c] sm:$0xf]
    %v13446 = vld [vmem:[%s12 + $0x30] sm:$0xf]
    %v13447 = vld [vmem:[%s12 + $0x34] sm:$0xf]
    %v13448 = vld [vmem:[%s12 + $0x38] sm:$0xf]
    %v13449 = vld [vmem:[%s12 + $0x3c] sm:$0xf]
    %v13450 = vld [vmem:[%s12 + $0x40] sm:$0xf]
    %v13451 = vld [vmem:[%s12 + $0x44] sm:$0xf]
    %v13452 = vld [vmem:[%s12 + $0x48] sm:$0xf]
    %v13453 = vld [vmem:[%s12 + $0x4c] sm:$0xf]
    %v13454 = vld [vmem:[%s12 + $0x50] sm:$0xf]
    %v13455 = vld [vmem:[%s12 + $0x54] sm:$0xf]
    %v13456 = vld [vmem:[%s12 + $0x58] sm:$0xf]
    %v13457 = vld [vmem:[%s12 + $0x5c] sm:$0xf]
    %v13458 = vld [vmem:[%s12 + $0x60] sm:$0xf]
    %v13459 = vld [vmem:[%s12 + $0x64] sm:$0xf]
    %v13460 = vld [vmem:[%s12 + $0x68] sm:$0xf]
    %v13461 = vld [vmem:[%s12 + $0x6c] sm:$0xf]
    %v13462 = vld [vmem:[%s12 + $0x70] sm:$0xf]
    %v13463 = vld [vmem:[%s12 + $0x74] sm:$0xf]
    %v13464 = vld [vmem:[%s12 + $0x78] sm:$0xf]
    %v13465 = vld [vmem:[%s12 + $0x7c] sm:$0xf]
    %v13466 = vld [vmem:[%s12 + $0x80] sm:$0xf]
    %v13467 = vld [vmem:[%s12 + $0x84] sm:$0xf]
    %v13468 = vld [vmem:[%s12 + $0x88] sm:$0xf]
    %v13469 = vld [vmem:[%s12 + $0x8c] sm:$0xf]
    %v13470 = vld [vmem:[%s12 + $0x90] sm:$0xf]
    %v13471 = vld [vmem:[%s12 + $0x94] sm:$0xf]
    %v13472 = vld [vmem:[%s12 + $0x98] sm:$0xf]
    %v13473 = vld [vmem:[%s12 + $0x9c] sm:$0xf]
    %v13474 = vld [vmem:[%s12 + $0xa0] sm:$0xf]
    %v13475 = vld [vmem:[%s12 + $0xa4] sm:$0xf]
    %v13476 = vld [vmem:[%s12 + $0xa8] sm:$0xf]
    %v13477 = vld [vmem:[%s12 + $0xac] sm:$0xf]
    %v13478 = vld [vmem:[%s12 + $0xb0] sm:$0xf]
    %v13479 = vld [vmem:[%s12 + $0xb4] sm:$0xf]
    %v13480 = vld [vmem:[%s12 + $0xb8] sm:$0xf]
    %v13481 = vld [vmem:[%s12 + $0xbc] sm:$0xf]
    %v13482 = vld [vmem:[%s12 + $0xc0] sm:$0xf]
    %v13483 = vld [vmem:[%s12 + $0xc4] sm:$0xf]
    %v13484 = vld [vmem:[%s12 + $0xc8] sm:$0xf]
    %v13485 = vld [vmem:[%s12 + $0xcc] sm:$0xf]
    %v13486 = vld [vmem:[%s12 + $0xd0] sm:$0xf]
    %v13487 = vld [vmem:[%s12 + $0xd4] sm:$0xf]
    %v13488 = vld [vmem:[%s12 + $0xd8] sm:$0xf]
    %v13489 = vld [vmem:[%s12 + $0xdc] sm:$0xf]
    %v13490 = vld [vmem:[%s12 + $0xe0] sm:$0xf]
    %v13491 = vld [vmem:[%s12 + $0xe4] sm:$0xf]
    %v13492 = vld [vmem:[%s12 + $0xe8] sm:$0xf]
    %v13493 = vld [vmem:[%s12 + $0xec] sm:$0xf]
    %v13494 = vld [vmem:[%s12 + $0xf0] sm:$0xf]
    %v13495 = vld [vmem:[%s12 + $0xf4] sm:$0xf]
    %v13496 = vld [vmem:[%s12 + $0xf8] sm:$0xf]
    %v13497 = vld [vmem:[%s12 + $0xfc] sm:$0xf]
    %v13498 = vld [vmem:[%s13] sm:$0x1]
    %v13500 = vperm.slane %v13498, 0
    %v13566 = vunpack.c.l.b16 %v13434
    %v13567 = vunpack.c.l.b16 %v13435
    %v13568 = vunpack.c.l.b16 %v13436
    %v13569 = vunpack.c.l.b16 %v13437
    %v13570 = vunpack.c.l.b16 %v13438
    %v13571 = vunpack.c.l.b16 %v13439
    %v13572 = vunpack.c.l.b16 %v13440
    %v13573 = vunpack.c.l.b16 %v13441
    %v13574 = vunpack.c.l.b16 %v13442
    %v13575 = vunpack.c.l.b16 %v13443
    %v13576 = vunpack.c.l.b16 %v13444
    %v13577 = vunpack.c.l.b16 %v13445
    %v13578 = vunpack.c.l.b16 %v13446
    %v13579 = vunpack.c.l.b16 %v13447
    %v13580 = vunpack.c.l.b16 %v13448
    %v13581 = vunpack.c.l.b16 %v13449
    %v13582 = vunpack.c.l.b16 %v13450
    %v13583 = vunpack.c.l.b16 %v13451
    %v13584 = vunpack.c.l.b16 %v13452
    %v13585 = vunpack.c.l.b16 %v13453
    %v13586 = vunpack.c.l.b16 %v13454
    %v13587 = vunpack.c.l.b16 %v13455
    %v13588 = vunpack.c.l.b16 %v13456
    %v13589 = vunpack.c.l.b16 %v13457
    %v13590 = vunpack.c.l.b16 %v13458
    %v13591 = vunpack.c.l.b16 %v13459
    %v13592 = vunpack.c.l.b16 %v13460
    %v13593 = vunpack.c.l.b16 %v13461
    %v13594 = vunpack.c.l.b16 %v13462
    %v13595 = vunpack.c.l.b16 %v13463
    %v13596 = vunpack.c.l.b16 %v13464
    %v13597 = vunpack.c.l.b16 %v13465
    %v13598 = vunpack.c.l.b16 %v13466
    %v13599 = vunpack.c.l.b16 %v13467
    %v13600 = vunpack.c.l.b16 %v13468
    %v13601 = vunpack.c.l.b16 %v13469
    %v13602 = vunpack.c.l.b16 %v13470
    %v13603 = vunpack.c.l.b16 %v13471
    %v13604 = vunpack.c.l.b16 %v13472
    %v13605 = vunpack.c.l.b16 %v13473
    %v13606 = vunpack.c.l.b16 %v13474
    %v13607 = vunpack.c.l.b16 %v13475
    %v13608 = vunpack.c.l.b16 %v13476
    %v13609 = vunpack.c.l.b16 %v13477
    %v13610 = vunpack.c.l.b16 %v13478
    %v13611 = vunpack.c.l.b16 %v13479
    %v13612 = vunpack.c.l.b16 %v13480
    %v13613 = vunpack.c.l.b16 %v13481
    %v13614 = vunpack.c.l.b16 %v13482
    %v13615 = vunpack.c.l.b16 %v13483
    %v13616 = vunpack.c.l.b16 %v13484
    %v13617 = vunpack.c.l.b16 %v13485
    %v13618 = vunpack.c.l.b16 %v13486
    %v13619 = vunpack.c.l.b16 %v13487
    %v13620 = vunpack.c.l.b16 %v13488
    %v13621 = vunpack.c.l.b16 %v13489
    %v13622 = vunpack.c.l.b16 %v13490
    %v13623 = vunpack.c.l.b16 %v13491
    %v13624 = vunpack.c.l.b16 %v13492
    %v13625 = vunpack.c.l.b16 %v13493
    %v13626 = vunpack.c.l.b16 %v13494
    %v13627 = vunpack.c.l.b16 %v13495
    %v13628 = vunpack.c.l.b16 %v13496
    %v13629 = vunpack.c.l.b16 %v13497
    %v13630 = vpack.c.b16 %v13567, %v13566
    %v13631 = vpack.c.b16 %v13569, %v13568
    %v13632 = vpack.c.b16 %v13571, %v13570
    %v13633 = vpack.c.b16 %v13573, %v13572
    %v13634 = vpack.c.b16 %v13575, %v13574
    %v13635 = vpack.c.b16 %v13577, %v13576
    %v13636 = vpack.c.b16 %v13579, %v13578
    %v13637 = vpack.c.b16 %v13581, %v13580
    %v13638 = vpack.c.b16 %v13583, %v13582
    %v13639 = vpack.c.b16 %v13585, %v13584
    %v13640 = vpack.c.b16 %v13587, %v13586
    %v13641 = vpack.c.b16 %v13589, %v13588
    %v13642 = vpack.c.b16 %v13591, %v13590
    %v13643 = vpack.c.b16 %v13593, %v13592
    %v13644 = vpack.c.b16 %v13595, %v13594
    %v13645 = vpack.c.b16 %v13597, %v13596
    %v13646 = vpack.c.b16 %v13599, %v13598
    %v13647 = vpack.c.b16 %v13601, %v13600
    %v13648 = vpack.c.b16 %v13603, %v13602
    %v13649 = vpack.c.b16 %v13605, %v13604
    %v13650 = vpack.c.b16 %v13607, %v13606
    %v13651 = vpack.c.b16 %v13609, %v13608
    %v13652 = vpack.c.b16 %v13611, %v13610
    %v13653 = vpack.c.b16 %v13613, %v13612
    %v13654 = vpack.c.b16 %v13615, %v13614
    %v13655 = vpack.c.b16 %v13617, %v13616
    %v13656 = vpack.c.b16 %v13619, %v13618
    %v13657 = vpack.c.b16 %v13621, %v13620
    %v13658 = vpack.c.b16 %v13623, %v13622
    %v13659 = vpack.c.b16 %v13625, %v13624
    %v13660 = vpack.c.b16 %v13627, %v13626
    %v13661 = vpack.c.b16 %v13629, %v13628
    %13694 = vmatpush.bf16.msra.mxu0 %v13637
    %13695 = vmatpush.bf16.msra.mxu0 %v13636
    %13696 = vmatpush.bf16.msra.mxu0 %v13635
    %13697 = vmatpush.bf16.msra.mxu0 %v13634
    %13698 = vmatpush.bf16.msra.mxu0 %v13633
    %13699 = vmatpush.bf16.msra.mxu0 %v13632
    %13700 = vmatpush.bf16.msra.mxu0 %v13631
    %13701 = vmatpush.bf16.msra.mxu0 %v13630
    %13702 = vmatmul.bf16.gmra.mxu0 %v13430
    %v13703 = vpop.f32.mrf.mxu0
    %v13704 = vadd.f32 %v13500, %v13703
    %v13705 = vpop.f32.mrf.mxu0
    %13706 = vdwg.mxu0
    %13707 = vmatpush.bf16.msra.mxu0 %v13645
    %13708 = vmatpush.bf16.msra.mxu0 %v13644
    %13709 = vmatpush.bf16.msra.mxu0 %v13643
    %13710 = vmatpush.bf16.msra.mxu0 %v13642
    %13711 = vmatpush.bf16.msra.mxu0 %v13641
    %13712 = vmatpush.bf16.msra.mxu0 %v13640
    %13713 = vmatpush.bf16.msra.mxu0 %v13639
    %13714 = vmatpush.bf16.msra.mxu0 %v13638
    %13715 = vmatmul.bf16.gmra.mxu0 %v13431
    %v13716 = vpop.f32.mrf.mxu0
    %v13717 = vadd.f32 %v13704, %v13716
    %v13718 = vpop.f32.mrf.mxu0
    %13719 = vdwg.mxu0
    %13720 = vmatpush.bf16.msra.mxu0 %v13653
    %13721 = vmatpush.bf16.msra.mxu0 %v13652
    %13722 = vmatpush.bf16.msra.mxu0 %v13651
    %13723 = vmatpush.bf16.msra.mxu0 %v13650
    %13724 = vmatpush.bf16.msra.mxu0 %v13649
    %13725 = vmatpush.bf16.msra.mxu0 %v13648
    %13726 = vmatpush.bf16.msra.mxu0 %v13647
    %13727 = vmatpush.bf16.msra.mxu0 %v13646
    %13728 = vmatmul.bf16.gmra.mxu0 %v13432
    %v13729 = vpop.f32.mrf.mxu0
    %v13730 = vadd.f32 %v13717, %v13729
    %v13731 = vpop.f32.mrf.mxu0
    %13732 = vdwg.mxu0
    %13733 = vmatpush.bf16.msra.mxu0 %v13661
    %13734 = vmatpush.bf16.msra.mxu0 %v13660
    %13735 = vmatpush.bf16.msra.mxu0 %v13659
    %13736 = vmatpush.bf16.msra.mxu0 %v13658
    %13737 = vmatpush.bf16.msra.mxu0 %v13657
    %13738 = vmatpush.bf16.msra.mxu0 %v13656
    %13739 = vmatpush.bf16.msra.mxu0 %v13655
    %13740 = vmatpush.bf16.msra.mxu0 %v13654
    %13741 = vmatmul.bf16.gmra.mxu0 %v13433
    %v13742 = vpop.f32.mrf.mxu0
    %v13743 = vadd.f32 %v13730, %v13742
    %v13744 = vpop.f32.mrf.mxu0
    %13745 = vdwg.mxu0
    %13746 = vst [vmem:[#allocation18] sm:$0x3] %v13743
    // Predicated region
    $region86: #{lenet_forward.1} parent=1 // pred_check
      _
    $region87: #{lenet_forward.1} parent=1 // pred_check_branch
      %13748 = sbr.rel (0) target = $region89
    $region88: #{lenet_forward.1} parent=1 // pred_region
      %13750 = vsyncadd [#allocation8], 0
      %s13752 = sshll.u32 [#allocation18], 4
      %s13753 = int_to_ptr.vmem [resolvable:$true] %s13752
      %s13754 = sshll.u32 %s14, 4
      %s13755 = int_to_ptr.hbm [resolvable:$true] %s13754
      %13757 = dma.vmem_to_hbm [thread:$0]  %s13753, 32, %s13755, [#allocation8]
    $region89: #{lenet_forward.1} parent=1 // pred_fallthru
      _
    // Predicated region
    $region90: #{lenet_forward.1} parent=1 // pred_check
      _
    $region91: #{lenet_forward.1} parent=1 // pred_check_branch
      %13759 = sbr.rel (0) target = $region93
    $region92: #{lenet_forward.1} parent=1 // pred_region
      %13761 = dma.done [#allocation8], 32
    $region93: #{lenet_forward.1} parent=1 // pred_fallthru
      _
    %13762 = vsyncpa [#allocation7], 1
    %13763 = vsyncpa [#allocation10], 1
    %13764 = vsyncpa [#allocation13], 1
    %13765 = vsyncpa [#allocation16], 1
    %13766 = vsyncpa [#allocation8], 1

</llo_original>
